<compile_context>
chip_gen: v7x
topology: tpu7x:2x2x1
jax: 0.10.0
libtpu: 0.0.40
codegen_flags: <defaults>
</compile_context>

<pallas_src>
import functools

import jax
import jax.numpy as jnp
from jax.experimental import pallas as pl
from jax.experimental.pallas import tpu as pltpu

NOISE_SIZE = 100
NOISE_PAD = 128          # K of layer 1, padded to a full lane group
H1 = 256
H2 = 512
H3 = 1024
IMG_SIZE = 28 * 28       # 784
IMG_PAD = 896            # 7 * 128, lane-dense padded output width


def _generator_kernel(x_ref,
                      w1_ref, b1_ref,
                      w2_ref, b2_ref,
                      w3_ref, b3_ref,
                      w4_ref, b4_ref,
                      o_ref):
    # Layer 1: (tb, 128) @ (128, 256) -> f32 acc, bias+ReLU in f32.
    h = jnp.dot(x_ref[...].astype(jnp.bfloat16), w1_ref[...],
                preferred_element_type=jnp.float32)
    h = jnp.maximum(h + b1_ref[...], 0.0)
    # Layer 2: (tb, 256) @ (256, 512)
    h = jnp.dot(h.astype(jnp.bfloat16), w2_ref[...],
                preferred_element_type=jnp.float32)
    h = jnp.maximum(h + b2_ref[...], 0.0)
    # Layer 3: (tb, 512) @ (512, 1024)
    h = jnp.dot(h.astype(jnp.bfloat16), w3_ref[...],
                preferred_element_type=jnp.float32)
    h = jnp.maximum(h + b3_ref[...], 0.0)
    # Layer 4: (tb, 1024) @ (1024, 896) -> tanh in f32 on the f32 accumulator.
    h = jnp.dot(h.astype(jnp.bfloat16), w4_ref[...],
                preferred_element_type=jnp.float32)
    o_ref[...] = jnp.tanh(h + b4_ref[...]).astype(o_ref.dtype)


@functools.partial(jax.jit, static_argnames=("block_b",))
def generator_forward(x, packed_params, *, block_b=256):
    """x: (B, 100) f32 noise -> (B, 784) f32 in (-1, 1).

    packed_params: output of pack_params() (bf16 weights, padded layers 1/4).
    """
    w1, b1, w2, b2, w3, b3, w4, b4 = packed_params
    B = x.shape[0]
    Bp = ((B + block_b - 1) // block_b) * block_b

    # Pad noise features 100 -> 128 and batch up to a multiple of block_b.
    xp = jnp.zeros((Bp, NOISE_PAD), jnp.float32)
    xp = xp.at[:B, :NOISE_SIZE].set(x.astype(jnp.float32))

    # Weights / biases are fully resident each grid step (constant index map).
    def resident(arr):
        return pl.BlockSpec(arr.shape, lambda i: (0, 0))

    grid = (Bp // block_b,)
    out = pl.pallas_call(
        _generator_kernel,
        out_shape=jax.ShapeDtypeStruct((Bp, IMG_PAD), jnp.float32),
        grid_spec=pltpu.PrefetchScalarGridSpec(
            num_scalar_prefetch=0,
            grid=grid,
            in_specs=[
                pl.BlockSpec((block_b, NOISE_PAD), lambda i: (i, 0)),
                resident(w1), resident(b1),
                resident(w2), resident(b2),
                resident(w3), resident(b3),
                resident(w4), resident(b4),
            ],
            out_specs=pl.BlockSpec((block_b, IMG_PAD), lambda i: (i, 0)),
        ),
        compiler_params=pltpu.CompilerParams(
            dimension_semantics=("parallel",),
            vmem_limit_bytes=40 << 20,  # fits v7x's 64 MiB physical VMEM
        ),
    )(xp, w1, b1, w2, b2, w3, b3, w4, b4)

    return out[:B, :IMG_SIZE]


def init_params(key):
    """f32 params matching nn.Linear default init U(-1/sqrt(fan_in), +1/sqrt(fan_in)).

    Weights stored as (in_features, out_features); biases as (1, out_features)."""
    dims = [(NOISE_SIZE, H1), (H1, H2), (H2, H3), (H3, IMG_SIZE)]
    params = []
    for (fan_in, fan_out) in dims:
        key, kw, kb = jax.random.split(key, 3)
        bound = 1.0 / jnp.sqrt(float(fan_in))
        w = jax.random.uniform(kw, (fan_in, fan_out), jnp.float32, -bound, bound)
        b = jax.random.uniform(kb, (1, fan_out), jnp.float32, -bound, bound)
        params += [w, b]
    return tuple(params)


def pack_params(params):
    """Pad layer-1 K (100->128) and layer-4 N (784->896) with zeros, cast
    weights to bf16 for native MXU throughput; biases stay f32."""
    w1, b1, w2, b2, w3, b3, w4, b4 = params
    w1p = jnp.zeros((NOISE_PAD, H1), jnp.float32).at[:NOISE_SIZE, :].set(w1)
    w4p = jnp.zeros((H3, IMG_PAD), jnp.float32).at[:, :IMG_SIZE].set(w4)
    b4p = jnp.zeros((1, IMG_PAD), jnp.float32).at[:, :IMG_SIZE].set(b4)
    return (
        w1p.astype(jnp.bfloat16), b1,
        w2.astype(jnp.bfloat16), b2,
        w3.astype(jnp.bfloat16), b3,
        w4p.astype(jnp.bfloat16), b4p,
    )


def reference_forward(x, params):
    """Pure-f32 JAX reference (unpadded params)."""
    w1, b1, w2, b2, w3, b3, w4, b4 = params
    h = jnp.maximum(x @ w1 + b1, 0.0)
    h = jnp.maximum(h @ w2 + b2, 0.0)
    h = jnp.maximum(h @ w3 + b3, 0.0)
    return jnp.tanh(h @ w4 + b4)


if __name__ == "__main__":
    key = jax.random.PRNGKey(0)
    k_param, k_x = jax.random.split(key)

    params = init_params(k_param)
    packed = pack_params(params)

    # block_b=128 with batch=256 keeps grid >= 2 (both v7x TensorCores get work)
    # while each tile is a full 128-row MXU tile.
    batch = 256
    x = jax.random.normal(k_x, (batch, NOISE_SIZE), dtype=jnp.float32)

    out = generator_forward(x, packed, block_b=128)
    out = jax.block_until_ready(out)

    ref = reference_forward(x, params)
    assert out.shape == (batch, IMG_SIZE)
    max_err = float(jnp.max(jnp.abs(out - ref)))
    # bf16 matmul inputs with f32 accumulation: relaxed tolerance vs f32 ref.
    assert jnp.allclose(out, ref, atol=2e-2, rtol=2e-2), (
        f"mismatch vs reference (max abs err {max_err:.4e})")

    print("KERNEL_OK")
</pallas_src>

<mosaic_0001>
module attributes {stable_mosaic.version = 11 : i64} {
  func.func @_generator_kernel(%arg0: i32, %arg1: memref<128x128xf32, #tpu.memory_space<vmem>>, %arg2: memref<128x256xbf16, #tpu.memory_space<vmem>>, %arg3: memref<1x256xf32, #tpu.memory_space<vmem>>, %arg4: memref<256x512xbf16, #tpu.memory_space<vmem>>, %arg5: memref<1x512xf32, #tpu.memory_space<vmem>>, %arg6: memref<512x1024xbf16, #tpu.memory_space<vmem>>, %arg7: memref<1x1024xf32, #tpu.memory_space<vmem>>, %arg8: memref<1024x896xbf16, #tpu.memory_space<vmem>>, %arg9: memref<1x896xf32, #tpu.memory_space<vmem>>, %arg10: memref<128x896xf32, #tpu.memory_space<vmem>>) attributes {dimension_semantics = [#tpu.dimension_semantics<parallel>], iteration_bounds = array<i64: 2>, scalar_prefetch = 0 : i64, scratch_operands = 0 : i64, tpu.core_type = #tpu.core_type<tc>, window_params = [{transform_indices = @transform_0, window_bounds = array<i64: 128, 128>}, {pipeline_mode = #tpu.pipeline_mode<synchronous>, transform_indices = @transform_1, window_bounds = array<i64: 128, 256>}, {pipeline_mode = #tpu.pipeline_mode<synchronous>, transform_indices = @transform_2, window_bounds = array<i64: 1, 256>}, {pipeline_mode = #tpu.pipeline_mode<synchronous>, transform_indices = @transform_3, window_bounds = array<i64: 256, 512>}, {pipeline_mode = #tpu.pipeline_mode<synchronous>, transform_indices = @transform_4, window_bounds = array<i64: 1, 512>}, {pipeline_mode = #tpu.pipeline_mode<synchronous>, transform_indices = @transform_5, window_bounds = array<i64: 512, 1024>}, {pipeline_mode = #tpu.pipeline_mode<synchronous>, transform_indices = @transform_6, window_bounds = array<i64: 1, 1024>}, {pipeline_mode = #tpu.pipeline_mode<synchronous>, transform_indices = @transform_7, window_bounds = array<i64: 1024, 896>}, {pipeline_mode = #tpu.pipeline_mode<synchronous>, transform_indices = @transform_8, window_bounds = array<i64: 1, 896>}, {transform_indices = @transform_9, window_bounds = array<i64: 128, 896>}]} {
    %c0 = arith.constant 0 : index
    %c0_0 = arith.constant 0 : index
    %0 = vector.load %arg1[%c0, %c0_0] : memref<128x128xf32, #tpu.memory_space<vmem>>, vector<128x128xf32>
    %1 = arith.truncf %0 : vector<128x128xf32> to vector<128x128xbf16>
    %c0_1 = arith.constant 0 : index
    %c0_2 = arith.constant 0 : index
    %2 = vector.load %arg2[%c0_1, %c0_2] : memref<128x256xbf16, #tpu.memory_space<vmem>>, vector<128x256xbf16>
    %cst = arith.constant dense<0.000000e+00> : vector<128x256xf32>
    %3 = tpu.matmul %1, %2, %cst {dimension_numbers = #tpu.dot_dimension_numbers<[1], [0], [0], [1], [0, 0, 1, 1], [], []>} : vector<128x128xbf16>, vector<128x256xbf16>, vector<128x256xf32> -> vector<128x256xf32>
    %c0_3 = arith.constant 0 : index
    %c0_4 = arith.constant 0 : index
    %4 = vector.load %arg3[%c0_3, %c0_4] : memref<1x256xf32, #tpu.memory_space<vmem>>, vector<1x256xf32>
    %5 = vector.broadcast %4 : vector<1x256xf32> to vector<128x256xf32>
    %6 = arith.addf %3, %5 : vector<128x256xf32>
    %cst_5 = arith.constant 0.000000e+00 : f32
    %7 = vector.broadcast %cst_5 : f32 to vector<128x256xf32>
    %8 = arith.maximumf %6, %7 : vector<128x256xf32>
    %9 = arith.truncf %8 : vector<128x256xf32> to vector<128x256xbf16>
    %c0_6 = arith.constant 0 : index
    %c0_7 = arith.constant 0 : index
    %10 = vector.load %arg4[%c0_6, %c0_7] : memref<256x512xbf16, #tpu.memory_space<vmem>>, vector<256x512xbf16>
    %cst_8 = arith.constant dense<0.000000e+00> : vector<128x512xf32>
    %11 = tpu.matmul %9, %10, %cst_8 {dimension_numbers = #tpu.dot_dimension_numbers<[1], [0], [0], [1], [0, 0, 1, 1], [], []>} : vector<128x256xbf16>, vector<256x512xbf16>, vector<128x512xf32> -> vector<128x512xf32>
    %c0_9 = arith.constant 0 : index
    %c0_10 = arith.constant 0 : index
    %12 = vector.load %arg5[%c0_9, %c0_10] : memref<1x512xf32, #tpu.memory_space<vmem>>, vector<1x512xf32>
    %13 = vector.broadcast %12 : vector<1x512xf32> to vector<128x512xf32>
    %14 = arith.addf %11, %13 : vector<128x512xf32>
    %cst_11 = arith.constant 0.000000e+00 : f32
    %15 = vector.broadcast %cst_11 : f32 to vector<128x512xf32>
    %16 = arith.maximumf %14, %15 : vector<128x512xf32>
    %17 = arith.truncf %16 : vector<128x512xf32> to vector<128x512xbf16>
    %c0_12 = arith.constant 0 : index
    %c0_13 = arith.constant 0 : index
    %18 = vector.load %arg6[%c0_12, %c0_13] : memref<512x1024xbf16, #tpu.memory_space<vmem>>, vector<512x1024xbf16>
    %cst_14 = arith.constant dense<0.000000e+00> : vector<128x1024xf32>
    %19 = tpu.matmul %17, %18, %cst_14 {dimension_numbers = #tpu.dot_dimension_numbers<[1], [0], [0], [1], [0, 0, 1, 1], [], []>} : vector<128x512xbf16>, vector<512x1024xbf16>, vector<128x1024xf32> -> vector<128x1024xf32>
    %c0_15 = arith.constant 0 : index
    %c0_16 = arith.constant 0 : index
    %20 = vector.load %arg7[%c0_15, %c0_16] : memref<1x1024xf32, #tpu.memory_space<vmem>>, vector<1x1024xf32>
    %21 = vector.broadcast %20 : vector<1x1024xf32> to vector<128x1024xf32>
    %22 = arith.addf %19, %21 : vector<128x1024xf32>
    %cst_17 = arith.constant 0.000000e+00 : f32
    %23 = vector.broadcast %cst_17 : f32 to vector<128x1024xf32>
    %24 = arith.maximumf %22, %23 : vector<128x1024xf32>
    %25 = arith.truncf %24 : vector<128x1024xf32> to vector<128x1024xbf16>
    %c0_18 = arith.constant 0 : index
    %c0_19 = arith.constant 0 : index
    %26 = vector.load %arg8[%c0_18, %c0_19] : memref<1024x896xbf16, #tpu.memory_space<vmem>>, vector<1024x896xbf16>
    %cst_20 = arith.constant dense<0.000000e+00> : vector<128x896xf32>
    %27 = tpu.matmul %25, %26, %cst_20 {dimension_numbers = #tpu.dot_dimension_numbers<[1], [0], [0], [1], [0, 0, 1, 1], [], []>} : vector<128x1024xbf16>, vector<1024x896xbf16>, vector<128x896xf32> -> vector<128x896xf32>
    %c0_21 = arith.constant 0 : index
    %c0_22 = arith.constant 0 : index
    %28 = vector.load %arg9[%c0_21, %c0_22] : memref<1x896xf32, #tpu.memory_space<vmem>>, vector<1x896xf32>
    %29 = vector.broadcast %28 : vector<1x896xf32> to vector<128x896xf32>
    %30 = arith.addf %27, %29 : vector<128x896xf32>
    %31 = math.tanh %30 : vector<128x896xf32>
    %c0_23 = arith.constant 0 : index
    %c0_24 = arith.constant 0 : index
    %32 = vector.load %arg10[%c0_23, %c0_24] : memref<128x896xf32, #tpu.memory_space<vmem>>, vector<128x896xf32>
    tpu.vector_store %arg10[%c0_23, %c0_24], %31 {strides = array<i32>} : memref<128x896xf32, #tpu.memory_space<vmem>>, vector<128x896xf32>,
    return
  }
  func.func @transform_0(%arg0: i32) -> (i32, i32) {
    %c0_i32 = arith.constant 0 : i32
    %c0_i32_0 = arith.constant 0 : i32
    return %arg0, %c0_i32 : i32, i32
  }
  func.func @transform_1(%arg0: i32) -> (i32, i32) {
    %c0_i32 = arith.constant 0 : i32
    %c0_i32_0 = arith.constant 0 : i32
    %c0_i32_1 = arith.constant 0 : i32
    return %c0_i32, %c0_i32_0 : i32, i32
  }
  func.func @transform_2(%arg0: i32) -> (i32, i32) {
    %c0_i32 = arith.constant 0 : i32
    %c0_i32_0 = arith.constant 0 : i32
    %c0_i32_1 = arith.constant 0 : i32
    return %c0_i32, %c0_i32_0 : i32, i32
  }
  func.func @transform_3(%arg0: i32) -> (i32, i32) {
    %c0_i32 = arith.constant 0 : i32
    %c0_i32_0 = arith.constant 0 : i32
    %c0_i32_1 = arith.constant 0 : i32
    return %c0_i32, %c0_i32_0 : i32, i32
  }
  func.func @transform_4(%arg0: i32) -> (i32, i32) {
    %c0_i32 = arith.constant 0 : i32
    %c0_i32_0 = arith.constant 0 : i32
    %c0_i32_1 = arith.constant 0 : i32
    return %c0_i32, %c0_i32_0 : i32, i32
  }
  func.func @transform_5(%arg0: i32) -> (i32, i32) {
    %c0_i32 = arith.constant 0 : i32
    %c0_i32_0 = arith.constant 0 : i32
    %c0_i32_1 = arith.constant 0 : i32
    return %c0_i32, %c0_i32_0 : i32, i32
  }
  func.func @transform_6(%arg0: i32) -> (i32, i32) {
    %c0_i32 = arith.constant 0 : i32
    %c0_i32_0 = arith.constant 0 : i32
    %c0_i32_1 = arith.constant 0 : i32
    return %c0_i32, %c0_i32_0 : i32, i32
  }
  func.func @transform_7(%arg0: i32) -> (i32, i32) {
    %c0_i32 = arith.constant 0 : i32
    %c0_i32_0 = arith.constant 0 : i32
    %c0_i32_1 = arith.constant 0 : i32
    return %c0_i32, %c0_i32_0 : i32, i32
  }
  func.func @transform_8(%arg0: i32) -> (i32, i32) {
    %c0_i32 = arith.constant 0 : i32
    %c0_i32_0 = arith.constant 0 : i32
    %c0_i32_1 = arith.constant 0 : i32
    return %c0_i32, %c0_i32_0 : i32, i32
  }
  func.func @transform_9(%arg0: i32) -> (i32, i32) {
    %c0_i32 = arith.constant 0 : i32
    %c0_i32_0 = arith.constant 0 : i32
    return %arg0, %c0_i32 : i32, i32
  }
}

</mosaic_0001>

<llo_original>
// kernel: generator_forward.1
$region0: #{generator_forward.1}
  #allocation0 [shape = 'u32[]', space=smem, size = 0x4, offset = 0x4, fixed_abs, tag = 'smem constant byte address 0x4 - core index']
  #allocation1 [shape = 'u32[144,128]{1,0:T(1,128)}', space=vmem, size = 0x12000, scoped, tag = 'internal scratch']
  %s0 = inlined_call_operand.vmem [shape: f32[256,128], index: 0, kind: input, shape index: {}]
  %s1 = inlined_call_operand.hbm [shape: bf16[128,256], index: 1, kind: input, shape index: {}]
  %s2 = inlined_call_operand.hbm [shape: f32[1,256], index: 2, kind: input, shape index: {}]
  %s3 = inlined_call_operand.hbm [shape: bf16[256,512], index: 3, kind: input, shape index: {}]
  %s4 = inlined_call_operand.hbm [shape: f32[1,512], index: 4, kind: input, shape index: {}]
  %s5 = inlined_call_operand.hbm [shape: bf16[512,1024], index: 5, kind: input, shape index: {}]
  %s6 = inlined_call_operand.hbm [shape: f32[1,1024], index: 6, kind: input, shape index: {}]
  %s7 = inlined_call_operand.hbm [shape: bf16[1024,896], index: 7, kind: input, shape index: {}]
  %s8 = inlined_call_operand.hbm [shape: f32[1,896], index: 8, kind: input, shape index: {}]
  %s9 = inlined_call_operand.vmem [shape: f32[256,896], index: 9, kind: output, shape index: {}]
  %s10 = sld [smem:[#allocation0]]
  $region101: #{generator_forward.1} parent=0
    _
  %s12 = ssub.s32 1, %s10
  %s13 = scalar_select 0, %s12, %s10
  $region1: #{generator_forward.1} parent=0
    #allocation2 [shape = 'u8[65536]{0}', space=vmem, size = 0x10000, scoped, tag = 'input window, operand 1, single buffered']
    #allocation3 [shape = 's32[2]{0}', space=sflag, size = 0x8, scoped, tag = 'scoped memory for generator_forward.1']
    #allocation4 [shape = 'u8[1024]{0}', space=vmem, size = 0x400, scoped, tag = 'input window, operand 2, single buffered']
    #allocation5 [shape = 's32[1]{0}', space=sflag, size = 0x4, scoped, tag = 'scoped memory for generator_forward.1']
    #allocation6 [shape = 'u8[262144]{0}', space=vmem, size = 0x40000, scoped, tag = 'input window, operand 3, single buffered']
    #allocation7 [shape = 'u8[2048]{0}', space=vmem, size = 0x800, scoped, tag = 'input window, operand 4, single buffered']
    #allocation8 [shape = 's32[1]{0}', space=sflag, size = 0x4, scoped, tag = 'scoped memory for generator_forward.1']
    #allocation9 [shape = 'u8[1048576]{0}', space=vmem, size = 0x100000, scoped, tag = 'input window, operand 5, single buffered']
    #allocation10 [shape = 'u8[4096]{0}', space=vmem, size = 0x1000, scoped, tag = 'input window, operand 6, single buffered']
    #allocation11 [shape = 's32[1]{0}', space=sflag, size = 0x4, scoped, tag = 'scoped memory for generator_forward.1']
    #allocation12 [shape = 'u8[1835008]{0}', space=vmem, size = 0x1c0000, scoped, tag = 'input window, operand 7, single buffered']
    #allocation13 [shape = 'u8[3584]{0}', space=vmem, size = 0x1000, scoped, tag = 'input window, operand 8, single buffered']
    #allocation14 [shape = 's32[1]{0}', space=sflag, size = 0x4, scoped, tag = 'scoped memory for generator_forward.1']
    %14 = vsyncpa [#allocation3], 0
    %15 = vsyncpa [#allocation5], 0
    %16 = vsyncpa [#allocation8], 0
    %17 = vsyncpa [#allocation11], 0
    %18 = vsyncpa [#allocation14], 0
    loop: start=0, step=1, limit=4
    $region2: #{generator_forward.1} parent=1 // loop_pre_header
      _
    $region3: #{generator_forward.1} parent=1 // loop_header
      %s20 = sphi 0, %s24
      %p21 = scmp.ge.s32.totalorder %s20, 4
      %s30 = sphi 0, %s32
      %s33 = sphi 0, %s30
      %s34 = sphi 0, %s33
      %s50 = sphi 0, %s34
      %s54 = sphi 0, %s54
      %s56 = sphi 0, %s54
      %s57 = sphi 0, %s56
      %s71 = sphi 0, %s57
      %s75 = sphi 0, %s75
      %s77 = sphi 0, %s75
      %s78 = sphi 0, %s77
      %s92 = sphi 0, %s78
      %s96 = sphi 0, %s96
      %s98 = sphi 0, %s96
      %s99 = sphi 0, %s98
      %s113 = sphi 0, %s99
      %s117 = sphi 0, %s117
      %s119 = sphi 0, %s117
      %s120 = sphi 0, %s119
      %s134 = sphi 0, %s120
      %s138 = sphi 0, %s138
      %s140 = sphi 0, %s138
      %s141 = sphi 0, %s140
      %s155 = sphi 0, %s141
      %s159 = sphi 0, %s159
      %s161 = sphi 0, %s159
      %s162 = sphi 0, %s161
      %s176 = sphi 0, %s162
      %s180 = sphi 0, %s180
      %s182 = sphi 0, %s180
      %s183 = sphi 0, %s182
      %s197 = sphi 0, %s183
      %s201 = sphi 0, %s201
      %s203 = sphi 0, %s201
      %s204 = sphi 0, %s203
      %s218 = sphi 0, %s204
      %s224 = sphi 0, %s226
      %s227 = sphi 0, %s224
      %s228 = sphi 0, %s227
      %s244 = sphi 0, %s228
    $region4: #{generator_forward.1} parent=1 // loop_header_branch
      %23 = sbr.rel (%p21) target = $region8
    $region5: #{generator_forward.1} parent=1 // loop_body
      %s25 = ssub.s32 %s20, 1
      %s26 = ssub.s32 %s20, 2
      %s27 = sadd.s32 %s20, 1
      %s28 = ssub.s32 %s20, %s27
      %p29 = scmp.eq.s32.totalorder %s28, 0
      %s31 = sadd.s32 %s30, 1
      %s32 = scalar_select %p29, %s30, %s31
      %p35 = pneg %p29
      %p36 = scmp.eq.s32.totalorder %s20, 1
      %p37 = por %p35, %p36
      %p38 = scmp.ne.s32.totalorder %s30, %s33
      %p39 = scmp.eq.s32.totalorder %s20, 0
      %p40 = por %p38, %p39
      %p41 = scmp.ne.s32.totalorder %s30, %s33
      %p42 = scmp.eq.s32.totalorder %s25, 1
      %p43 = por %p41, %p42
      %p44 = scmp.ne.s32.totalorder %s33, %s34
      %p45 = scmp.eq.s32.totalorder %s25, 0
      %p46 = por %p44, %p45
      %p47 = scmp.ne.s32.totalorder %s33, %s34
      %p48 = scmp.eq.s32.totalorder %s26, 1
      %p49 = por %p47, %p48
      %p51 = scmp.ne.s32.totalorder %s34, %s50
      %p52 = scmp.eq.s32.totalorder %s26, 0
      %p53 = por %p51, %p52
      %s55 = sadd.s32 %s54, 1
      %p58 = scmp.eq.s32.totalorder %s20, 1
      %p59 = scmp.ne.s32.totalorder %s54, %s56
      %p60 = scmp.eq.s32.totalorder %s20, 0
      %p61 = por %p59, %p60
      %p62 = scmp.ne.s32.totalorder %s54, %s56
      %p63 = scmp.eq.s32.totalorder %s25, 1
      %p64 = por %p62, %p63
      %p65 = scmp.ne.s32.totalorder %s56, %s57
      %p66 = scmp.eq.s32.totalorder %s25, 0
      %p67 = por %p65, %p66
      %p68 = scmp.ne.s32.totalorder %s56, %s57
      %p69 = scmp.eq.s32.totalorder %s26, 1
      %p70 = por %p68, %p69
      %p72 = scmp.ne.s32.totalorder %s57, %s71
      %p73 = scmp.eq.s32.totalorder %s26, 0
      %p74 = por %p72, %p73
      %s76 = sadd.s32 %s75, 1
      %p79 = scmp.eq.s32.totalorder %s20, 1
      %p80 = scmp.ne.s32.totalorder %s75, %s77
      %p81 = scmp.eq.s32.totalorder %s20, 0
      %p82 = por %p80, %p81
      %p83 = scmp.ne.s32.totalorder %s75, %s77
      %p84 = scmp.eq.s32.totalorder %s25, 1
      %p85 = por %p83, %p84
      %p86 = scmp.ne.s32.totalorder %s77, %s78
      %p87 = scmp.eq.s32.totalorder %s25, 0
      %p88 = por %p86, %p87
      %p89 = scmp.ne.s32.totalorder %s77, %s78
      %p90 = scmp.eq.s32.totalorder %s26, 1
      %p91 = por %p89, %p90
      %p93 = scmp.ne.s32.totalorder %s78, %s92
      %p94 = scmp.eq.s32.totalorder %s26, 0
      %p95 = por %p93, %p94
      %s97 = sadd.s32 %s96, 1
      %p100 = scmp.eq.s32.totalorder %s20, 1
      %p101 = scmp.ne.s32.totalorder %s96, %s98
      %p102 = scmp.eq.s32.totalorder %s20, 0
      %p103 = por %p101, %p102
      %p104 = scmp.ne.s32.totalorder %s96, %s98
      %p105 = scmp.eq.s32.totalorder %s25, 1
      %p106 = por %p104, %p105
      %p107 = scmp.ne.s32.totalorder %s98, %s99
      %p108 = scmp.eq.s32.totalorder %s25, 0
      %p109 = por %p107, %p108
      %p110 = scmp.ne.s32.totalorder %s98, %s99
      %p111 = scmp.eq.s32.totalorder %s26, 1
      %p112 = por %p110, %p111
      %p114 = scmp.ne.s32.totalorder %s99, %s113
      %p115 = scmp.eq.s32.totalorder %s26, 0
      %p116 = por %p114, %p115
      %s118 = sadd.s32 %s117, 1
      %p121 = scmp.eq.s32.totalorder %s20, 1
      %p122 = scmp.ne.s32.totalorder %s117, %s119
      %p123 = scmp.eq.s32.totalorder %s20, 0
      %p124 = por %p122, %p123
      %p125 = scmp.ne.s32.totalorder %s117, %s119
      %p126 = scmp.eq.s32.totalorder %s25, 1
      %p127 = por %p125, %p126
      %p128 = scmp.ne.s32.totalorder %s119, %s120
      %p129 = scmp.eq.s32.totalorder %s25, 0
      %p130 = por %p128, %p129
      %p131 = scmp.ne.s32.totalorder %s119, %s120
      %p132 = scmp.eq.s32.totalorder %s26, 1
      %p133 = por %p131, %p132
      %p135 = scmp.ne.s32.totalorder %s120, %s134
      %p136 = scmp.eq.s32.totalorder %s26, 0
      %p137 = por %p135, %p136
      %s139 = sadd.s32 %s138, 1
      %p142 = scmp.eq.s32.totalorder %s20, 1
      %p143 = scmp.ne.s32.totalorder %s138, %s140
      %p144 = scmp.eq.s32.totalorder %s20, 0
      %p145 = por %p143, %p144
      %p146 = scmp.ne.s32.totalorder %s138, %s140
      %p147 = scmp.eq.s32.totalorder %s25, 1
      %p148 = por %p146, %p147
      %p149 = scmp.ne.s32.totalorder %s140, %s141
      %p150 = scmp.eq.s32.totalorder %s25, 0
      %p151 = por %p149, %p150
      %p152 = scmp.ne.s32.totalorder %s140, %s141
      %p153 = scmp.eq.s32.totalorder %s26, 1
      %p154 = por %p152, %p153
      %p156 = scmp.ne.s32.totalorder %s141, %s155
      %p157 = scmp.eq.s32.totalorder %s26, 0
      %p158 = por %p156, %p157
      %s160 = sadd.s32 %s159, 1
      %p163 = scmp.eq.s32.totalorder %s20, 1
      %p164 = scmp.ne.s32.totalorder %s159, %s161
      %p165 = scmp.eq.s32.totalorder %s20, 0
      %p166 = por %p164, %p165
      %p167 = scmp.ne.s32.totalorder %s159, %s161
      %p168 = scmp.eq.s32.totalorder %s25, 1
      %p169 = por %p167, %p168
      %p170 = scmp.ne.s32.totalorder %s161, %s162
      %p171 = scmp.eq.s32.totalorder %s25, 0
      %p172 = por %p170, %p171
      %p173 = scmp.ne.s32.totalorder %s161, %s162
      %p174 = scmp.eq.s32.totalorder %s26, 1
      %p175 = por %p173, %p174
      %p177 = scmp.ne.s32.totalorder %s162, %s176
      %p178 = scmp.eq.s32.totalorder %s26, 0
      %p179 = por %p177, %p178
      %s181 = sadd.s32 %s180, 1
      %p184 = scmp.eq.s32.totalorder %s20, 1
      %p185 = scmp.ne.s32.totalorder %s180, %s182
      %p186 = scmp.eq.s32.totalorder %s20, 0
      %p187 = por %p185, %p186
      %p188 = scmp.ne.s32.totalorder %s180, %s182
      %p189 = scmp.eq.s32.totalorder %s25, 1
      %p190 = por %p188, %p189
      %p191 = scmp.ne.s32.totalorder %s182, %s183
      %p192 = scmp.eq.s32.totalorder %s25, 0
      %p193 = por %p191, %p192
      %p194 = scmp.ne.s32.totalorder %s182, %s183
      %p195 = scmp.eq.s32.totalorder %s26, 1
      %p196 = por %p194, %p195
      %p198 = scmp.ne.s32.totalorder %s183, %s197
      %p199 = scmp.eq.s32.totalorder %s26, 0
      %p200 = por %p198, %p199
      %s202 = sadd.s32 %s201, 1
      %p205 = scmp.eq.s32.totalorder %s20, 1
      %p206 = scmp.ne.s32.totalorder %s201, %s203
      %p207 = scmp.eq.s32.totalorder %s20, 0
      %p208 = por %p206, %p207
      %p209 = scmp.ne.s32.totalorder %s201, %s203
      %p210 = scmp.eq.s32.totalorder %s25, 1
      %p211 = por %p209, %p210
      %p212 = scmp.ne.s32.totalorder %s203, %s204
      %p213 = scmp.eq.s32.totalorder %s25, 0
      %p214 = por %p212, %p213
      %p215 = scmp.ne.s32.totalorder %s203, %s204
      %p216 = scmp.eq.s32.totalorder %s26, 1
      %p217 = por %p215, %p216
      %p219 = scmp.ne.s32.totalorder %s204, %s218
      %p220 = scmp.eq.s32.totalorder %s26, 0
      %p221 = por %p219, %p220
      %s222 = ssub.s32 %s20, %s27
      %p223 = scmp.eq.s32.totalorder %s222, 0
      %s225 = sadd.s32 %s224, 1
      %s226 = scalar_select %p223, %s224, %s225
      %p229 = pneg %p223
      %p230 = scmp.eq.s32.totalorder %s20, 1
      %p231 = por %p229, %p230
      %p232 = scmp.ne.s32.totalorder %s224, %s227
      %p233 = scmp.eq.s32.totalorder %s20, 0
      %p234 = por %p232, %p233
      %p235 = scmp.ne.s32.totalorder %s224, %s227
      %p236 = scmp.eq.s32.totalorder %s25, 1
      %p237 = por %p235, %p236
      %p238 = scmp.ne.s32.totalorder %s227, %s228
      %p239 = scmp.eq.s32.totalorder %s25, 0
      %p240 = por %p238, %p239
      %p241 = scmp.ne.s32.totalorder %s227, %s228
      %p242 = scmp.eq.s32.totalorder %s26, 1
      %p243 = por %p241, %p242
      %p245 = scmp.ne.s32.totalorder %s228, %s244
      %p246 = scmp.eq.s32.totalorder %s26, 0
      %p247 = por %p245, %p246
      %p248 = scmp.le.s32.totalorder 1, %s20
      %p249 = scmp.lt.s32.totalorder %s20, 3
      %p250 = pnand %p248, %p249
      %p251 = pneg %p250
      // Predicated region
      $region9: #{generator_forward.1} parent=5 // pred_check
        _
      $region10: #{generator_forward.1} parent=5 // pred_check_branch
        %253 = sbr.rel (%p250) target = $region12
      $region11: #{generator_forward.1} parent=5 // pred_region
        %s254 = ssub.s32 %s20, 1
        // Predicated region
        $region13: #{generator_forward.1} parent=11 // pred_check
          %p255 = pneg %p67
        $region14: #{generator_forward.1} parent=11 // pred_check_branch
          %257 = sbr.rel (%p255) target = $region16
        $region15: #{generator_forward.1} parent=11 // pred_region
          %s259 = ssub.s32 2048, 2048
          %260 = vsyncadd [#allocation3], %s259
          %s261 = sshll.u32 [#allocation2], 4
          %s262 = int_to_ptr.vmem [resolvable:$true] %s261
          %267 = dma.hbm_to_vmem [thread:$0]  %s1, 2048, %s262, [#allocation3], 128, 128, 8
        $region16: #{generator_forward.1} parent=11 // pred_fallthru
          _
        // Predicated region
        $region17: #{generator_forward.1} parent=11 // pred_check
          %p268 = pneg %p88
        $region18: #{generator_forward.1} parent=11 // pred_check_branch
          %270 = sbr.rel (%p268) target = $region20
        $region19: #{generator_forward.1} parent=11 // pred_region
          %s272 = ssub.s32 32, 32
          %273 = vsyncadd [#allocation5], %s272
          %s275 = sshll.u32 [#allocation4], 4
          %s276 = int_to_ptr.vmem [resolvable:$true] %s275
          %278 = dma.hbm_to_vmem [thread:$0]  %s2, 32, %s276, [#allocation5]
        $region20: #{generator_forward.1} parent=11 // pred_fallthru
          _
        // Predicated region
        $region21: #{generator_forward.1} parent=11 // pred_check
          %p279 = pneg %p109
        $region22: #{generator_forward.1} parent=11 // pred_check_branch
          %281 = sbr.rel (%p279) target = $region24
        $region23: #{generator_forward.1} parent=11 // pred_region
          %s283 = ssub.s32 8192, 8192
          %284 = vsyncadd [#allocation5], %s283
          %s285 = sshll.u32 [#allocation6], 4
          %s286 = int_to_ptr.vmem [resolvable:$true] %s285
          %291 = dma.hbm_to_vmem [thread:$0]  %s3, 8192, %s286, [#allocation5], 256, 256, 16
        $region24: #{generator_forward.1} parent=11 // pred_fallthru
          _
        // Predicated region
        $region25: #{generator_forward.1} parent=11 // pred_check
          %p292 = pneg %p130
        $region26: #{generator_forward.1} parent=11 // pred_check_branch
          %294 = sbr.rel (%p292) target = $region28
        $region27: #{generator_forward.1} parent=11 // pred_region
          %s296 = ssub.s32 64, 64
          %297 = vsyncadd [#allocation8], %s296
          %s299 = sshll.u32 [#allocation7], 4
          %s300 = int_to_ptr.vmem [resolvable:$true] %s299
          %302 = dma.hbm_to_vmem [thread:$0]  %s4, 64, %s300, [#allocation8]
        $region28: #{generator_forward.1} parent=11 // pred_fallthru
          _
        // Predicated region
        $region29: #{generator_forward.1} parent=11 // pred_check
          %p303 = pneg %p151
        $region30: #{generator_forward.1} parent=11 // pred_check_branch
          %305 = sbr.rel (%p303) target = $region32
        $region31: #{generator_forward.1} parent=11 // pred_region
          %s307 = ssub.s32 32768, 32768
          %308 = vsyncadd [#allocation8], %s307
          %s309 = sshll.u32 [#allocation9], 4
          %s310 = int_to_ptr.vmem [resolvable:$true] %s309
          %315 = dma.hbm_to_vmem [thread:$0]  %s5, 32768, %s310, [#allocation8], 512, 512, 32
        $region32: #{generator_forward.1} parent=11 // pred_fallthru
          _
        // Predicated region
        $region33: #{generator_forward.1} parent=11 // pred_check
          %p316 = pneg %p172
        $region34: #{generator_forward.1} parent=11 // pred_check_branch
          %318 = sbr.rel (%p316) target = $region36
        $region35: #{generator_forward.1} parent=11 // pred_region
          %s320 = ssub.s32 128, 128
          %321 = vsyncadd [#allocation11], %s320
          %s323 = sshll.u32 [#allocation10], 4
          %s324 = int_to_ptr.vmem [resolvable:$true] %s323
          %326 = dma.hbm_to_vmem [thread:$0]  %s6, 128, %s324, [#allocation11]
        $region36: #{generator_forward.1} parent=11 // pred_fallthru
          _
        // Predicated region
        $region37: #{generator_forward.1} parent=11 // pred_check
          %p327 = pneg %p193
        $region38: #{generator_forward.1} parent=11 // pred_check_branch
          %329 = sbr.rel (%p327) target = $region40
        $region39: #{generator_forward.1} parent=11 // pred_region
          %s331 = ssub.s32 57344, 57344
          %332 = vsyncadd [#allocation11], %s331
          %s333 = sshll.u32 [#allocation12], 4
          %s334 = int_to_ptr.vmem [resolvable:$true] %s333
          %339 = dma.hbm_to_vmem [thread:$0]  %s7, 57344, %s334, [#allocation11], 448, 448, 28
        $region40: #{generator_forward.1} parent=11 // pred_fallthru
          _
        // Predicated region
        $region41: #{generator_forward.1} parent=11 // pred_check
          %p340 = pneg %p214
        $region42: #{generator_forward.1} parent=11 // pred_check_branch
          %342 = sbr.rel (%p340) target = $region44
        $region43: #{generator_forward.1} parent=11 // pred_region
          %s344 = ssub.s32 112, 112
          %345 = vsyncadd [#allocation14], %s344
          %s347 = sshll.u32 [#allocation13], 4
          %s348 = int_to_ptr.vmem [resolvable:$true] %s347
          %350 = dma.hbm_to_vmem [thread:$0]  %s8, 112, %s348, [#allocation14]
        $region44: #{generator_forward.1} parent=11 // pred_fallthru
          _
      $region12: #{generator_forward.1} parent=5 // pred_fallthru
        _
      %p351 = scmp.lt.s32.totalorder %s20, 2
      // Predicated region
      $region45: #{generator_forward.1} parent=5 // pred_check
        %p352 = pneg %p351
      $region46: #{generator_forward.1} parent=5 // pred_check_branch
        %354 = sbr.rel (%p352) target = $region48
      $region47: #{generator_forward.1} parent=5 // pred_region
        // Predicated region
        $region49: #{generator_forward.1} parent=47 // pred_check
          %p355 = pneg %p40
        $region50: #{generator_forward.1} parent=47 // pred_check_branch
          %357 = sbr.rel (%p355) target = $region52
        $region51: #{generator_forward.1} parent=47 // pred_region
          %s358 = smul.u32 16, %s20
          %p359 = scmp.lt.s32.totalorder %s358, 31
          %s360 = scalar_select %p359, %s358, 31
          %s361 = smul.addr %s360, 8
          %s362 = scalar_lea.vmem %s0, %s361
          %s363 = smul.u32 16, %s20
        $region52: #{generator_forward.1} parent=47 // pred_fallthru
          _
      $region48: #{generator_forward.1} parent=5 // pred_fallthru
        _
      %p364 = scmp.le.s32.totalorder 1, %s20
      %p365 = scmp.lt.s32.totalorder %s20, 3
      %p366 = pnand %p364, %p365
      %p367 = pneg %p366
      // Predicated region
      $region53: #{generator_forward.1} parent=5 // pred_check
        _
      $region54: #{generator_forward.1} parent=5 // pred_check_branch
        %369 = sbr.rel (%p366) target = $region56
      $region55: #{generator_forward.1} parent=5 // pred_region
        %s370 = ssub.s32 %s20, 1
        // Predicated region
        $region57: #{generator_forward.1} parent=55 // pred_check
          %p371 = pneg %p67
        $region58: #{generator_forward.1} parent=55 // pred_check_branch
          %373 = sbr.rel (%p371) target = $region60
        $region59: #{generator_forward.1} parent=55 // pred_region
          %374 = dma.done [#allocation3], 2048
        $region60: #{generator_forward.1} parent=55 // pred_fallthru
          _
        // Predicated region
        $region61: #{generator_forward.1} parent=55 // pred_check
          %p375 = pneg %p88
        $region62: #{generator_forward.1} parent=55 // pred_check_branch
          %377 = sbr.rel (%p375) target = $region64
        $region63: #{generator_forward.1} parent=55 // pred_region
          %378 = dma.done [#allocation5], 32
        $region64: #{generator_forward.1} parent=55 // pred_fallthru
          _
        // Predicated region
        $region65: #{generator_forward.1} parent=55 // pred_check
          %p379 = pneg %p109
        $region66: #{generator_forward.1} parent=55 // pred_check_branch
          %381 = sbr.rel (%p379) target = $region68
        $region67: #{generator_forward.1} parent=55 // pred_region
          %382 = dma.done [#allocation5], 8192
        $region68: #{generator_forward.1} parent=55 // pred_fallthru
          _
        // Predicated region
        $region69: #{generator_forward.1} parent=55 // pred_check
          %p383 = pneg %p130
        $region70: #{generator_forward.1} parent=55 // pred_check_branch
          %385 = sbr.rel (%p383) target = $region72
        $region71: #{generator_forward.1} parent=55 // pred_region
          %386 = dma.done [#allocation8], 64
        $region72: #{generator_forward.1} parent=55 // pred_fallthru
          _
        // Predicated region
        $region73: #{generator_forward.1} parent=55 // pred_check
          %p387 = pneg %p151
        $region74: #{generator_forward.1} parent=55 // pred_check_branch
          %389 = sbr.rel (%p387) target = $region76
        $region75: #{generator_forward.1} parent=55 // pred_region
          %390 = dma.done [#allocation8], 32768
        $region76: #{generator_forward.1} parent=55 // pred_fallthru
          _
        // Predicated region
        $region77: #{generator_forward.1} parent=55 // pred_check
          %p391 = pneg %p172
        $region78: #{generator_forward.1} parent=55 // pred_check_branch
          %393 = sbr.rel (%p391) target = $region80
        $region79: #{generator_forward.1} parent=55 // pred_region
          %394 = dma.done [#allocation11], 128
        $region80: #{generator_forward.1} parent=55 // pred_fallthru
          _
        // Predicated region
        $region81: #{generator_forward.1} parent=55 // pred_check
          %p395 = pneg %p193
        $region82: #{generator_forward.1} parent=55 // pred_check_branch
          %397 = sbr.rel (%p395) target = $region84
        $region83: #{generator_forward.1} parent=55 // pred_region
          %398 = dma.done [#allocation11], 57344
        $region84: #{generator_forward.1} parent=55 // pred_fallthru
          _
        // Predicated region
        $region85: #{generator_forward.1} parent=55 // pred_check
          %p399 = pneg %p214
        $region86: #{generator_forward.1} parent=55 // pred_check_branch
          %401 = sbr.rel (%p399) target = $region88
        $region87: #{generator_forward.1} parent=55 // pred_region
          %402 = dma.done [#allocation14], 112
        $region88: #{generator_forward.1} parent=55 // pred_fallthru
          _
        %s403 = smul.u32 16, %s25
        %p404 = scmp.lt.s32.totalorder %s403, 31
        %s405 = scalar_select %p404, %s403, 31
        %s406 = smul.addr %s405, 8
        %s407 = scalar_lea.vmem %s0, %s406
        %p408 = pneg %p46
        %p409 = pneg %p43
        %p410 = pneg %p67
        %p411 = pneg %p64
        %p412 = pneg %p88
        %p413 = pneg %p85
        %p414 = pneg %p109
        %p415 = pneg %p106
        %p416 = pneg %p130
        %p417 = pneg %p127
        %p418 = pneg %p151
        %p419 = pneg %p148
        %p420 = pneg %p172
        %p421 = pneg %p169
        %p422 = pneg %p193
        %p423 = pneg %p190
        %p424 = pneg %p214
        %p425 = pneg %p211
        %p426 = pneg %p240
        %p427 = pneg %p237
        %s428 = smul.u32 16, %s25
        %p429 = scmp.lt.s32.totalorder %s428, 31
        %s430 = scalar_select %p429, %s428, 31
        %s431 = smul.addr %s430, 7
        %s432 = smul.addr %s431, 8
        %s433 = scalar_lea.vmem %s9, %s432
        %s434 = smul.u32 16, %s25
        %p435 = scmp.lt.s32.totalorder %s434, 31
        %s436 = scalar_select %p435, %s434, 31
        %s437 = smul.addr %s436, 8
        %s438 = scalar_lea.vmem %s0, %s437
        %s439 = smul.u32 16, %s25
        %s440 = smul.u32 16, %s25
        %p441 = scmp.lt.s32.totalorder %s440, 31
        %s442 = scalar_select %p441, %s440, 31
        %s443 = smul.addr %s442, 7
        %s444 = smul.addr %s443, 8
        %s445 = scalar_lea.vmem %s9, %s444
        %s446 = smul.u32 16, %s25
        %v448 = vld [vmem:[%s438] sm:$0xff]
        %v449 = vld [vmem:[%s438 + $0x8] sm:$0xff]
        %v450 = vld [vmem:[%s438 + $0x10] sm:$0xff]
        %v451 = vld [vmem:[%s438 + $0x18] sm:$0xff]
        %v452 = vld [vmem:[%s438 + $0x20] sm:$0xff]
        %v453 = vld [vmem:[%s438 + $0x28] sm:$0xff]
        %v454 = vld [vmem:[%s438 + $0x30] sm:$0xff]
        %v455 = vld [vmem:[%s438 + $0x38] sm:$0xff]
        %v456 = vld [vmem:[%s438 + $0x40] sm:$0xff]
        %v457 = vld [vmem:[%s438 + $0x48] sm:$0xff]
        %v458 = vld [vmem:[%s438 + $0x50] sm:$0xff]
        %v459 = vld [vmem:[%s438 + $0x58] sm:$0xff]
        %v460 = vld [vmem:[%s438 + $0x60] sm:$0xff]
        %v461 = vld [vmem:[%s438 + $0x68] sm:$0xff]
        %v462 = vld [vmem:[%s438 + $0x70] sm:$0xff]
        %v463 = vld [vmem:[%s438 + $0x78] sm:$0xff]
        %v464 = vpack.c.bf16 %v449, %v448
        %v465 = vpack.c.bf16 %v451, %v450
        %v466 = vpack.c.bf16 %v453, %v452
        %v467 = vpack.c.bf16 %v455, %v454
        %v468 = vpack.c.bf16 %v457, %v456
        %v469 = vpack.c.bf16 %v459, %v458
        %v470 = vpack.c.bf16 %v461, %v460
        %v471 = vpack.c.bf16 %v463, %v462
        %v472 = vld [vmem:[#allocation2] sm:$0xff]
        %v473 = vld [vmem:[#allocation2 + $0x8] sm:$0xff]
        %v474 = vld [vmem:[#allocation2 + $0x10] sm:$0xff]
        %v475 = vld [vmem:[#allocation2 + $0x18] sm:$0xff]
        %v476 = vld [vmem:[#allocation2 + $0x20] sm:$0xff]
        %v477 = vld [vmem:[#allocation2 + $0x28] sm:$0xff]
        %v478 = vld [vmem:[#allocation2 + $0x30] sm:$0xff]
        %v479 = vld [vmem:[#allocation2 + $0x38] sm:$0xff]
        %v480 = vld [vmem:[#allocation2 + $0x40] sm:$0xff]
        %v481 = vld [vmem:[#allocation2 + $0x48] sm:$0xff]
        %v482 = vld [vmem:[#allocation2 + $0x50] sm:$0xff]
        %v483 = vld [vmem:[#allocation2 + $0x58] sm:$0xff]
        %v484 = vld [vmem:[#allocation2 + $0x60] sm:$0xff]
        %v485 = vld [vmem:[#allocation2 + $0x68] sm:$0xff]
        %v486 = vld [vmem:[#allocation2 + $0x70] sm:$0xff]
        %v487 = vld [vmem:[#allocation2 + $0x78] sm:$0xff]
        %v488 = vld [vmem:[#allocation4] sm:$0x3]
        %v490 = vlaneseq
        %v491 = vshrl.u32 %v490, 7
        %v492 = vsub.s32 0, %v491
        %v493 = vrot.slane %v488, %v492
        %v494 = vlaneseq
        %v495 = vshrl.u32 %v494, 7
        %v496 = vsub.s32 1, %v495
        %v497 = vrot.slane %v488, %v496
        %v516 = vunpack.c.l.b16 %v472
        %v517 = vunpack.c.h.b16 %v472
        %v518 = vunpack.c.l.b16 %v473
        %v519 = vunpack.c.h.b16 %v473
        %v520 = vunpack.c.l.b16 %v474
        %v521 = vunpack.c.h.b16 %v474
        %v522 = vunpack.c.l.b16 %v475
        %v523 = vunpack.c.h.b16 %v475
        %v524 = vunpack.c.l.b16 %v476
        %v525 = vunpack.c.h.b16 %v476
        %v526 = vunpack.c.l.b16 %v477
        %v527 = vunpack.c.h.b16 %v477
        %v528 = vunpack.c.l.b16 %v478
        %v529 = vunpack.c.h.b16 %v478
        %v530 = vunpack.c.l.b16 %v479
        %v531 = vunpack.c.h.b16 %v479
        %v532 = vunpack.c.l.b16 %v480
        %v533 = vunpack.c.h.b16 %v480
        %v534 = vunpack.c.l.b16 %v481
        %v535 = vunpack.c.h.b16 %v481
        %v536 = vunpack.c.l.b16 %v482
        %v537 = vunpack.c.h.b16 %v482
        %v538 = vunpack.c.l.b16 %v483
        %v539 = vunpack.c.h.b16 %v483
        %v540 = vunpack.c.l.b16 %v484
        %v541 = vunpack.c.h.b16 %v484
        %v542 = vunpack.c.l.b16 %v485
        %v543 = vunpack.c.h.b16 %v485
        %v544 = vunpack.c.l.b16 %v486
        %v545 = vunpack.c.h.b16 %v486
        %v546 = vunpack.c.l.b16 %v487
        %v547 = vunpack.c.h.b16 %v487
        %v548 = vpack.c.b16 %v518, %v516
        %v549 = vpack.c.b16 %v519, %v517
        %v550 = vpack.c.b16 %v522, %v520
        %v551 = vpack.c.b16 %v523, %v521
        %v552 = vpack.c.b16 %v526, %v524
        %v553 = vpack.c.b16 %v527, %v525
        %v554 = vpack.c.b16 %v530, %v528
        %v555 = vpack.c.b16 %v531, %v529
        %v556 = vpack.c.b16 %v534, %v532
        %v557 = vpack.c.b16 %v535, %v533
        %v558 = vpack.c.b16 %v538, %v536
        %v559 = vpack.c.b16 %v539, %v537
        %v560 = vpack.c.b16 %v542, %v540
        %v561 = vpack.c.b16 %v543, %v541
        %v562 = vpack.c.b16 %v546, %v544
        %v563 = vpack.c.b16 %v547, %v545
        %580 = vmatprep.subr.bf16.mxu0 %v549
        %581 = vmatpush1.bf16.msra.mxu0 %v548
        %582 = vmatprep.subr.bf16.mxu0 %v551
        %583 = vmatpush1.bf16.msra.mxu0 %v550
        %584 = vmatprep.subr.bf16.mxu0 %v553
        %585 = vmatpush1.bf16.msra.mxu0 %v552
        %586 = vmatprep.subr.bf16.mxu0 %v555
        %587 = vmatpush1.bf16.msra.mxu0 %v554
        %588 = vmatprep.subr.bf16.mxu0 %v557
        %589 = vmatpush1.bf16.msra.mxu0 %v556
        %590 = vmatprep.subr.bf16.mxu0 %v559
        %591 = vmatpush1.bf16.msra.mxu0 %v558
        %592 = vmatprep.subr.bf16.mxu0 %v561
        %593 = vmatpush1.bf16.msra.mxu0 %v560
        %594 = vmatprep.subr.bf16.mxu0 %v563
        %595 = vmatpush1.bf16.msra.mxu0 %v562
        %596 = vmatprep.subr.bf16.mxu0 0
        %597 = vmatpush1.bf16.msra.mxu0 0
        %598 = vmatprep.subr.bf16.mxu0 0
        %599 = vmatpush1.bf16.msra.mxu0 0
        %600 = vmatprep.subr.bf16.mxu0 0
        %601 = vmatpush1.bf16.msra.mxu0 0
        %602 = vmatprep.subr.bf16.mxu0 0
        %603 = vmatpush1.bf16.msra.mxu0 0
        %604 = vmatprep.subr.bf16.mxu0 0
        %605 = vmatpush1.bf16.msra.mxu0 0
        %606 = vmatprep.subr.bf16.mxu0 0
        %607 = vmatpush1.bf16.msra.mxu0 0
        %608 = vmatprep.subr.bf16.mxu0 0
        %609 = vmatpush1.bf16.msra.mxu0 0
        %610 = vmatprep.subr.bf16.mxu0 0
        %611 = vmatpush1.bf16.msra.mxu0 0
        %612 = vmatprep.mubr.bf16.mxu0 0
        %613 = vmatmul.mubr.bf16.gmra.mrb[0].mxu0 %v464
        %v614 = vpop.f32.mrb[0].mxu0
        %v615 = vadd.f32 %v493, %v614
        %v616 = vpop.f32.mrb[0].mxu0
        %v617 = vadd.f32 %v497, %v616
        %v618 = vpop.f32.mrb[0].mxu0
        %v619 = vadd.f32 %v493, %v618
        %v620 = vpop.f32.mrb[0].mxu0
        %v621 = vadd.f32 %v497, %v620
        %622 = vmatprep.mubr.bf16.mxu0 0
        %623 = vmatmul.mubr.bf16.gmra.mrb[0].mxu0 %v465
        %v624 = vpop.f32.mrb[0].mxu0
        %v625 = vadd.f32 %v493, %v624
        %v626 = vpop.f32.mrb[0].mxu0
        %v627 = vadd.f32 %v497, %v626
        %v628 = vpop.f32.mrb[0].mxu0
        %v629 = vadd.f32 %v493, %v628
        %v630 = vpop.f32.mrb[0].mxu0
        %v631 = vadd.f32 %v497, %v630
        %632 = vmatprep.mubr.bf16.mxu0 0
        %633 = vmatmul.mubr.bf16.gmra.mrb[0].mxu0 %v466
        %v634 = vpop.f32.mrb[0].mxu0
        %v635 = vadd.f32 %v493, %v634
        %v636 = vpop.f32.mrb[0].mxu0
        %v637 = vadd.f32 %v497, %v636
        %v638 = vpop.f32.mrb[0].mxu0
        %v639 = vadd.f32 %v493, %v638
        %v640 = vpop.f32.mrb[0].mxu0
        %v641 = vadd.f32 %v497, %v640
        %642 = vmatprep.mubr.bf16.mxu0 0
        %643 = vmatmul.mubr.bf16.gmra.mrb[0].mxu0 %v467
        %v644 = vpop.f32.mrb[0].mxu0
        %v645 = vadd.f32 %v493, %v644
        %v646 = vpop.f32.mrb[0].mxu0
        %v647 = vadd.f32 %v497, %v646
        %v648 = vpop.f32.mrb[0].mxu0
        %v649 = vadd.f32 %v493, %v648
        %v650 = vpop.f32.mrb[0].mxu0
        %v651 = vadd.f32 %v497, %v650
        %652 = vmatprep.mubr.bf16.mxu0 0
        %653 = vmatmul.mubr.bf16.gmra.mrb[0].mxu0 %v468
        %v654 = vpop.f32.mrb[0].mxu0
        %v655 = vadd.f32 %v493, %v654
        %v656 = vpop.f32.mrb[0].mxu0
        %v657 = vadd.f32 %v497, %v656
        %v658 = vpop.f32.mrb[0].mxu0
        %v659 = vadd.f32 %v493, %v658
        %v660 = vpop.f32.mrb[0].mxu0
        %v661 = vadd.f32 %v497, %v660
        %662 = vmatprep.mubr.bf16.mxu0 0
        %663 = vmatmul.mubr.bf16.gmra.mrb[0].mxu0 %v469
        %v664 = vpop.f32.mrb[0].mxu0
        %v665 = vadd.f32 %v493, %v664
        %v666 = vpop.f32.mrb[0].mxu0
        %v667 = vadd.f32 %v497, %v666
        %v668 = vpop.f32.mrb[0].mxu0
        %v669 = vadd.f32 %v493, %v668
        %v670 = vpop.f32.mrb[0].mxu0
        %v671 = vadd.f32 %v497, %v670
        %672 = vmatprep.mubr.bf16.mxu0 0
        %673 = vmatmul.mubr.bf16.gmra.mrb[0].mxu0 %v470
        %v674 = vpop.f32.mrb[0].mxu0
        %v675 = vadd.f32 %v493, %v674
        %v676 = vpop.f32.mrb[0].mxu0
        %v677 = vadd.f32 %v497, %v676
        %v678 = vpop.f32.mrb[0].mxu0
        %v679 = vadd.f32 %v493, %v678
        %v680 = vpop.f32.mrb[0].mxu0
        %v681 = vadd.f32 %v497, %v680
        %682 = vmatprep.mubr.bf16.mxu0 0
        %683 = vmatmul.mubr.bf16.gmra.mrb[0].mxu0 %v471
        %v684 = vpop.f32.mrb[0].mxu0
        %v685 = vadd.f32 %v493, %v684
        %v686 = vpop.f32.mrb[0].mxu0
        %v687 = vadd.f32 %v497, %v686
        %v688 = vpop.f32.mrb[0].mxu0
        %v689 = vadd.f32 %v493, %v688
        %v690 = vpop.f32.mrb[0].mxu0
        %v691 = vadd.f32 %v497, %v690
        %692 = vdwg.mxu0
        %v693 = vmax.f32 %v615, 0.0
        %v694 = vmax.f32 %v617, 0.0
        %v695 = vmax.f32 %v619, 0.0
        %v696 = vmax.f32 %v621, 0.0
        %v697 = vmax.f32 %v625, 0.0
        %v698 = vmax.f32 %v627, 0.0
        %v699 = vmax.f32 %v629, 0.0
        %v700 = vmax.f32 %v631, 0.0
        %v701 = vmax.f32 %v635, 0.0
        %v702 = vmax.f32 %v637, 0.0
        %v703 = vmax.f32 %v639, 0.0
        %v704 = vmax.f32 %v641, 0.0
        %v705 = vmax.f32 %v645, 0.0
        %v706 = vmax.f32 %v647, 0.0
        %v707 = vmax.f32 %v649, 0.0
        %v708 = vmax.f32 %v651, 0.0
        %v709 = vmax.f32 %v655, 0.0
        %v710 = vmax.f32 %v657, 0.0
        %v711 = vmax.f32 %v659, 0.0
        %v712 = vmax.f32 %v661, 0.0
        %v713 = vmax.f32 %v665, 0.0
        %v714 = vmax.f32 %v667, 0.0
        %v715 = vmax.f32 %v669, 0.0
        %v716 = vmax.f32 %v671, 0.0
        %v717 = vmax.f32 %v675, 0.0
        %v718 = vmax.f32 %v677, 0.0
        %v719 = vmax.f32 %v679, 0.0
        %v720 = vmax.f32 %v681, 0.0
        %v721 = vmax.f32 %v685, 0.0
        %v722 = vmax.f32 %v687, 0.0
        %v723 = vmax.f32 %v689, 0.0
        %v724 = vmax.f32 %v691, 0.0
        %v725 = vpack.c.bf16 %v695, %v693
        %v726 = vpack.c.bf16 %v696, %v694
        %v727 = vpack.c.bf16 %v699, %v697
        %v728 = vpack.c.bf16 %v700, %v698
        %v729 = vpack.c.bf16 %v703, %v701
        %v730 = vpack.c.bf16 %v704, %v702
        %v731 = vpack.c.bf16 %v707, %v705
        %v732 = vpack.c.bf16 %v708, %v706
        %v733 = vpack.c.bf16 %v711, %v709
        %v734 = vpack.c.bf16 %v712, %v710
        %v735 = vpack.c.bf16 %v715, %v713
        %v736 = vpack.c.bf16 %v716, %v714
        %v737 = vpack.c.bf16 %v719, %v717
        %v738 = vpack.c.bf16 %v720, %v718
        %v739 = vpack.c.bf16 %v723, %v721
        %v740 = vpack.c.bf16 %v724, %v722
        %v741 = vld [vmem:[#allocation6] sm:$0xff]
        %v742 = vld [vmem:[#allocation6 + $0x8] sm:$0xff]
        %v743 = vld [vmem:[#allocation6 + $0x10] sm:$0xff]
        %v744 = vld [vmem:[#allocation6 + $0x18] sm:$0xff]
        %v745 = vld [vmem:[#allocation6 + $0x20] sm:$0xff]
        %v746 = vld [vmem:[#allocation6 + $0x28] sm:$0xff]
        %v747 = vld [vmem:[#allocation6 + $0x30] sm:$0xff]
        %v748 = vld [vmem:[#allocation6 + $0x38] sm:$0xff]
        %v749 = vld [vmem:[#allocation6 + $0x40] sm:$0xff]
        %v750 = vld [vmem:[#allocation6 + $0x48] sm:$0xff]
        %v751 = vld [vmem:[#allocation6 + $0x50] sm:$0xff]
        %v752 = vld [vmem:[#allocation6 + $0x58] sm:$0xff]
        %v753 = vld [vmem:[#allocation6 + $0x60] sm:$0xff]
        %v754 = vld [vmem:[#allocation6 + $0x68] sm:$0xff]
        %v755 = vld [vmem:[#allocation6 + $0x70] sm:$0xff]
        %v756 = vld [vmem:[#allocation6 + $0x78] sm:$0xff]
        %v757 = vld [vmem:[#allocation6 + $0x80] sm:$0xff]
        %v758 = vld [vmem:[#allocation6 + $0x88] sm:$0xff]
        %v759 = vld [vmem:[#allocation6 + $0x90] sm:$0xff]
        %v760 = vld [vmem:[#allocation6 + $0x98] sm:$0xff]
        %v761 = vld [vmem:[#allocation6 + $0xa0] sm:$0xff]
        %v762 = vld [vmem:[#allocation6 + $0xa8] sm:$0xff]
        %v763 = vld [vmem:[#allocation6 + $0xb0] sm:$0xff]
        %v764 = vld [vmem:[#allocation6 + $0xb8] sm:$0xff]
        %v765 = vld [vmem:[#allocation6 + $0xc0] sm:$0xff]
        %v766 = vld [vmem:[#allocation6 + $0xc8] sm:$0xff]
        %v767 = vld [vmem:[#allocation6 + $0xd0] sm:$0xff]
        %v768 = vld [vmem:[#allocation6 + $0xd8] sm:$0xff]
        %v769 = vld [vmem:[#allocation6 + $0xe0] sm:$0xff]
        %v770 = vld [vmem:[#allocation6 + $0xe8] sm:$0xff]
        %v771 = vld [vmem:[#allocation6 + $0xf0] sm:$0xff]
        %v772 = vld [vmem:[#allocation6 + $0xf8] sm:$0xff]
        %v773 = vld [vmem:[#allocation6 + $0x100] sm:$0xff]
        %v774 = vld [vmem:[#allocation6 + $0x108] sm:$0xff]
        %v775 = vld [vmem:[#allocation6 + $0x110] sm:$0xff]
        %v776 = vld [vmem:[#allocation6 + $0x118] sm:$0xff]
        %v777 = vld [vmem:[#allocation6 + $0x120] sm:$0xff]
        %v778 = vld [vmem:[#allocation6 + $0x128] sm:$0xff]
        %v779 = vld [vmem:[#allocation6 + $0x130] sm:$0xff]
        %v780 = vld [vmem:[#allocation6 + $0x138] sm:$0xff]
        %v781 = vld [vmem:[#allocation6 + $0x140] sm:$0xff]
        %v782 = vld [vmem:[#allocation6 + $0x148] sm:$0xff]
        %v783 = vld [vmem:[#allocation6 + $0x150] sm:$0xff]
        %v784 = vld [vmem:[#allocation6 + $0x158] sm:$0xff]
        %v785 = vld [vmem:[#allocation6 + $0x160] sm:$0xff]
        %v786 = vld [vmem:[#allocation6 + $0x168] sm:$0xff]
        %v787 = vld [vmem:[#allocation6 + $0x170] sm:$0xff]
        %v788 = vld [vmem:[#allocation6 + $0x178] sm:$0xff]
        %v789 = vld [vmem:[#allocation6 + $0x180] sm:$0xff]
        %v790 = vld [vmem:[#allocation6 + $0x188] sm:$0xff]
        %v791 = vld [vmem:[#allocation6 + $0x190] sm:$0xff]
        %v792 = vld [vmem:[#allocation6 + $0x198] sm:$0xff]
        %v793 = vld [vmem:[#allocation6 + $0x1a0] sm:$0xff]
        %v794 = vld [vmem:[#allocation6 + $0x1a8] sm:$0xff]
        %v795 = vld [vmem:[#allocation6 + $0x1b0] sm:$0xff]
        %v796 = vld [vmem:[#allocation6 + $0x1b8] sm:$0xff]
        %v797 = vld [vmem:[#allocation6 + $0x1c0] sm:$0xff]
        %v798 = vld [vmem:[#allocation6 + $0x1c8] sm:$0xff]
        %v799 = vld [vmem:[#allocation6 + $0x1d0] sm:$0xff]
        %v800 = vld [vmem:[#allocation6 + $0x1d8] sm:$0xff]
        %v801 = vld [vmem:[#allocation6 + $0x1e0] sm:$0xff]
        %v802 = vld [vmem:[#allocation6 + $0x1e8] sm:$0xff]
        %v803 = vld [vmem:[#allocation6 + $0x1f0] sm:$0xff]
        %v804 = vld [vmem:[#allocation6 + $0x1f8] sm:$0xff]
        %v805 = vld [vmem:[#allocation7] sm:$0xf]
        %v807 = vlaneseq
        %v808 = vshrl.u32 %v807, 7
        %v809 = vsub.s32 0, %v808
        %v810 = vrot.slane %v805, %v809
        %v811 = vlaneseq
        %v812 = vshrl.u32 %v811, 7
        %v813 = vsub.s32 1, %v812
        %v814 = vrot.slane %v805, %v813
        %v815 = vlaneseq
        %v816 = vshrl.u32 %v815, 7
        %v817 = vsub.s32 2, %v816
        %v818 = vrot.slane %v805, %v817
        %v819 = vlaneseq
        %v820 = vshrl.u32 %v819, 7
        %v821 = vsub.s32 3, %v820
        %v822 = vrot.slane %v805, %v821
        %v891 = vunpack.c.l.b16 %v741
        %v892 = vunpack.c.h.b16 %v741
        %v893 = vunpack.c.l.b16 %v742
        %v894 = vunpack.c.h.b16 %v742
        %v895 = vunpack.c.l.b16 %v743
        %v896 = vunpack.c.h.b16 %v743
        %v897 = vunpack.c.l.b16 %v744
        %v898 = vunpack.c.h.b16 %v744
        %v899 = vunpack.c.l.b16 %v745
        %v900 = vunpack.c.h.b16 %v745
        %v901 = vunpack.c.l.b16 %v746
        %v902 = vunpack.c.h.b16 %v746
        %v903 = vunpack.c.l.b16 %v747
        %v904 = vunpack.c.h.b16 %v747
        %v905 = vunpack.c.l.b16 %v748
        %v906 = vunpack.c.h.b16 %v748
        %v907 = vunpack.c.l.b16 %v749
        %v908 = vunpack.c.h.b16 %v749
        %v909 = vunpack.c.l.b16 %v750
        %v910 = vunpack.c.h.b16 %v750
        %v911 = vunpack.c.l.b16 %v751
        %v912 = vunpack.c.h.b16 %v751
        %v913 = vunpack.c.l.b16 %v752
        %v914 = vunpack.c.h.b16 %v752
        %v915 = vunpack.c.l.b16 %v753
        %v916 = vunpack.c.h.b16 %v753
        %v917 = vunpack.c.l.b16 %v754
        %v918 = vunpack.c.h.b16 %v754
        %v919 = vunpack.c.l.b16 %v755
        %v920 = vunpack.c.h.b16 %v755
        %v921 = vunpack.c.l.b16 %v756
        %v922 = vunpack.c.h.b16 %v756
        %v923 = vunpack.c.l.b16 %v757
        %v924 = vunpack.c.h.b16 %v757
        %v925 = vunpack.c.l.b16 %v758
        %v926 = vunpack.c.h.b16 %v758
        %v927 = vunpack.c.l.b16 %v759
        %v928 = vunpack.c.h.b16 %v759
        %v929 = vunpack.c.l.b16 %v760
        %v930 = vunpack.c.h.b16 %v760
        %v931 = vunpack.c.l.b16 %v761
        %v932 = vunpack.c.h.b16 %v761
        %v933 = vunpack.c.l.b16 %v762
        %v934 = vunpack.c.h.b16 %v762
        %v935 = vunpack.c.l.b16 %v763
        %v936 = vunpack.c.h.b16 %v763
        %v937 = vunpack.c.l.b16 %v764
        %v938 = vunpack.c.h.b16 %v764
        %v939 = vunpack.c.l.b16 %v765
        %v940 = vunpack.c.h.b16 %v765
        %v941 = vunpack.c.l.b16 %v766
        %v942 = vunpack.c.h.b16 %v766
        %v943 = vunpack.c.l.b16 %v767
        %v944 = vunpack.c.h.b16 %v767
        %v945 = vunpack.c.l.b16 %v768
        %v946 = vunpack.c.h.b16 %v768
        %v947 = vunpack.c.l.b16 %v769
        %v948 = vunpack.c.h.b16 %v769
        %v949 = vunpack.c.l.b16 %v770
        %v950 = vunpack.c.h.b16 %v770
        %v951 = vunpack.c.l.b16 %v771
        %v952 = vunpack.c.h.b16 %v771
        %v953 = vunpack.c.l.b16 %v772
        %v954 = vunpack.c.h.b16 %v772
        %v955 = vunpack.c.l.b16 %v773
        %v956 = vunpack.c.h.b16 %v773
        %v957 = vunpack.c.l.b16 %v774
        %v958 = vunpack.c.h.b16 %v774
        %v959 = vunpack.c.l.b16 %v775
        %v960 = vunpack.c.h.b16 %v775
        %v961 = vunpack.c.l.b16 %v776
        %v962 = vunpack.c.h.b16 %v776
        %v963 = vunpack.c.l.b16 %v777
        %v964 = vunpack.c.h.b16 %v777
        %v965 = vunpack.c.l.b16 %v778
        %v966 = vunpack.c.h.b16 %v778
        %v967 = vunpack.c.l.b16 %v779
        %v968 = vunpack.c.h.b16 %v779
        %v969 = vunpack.c.l.b16 %v780
        %v970 = vunpack.c.h.b16 %v780
        %v971 = vunpack.c.l.b16 %v781
        %v972 = vunpack.c.h.b16 %v781
        %v973 = vunpack.c.l.b16 %v782
        %v974 = vunpack.c.h.b16 %v782
        %v975 = vunpack.c.l.b16 %v783
        %v976 = vunpack.c.h.b16 %v783
        %v977 = vunpack.c.l.b16 %v784
        %v978 = vunpack.c.h.b16 %v784
        %v979 = vunpack.c.l.b16 %v785
        %v980 = vunpack.c.h.b16 %v785
        %v981 = vunpack.c.l.b16 %v786
        %v982 = vunpack.c.h.b16 %v786
        %v983 = vunpack.c.l.b16 %v787
        %v984 = vunpack.c.h.b16 %v787
        %v985 = vunpack.c.l.b16 %v788
        %v986 = vunpack.c.h.b16 %v788
        %v987 = vunpack.c.l.b16 %v789
        %v988 = vunpack.c.h.b16 %v789
        %v989 = vunpack.c.l.b16 %v790
        %v990 = vunpack.c.h.b16 %v790
        %v991 = vunpack.c.l.b16 %v791
        %v992 = vunpack.c.h.b16 %v791
        %v993 = vunpack.c.l.b16 %v792
        %v994 = vunpack.c.h.b16 %v792
        %v995 = vunpack.c.l.b16 %v793
        %v996 = vunpack.c.h.b16 %v793
        %v997 = vunpack.c.l.b16 %v794
        %v998 = vunpack.c.h.b16 %v794
        %v999 = vunpack.c.l.b16 %v795
        %v1000 = vunpack.c.h.b16 %v795
        %v1001 = vunpack.c.l.b16 %v796
        %v1002 = vunpack.c.h.b16 %v796
        %v1003 = vunpack.c.l.b16 %v797
        %v1004 = vunpack.c.h.b16 %v797
        %v1005 = vunpack.c.l.b16 %v798
        %v1006 = vunpack.c.h.b16 %v798
        %v1007 = vunpack.c.l.b16 %v799
        %v1008 = vunpack.c.h.b16 %v799
        %v1009 = vunpack.c.l.b16 %v800
        %v1010 = vunpack.c.h.b16 %v800
        %v1011 = vunpack.c.l.b16 %v801
        %v1012 = vunpack.c.h.b16 %v801
        %v1013 = vunpack.c.l.b16 %v802
        %v1014 = vunpack.c.h.b16 %v802
        %v1015 = vunpack.c.l.b16 %v803
        %v1016 = vunpack.c.h.b16 %v803
        %v1017 = vunpack.c.l.b16 %v804
        %v1018 = vunpack.c.h.b16 %v804
        %v1019 = vpack.c.b16 %v895, %v891
        %v1020 = vpack.c.b16 %v896, %v892
        %v1021 = vpack.c.b16 %v897, %v893
        %v1022 = vpack.c.b16 %v898, %v894
        %v1023 = vpack.c.b16 %v903, %v899
        %v1024 = vpack.c.b16 %v904, %v900
        %v1025 = vpack.c.b16 %v905, %v901
        %v1026 = vpack.c.b16 %v906, %v902
        %v1027 = vpack.c.b16 %v911, %v907
        %v1028 = vpack.c.b16 %v912, %v908
        %v1029 = vpack.c.b16 %v913, %v909
        %v1030 = vpack.c.b16 %v914, %v910
        %v1031 = vpack.c.b16 %v919, %v915
        %v1032 = vpack.c.b16 %v920, %v916
        %v1033 = vpack.c.b16 %v921, %v917
        %v1034 = vpack.c.b16 %v922, %v918
        %v1035 = vpack.c.b16 %v927, %v923
        %v1036 = vpack.c.b16 %v928, %v924
        %v1037 = vpack.c.b16 %v929, %v925
        %v1038 = vpack.c.b16 %v930, %v926
        %v1039 = vpack.c.b16 %v935, %v931
        %v1040 = vpack.c.b16 %v936, %v932
        %v1041 = vpack.c.b16 %v937, %v933
        %v1042 = vpack.c.b16 %v938, %v934
        %v1043 = vpack.c.b16 %v943, %v939
        %v1044 = vpack.c.b16 %v944, %v940
        %v1045 = vpack.c.b16 %v945, %v941
        %v1046 = vpack.c.b16 %v946, %v942
        %v1047 = vpack.c.b16 %v951, %v947
        %v1048 = vpack.c.b16 %v952, %v948
        %v1049 = vpack.c.b16 %v953, %v949
        %v1050 = vpack.c.b16 %v954, %v950
        %v1051 = vpack.c.b16 %v959, %v955
        %v1052 = vpack.c.b16 %v960, %v956
        %v1053 = vpack.c.b16 %v961, %v957
        %v1054 = vpack.c.b16 %v962, %v958
        %v1055 = vpack.c.b16 %v967, %v963
        %v1056 = vpack.c.b16 %v968, %v964
        %v1057 = vpack.c.b16 %v969, %v965
        %v1058 = vpack.c.b16 %v970, %v966
        %v1059 = vpack.c.b16 %v975, %v971
        %v1060 = vpack.c.b16 %v976, %v972
        %v1061 = vpack.c.b16 %v977, %v973
        %v1062 = vpack.c.b16 %v978, %v974
        %v1063 = vpack.c.b16 %v983, %v979
        %v1064 = vpack.c.b16 %v984, %v980
        %v1065 = vpack.c.b16 %v985, %v981
        %v1066 = vpack.c.b16 %v986, %v982
        %v1067 = vpack.c.b16 %v991, %v987
        %v1068 = vpack.c.b16 %v992, %v988
        %v1069 = vpack.c.b16 %v993, %v989
        %v1070 = vpack.c.b16 %v994, %v990
        %v1071 = vpack.c.b16 %v999, %v995
        %v1072 = vpack.c.b16 %v1000, %v996
        %v1073 = vpack.c.b16 %v1001, %v997
        %v1074 = vpack.c.b16 %v1002, %v998
        %v1075 = vpack.c.b16 %v1007, %v1003
        %v1076 = vpack.c.b16 %v1008, %v1004
        %v1077 = vpack.c.b16 %v1009, %v1005
        %v1078 = vpack.c.b16 %v1010, %v1006
        %v1079 = vpack.c.b16 %v1015, %v1011
        %v1080 = vpack.c.b16 %v1016, %v1012
        %v1081 = vpack.c.b16 %v1017, %v1013
        %v1082 = vpack.c.b16 %v1018, %v1014
        %1147 = vmatprep.subr.bf16.mxu0 %v1020
        %1148 = vmatpush1.bf16.msra.mxu0 %v1019
        %1149 = vmatprep.subr.bf16.mxu0 %v1024
        %1150 = vmatpush1.bf16.msra.mxu0 %v1023
        %1151 = vmatprep.subr.bf16.mxu0 %v1028
        %1152 = vmatpush1.bf16.msra.mxu0 %v1027
        %1153 = vmatprep.subr.bf16.mxu0 %v1032
        %1154 = vmatpush1.bf16.msra.mxu0 %v1031
        %1155 = vmatprep.subr.bf16.mxu0 %v1036
        %1156 = vmatpush1.bf16.msra.mxu0 %v1035
        %1157 = vmatprep.subr.bf16.mxu0 %v1040
        %1158 = vmatpush1.bf16.msra.mxu0 %v1039
        %1159 = vmatprep.subr.bf16.mxu0 %v1044
        %1160 = vmatpush1.bf16.msra.mxu0 %v1043
        %1161 = vmatprep.subr.bf16.mxu0 %v1048
        %1162 = vmatpush1.bf16.msra.mxu0 %v1047
        %1163 = vmatprep.subr.bf16.mxu0 %v1052
        %1164 = vmatpush1.bf16.msra.mxu0 %v1051
        %1165 = vmatprep.subr.bf16.mxu0 %v1056
        %1166 = vmatpush1.bf16.msra.mxu0 %v1055
        %1167 = vmatprep.subr.bf16.mxu0 %v1060
        %1168 = vmatpush1.bf16.msra.mxu0 %v1059
        %1169 = vmatprep.subr.bf16.mxu0 %v1064
        %1170 = vmatpush1.bf16.msra.mxu0 %v1063
        %1171 = vmatprep.subr.bf16.mxu0 %v1068
        %1172 = vmatpush1.bf16.msra.mxu0 %v1067
        %1173 = vmatprep.subr.bf16.mxu0 %v1072
        %1174 = vmatpush1.bf16.msra.mxu0 %v1071
        %1175 = vmatprep.subr.bf16.mxu0 %v1076
        %1176 = vmatpush1.bf16.msra.mxu0 %v1075
        %1177 = vmatprep.subr.bf16.mxu0 %v1080
        %1178 = vmatpush1.bf16.msra.mxu0 %v1079
        %1179 = vmatprep.mubr.bf16.mxu0 %v726
        %1180 = vmatmul.mubr.bf16.gmra.mrb[0].mxu0 %v725
        %v1181 = vpop.f32.mrb[0].mxu0
        %v1182 = vadd.f32 %v810, %v1181
        %v1183 = vpop.f32.mrb[0].mxu0
        %v1184 = vadd.f32 %v814, %v1183
        %v1185 = vpop.f32.mrb[0].mxu0
        %v1186 = vadd.f32 %v810, %v1185
        %v1187 = vpop.f32.mrb[0].mxu0
        %v1188 = vadd.f32 %v814, %v1187
        %1189 = vmatprep.mubr.bf16.mxu0 %v728
        %1190 = vmatmul.mubr.bf16.gmra.mrb[0].mxu0 %v727
        %v1191 = vpop.f32.mrb[0].mxu0
        %v1192 = vadd.f32 %v810, %v1191
        %v1193 = vpop.f32.mrb[0].mxu0
        %v1194 = vadd.f32 %v814, %v1193
        %v1195 = vpop.f32.mrb[0].mxu0
        %v1196 = vadd.f32 %v810, %v1195
        %v1197 = vpop.f32.mrb[0].mxu0
        %v1198 = vadd.f32 %v814, %v1197
        %1199 = vmatprep.mubr.bf16.mxu0 %v730
        %1200 = vmatmul.mubr.bf16.gmra.mrb[0].mxu0 %v729
        %v1201 = vpop.f32.mrb[0].mxu0
        %v1202 = vadd.f32 %v810, %v1201
        %v1203 = vpop.f32.mrb[0].mxu0
        %v1204 = vadd.f32 %v814, %v1203
        %v1205 = vpop.f32.mrb[0].mxu0
        %v1206 = vadd.f32 %v810, %v1205
        %v1207 = vpop.f32.mrb[0].mxu0
        %v1208 = vadd.f32 %v814, %v1207
        %1209 = vmatprep.mubr.bf16.mxu0 %v732
        %1210 = vmatmul.mubr.bf16.gmra.mrb[0].mxu0 %v731
        %v1211 = vpop.f32.mrb[0].mxu0
        %v1212 = vadd.f32 %v810, %v1211
        %v1213 = vpop.f32.mrb[0].mxu0
        %v1214 = vadd.f32 %v814, %v1213
        %v1215 = vpop.f32.mrb[0].mxu0
        %v1216 = vadd.f32 %v810, %v1215
        %v1217 = vpop.f32.mrb[0].mxu0
        %v1218 = vadd.f32 %v814, %v1217
        %1219 = vmatprep.mubr.bf16.mxu0 %v734
        %1220 = vmatmul.mubr.bf16.gmra.mrb[0].mxu0 %v733
        %v1221 = vpop.f32.mrb[0].mxu0
        %v1222 = vadd.f32 %v810, %v1221
        %v1223 = vpop.f32.mrb[0].mxu0
        %v1224 = vadd.f32 %v814, %v1223
        %v1225 = vpop.f32.mrb[0].mxu0
        %v1226 = vadd.f32 %v810, %v1225
        %v1227 = vpop.f32.mrb[0].mxu0
        %v1228 = vadd.f32 %v814, %v1227
        %1229 = vmatprep.mubr.bf16.mxu0 %v736
        %1230 = vmatmul.mubr.bf16.gmra.mrb[0].mxu0 %v735
        %v1231 = vpop.f32.mrb[0].mxu0
        %v1232 = vadd.f32 %v810, %v1231
        %v1233 = vpop.f32.mrb[0].mxu0
        %v1234 = vadd.f32 %v814, %v1233
        %v1235 = vpop.f32.mrb[0].mxu0
        %v1236 = vadd.f32 %v810, %v1235
        %v1237 = vpop.f32.mrb[0].mxu0
        %v1238 = vadd.f32 %v814, %v1237
        %1239 = vmatprep.mubr.bf16.mxu0 %v738
        %1240 = vmatmul.mubr.bf16.gmra.mrb[0].mxu0 %v737
        %v1241 = vpop.f32.mrb[0].mxu0
        %v1242 = vadd.f32 %v810, %v1241
        %v1243 = vpop.f32.mrb[0].mxu0
        %v1244 = vadd.f32 %v814, %v1243
        %v1245 = vpop.f32.mrb[0].mxu0
        %v1246 = vadd.f32 %v810, %v1245
        %v1247 = vpop.f32.mrb[0].mxu0
        %v1248 = vadd.f32 %v814, %v1247
        %1249 = vmatprep.mubr.bf16.mxu0 %v740
        %1250 = vmatmul.mubr.bf16.gmra.mrb[0].mxu0 %v739
        %v1251 = vpop.f32.mrb[0].mxu0
        %v1252 = vadd.f32 %v810, %v1251
        %v1253 = vpop.f32.mrb[0].mxu0
        %v1254 = vadd.f32 %v814, %v1253
        %v1255 = vpop.f32.mrb[0].mxu0
        %v1256 = vadd.f32 %v810, %v1255
        %v1257 = vpop.f32.mrb[0].mxu0
        %v1258 = vadd.f32 %v814, %v1257
        %1259 = vdwg.mxu0
        %1260 = vmatprep.subr.bf16.mxu0 %v1022
        %1261 = vmatpush1.bf16.msra.mxu0 %v1021
        %1262 = vmatprep.subr.bf16.mxu0 %v1026
        %1263 = vmatpush1.bf16.msra.mxu0 %v1025
        %1264 = vmatprep.subr.bf16.mxu0 %v1030
        %1265 = vmatpush1.bf16.msra.mxu0 %v1029
        %1266 = vmatprep.subr.bf16.mxu0 %v1034
        %1267 = vmatpush1.bf16.msra.mxu0 %v1033
        %1268 = vmatprep.subr.bf16.mxu0 %v1038
        %1269 = vmatpush1.bf16.msra.mxu0 %v1037
        %1270 = vmatprep.subr.bf16.mxu0 %v1042
        %1271 = vmatpush1.bf16.msra.mxu0 %v1041
        %1272 = vmatprep.subr.bf16.mxu0 %v1046
        %1273 = vmatpush1.bf16.msra.mxu0 %v1045
        %1274 = vmatprep.subr.bf16.mxu0 %v1050
        %1275 = vmatpush1.bf16.msra.mxu0 %v1049
        %1276 = vmatprep.subr.bf16.mxu0 %v1054
        %1277 = vmatpush1.bf16.msra.mxu0 %v1053
        %1278 = vmatprep.subr.bf16.mxu0 %v1058
        %1279 = vmatpush1.bf16.msra.mxu0 %v1057
        %1280 = vmatprep.subr.bf16.mxu0 %v1062
        %1281 = vmatpush1.bf16.msra.mxu0 %v1061
        %1282 = vmatprep.subr.bf16.mxu0 %v1066
        %1283 = vmatpush1.bf16.msra.mxu0 %v1065
        %1284 = vmatprep.subr.bf16.mxu0 %v1070
        %1285 = vmatpush1.bf16.msra.mxu0 %v1069
        %1286 = vmatprep.subr.bf16.mxu0 %v1074
        %1287 = vmatpush1.bf16.msra.mxu0 %v1073
        %1288 = vmatprep.subr.bf16.mxu0 %v1078
        %1289 = vmatpush1.bf16.msra.mxu0 %v1077
        %1290 = vmatprep.subr.bf16.mxu0 %v1082
        %1291 = vmatpush1.bf16.msra.mxu0 %v1081
        %1292 = vmatprep.mubr.bf16.mxu0 %v726
        %1293 = vmatmul.mubr.bf16.gmra.mrb[0].mxu0 %v725
        %v1294 = vpop.f32.mrb[0].mxu0
        %v1295 = vadd.f32 %v818, %v1294
        %v1296 = vpop.f32.mrb[0].mxu0
        %v1297 = vadd.f32 %v822, %v1296
        %v1298 = vpop.f32.mrb[0].mxu0
        %v1299 = vadd.f32 %v818, %v1298
        %v1300 = vpop.f32.mrb[0].mxu0
        %v1301 = vadd.f32 %v822, %v1300
        %1302 = vmatprep.mubr.bf16.mxu0 %v728
        %1303 = vmatmul.mubr.bf16.gmra.mrb[0].mxu0 %v727
        %v1304 = vpop.f32.mrb[0].mxu0
        %v1305 = vadd.f32 %v818, %v1304
        %v1306 = vpop.f32.mrb[0].mxu0
        %v1307 = vadd.f32 %v822, %v1306
        %v1308 = vpop.f32.mrb[0].mxu0
        %v1309 = vadd.f32 %v818, %v1308
        %v1310 = vpop.f32.mrb[0].mxu0
        %v1311 = vadd.f32 %v822, %v1310
        %1312 = vmatprep.mubr.bf16.mxu0 %v730
        %1313 = vmatmul.mubr.bf16.gmra.mrb[0].mxu0 %v729
        %v1314 = vpop.f32.mrb[0].mxu0
        %v1315 = vadd.f32 %v818, %v1314
        %v1316 = vpop.f32.mrb[0].mxu0
        %v1317 = vadd.f32 %v822, %v1316
        %v1318 = vpop.f32.mrb[0].mxu0
        %v1319 = vadd.f32 %v818, %v1318
        %v1320 = vpop.f32.mrb[0].mxu0
        %v1321 = vadd.f32 %v822, %v1320
        %1322 = vmatprep.mubr.bf16.mxu0 %v732
        %1323 = vmatmul.mubr.bf16.gmra.mrb[0].mxu0 %v731
        %v1324 = vpop.f32.mrb[0].mxu0
        %v1325 = vadd.f32 %v818, %v1324
        %v1326 = vpop.f32.mrb[0].mxu0
        %v1327 = vadd.f32 %v822, %v1326
        %v1328 = vpop.f32.mrb[0].mxu0
        %v1329 = vadd.f32 %v818, %v1328
        %v1330 = vpop.f32.mrb[0].mxu0
        %v1331 = vadd.f32 %v822, %v1330
        %1332 = vmatprep.mubr.bf16.mxu0 %v734
        %1333 = vmatmul.mubr.bf16.gmra.mrb[0].mxu0 %v733
        %v1334 = vpop.f32.mrb[0].mxu0
        %v1335 = vadd.f32 %v818, %v1334
        %v1336 = vpop.f32.mrb[0].mxu0
        %v1337 = vadd.f32 %v822, %v1336
        %v1338 = vpop.f32.mrb[0].mxu0
        %v1339 = vadd.f32 %v818, %v1338
        %v1340 = vpop.f32.mrb[0].mxu0
        %v1341 = vadd.f32 %v822, %v1340
        %1342 = vmatprep.mubr.bf16.mxu0 %v736
        %1343 = vmatmul.mubr.bf16.gmra.mrb[0].mxu0 %v735
        %v1344 = vpop.f32.mrb[0].mxu0
        %v1345 = vadd.f32 %v818, %v1344
        %v1346 = vpop.f32.mrb[0].mxu0
        %v1347 = vadd.f32 %v822, %v1346
        %v1348 = vpop.f32.mrb[0].mxu0
        %v1349 = vadd.f32 %v818, %v1348
        %v1350 = vpop.f32.mrb[0].mxu0
        %v1351 = vadd.f32 %v822, %v1350
        %1352 = vmatprep.mubr.bf16.mxu0 %v738
        %1353 = vmatmul.mubr.bf16.gmra.mrb[0].mxu0 %v737
        %v1354 = vpop.f32.mrb[0].mxu0
        %v1355 = vadd.f32 %v818, %v1354
        %v1356 = vpop.f32.mrb[0].mxu0
        %v1357 = vadd.f32 %v822, %v1356
        %v1358 = vpop.f32.mrb[0].mxu0
        %v1359 = vadd.f32 %v818, %v1358
        %v1360 = vpop.f32.mrb[0].mxu0
        %v1361 = vadd.f32 %v822, %v1360
        %1362 = vmatprep.mubr.bf16.mxu0 %v740
        %1363 = vmatmul.mubr.bf16.gmra.mrb[0].mxu0 %v739
        %v1364 = vpop.f32.mrb[0].mxu0
        %v1365 = vadd.f32 %v818, %v1364
        %v1366 = vpop.f32.mrb[0].mxu0
        %v1367 = vadd.f32 %v822, %v1366
        %v1368 = vpop.f32.mrb[0].mxu0
        %v1369 = vadd.f32 %v818, %v1368
        %v1370 = vpop.f32.mrb[0].mxu0
        %v1371 = vadd.f32 %v822, %v1370
        %1372 = vdwg.mxu0
        %v1373 = vmax.f32 %v1182, 0.0
        %v1374 = vmax.f32 %v1184, 0.0
        %v1375 = vmax.f32 %v1295, 0.0
        %v1376 = vmax.f32 %v1297, 0.0
        %v1377 = vmax.f32 %v1186, 0.0
        %v1378 = vmax.f32 %v1188, 0.0
        %v1379 = vmax.f32 %v1299, 0.0
        %v1380 = vmax.f32 %v1301, 0.0
        %v1381 = vmax.f32 %v1192, 0.0
        %v1382 = vmax.f32 %v1194, 0.0
        %v1383 = vmax.f32 %v1305, 0.0
        %v1384 = vmax.f32 %v1307, 0.0
        %v1385 = vmax.f32 %v1196, 0.0
        %v1386 = vmax.f32 %v1198, 0.0
        %v1387 = vmax.f32 %v1309, 0.0
        %v1388 = vmax.f32 %v1311, 0.0
        %v1389 = vmax.f32 %v1202, 0.0
        %v1390 = vmax.f32 %v1204, 0.0
        %v1391 = vmax.f32 %v1315, 0.0
        %v1392 = vmax.f32 %v1317, 0.0
        %v1393 = vmax.f32 %v1206, 0.0
        %v1394 = vmax.f32 %v1208, 0.0
        %v1395 = vmax.f32 %v1319, 0.0
        %v1396 = vmax.f32 %v1321, 0.0
        %v1397 = vmax.f32 %v1212, 0.0
        %v1398 = vmax.f32 %v1214, 0.0
        %v1399 = vmax.f32 %v1325, 0.0
        %v1400 = vmax.f32 %v1327, 0.0
        %v1401 = vmax.f32 %v1216, 0.0
        %v1402 = vmax.f32 %v1218, 0.0
        %v1403 = vmax.f32 %v1329, 0.0
        %v1404 = vmax.f32 %v1331, 0.0
        %v1405 = vmax.f32 %v1222, 0.0
        %v1406 = vmax.f32 %v1224, 0.0
        %v1407 = vmax.f32 %v1335, 0.0
        %v1408 = vmax.f32 %v1337, 0.0
        %v1409 = vmax.f32 %v1226, 0.0
        %v1410 = vmax.f32 %v1228, 0.0
        %v1411 = vmax.f32 %v1339, 0.0
        %v1412 = vmax.f32 %v1341, 0.0
        %v1413 = vmax.f32 %v1232, 0.0
        %v1414 = vmax.f32 %v1234, 0.0
        %v1415 = vmax.f32 %v1345, 0.0
        %v1416 = vmax.f32 %v1347, 0.0
        %v1417 = vmax.f32 %v1236, 0.0
        %v1418 = vmax.f32 %v1238, 0.0
        %v1419 = vmax.f32 %v1349, 0.0
        %v1420 = vmax.f32 %v1351, 0.0
        %v1421 = vmax.f32 %v1242, 0.0
        %v1422 = vmax.f32 %v1244, 0.0
        %v1423 = vmax.f32 %v1355, 0.0
        %v1424 = vmax.f32 %v1357, 0.0
        %v1425 = vmax.f32 %v1246, 0.0
        %v1426 = vmax.f32 %v1248, 0.0
        %v1427 = vmax.f32 %v1359, 0.0
        %v1428 = vmax.f32 %v1361, 0.0
        %v1429 = vmax.f32 %v1252, 0.0
        %v1430 = vmax.f32 %v1254, 0.0
        %v1431 = vmax.f32 %v1365, 0.0
        %v1432 = vmax.f32 %v1367, 0.0
        %v1433 = vmax.f32 %v1256, 0.0
        %v1434 = vmax.f32 %v1258, 0.0
        %v1435 = vmax.f32 %v1369, 0.0
        %v1436 = vmax.f32 %v1371, 0.0
        %v1437 = vpack.c.bf16 %v1377, %v1373
        %v1438 = vpack.c.bf16 %v1378, %v1374
        %v1439 = vpack.c.bf16 %v1379, %v1375
        %v1440 = vpack.c.bf16 %v1380, %v1376
        %v1441 = vpack.c.bf16 %v1385, %v1381
        %v1442 = vpack.c.bf16 %v1386, %v1382
        %v1443 = vpack.c.bf16 %v1387, %v1383
        %v1444 = vpack.c.bf16 %v1388, %v1384
        %v1445 = vpack.c.bf16 %v1393, %v1389
        %v1446 = vpack.c.bf16 %v1394, %v1390
        %v1447 = vpack.c.bf16 %v1395, %v1391
        %v1448 = vpack.c.bf16 %v1396, %v1392
        %v1449 = vpack.c.bf16 %v1401, %v1397
        %v1450 = vpack.c.bf16 %v1402, %v1398
        %v1451 = vpack.c.bf16 %v1403, %v1399
        %v1452 = vpack.c.bf16 %v1404, %v1400
        %v1453 = vpack.c.bf16 %v1409, %v1405
        %v1454 = vpack.c.bf16 %v1410, %v1406
        %v1455 = vpack.c.bf16 %v1411, %v1407
        %v1456 = vpack.c.bf16 %v1412, %v1408
        %v1457 = vpack.c.bf16 %v1417, %v1413
        %v1458 = vpack.c.bf16 %v1418, %v1414
        %v1459 = vpack.c.bf16 %v1419, %v1415
        %v1460 = vpack.c.bf16 %v1420, %v1416
        %v1461 = vpack.c.bf16 %v1425, %v1421
        %v1462 = vpack.c.bf16 %v1426, %v1422
        %v1463 = vpack.c.bf16 %v1427, %v1423
        %v1464 = vpack.c.bf16 %v1428, %v1424
        %v1465 = vpack.c.bf16 %v1433, %v1429
        %v1466 = vpack.c.bf16 %v1434, %v1430
        %v1467 = vpack.c.bf16 %v1435, %v1431
        %v1468 = vpack.c.bf16 %v1436, %v1432
        %v1469 = vld [vmem:[#allocation9] sm:$0xff]
        %v1470 = vld [vmem:[#allocation9 + $0x8] sm:$0xff]
        %v1471 = vld [vmem:[#allocation9 + $0x10] sm:$0xff]
        %v1472 = vld [vmem:[#allocation9 + $0x18] sm:$0xff]
        %v1473 = vld [vmem:[#allocation9 + $0x20] sm:$0xff]
        %v1474 = vld [vmem:[#allocation9 + $0x28] sm:$0xff]
        %v1475 = vld [vmem:[#allocation9 + $0x30] sm:$0xff]
        %v1476 = vld [vmem:[#allocation9 + $0x38] sm:$0xff]
        %v1477 = vld [vmem:[#allocation9 + $0x40] sm:$0xff]
        %v1478 = vld [vmem:[#allocation9 + $0x48] sm:$0xff]
        %v1479 = vld [vmem:[#allocation9 + $0x50] sm:$0xff]
        %v1480 = vld [vmem:[#allocation9 + $0x58] sm:$0xff]
        %v1481 = vld [vmem:[#allocation9 + $0x60] sm:$0xff]
        %v1482 = vld [vmem:[#allocation9 + $0x68] sm:$0xff]
        %v1483 = vld [vmem:[#allocation9 + $0x70] sm:$0xff]
        %v1484 = vld [vmem:[#allocation9 + $0x78] sm:$0xff]
        %v1485 = vld [vmem:[#allocation9 + $0x80] sm:$0xff]
        %v1486 = vld [vmem:[#allocation9 + $0x88] sm:$0xff]
        %v1487 = vld [vmem:[#allocation9 + $0x90] sm:$0xff]
        %v1488 = vld [vmem:[#allocation9 + $0x98] sm:$0xff]
        %v1489 = vld [vmem:[#allocation9 + $0xa0] sm:$0xff]
        %v1490 = vld [vmem:[#allocation9 + $0xa8] sm:$0xff]
        %v1491 = vld [vmem:[#allocation9 + $0xb0] sm:$0xff]
        %v1492 = vld [vmem:[#allocation9 + $0xb8] sm:$0xff]
        %v1493 = vld [vmem:[#allocation9 + $0xc0] sm:$0xff]
        %v1494 = vld [vmem:[#allocation9 + $0xc8] sm:$0xff]
        %v1495 = vld [vmem:[#allocation9 + $0xd0] sm:$0xff]
        %v1496 = vld [vmem:[#allocation9 + $0xd8] sm:$0xff]
        %v1497 = vld [vmem:[#allocation9 + $0xe0] sm:$0xff]
        %v1498 = vld [vmem:[#allocation9 + $0xe8] sm:$0xff]
        %v1499 = vld [vmem:[#allocation9 + $0xf0] sm:$0xff]
        %v1500 = vld [vmem:[#allocation9 + $0xf8] sm:$0xff]
        %v1501 = vld [vmem:[#allocation9 + $0x100] sm:$0xff]
        %v1502 = vld [vmem:[#allocation9 + $0x108] sm:$0xff]
        %v1503 = vld [vmem:[#allocation9 + $0x110] sm:$0xff]
        %v1504 = vld [vmem:[#allocation9 + $0x118] sm:$0xff]
        %v1505 = vld [vmem:[#allocation9 + $0x120] sm:$0xff]
        %v1506 = vld [vmem:[#allocation9 + $0x128] sm:$0xff]
        %v1507 = vld [vmem:[#allocation9 + $0x130] sm:$0xff]
        %v1508 = vld [vmem:[#allocation9 + $0x138] sm:$0xff]
        %v1509 = vld [vmem:[#allocation9 + $0x140] sm:$0xff]
        %v1510 = vld [vmem:[#allocation9 + $0x148] sm:$0xff]
        %v1511 = vld [vmem:[#allocation9 + $0x150] sm:$0xff]
        %v1512 = vld [vmem:[#allocation9 + $0x158] sm:$0xff]
        %v1513 = vld [vmem:[#allocation9 + $0x160] sm:$0xff]
        %v1514 = vld [vmem:[#allocation9 + $0x168] sm:$0xff]
        %v1515 = vld [vmem:[#allocation9 + $0x170] sm:$0xff]
        %v1516 = vld [vmem:[#allocation9 + $0x178] sm:$0xff]
        %v1517 = vld [vmem:[#allocation9 + $0x180] sm:$0xff]
        %v1518 = vld [vmem:[#allocation9 + $0x188] sm:$0xff]
        %v1519 = vld [vmem:[#allocation9 + $0x190] sm:$0xff]
        %v1520 = vld [vmem:[#allocation9 + $0x198] sm:$0xff]
        %v1521 = vld [vmem:[#allocation9 + $0x1a0] sm:$0xff]
        %v1522 = vld [vmem:[#allocation9 + $0x1a8] sm:$0xff]
        %v1523 = vld [vmem:[#allocation9 + $0x1b0] sm:$0xff]
        %v1524 = vld [vmem:[#allocation9 + $0x1b8] sm:$0xff]
        %v1525 = vld [vmem:[#allocation9 + $0x1c0] sm:$0xff]
        %v1526 = vld [vmem:[#allocation9 + $0x1c8] sm:$0xff]
        %v1527 = vld [vmem:[#allocation9 + $0x1d0] sm:$0xff]
        %v1528 = vld [vmem:[#allocation9 + $0x1d8] sm:$0xff]
        %v1529 = vld [vmem:[#allocation9 + $0x1e0] sm:$0xff]
        %v1530 = vld [vmem:[#allocation9 + $0x1e8] sm:$0xff]
        %v1531 = vld [vmem:[#allocation9 + $0x1f0] sm:$0xff]
        %v1532 = vld [vmem:[#allocation9 + $0x1f8] sm:$0xff]
        %v1533 = vld [vmem:[#allocation9 + $0x200] sm:$0xff]
        %v1534 = vld [vmem:[#allocation9 + $0x208] sm:$0xff]
        %v1535 = vld [vmem:[#allocation9 + $0x210] sm:$0xff]
        %v1536 = vld [vmem:[#allocation9 + $0x218] sm:$0xff]
        %v1537 = vld [vmem:[#allocation9 + $0x220] sm:$0xff]
        %v1538 = vld [vmem:[#allocation9 + $0x228] sm:$0xff]
        %v1539 = vld [vmem:[#allocation9 + $0x230] sm:$0xff]
        %v1540 = vld [vmem:[#allocation9 + $0x238] sm:$0xff]
        %v1541 = vld [vmem:[#allocation9 + $0x240] sm:$0xff]
        %v1542 = vld [vmem:[#allocation9 + $0x248] sm:$0xff]
        %v1543 = vld [vmem:[#allocation9 + $0x250] sm:$0xff]
        %v1544 = vld [vmem:[#allocation9 + $0x258] sm:$0xff]
        %v1545 = vld [vmem:[#allocation9 + $0x260] sm:$0xff]
        %v1546 = vld [vmem:[#allocation9 + $0x268] sm:$0xff]
        %v1547 = vld [vmem:[#allocation9 + $0x270] sm:$0xff]
        %v1548 = vld [vmem:[#allocation9 + $0x278] sm:$0xff]
        %v1549 = vld [vmem:[#allocation9 + $0x280] sm:$0xff]
        %v1550 = vld [vmem:[#allocation9 + $0x288] sm:$0xff]
        %v1551 = vld [vmem:[#allocation9 + $0x290] sm:$0xff]
        %v1552 = vld [vmem:[#allocation9 + $0x298] sm:$0xff]
        %v1553 = vld [vmem:[#allocation9 + $0x2a0] sm:$0xff]
        %v1554 = vld [vmem:[#allocation9 + $0x2a8] sm:$0xff]
        %v1555 = vld [vmem:[#allocation9 + $0x2b0] sm:$0xff]
        %v1556 = vld [vmem:[#allocation9 + $0x2b8] sm:$0xff]
        %v1557 = vld [vmem:[#allocation9 + $0x2c0] sm:$0xff]
        %v1558 = vld [vmem:[#allocation9 + $0x2c8] sm:$0xff]
        %v1559 = vld [vmem:[#allocation9 + $0x2d0] sm:$0xff]
        %v1560 = vld [vmem:[#allocation9 + $0x2d8] sm:$0xff]
        %v1561 = vld [vmem:[#allocation9 + $0x2e0] sm:$0xff]
        %v1562 = vld [vmem:[#allocation9 + $0x2e8] sm:$0xff]
        %v1563 = vld [vmem:[#allocation9 + $0x2f0] sm:$0xff]
        %v1564 = vld [vmem:[#allocation9 + $0x2f8] sm:$0xff]
        %v1565 = vld [vmem:[#allocation9 + $0x300] sm:$0xff]
        %v1566 = vld [vmem:[#allocation9 + $0x308] sm:$0xff]
        %v1567 = vld [vmem:[#allocation9 + $0x310] sm:$0xff]
        %v1568 = vld [vmem:[#allocation9 + $0x318] sm:$0xff]
        %v1569 = vld [vmem:[#allocation9 + $0x320] sm:$0xff]
        %v1570 = vld [vmem:[#allocation9 + $0x328] sm:$0xff]
        %v1571 = vld [vmem:[#allocation9 + $0x330] sm:$0xff]
        %v1572 = vld [vmem:[#allocation9 + $0x338] sm:$0xff]
        %v1573 = vld [vmem:[#allocation9 + $0x340] sm:$0xff]
        %v1574 = vld [vmem:[#allocation9 + $0x348] sm:$0xff]
        %v1575 = vld [vmem:[#allocation9 + $0x350] sm:$0xff]
        %v1576 = vld [vmem:[#allocation9 + $0x358] sm:$0xff]
        %v1577 = vld [vmem:[#allocation9 + $0x360] sm:$0xff]
        %v1578 = vld [vmem:[#allocation9 + $0x368] sm:$0xff]
        %v1579 = vld [vmem:[#allocation9 + $0x370] sm:$0xff]
        %v1580 = vld [vmem:[#allocation9 + $0x378] sm:$0xff]
        %v1581 = vld [vmem:[#allocation9 + $0x380] sm:$0xff]
        %v1582 = vld [vmem:[#allocation9 + $0x388] sm:$0xff]
        %v1583 = vld [vmem:[#allocation9 + $0x390] sm:$0xff]
        %v1584 = vld [vmem:[#allocation9 + $0x398] sm:$0xff]
        %v1585 = vld [vmem:[#allocation9 + $0x3a0] sm:$0xff]
        %v1586 = vld [vmem:[#allocation9 + $0x3a8] sm:$0xff]
        %v1587 = vld [vmem:[#allocation9 + $0x3b0] sm:$0xff]
        %v1588 = vld [vmem:[#allocation9 + $0x3b8] sm:$0xff]
        %v1589 = vld [vmem:[#allocation9 + $0x3c0] sm:$0xff]
        %v1590 = vld [vmem:[#allocation9 + $0x3c8] sm:$0xff]
        %v1591 = vld [vmem:[#allocation9 + $0x3d0] sm:$0xff]
        %v1592 = vld [vmem:[#allocation9 + $0x3d8] sm:$0xff]
        %v1593 = vld [vmem:[#allocation9 + $0x3e0] sm:$0xff]
        %v1594 = vld [vmem:[#allocation9 + $0x3e8] sm:$0xff]
        %v1595 = vld [vmem:[#allocation9 + $0x3f0] sm:$0xff]
        %v1596 = vld [vmem:[#allocation9 + $0x3f8] sm:$0xff]
        %v1597 = vld [vmem:[#allocation9 + $0x400] sm:$0xff]
        %v1598 = vld [vmem:[#allocation9 + $0x408] sm:$0xff]
        %v1599 = vld [vmem:[#allocation9 + $0x410] sm:$0xff]
        %v1600 = vld [vmem:[#allocation9 + $0x418] sm:$0xff]
        %v1601 = vld [vmem:[#allocation9 + $0x420] sm:$0xff]
        %v1602 = vld [vmem:[#allocation9 + $0x428] sm:$0xff]
        %v1603 = vld [vmem:[#allocation9 + $0x430] sm:$0xff]
        %v1604 = vld [vmem:[#allocation9 + $0x438] sm:$0xff]
        %v1605 = vld [vmem:[#allocation9 + $0x440] sm:$0xff]
        %v1606 = vld [vmem:[#allocation9 + $0x448] sm:$0xff]
        %v1607 = vld [vmem:[#allocation9 + $0x450] sm:$0xff]
        %v1608 = vld [vmem:[#allocation9 + $0x458] sm:$0xff]
        %v1609 = vld [vmem:[#allocation9 + $0x460] sm:$0xff]
        %v1610 = vld [vmem:[#allocation9 + $0x468] sm:$0xff]
        %v1611 = vld [vmem:[#allocation9 + $0x470] sm:$0xff]
        %v1612 = vld [vmem:[#allocation9 + $0x478] sm:$0xff]
        %v1613 = vld [vmem:[#allocation9 + $0x480] sm:$0xff]
        %v1614 = vld [vmem:[#allocation9 + $0x488] sm:$0xff]
        %v1615 = vld [vmem:[#allocation9 + $0x490] sm:$0xff]
        %v1616 = vld [vmem:[#allocation9 + $0x498] sm:$0xff]
        %v1617 = vld [vmem:[#allocation9 + $0x4a0] sm:$0xff]
        %v1618 = vld [vmem:[#allocation9 + $0x4a8] sm:$0xff]
        %v1619 = vld [vmem:[#allocation9 + $0x4b0] sm:$0xff]
        %v1620 = vld [vmem:[#allocation9 + $0x4b8] sm:$0xff]
        %v1621 = vld [vmem:[#allocation9 + $0x4c0] sm:$0xff]
        %v1622 = vld [vmem:[#allocation9 + $0x4c8] sm:$0xff]
        %v1623 = vld [vmem:[#allocation9 + $0x4d0] sm:$0xff]
        %v1624 = vld [vmem:[#allocation9 + $0x4d8] sm:$0xff]
        %v1625 = vld [vmem:[#allocation9 + $0x4e0] sm:$0xff]
        %v1626 = vld [vmem:[#allocation9 + $0x4e8] sm:$0xff]
        %v1627 = vld [vmem:[#allocation9 + $0x4f0] sm:$0xff]
        %v1628 = vld [vmem:[#allocation9 + $0x4f8] sm:$0xff]
        %v1629 = vld [vmem:[#allocation9 + $0x500] sm:$0xff]
        %v1630 = vld [vmem:[#allocation9 + $0x508] sm:$0xff]
        %v1631 = vld [vmem:[#allocation9 + $0x510] sm:$0xff]
        %v1632 = vld [vmem:[#allocation9 + $0x518] sm:$0xff]
        %v1633 = vld [vmem:[#allocation9 + $0x520] sm:$0xff]
        %v1634 = vld [vmem:[#allocation9 + $0x528] sm:$0xff]
        %v1635 = vld [vmem:[#allocation9 + $0x530] sm:$0xff]
        %v1636 = vld [vmem:[#allocation9 + $0x538] sm:$0xff]
        %v1637 = vld [vmem:[#allocation9 + $0x540] sm:$0xff]
        %v1638 = vld [vmem:[#allocation9 + $0x548] sm:$0xff]
        %v1639 = vld [vmem:[#allocation9 + $0x550] sm:$0xff]
        %v1640 = vld [vmem:[#allocation9 + $0x558] sm:$0xff]
        %v1641 = vld [vmem:[#allocation9 + $0x560] sm:$0xff]
        %v1642 = vld [vmem:[#allocation9 + $0x568] sm:$0xff]
        %v1643 = vld [vmem:[#allocation9 + $0x570] sm:$0xff]
        %v1644 = vld [vmem:[#allocation9 + $0x578] sm:$0xff]
        %v1645 = vld [vmem:[#allocation9 + $0x580] sm:$0xff]
        %v1646 = vld [vmem:[#allocation9 + $0x588] sm:$0xff]
        %v1647 = vld [vmem:[#allocation9 + $0x590] sm:$0xff]
        %v1648 = vld [vmem:[#allocation9 + $0x598] sm:$0xff]
        %v1649 = vld [vmem:[#allocation9 + $0x5a0] sm:$0xff]
        %v1650 = vld [vmem:[#allocation9 + $0x5a8] sm:$0xff]
        %v1651 = vld [vmem:[#allocation9 + $0x5b0] sm:$0xff]
        %v1652 = vld [vmem:[#allocation9 + $0x5b8] sm:$0xff]
        %v1653 = vld [vmem:[#allocation9 + $0x5c0] sm:$0xff]
        %v1654 = vld [vmem:[#allocation9 + $0x5c8] sm:$0xff]
        %v1655 = vld [vmem:[#allocation9 + $0x5d0] sm:$0xff]
        %v1656 = vld [vmem:[#allocation9 + $0x5d8] sm:$0xff]
        %v1657 = vld [vmem:[#allocation9 + $0x5e0] sm:$0xff]
        %v1658 = vld [vmem:[#allocation9 + $0x5e8] sm:$0xff]
        %v1659 = vld [vmem:[#allocation9 + $0x5f0] sm:$0xff]
        %v1660 = vld [vmem:[#allocation9 + $0x5f8] sm:$0xff]
        %v1661 = vld [vmem:[#allocation9 + $0x600] sm:$0xff]
        %v1662 = vld [vmem:[#allocation9 + $0x608] sm:$0xff]
        %v1663 = vld [vmem:[#allocation9 + $0x610] sm:$0xff]
        %v1664 = vld [vmem:[#allocation9 + $0x618] sm:$0xff]
        %v1665 = vld [vmem:[#allocation9 + $0x620] sm:$0xff]
        %v1666 = vld [vmem:[#allocation9 + $0x628] sm:$0xff]
        %v1667 = vld [vmem:[#allocation9 + $0x630] sm:$0xff]
        %v1668 = vld [vmem:[#allocation9 + $0x638] sm:$0xff]
        %v1669 = vld [vmem:[#allocation9 + $0x640] sm:$0xff]
        %v1670 = vld [vmem:[#allocation9 + $0x648] sm:$0xff]
        %v1671 = vld [vmem:[#allocation9 + $0x650] sm:$0xff]
        %v1672 = vld [vmem:[#allocation9 + $0x658] sm:$0xff]
        %v1673 = vld [vmem:[#allocation9 + $0x660] sm:$0xff]
        %v1674 = vld [vmem:[#allocation9 + $0x668] sm:$0xff]
        %v1675 = vld [vmem:[#allocation9 + $0x670] sm:$0xff]
        %v1676 = vld [vmem:[#allocation9 + $0x678] sm:$0xff]
        %v1677 = vld [vmem:[#allocation9 + $0x680] sm:$0xff]
        %v1678 = vld [vmem:[#allocation9 + $0x688] sm:$0xff]
        %v1679 = vld [vmem:[#allocation9 + $0x690] sm:$0xff]
        %v1680 = vld [vmem:[#allocation9 + $0x698] sm:$0xff]
        %v1681 = vld [vmem:[#allocation9 + $0x6a0] sm:$0xff]
        %v1682 = vld [vmem:[#allocation9 + $0x6a8] sm:$0xff]
        %v1683 = vld [vmem:[#allocation9 + $0x6b0] sm:$0xff]
        %v1684 = vld [vmem:[#allocation9 + $0x6b8] sm:$0xff]
        %v1685 = vld [vmem:[#allocation9 + $0x6c0] sm:$0xff]
        %v1686 = vld [vmem:[#allocation9 + $0x6c8] sm:$0xff]
        %v1687 = vld [vmem:[#allocation9 + $0x6d0] sm:$0xff]
        %v1688 = vld [vmem:[#allocation9 + $0x6d8] sm:$0xff]
        %v1689 = vld [vmem:[#allocation9 + $0x6e0] sm:$0xff]
        %v1690 = vld [vmem:[#allocation9 + $0x6e8] sm:$0xff]
        %v1691 = vld [vmem:[#allocation9 + $0x6f0] sm:$0xff]
        %v1692 = vld [vmem:[#allocation9 + $0x6f8] sm:$0xff]
        %v1693 = vld [vmem:[#allocation9 + $0x700] sm:$0xff]
        %v1694 = vld [vmem:[#allocation9 + $0x708] sm:$0xff]
        %v1695 = vld [vmem:[#allocation9 + $0x710] sm:$0xff]
        %v1696 = vld [vmem:[#allocation9 + $0x718] sm:$0xff]
        %v1697 = vld [vmem:[#allocation9 + $0x720] sm:$0xff]
        %v1698 = vld [vmem:[#allocation9 + $0x728] sm:$0xff]
        %v1699 = vld [vmem:[#allocation9 + $0x730] sm:$0xff]
        %v1700 = vld [vmem:[#allocation9 + $0x738] sm:$0xff]
        %v1701 = vld [vmem:[#allocation9 + $0x740] sm:$0xff]
        %v1702 = vld [vmem:[#allocation9 + $0x748] sm:$0xff]
        %v1703 = vld [vmem:[#allocation9 + $0x750] sm:$0xff]
        %v1704 = vld [vmem:[#allocation9 + $0x758] sm:$0xff]
        %v1705 = vld [vmem:[#allocation9 + $0x760] sm:$0xff]
        %v1706 = vld [vmem:[#allocation9 + $0x768] sm:$0xff]
        %v1707 = vld [vmem:[#allocation9 + $0x770] sm:$0xff]
        %v1708 = vld [vmem:[#allocation9 + $0x778] sm:$0xff]
        %v1709 = vld [vmem:[#allocation9 + $0x780] sm:$0xff]
        %v1710 = vld [vmem:[#allocation9 + $0x788] sm:$0xff]
        %v1711 = vld [vmem:[#allocation9 + $0x790] sm:$0xff]
        %v1712 = vld [vmem:[#allocation9 + $0x798] sm:$0xff]
        %v1713 = vld [vmem:[#allocation9 + $0x7a0] sm:$0xff]
        %v1714 = vld [vmem:[#allocation9 + $0x7a8] sm:$0xff]
        %v1715 = vld [vmem:[#allocation9 + $0x7b0] sm:$0xff]
        %v1716 = vld [vmem:[#allocation9 + $0x7b8] sm:$0xff]
        %v1717 = vld [vmem:[#allocation9 + $0x7c0] sm:$0xff]
        %v1718 = vld [vmem:[#allocation9 + $0x7c8] sm:$0xff]
        %v1719 = vld [vmem:[#allocation9 + $0x7d0] sm:$0xff]
        %v1720 = vld [vmem:[#allocation9 + $0x7d8] sm:$0xff]
        %v1721 = vld [vmem:[#allocation9 + $0x7e0] sm:$0xff]
        %v1722 = vld [vmem:[#allocation9 + $0x7e8] sm:$0xff]
        %v1723 = vld [vmem:[#allocation9 + $0x7f0] sm:$0xff]
        %v1724 = vld [vmem:[#allocation9 + $0x7f8] sm:$0xff]
        %v1725 = vld [vmem:[#allocation10] sm:$0xff]
        %v1727 = vlaneseq
        %v1728 = vshrl.u32 %v1727, 7
        %v1729 = vsub.s32 0, %v1728
        %v1730 = vrot.slane %v1725, %v1729
        %v1731 = vlaneseq
        %v1732 = vshrl.u32 %v1731, 7
        %v1733 = vsub.s32 1, %v1732
        %v1734 = vrot.slane %v1725, %v1733
        %v1735 = vlaneseq
        %v1736 = vshrl.u32 %v1735, 7
        %v1737 = vsub.s32 2, %v1736
        %v1738 = vrot.slane %v1725, %v1737
        %v1739 = vlaneseq
        %v1740 = vshrl.u32 %v1739, 7
        %v1741 = vsub.s32 3, %v1740
        %v1742 = vrot.slane %v1725, %v1741
        %v1743 = vlaneseq
        %v1744 = vshrl.u32 %v1743, 7
        %v1745 = vsub.s32 4, %v1744
        %v1746 = vrot.slane %v1725, %v1745
        %v1747 = vlaneseq
        %v1748 = vshrl.u32 %v1747, 7
        %v1749 = vsub.s32 5, %v1748
        %v1750 = vrot.slane %v1725, %v1749
        %v1751 = vlaneseq
        %v1752 = vshrl.u32 %v1751, 7
        %v1753 = vsub.s32 6, %v1752
        %v1754 = vrot.slane %v1725, %v1753
        %v1755 = vlaneseq
        %v1756 = vshrl.u32 %v1755, 7
        %v1757 = vsub.s32 7, %v1756
        %v1758 = vrot.slane %v1725, %v1757
        %v2023 = vunpack.c.l.b16 %v1469
        %v2024 = vunpack.c.h.b16 %v1469
        %v2025 = vunpack.c.l.b16 %v1470
        %v2026 = vunpack.c.h.b16 %v1470
        %v2027 = vunpack.c.l.b16 %v1471
        %v2028 = vunpack.c.h.b16 %v1471
        %v2029 = vunpack.c.l.b16 %v1472
        %v2030 = vunpack.c.h.b16 %v1472
        %v2031 = vunpack.c.l.b16 %v1473
        %v2032 = vunpack.c.h.b16 %v1473
        %v2033 = vunpack.c.l.b16 %v1474
        %v2034 = vunpack.c.h.b16 %v1474
        %v2035 = vunpack.c.l.b16 %v1475
        %v2036 = vunpack.c.h.b16 %v1475
        %v2037 = vunpack.c.l.b16 %v1476
        %v2038 = vunpack.c.h.b16 %v1476
        %v2039 = vunpack.c.l.b16 %v1477
        %v2040 = vunpack.c.h.b16 %v1477
        %v2041 = vunpack.c.l.b16 %v1478
        %v2042 = vunpack.c.h.b16 %v1478
        %v2043 = vunpack.c.l.b16 %v1479
        %v2044 = vunpack.c.h.b16 %v1479
        %v2045 = vunpack.c.l.b16 %v1480
        %v2046 = vunpack.c.h.b16 %v1480
        %v2047 = vunpack.c.l.b16 %v1481
        %v2048 = vunpack.c.h.b16 %v1481
        %v2049 = vunpack.c.l.b16 %v1482
        %v2050 = vunpack.c.h.b16 %v1482
        %v2051 = vunpack.c.l.b16 %v1483
        %v2052 = vunpack.c.h.b16 %v1483
        %v2053 = vunpack.c.l.b16 %v1484
        %v2054 = vunpack.c.h.b16 %v1484
        %v2055 = vunpack.c.l.b16 %v1485
        %v2056 = vunpack.c.h.b16 %v1485
        %v2057 = vunpack.c.l.b16 %v1486
        %v2058 = vunpack.c.h.b16 %v1486
        %v2059 = vunpack.c.l.b16 %v1487
        %v2060 = vunpack.c.h.b16 %v1487
        %v2061 = vunpack.c.l.b16 %v1488
        %v2062 = vunpack.c.h.b16 %v1488
        %v2063 = vunpack.c.l.b16 %v1489
        %v2064 = vunpack.c.h.b16 %v1489
        %v2065 = vunpack.c.l.b16 %v1490
        %v2066 = vunpack.c.h.b16 %v1490
        %v2067 = vunpack.c.l.b16 %v1491
        %v2068 = vunpack.c.h.b16 %v1491
        %v2069 = vunpack.c.l.b16 %v1492
        %v2070 = vunpack.c.h.b16 %v1492
        %v2071 = vunpack.c.l.b16 %v1493
        %v2072 = vunpack.c.h.b16 %v1493
        %v2073 = vunpack.c.l.b16 %v1494
        %v2074 = vunpack.c.h.b16 %v1494
        %v2075 = vunpack.c.l.b16 %v1495
        %v2076 = vunpack.c.h.b16 %v1495
        %v2077 = vunpack.c.l.b16 %v1496
        %v2078 = vunpack.c.h.b16 %v1496
        %v2079 = vunpack.c.l.b16 %v1497
        %v2080 = vunpack.c.h.b16 %v1497
        %v2081 = vunpack.c.l.b16 %v1498
        %v2082 = vunpack.c.h.b16 %v1498
        %v2083 = vunpack.c.l.b16 %v1499
        %v2084 = vunpack.c.h.b16 %v1499
        %v2085 = vunpack.c.l.b16 %v1500
        %v2086 = vunpack.c.h.b16 %v1500
        %v2087 = vunpack.c.l.b16 %v1501
        %v2088 = vunpack.c.h.b16 %v1501
        %v2089 = vunpack.c.l.b16 %v1502
        %v2090 = vunpack.c.h.b16 %v1502
        %v2091 = vunpack.c.l.b16 %v1503
        %v2092 = vunpack.c.h.b16 %v1503
        %v2093 = vunpack.c.l.b16 %v1504
        %v2094 = vunpack.c.h.b16 %v1504
        %v2095 = vunpack.c.l.b16 %v1505
        %v2096 = vunpack.c.h.b16 %v1505
        %v2097 = vunpack.c.l.b16 %v1506
        %v2098 = vunpack.c.h.b16 %v1506
        %v2099 = vunpack.c.l.b16 %v1507
        %v2100 = vunpack.c.h.b16 %v1507
        %v2101 = vunpack.c.l.b16 %v1508
        %v2102 = vunpack.c.h.b16 %v1508
        %v2103 = vunpack.c.l.b16 %v1509
        %v2104 = vunpack.c.h.b16 %v1509
        %v2105 = vunpack.c.l.b16 %v1510
        %v2106 = vunpack.c.h.b16 %v1510
        %v2107 = vunpack.c.l.b16 %v1511
        %v2108 = vunpack.c.h.b16 %v1511
        %v2109 = vunpack.c.l.b16 %v1512
        %v2110 = vunpack.c.h.b16 %v1512
        %v2111 = vunpack.c.l.b16 %v1513
        %v2112 = vunpack.c.h.b16 %v1513
        %v2113 = vunpack.c.l.b16 %v1514
        %v2114 = vunpack.c.h.b16 %v1514
        %v2115 = vunpack.c.l.b16 %v1515
        %v2116 = vunpack.c.h.b16 %v1515
        %v2117 = vunpack.c.l.b16 %v1516
        %v2118 = vunpack.c.h.b16 %v1516
        %v2119 = vunpack.c.l.b16 %v1517
        %v2120 = vunpack.c.h.b16 %v1517
        %v2121 = vunpack.c.l.b16 %v1518
        %v2122 = vunpack.c.h.b16 %v1518
        %v2123 = vunpack.c.l.b16 %v1519
        %v2124 = vunpack.c.h.b16 %v1519
        %v2125 = vunpack.c.l.b16 %v1520
        %v2126 = vunpack.c.h.b16 %v1520
        %v2127 = vunpack.c.l.b16 %v1521
        %v2128 = vunpack.c.h.b16 %v1521
        %v2129 = vunpack.c.l.b16 %v1522
        %v2130 = vunpack.c.h.b16 %v1522
        %v2131 = vunpack.c.l.b16 %v1523
        %v2132 = vunpack.c.h.b16 %v1523
        %v2133 = vunpack.c.l.b16 %v1524
        %v2134 = vunpack.c.h.b16 %v1524
        %v2135 = vunpack.c.l.b16 %v1525
        %v2136 = vunpack.c.h.b16 %v1525
        %v2137 = vunpack.c.l.b16 %v1526
        %v2138 = vunpack.c.h.b16 %v1526
        %v2139 = vunpack.c.l.b16 %v1527
        %v2140 = vunpack.c.h.b16 %v1527
        %v2141 = vunpack.c.l.b16 %v1528
        %v2142 = vunpack.c.h.b16 %v1528
        %v2143 = vunpack.c.l.b16 %v1529
        %v2144 = vunpack.c.h.b16 %v1529
        %v2145 = vunpack.c.l.b16 %v1530
        %v2146 = vunpack.c.h.b16 %v1530
        %v2147 = vunpack.c.l.b16 %v1531
        %v2148 = vunpack.c.h.b16 %v1531
        %v2149 = vunpack.c.l.b16 %v1532
        %v2150 = vunpack.c.h.b16 %v1532
        %v2151 = vunpack.c.l.b16 %v1533
        %v2152 = vunpack.c.h.b16 %v1533
        %v2153 = vunpack.c.l.b16 %v1534
        %v2154 = vunpack.c.h.b16 %v1534
        %v2155 = vunpack.c.l.b16 %v1535
        %v2156 = vunpack.c.h.b16 %v1535
        %v2157 = vunpack.c.l.b16 %v1536
        %v2158 = vunpack.c.h.b16 %v1536
        %v2159 = vunpack.c.l.b16 %v1537
        %v2160 = vunpack.c.h.b16 %v1537
        %v2161 = vunpack.c.l.b16 %v1538
        %v2162 = vunpack.c.h.b16 %v1538
        %v2163 = vunpack.c.l.b16 %v1539
        %v2164 = vunpack.c.h.b16 %v1539
        %v2165 = vunpack.c.l.b16 %v1540
        %v2166 = vunpack.c.h.b16 %v1540
        %v2167 = vunpack.c.l.b16 %v1541
        %v2168 = vunpack.c.h.b16 %v1541
        %v2169 = vunpack.c.l.b16 %v1542
        %v2170 = vunpack.c.h.b16 %v1542
        %v2171 = vunpack.c.l.b16 %v1543
        %v2172 = vunpack.c.h.b16 %v1543
        %v2173 = vunpack.c.l.b16 %v1544
        %v2174 = vunpack.c.h.b16 %v1544
        %v2175 = vunpack.c.l.b16 %v1545
        %v2176 = vunpack.c.h.b16 %v1545
        %v2177 = vunpack.c.l.b16 %v1546
        %v2178 = vunpack.c.h.b16 %v1546
        %v2179 = vunpack.c.l.b16 %v1547
        %v2180 = vunpack.c.h.b16 %v1547
        %v2181 = vunpack.c.l.b16 %v1548
        %v2182 = vunpack.c.h.b16 %v1548
        %v2183 = vunpack.c.l.b16 %v1549
        %v2184 = vunpack.c.h.b16 %v1549
        %v2185 = vunpack.c.l.b16 %v1550
        %v2186 = vunpack.c.h.b16 %v1550
        %v2187 = vunpack.c.l.b16 %v1551
        %v2188 = vunpack.c.h.b16 %v1551
        %v2189 = vunpack.c.l.b16 %v1552
        %v2190 = vunpack.c.h.b16 %v1552
        %v2191 = vunpack.c.l.b16 %v1553
        %v2192 = vunpack.c.h.b16 %v1553
        %v2193 = vunpack.c.l.b16 %v1554
        %v2194 = vunpack.c.h.b16 %v1554
        %v2195 = vunpack.c.l.b16 %v1555
        %v2196 = vunpack.c.h.b16 %v1555
        %v2197 = vunpack.c.l.b16 %v1556
        %v2198 = vunpack.c.h.b16 %v1556
        %v2199 = vunpack.c.l.b16 %v1557
        %v2200 = vunpack.c.h.b16 %v1557
        %v2201 = vunpack.c.l.b16 %v1558
        %v2202 = vunpack.c.h.b16 %v1558
        %v2203 = vunpack.c.l.b16 %v1559
        %v2204 = vunpack.c.h.b16 %v1559
        %v2205 = vunpack.c.l.b16 %v1560
        %v2206 = vunpack.c.h.b16 %v1560
        %v2207 = vunpack.c.l.b16 %v1561
        %v2208 = vunpack.c.h.b16 %v1561
        %v2209 = vunpack.c.l.b16 %v1562
        %v2210 = vunpack.c.h.b16 %v1562
        %v2211 = vunpack.c.l.b16 %v1563
        %v2212 = vunpack.c.h.b16 %v1563
        %v2213 = vunpack.c.l.b16 %v1564
        %v2214 = vunpack.c.h.b16 %v1564
        %v2215 = vunpack.c.l.b16 %v1565
        %v2216 = vunpack.c.h.b16 %v1565
        %v2217 = vunpack.c.l.b16 %v1566
        %v2218 = vunpack.c.h.b16 %v1566
        %v2219 = vunpack.c.l.b16 %v1567
        %v2220 = vunpack.c.h.b16 %v1567
        %v2221 = vunpack.c.l.b16 %v1568
        %v2222 = vunpack.c.h.b16 %v1568
        %v2223 = vunpack.c.l.b16 %v1569
        %v2224 = vunpack.c.h.b16 %v1569
        %v2225 = vunpack.c.l.b16 %v1570
        %v2226 = vunpack.c.h.b16 %v1570
        %v2227 = vunpack.c.l.b16 %v1571
        %v2228 = vunpack.c.h.b16 %v1571
        %v2229 = vunpack.c.l.b16 %v1572
        %v2230 = vunpack.c.h.b16 %v1572
        %v2231 = vunpack.c.l.b16 %v1573
        %v2232 = vunpack.c.h.b16 %v1573
        %v2233 = vunpack.c.l.b16 %v1574
        %v2234 = vunpack.c.h.b16 %v1574
        %v2235 = vunpack.c.l.b16 %v1575
        %v2236 = vunpack.c.h.b16 %v1575
        %v2237 = vunpack.c.l.b16 %v1576
        %v2238 = vunpack.c.h.b16 %v1576
        %v2239 = vunpack.c.l.b16 %v1577
        %v2240 = vunpack.c.h.b16 %v1577
        %v2241 = vunpack.c.l.b16 %v1578
        %v2242 = vunpack.c.h.b16 %v1578
        %v2243 = vunpack.c.l.b16 %v1579
        %v2244 = vunpack.c.h.b16 %v1579
        %v2245 = vunpack.c.l.b16 %v1580
        %v2246 = vunpack.c.h.b16 %v1580
        %v2247 = vunpack.c.l.b16 %v1581
        %v2248 = vunpack.c.h.b16 %v1581
        %v2249 = vunpack.c.l.b16 %v1582
        %v2250 = vunpack.c.h.b16 %v1582
        %v2251 = vunpack.c.l.b16 %v1583
        %v2252 = vunpack.c.h.b16 %v1583
        %v2253 = vunpack.c.l.b16 %v1584
        %v2254 = vunpack.c.h.b16 %v1584
        %v2255 = vunpack.c.l.b16 %v1585
        %v2256 = vunpack.c.h.b16 %v1585
        %v2257 = vunpack.c.l.b16 %v1586
        %v2258 = vunpack.c.h.b16 %v1586
        %v2259 = vunpack.c.l.b16 %v1587
        %v2260 = vunpack.c.h.b16 %v1587
        %v2261 = vunpack.c.l.b16 %v1588
        %v2262 = vunpack.c.h.b16 %v1588
        %v2263 = vunpack.c.l.b16 %v1589
        %v2264 = vunpack.c.h.b16 %v1589
        %v2265 = vunpack.c.l.b16 %v1590
        %v2266 = vunpack.c.h.b16 %v1590
        %v2267 = vunpack.c.l.b16 %v1591
        %v2268 = vunpack.c.h.b16 %v1591
        %v2269 = vunpack.c.l.b16 %v1592
        %v2270 = vunpack.c.h.b16 %v1592
        %v2271 = vunpack.c.l.b16 %v1593
        %v2272 = vunpack.c.h.b16 %v1593
        %v2273 = vunpack.c.l.b16 %v1594
        %v2274 = vunpack.c.h.b16 %v1594
        %v2275 = vunpack.c.l.b16 %v1595
        %v2276 = vunpack.c.h.b16 %v1595
        %v2277 = vunpack.c.l.b16 %v1596
        %v2278 = vunpack.c.h.b16 %v1596
        %v2279 = vunpack.c.l.b16 %v1597
        %v2280 = vunpack.c.h.b16 %v1597
        %v2281 = vunpack.c.l.b16 %v1598
        %v2282 = vunpack.c.h.b16 %v1598
        %v2283 = vunpack.c.l.b16 %v1599
        %v2284 = vunpack.c.h.b16 %v1599
        %v2285 = vunpack.c.l.b16 %v1600
        %v2286 = vunpack.c.h.b16 %v1600
        %v2287 = vunpack.c.l.b16 %v1601
        %v2288 = vunpack.c.h.b16 %v1601
        %v2289 = vunpack.c.l.b16 %v1602
        %v2290 = vunpack.c.h.b16 %v1602
        %v2291 = vunpack.c.l.b16 %v1603
        %v2292 = vunpack.c.h.b16 %v1603
        %v2293 = vunpack.c.l.b16 %v1604
        %v2294 = vunpack.c.h.b16 %v1604
        %v2295 = vunpack.c.l.b16 %v1605
        %v2296 = vunpack.c.h.b16 %v1605
        %v2297 = vunpack.c.l.b16 %v1606
        %v2298 = vunpack.c.h.b16 %v1606
        %v2299 = vunpack.c.l.b16 %v1607
        %v2300 = vunpack.c.h.b16 %v1607
        %v2301 = vunpack.c.l.b16 %v1608
        %v2302 = vunpack.c.h.b16 %v1608
        %v2303 = vunpack.c.l.b16 %v1609
        %v2304 = vunpack.c.h.b16 %v1609
        %v2305 = vunpack.c.l.b16 %v1610
        %v2306 = vunpack.c.h.b16 %v1610
        %v2307 = vunpack.c.l.b16 %v1611
        %v2308 = vunpack.c.h.b16 %v1611
        %v2309 = vunpack.c.l.b16 %v1612
        %v2310 = vunpack.c.h.b16 %v1612
        %v2311 = vunpack.c.l.b16 %v1613
        %v2312 = vunpack.c.h.b16 %v1613
        %v2313 = vunpack.c.l.b16 %v1614
        %v2314 = vunpack.c.h.b16 %v1614
        %v2315 = vunpack.c.l.b16 %v1615
        %v2316 = vunpack.c.h.b16 %v1615
        %v2317 = vunpack.c.l.b16 %v1616
        %v2318 = vunpack.c.h.b16 %v1616
        %v2319 = vunpack.c.l.b16 %v1617
        %v2320 = vunpack.c.h.b16 %v1617
        %v2321 = vunpack.c.l.b16 %v1618
        %v2322 = vunpack.c.h.b16 %v1618
        %v2323 = vunpack.c.l.b16 %v1619
        %v2324 = vunpack.c.h.b16 %v1619
        %v2325 = vunpack.c.l.b16 %v1620
        %v2326 = vunpack.c.h.b16 %v1620
        %v2327 = vunpack.c.l.b16 %v1621
        %v2328 = vunpack.c.h.b16 %v1621
        %v2329 = vunpack.c.l.b16 %v1622
        %v2330 = vunpack.c.h.b16 %v1622
        %v2331 = vunpack.c.l.b16 %v1623
        %v2332 = vunpack.c.h.b16 %v1623
        %v2333 = vunpack.c.l.b16 %v1624
        %v2334 = vunpack.c.h.b16 %v1624
        %v2335 = vunpack.c.l.b16 %v1625
        %v2336 = vunpack.c.h.b16 %v1625
        %v2337 = vunpack.c.l.b16 %v1626
        %v2338 = vunpack.c.h.b16 %v1626
        %v2339 = vunpack.c.l.b16 %v1627
        %v2340 = vunpack.c.h.b16 %v1627
        %v2341 = vunpack.c.l.b16 %v1628
        %v2342 = vunpack.c.h.b16 %v1628
        %v2343 = vunpack.c.l.b16 %v1629
        %v2344 = vunpack.c.h.b16 %v1629
        %v2345 = vunpack.c.l.b16 %v1630
        %v2346 = vunpack.c.h.b16 %v1630
        %v2347 = vunpack.c.l.b16 %v1631
        %v2348 = vunpack.c.h.b16 %v1631
        %v2349 = vunpack.c.l.b16 %v1632
        %v2350 = vunpack.c.h.b16 %v1632
        %v2351 = vunpack.c.l.b16 %v1633
        %v2352 = vunpack.c.h.b16 %v1633
        %v2353 = vunpack.c.l.b16 %v1634
        %v2354 = vunpack.c.h.b16 %v1634
        %v2355 = vunpack.c.l.b16 %v1635
        %v2356 = vunpack.c.h.b16 %v1635
        %v2357 = vunpack.c.l.b16 %v1636
        %v2358 = vunpack.c.h.b16 %v1636
        %v2359 = vunpack.c.l.b16 %v1637
        %v2360 = vunpack.c.h.b16 %v1637
        %v2361 = vunpack.c.l.b16 %v1638
        %v2362 = vunpack.c.h.b16 %v1638
        %v2363 = vunpack.c.l.b16 %v1639
        %v2364 = vunpack.c.h.b16 %v1639
        %v2365 = vunpack.c.l.b16 %v1640
        %v2366 = vunpack.c.h.b16 %v1640
        %v2367 = vunpack.c.l.b16 %v1641
        %v2368 = vunpack.c.h.b16 %v1641
        %v2369 = vunpack.c.l.b16 %v1642
        %v2370 = vunpack.c.h.b16 %v1642
        %v2371 = vunpack.c.l.b16 %v1643
        %v2372 = vunpack.c.h.b16 %v1643
        %v2373 = vunpack.c.l.b16 %v1644
        %v2374 = vunpack.c.h.b16 %v1644
        %v2375 = vunpack.c.l.b16 %v1645
        %v2376 = vunpack.c.h.b16 %v1645
        %v2377 = vunpack.c.l.b16 %v1646
        %v2378 = vunpack.c.h.b16 %v1646
        %v2379 = vunpack.c.l.b16 %v1647
        %v2380 = vunpack.c.h.b16 %v1647
        %v2381 = vunpack.c.l.b16 %v1648
        %v2382 = vunpack.c.h.b16 %v1648
        %v2383 = vunpack.c.l.b16 %v1649
        %v2384 = vunpack.c.h.b16 %v1649
        %v2385 = vunpack.c.l.b16 %v1650
        %v2386 = vunpack.c.h.b16 %v1650
        %v2387 = vunpack.c.l.b16 %v1651
        %v2388 = vunpack.c.h.b16 %v1651
        %v2389 = vunpack.c.l.b16 %v1652
        %v2390 = vunpack.c.h.b16 %v1652
        %v2391 = vunpack.c.l.b16 %v1653
        %v2392 = vunpack.c.h.b16 %v1653
        %v2393 = vunpack.c.l.b16 %v1654
        %v2394 = vunpack.c.h.b16 %v1654
        %v2395 = vunpack.c.l.b16 %v1655
        %v2396 = vunpack.c.h.b16 %v1655
        %v2397 = vunpack.c.l.b16 %v1656
        %v2398 = vunpack.c.h.b16 %v1656
        %v2399 = vunpack.c.l.b16 %v1657
        %v2400 = vunpack.c.h.b16 %v1657
        %v2401 = vunpack.c.l.b16 %v1658
        %v2402 = vunpack.c.h.b16 %v1658
        %v2403 = vunpack.c.l.b16 %v1659
        %v2404 = vunpack.c.h.b16 %v1659
        %v2405 = vunpack.c.l.b16 %v1660
        %v2406 = vunpack.c.h.b16 %v1660
        %v2407 = vunpack.c.l.b16 %v1661
        %v2408 = vunpack.c.h.b16 %v1661
        %v2409 = vunpack.c.l.b16 %v1662
        %v2410 = vunpack.c.h.b16 %v1662
        %v2411 = vunpack.c.l.b16 %v1663
        %v2412 = vunpack.c.h.b16 %v1663
        %v2413 = vunpack.c.l.b16 %v1664
        %v2414 = vunpack.c.h.b16 %v1664
        %v2415 = vunpack.c.l.b16 %v1665
        %v2416 = vunpack.c.h.b16 %v1665
        %v2417 = vunpack.c.l.b16 %v1666
        %v2418 = vunpack.c.h.b16 %v1666
        %v2419 = vunpack.c.l.b16 %v1667
        %v2420 = vunpack.c.h.b16 %v1667
        %v2421 = vunpack.c.l.b16 %v1668
        %v2422 = vunpack.c.h.b16 %v1668
        %v2423 = vunpack.c.l.b16 %v1669
        %v2424 = vunpack.c.h.b16 %v1669
        %v2425 = vunpack.c.l.b16 %v1670
        %v2426 = vunpack.c.h.b16 %v1670
        %v2427 = vunpack.c.l.b16 %v1671
        %v2428 = vunpack.c.h.b16 %v1671
        %v2429 = vunpack.c.l.b16 %v1672
        %v2430 = vunpack.c.h.b16 %v1672
        %v2431 = vunpack.c.l.b16 %v1673
        %v2432 = vunpack.c.h.b16 %v1673
        %v2433 = vunpack.c.l.b16 %v1674
        %v2434 = vunpack.c.h.b16 %v1674
        %v2435 = vunpack.c.l.b16 %v1675
        %v2436 = vunpack.c.h.b16 %v1675
        %v2437 = vunpack.c.l.b16 %v1676
        %v2438 = vunpack.c.h.b16 %v1676
        %v2439 = vunpack.c.l.b16 %v1677
        %v2440 = vunpack.c.h.b16 %v1677
        %v2441 = vunpack.c.l.b16 %v1678
        %v2442 = vunpack.c.h.b16 %v1678
        %v2443 = vunpack.c.l.b16 %v1679
        %v2444 = vunpack.c.h.b16 %v1679
        %v2445 = vunpack.c.l.b16 %v1680
        %v2446 = vunpack.c.h.b16 %v1680
        %v2447 = vunpack.c.l.b16 %v1681
        %v2448 = vunpack.c.h.b16 %v1681
        %v2449 = vunpack.c.l.b16 %v1682
        %v2450 = vunpack.c.h.b16 %v1682
        %v2451 = vunpack.c.l.b16 %v1683
        %v2452 = vunpack.c.h.b16 %v1683
        %v2453 = vunpack.c.l.b16 %v1684
        %v2454 = vunpack.c.h.b16 %v1684
        %v2455 = vunpack.c.l.b16 %v1685
        %v2456 = vunpack.c.h.b16 %v1685
        %v2457 = vunpack.c.l.b16 %v1686
        %v2458 = vunpack.c.h.b16 %v1686
        %v2459 = vunpack.c.l.b16 %v1687
        %v2460 = vunpack.c.h.b16 %v1687
        %v2461 = vunpack.c.l.b16 %v1688
        %v2462 = vunpack.c.h.b16 %v1688
        %v2463 = vunpack.c.l.b16 %v1689
        %v2464 = vunpack.c.h.b16 %v1689
        %v2465 = vunpack.c.l.b16 %v1690
        %v2466 = vunpack.c.h.b16 %v1690
        %v2467 = vunpack.c.l.b16 %v1691
        %v2468 = vunpack.c.h.b16 %v1691
        %v2469 = vunpack.c.l.b16 %v1692
        %v2470 = vunpack.c.h.b16 %v1692
        %v2471 = vunpack.c.l.b16 %v1693
        %v2472 = vunpack.c.h.b16 %v1693
        %v2473 = vunpack.c.l.b16 %v1694
        %v2474 = vunpack.c.h.b16 %v1694
        %v2475 = vunpack.c.l.b16 %v1695
        %v2476 = vunpack.c.h.b16 %v1695
        %v2477 = vunpack.c.l.b16 %v1696
        %v2478 = vunpack.c.h.b16 %v1696
        %v2479 = vunpack.c.l.b16 %v1697
        %v2480 = vunpack.c.h.b16 %v1697
        %v2481 = vunpack.c.l.b16 %v1698
        %v2482 = vunpack.c.h.b16 %v1698
        %v2483 = vunpack.c.l.b16 %v1699
        %v2484 = vunpack.c.h.b16 %v1699
        %v2485 = vunpack.c.l.b16 %v1700
        %v2486 = vunpack.c.h.b16 %v1700
        %v2487 = vunpack.c.l.b16 %v1701
        %v2488 = vunpack.c.h.b16 %v1701
        %v2489 = vunpack.c.l.b16 %v1702
        %v2490 = vunpack.c.h.b16 %v1702
        %v2491 = vunpack.c.l.b16 %v1703
        %v2492 = vunpack.c.h.b16 %v1703
        %v2493 = vunpack.c.l.b16 %v1704
        %v2494 = vunpack.c.h.b16 %v1704
        %v2495 = vunpack.c.l.b16 %v1705
        %v2496 = vunpack.c.h.b16 %v1705
        %v2497 = vunpack.c.l.b16 %v1706
        %v2498 = vunpack.c.h.b16 %v1706
        %v2499 = vunpack.c.l.b16 %v1707
        %v2500 = vunpack.c.h.b16 %v1707
        %v2501 = vunpack.c.l.b16 %v1708
        %v2502 = vunpack.c.h.b16 %v1708
        %v2503 = vunpack.c.l.b16 %v1709
        %v2504 = vunpack.c.h.b16 %v1709
        %v2505 = vunpack.c.l.b16 %v1710
        %v2506 = vunpack.c.h.b16 %v1710
        %v2507 = vunpack.c.l.b16 %v1711
        %v2508 = vunpack.c.h.b16 %v1711
        %v2509 = vunpack.c.l.b16 %v1712
        %v2510 = vunpack.c.h.b16 %v1712
        %v2511 = vunpack.c.l.b16 %v1713
        %v2512 = vunpack.c.h.b16 %v1713
        %v2513 = vunpack.c.l.b16 %v1714
        %v2514 = vunpack.c.h.b16 %v1714
        %v2515 = vunpack.c.l.b16 %v1715
        %v2516 = vunpack.c.h.b16 %v1715
        %v2517 = vunpack.c.l.b16 %v1716
        %v2518 = vunpack.c.h.b16 %v1716
        %v2519 = vunpack.c.l.b16 %v1717
        %v2520 = vunpack.c.h.b16 %v1717
        %v2521 = vunpack.c.l.b16 %v1718
        %v2522 = vunpack.c.h.b16 %v1718
        %v2523 = vunpack.c.l.b16 %v1719
        %v2524 = vunpack.c.h.b16 %v1719
        %v2525 = vunpack.c.l.b16 %v1720
        %v2526 = vunpack.c.h.b16 %v1720
        %v2527 = vunpack.c.l.b16 %v1721
        %v2528 = vunpack.c.h.b16 %v1721
        %v2529 = vunpack.c.l.b16 %v1722
        %v2530 = vunpack.c.h.b16 %v1722
        %v2531 = vunpack.c.l.b16 %v1723
        %v2532 = vunpack.c.h.b16 %v1723
        %v2533 = vunpack.c.l.b16 %v1724
        %v2534 = vunpack.c.h.b16 %v1724
        %v2535 = vpack.c.b16 %v2031, %v2023
        %v2536 = vpack.c.b16 %v2032, %v2024
        %v2537 = vpack.c.b16 %v2033, %v2025
        %v2538 = vpack.c.b16 %v2034, %v2026
        %v2539 = vpack.c.b16 %v2035, %v2027
        %v2540 = vpack.c.b16 %v2036, %v2028
        %v2541 = vpack.c.b16 %v2037, %v2029
        %v2542 = vpack.c.b16 %v2038, %v2030
        %v2543 = vpack.c.b16 %v2047, %v2039
        %v2544 = vpack.c.b16 %v2048, %v2040
        %v2545 = vpack.c.b16 %v2049, %v2041
        %v2546 = vpack.c.b16 %v2050, %v2042
        %v2547 = vpack.c.b16 %v2051, %v2043
        %v2548 = vpack.c.b16 %v2052, %v2044
        %v2549 = vpack.c.b16 %v2053, %v2045
        %v2550 = vpack.c.b16 %v2054, %v2046
        %v2551 = vpack.c.b16 %v2063, %v2055
        %v2552 = vpack.c.b16 %v2064, %v2056
        %v2553 = vpack.c.b16 %v2065, %v2057
        %v2554 = vpack.c.b16 %v2066, %v2058
        %v2555 = vpack.c.b16 %v2067, %v2059
        %v2556 = vpack.c.b16 %v2068, %v2060
        %v2557 = vpack.c.b16 %v2069, %v2061
        %v2558 = vpack.c.b16 %v2070, %v2062
        %v2559 = vpack.c.b16 %v2079, %v2071
        %v2560 = vpack.c.b16 %v2080, %v2072
        %v2561 = vpack.c.b16 %v2081, %v2073
        %v2562 = vpack.c.b16 %v2082, %v2074
        %v2563 = vpack.c.b16 %v2083, %v2075
        %v2564 = vpack.c.b16 %v2084, %v2076
        %v2565 = vpack.c.b16 %v2085, %v2077
        %v2566 = vpack.c.b16 %v2086, %v2078
        %v2567 = vpack.c.b16 %v2095, %v2087
        %v2568 = vpack.c.b16 %v2096, %v2088
        %v2569 = vpack.c.b16 %v2097, %v2089
        %v2570 = vpack.c.b16 %v2098, %v2090
        %v2571 = vpack.c.b16 %v2099, %v2091
        %v2572 = vpack.c.b16 %v2100, %v2092
        %v2573 = vpack.c.b16 %v2101, %v2093
        %v2574 = vpack.c.b16 %v2102, %v2094
        %v2575 = vpack.c.b16 %v2111, %v2103
        %v2576 = vpack.c.b16 %v2112, %v2104
        %v2577 = vpack.c.b16 %v2113, %v2105
        %v2578 = vpack.c.b16 %v2114, %v2106
        %v2579 = vpack.c.b16 %v2115, %v2107
        %v2580 = vpack.c.b16 %v2116, %v2108
        %v2581 = vpack.c.b16 %v2117, %v2109
        %v2582 = vpack.c.b16 %v2118, %v2110
        %v2583 = vpack.c.b16 %v2127, %v2119
        %v2584 = vpack.c.b16 %v2128, %v2120
        %v2585 = vpack.c.b16 %v2129, %v2121
        %v2586 = vpack.c.b16 %v2130, %v2122
        %v2587 = vpack.c.b16 %v2131, %v2123
        %v2588 = vpack.c.b16 %v2132, %v2124
        %v2589 = vpack.c.b16 %v2133, %v2125
        %v2590 = vpack.c.b16 %v2134, %v2126
        %v2591 = vpack.c.b16 %v2143, %v2135
        %v2592 = vpack.c.b16 %v2144, %v2136
        %v2593 = vpack.c.b16 %v2145, %v2137
        %v2594 = vpack.c.b16 %v2146, %v2138
        %v2595 = vpack.c.b16 %v2147, %v2139
        %v2596 = vpack.c.b16 %v2148, %v2140
        %v2597 = vpack.c.b16 %v2149, %v2141
        %v2598 = vpack.c.b16 %v2150, %v2142
        %v2599 = vpack.c.b16 %v2159, %v2151
        %v2600 = vpack.c.b16 %v2160, %v2152
        %v2601 = vpack.c.b16 %v2161, %v2153
        %v2602 = vpack.c.b16 %v2162, %v2154
        %v2603 = vpack.c.b16 %v2163, %v2155
        %v2604 = vpack.c.b16 %v2164, %v2156
        %v2605 = vpack.c.b16 %v2165, %v2157
        %v2606 = vpack.c.b16 %v2166, %v2158
        %v2607 = vpack.c.b16 %v2175, %v2167
        %v2608 = vpack.c.b16 %v2176, %v2168
        %v2609 = vpack.c.b16 %v2177, %v2169
        %v2610 = vpack.c.b16 %v2178, %v2170
        %v2611 = vpack.c.b16 %v2179, %v2171
        %v2612 = vpack.c.b16 %v2180, %v2172
        %v2613 = vpack.c.b16 %v2181, %v2173
        %v2614 = vpack.c.b16 %v2182, %v2174
        %v2615 = vpack.c.b16 %v2191, %v2183
        %v2616 = vpack.c.b16 %v2192, %v2184
        %v2617 = vpack.c.b16 %v2193, %v2185
        %v2618 = vpack.c.b16 %v2194, %v2186
        %v2619 = vpack.c.b16 %v2195, %v2187
        %v2620 = vpack.c.b16 %v2196, %v2188
        %v2621 = vpack.c.b16 %v2197, %v2189
        %v2622 = vpack.c.b16 %v2198, %v2190
        %v2623 = vpack.c.b16 %v2207, %v2199
        %v2624 = vpack.c.b16 %v2208, %v2200
        %v2625 = vpack.c.b16 %v2209, %v2201
        %v2626 = vpack.c.b16 %v2210, %v2202
        %v2627 = vpack.c.b16 %v2211, %v2203
        %v2628 = vpack.c.b16 %v2212, %v2204
        %v2629 = vpack.c.b16 %v2213, %v2205
        %v2630 = vpack.c.b16 %v2214, %v2206
        %v2631 = vpack.c.b16 %v2223, %v2215
        %v2632 = vpack.c.b16 %v2224, %v2216
        %v2633 = vpack.c.b16 %v2225, %v2217
        %v2634 = vpack.c.b16 %v2226, %v2218
        %v2635 = vpack.c.b16 %v2227, %v2219
        %v2636 = vpack.c.b16 %v2228, %v2220
        %v2637 = vpack.c.b16 %v2229, %v2221
        %v2638 = vpack.c.b16 %v2230, %v2222
        %v2639 = vpack.c.b16 %v2239, %v2231
        %v2640 = vpack.c.b16 %v2240, %v2232
        %v2641 = vpack.c.b16 %v2241, %v2233
        %v2642 = vpack.c.b16 %v2242, %v2234
        %v2643 = vpack.c.b16 %v2243, %v2235
        %v2644 = vpack.c.b16 %v2244, %v2236
        %v2645 = vpack.c.b16 %v2245, %v2237
        %v2646 = vpack.c.b16 %v2246, %v2238
        %v2647 = vpack.c.b16 %v2255, %v2247
        %v2648 = vpack.c.b16 %v2256, %v2248
        %v2649 = vpack.c.b16 %v2257, %v2249
        %v2650 = vpack.c.b16 %v2258, %v2250
        %v2651 = vpack.c.b16 %v2259, %v2251
        %v2652 = vpack.c.b16 %v2260, %v2252
        %v2653 = vpack.c.b16 %v2261, %v2253
        %v2654 = vpack.c.b16 %v2262, %v2254
        %v2655 = vpack.c.b16 %v2271, %v2263
        %v2656 = vpack.c.b16 %v2272, %v2264
        %v2657 = vpack.c.b16 %v2273, %v2265
        %v2658 = vpack.c.b16 %v2274, %v2266
        %v2659 = vpack.c.b16 %v2275, %v2267
        %v2660 = vpack.c.b16 %v2276, %v2268
        %v2661 = vpack.c.b16 %v2277, %v2269
        %v2662 = vpack.c.b16 %v2278, %v2270
        %v2663 = vpack.c.b16 %v2287, %v2279
        %v2664 = vpack.c.b16 %v2288, %v2280
        %v2665 = vpack.c.b16 %v2289, %v2281
        %v2666 = vpack.c.b16 %v2290, %v2282
        %v2667 = vpack.c.b16 %v2291, %v2283
        %v2668 = vpack.c.b16 %v2292, %v2284
        %v2669 = vpack.c.b16 %v2293, %v2285
        %v2670 = vpack.c.b16 %v2294, %v2286
        %v2671 = vpack.c.b16 %v2303, %v2295
        %v2672 = vpack.c.b16 %v2304, %v2296
        %v2673 = vpack.c.b16 %v2305, %v2297
        %v2674 = vpack.c.b16 %v2306, %v2298
        %v2675 = vpack.c.b16 %v2307, %v2299
        %v2676 = vpack.c.b16 %v2308, %v2300
        %v2677 = vpack.c.b16 %v2309, %v2301
        %v2678 = vpack.c.b16 %v2310, %v2302
        %v2679 = vpack.c.b16 %v2319, %v2311
        %v2680 = vpack.c.b16 %v2320, %v2312
        %v2681 = vpack.c.b16 %v2321, %v2313
        %v2682 = vpack.c.b16 %v2322, %v2314
        %v2683 = vpack.c.b16 %v2323, %v2315
        %v2684 = vpack.c.b16 %v2324, %v2316
        %v2685 = vpack.c.b16 %v2325, %v2317
        %v2686 = vpack.c.b16 %v2326, %v2318
        %v2687 = vpack.c.b16 %v2335, %v2327
        %v2688 = vpack.c.b16 %v2336, %v2328
        %v2689 = vpack.c.b16 %v2337, %v2329
        %v2690 = vpack.c.b16 %v2338, %v2330
        %v2691 = vpack.c.b16 %v2339, %v2331
        %v2692 = vpack.c.b16 %v2340, %v2332
        %v2693 = vpack.c.b16 %v2341, %v2333
        %v2694 = vpack.c.b16 %v2342, %v2334
        %v2695 = vpack.c.b16 %v2351, %v2343
        %v2696 = vpack.c.b16 %v2352, %v2344
        %v2697 = vpack.c.b16 %v2353, %v2345
        %v2698 = vpack.c.b16 %v2354, %v2346
        %v2699 = vpack.c.b16 %v2355, %v2347
        %v2700 = vpack.c.b16 %v2356, %v2348
        %v2701 = vpack.c.b16 %v2357, %v2349
        %v2702 = vpack.c.b16 %v2358, %v2350
        %v2703 = vpack.c.b16 %v2367, %v2359
        %v2704 = vpack.c.b16 %v2368, %v2360
        %v2705 = vpack.c.b16 %v2369, %v2361
        %v2706 = vpack.c.b16 %v2370, %v2362
        %v2707 = vpack.c.b16 %v2371, %v2363
        %v2708 = vpack.c.b16 %v2372, %v2364
        %v2709 = vpack.c.b16 %v2373, %v2365
        %v2710 = vpack.c.b16 %v2374, %v2366
        %v2711 = vpack.c.b16 %v2383, %v2375
        %v2712 = vpack.c.b16 %v2384, %v2376
        %v2713 = vpack.c.b16 %v2385, %v2377
        %v2714 = vpack.c.b16 %v2386, %v2378
        %v2715 = vpack.c.b16 %v2387, %v2379
        %v2716 = vpack.c.b16 %v2388, %v2380
        %v2717 = vpack.c.b16 %v2389, %v2381
        %v2718 = vpack.c.b16 %v2390, %v2382
        %v2719 = vpack.c.b16 %v2399, %v2391
        %v2720 = vpack.c.b16 %v2400, %v2392
        %v2721 = vpack.c.b16 %v2401, %v2393
        %v2722 = vpack.c.b16 %v2402, %v2394
        %v2723 = vpack.c.b16 %v2403, %v2395
        %v2724 = vpack.c.b16 %v2404, %v2396
        %v2725 = vpack.c.b16 %v2405, %v2397
        %v2726 = vpack.c.b16 %v2406, %v2398
        %v2727 = vpack.c.b16 %v2415, %v2407
        %v2728 = vpack.c.b16 %v2416, %v2408
        %v2729 = vpack.c.b16 %v2417, %v2409
        %v2730 = vpack.c.b16 %v2418, %v2410
        %v2731 = vpack.c.b16 %v2419, %v2411
        %v2732 = vpack.c.b16 %v2420, %v2412
        %v2733 = vpack.c.b16 %v2421, %v2413
        %v2734 = vpack.c.b16 %v2422, %v2414
        %v2735 = vpack.c.b16 %v2431, %v2423
        %v2736 = vpack.c.b16 %v2432, %v2424
        %v2737 = vpack.c.b16 %v2433, %v2425
        %v2738 = vpack.c.b16 %v2434, %v2426
        %v2739 = vpack.c.b16 %v2435, %v2427
        %v2740 = vpack.c.b16 %v2436, %v2428
        %v2741 = vpack.c.b16 %v2437, %v2429
        %v2742 = vpack.c.b16 %v2438, %v2430
        %v2743 = vpack.c.b16 %v2447, %v2439
        %v2744 = vpack.c.b16 %v2448, %v2440
        %v2745 = vpack.c.b16 %v2449, %v2441
        %v2746 = vpack.c.b16 %v2450, %v2442
        %v2747 = vpack.c.b16 %v2451, %v2443
        %v2748 = vpack.c.b16 %v2452, %v2444
        %v2749 = vpack.c.b16 %v2453, %v2445
        %v2750 = vpack.c.b16 %v2454, %v2446
        %v2751 = vpack.c.b16 %v2463, %v2455
        %v2752 = vpack.c.b16 %v2464, %v2456
        %v2753 = vpack.c.b16 %v2465, %v2457
        %v2754 = vpack.c.b16 %v2466, %v2458
        %v2755 = vpack.c.b16 %v2467, %v2459
        %v2756 = vpack.c.b16 %v2468, %v2460
        %v2757 = vpack.c.b16 %v2469, %v2461
        %v2758 = vpack.c.b16 %v2470, %v2462
        %v2759 = vpack.c.b16 %v2479, %v2471
        %v2760 = vpack.c.b16 %v2480, %v2472
        %v2761 = vpack.c.b16 %v2481, %v2473
        %v2762 = vpack.c.b16 %v2482, %v2474
        %v2763 = vpack.c.b16 %v2483, %v2475
        %v2764 = vpack.c.b16 %v2484, %v2476
        %v2765 = vpack.c.b16 %v2485, %v2477
        %v2766 = vpack.c.b16 %v2486, %v2478
        %v2767 = vpack.c.b16 %v2495, %v2487
        %v2768 = vpack.c.b16 %v2496, %v2488
        %v2769 = vpack.c.b16 %v2497, %v2489
        %v2770 = vpack.c.b16 %v2498, %v2490
        %v2771 = vpack.c.b16 %v2499, %v2491
        %v2772 = vpack.c.b16 %v2500, %v2492
        %v2773 = vpack.c.b16 %v2501, %v2493
        %v2774 = vpack.c.b16 %v2502, %v2494
        %v2775 = vpack.c.b16 %v2511, %v2503
        %v2776 = vpack.c.b16 %v2512, %v2504
        %v2777 = vpack.c.b16 %v2513, %v2505
        %v2778 = vpack.c.b16 %v2514, %v2506
        %v2779 = vpack.c.b16 %v2515, %v2507
        %v2780 = vpack.c.b16 %v2516, %v2508
        %v2781 = vpack.c.b16 %v2517, %v2509
        %v2782 = vpack.c.b16 %v2518, %v2510
        %v2783 = vpack.c.b16 %v2527, %v2519
        %v2784 = vpack.c.b16 %v2528, %v2520
        %v2785 = vpack.c.b16 %v2529, %v2521
        %v2786 = vpack.c.b16 %v2530, %v2522
        %v2787 = vpack.c.b16 %v2531, %v2523
        %v2788 = vpack.c.b16 %v2532, %v2524
        %v2789 = vpack.c.b16 %v2533, %v2525
        %v2790 = vpack.c.b16 %v2534, %v2526
        %3047 = vmatprep.subr.bf16.mxu0 %v2536
        %3048 = vmatpush1.bf16.msra.mxu0 %v2535
        %3049 = vmatprep.subr.bf16.mxu0 %v2544
        %3050 = vmatpush1.bf16.msra.mxu0 %v2543
        %3051 = vmatprep.subr.bf16.mxu0 %v2552
        %3052 = vmatpush1.bf16.msra.mxu0 %v2551
        %3053 = vmatprep.subr.bf16.mxu0 %v2560
        %3054 = vmatpush1.bf16.msra.mxu0 %v2559
        %3055 = vmatprep.subr.bf16.mxu0 %v2568
        %3056 = vmatpush1.bf16.msra.mxu0 %v2567
        %3057 = vmatprep.subr.bf16.mxu0 %v2576
        %3058 = vmatpush1.bf16.msra.mxu0 %v2575
        %3059 = vmatprep.subr.bf16.mxu0 %v2584
        %3060 = vmatpush1.bf16.msra.mxu0 %v2583
        %3061 = vmatprep.subr.bf16.mxu0 %v2592
        %3062 = vmatpush1.bf16.msra.mxu0 %v2591
        %3063 = vmatprep.subr.bf16.mxu0 %v2600
        %3064 = vmatpush1.bf16.msra.mxu0 %v2599
        %3065 = vmatprep.subr.bf16.mxu0 %v2608
        %3066 = vmatpush1.bf16.msra.mxu0 %v2607
        %3067 = vmatprep.subr.bf16.mxu0 %v2616
        %3068 = vmatpush1.bf16.msra.mxu0 %v2615
        %3069 = vmatprep.subr.bf16.mxu0 %v2624
        %3070 = vmatpush1.bf16.msra.mxu0 %v2623
        %3071 = vmatprep.subr.bf16.mxu0 %v2632
        %3072 = vmatpush1.bf16.msra.mxu0 %v2631
        %3073 = vmatprep.subr.bf16.mxu0 %v2640
        %3074 = vmatpush1.bf16.msra.mxu0 %v2639
        %3075 = vmatprep.subr.bf16.mxu0 %v2648
        %3076 = vmatpush1.bf16.msra.mxu0 %v2647
        %3077 = vmatprep.subr.bf16.mxu0 %v2656
        %3078 = vmatpush1.bf16.msra.mxu0 %v2655
        %3079 = vmatprep.mubr.bf16.mxu0 %v1438
        %3080 = vmatmul.mubr.bf16.gmra.mrb[0].mxu0 %v1437
        %v3081 = vpop.f32.mrb[0].mxu0
        %v3082 = vadd.f32 %v1730, %v3081
        %v3083 = vpop.f32.mrb[0].mxu0
        %v3084 = vadd.f32 %v1734, %v3083
        %v3085 = vpop.f32.mrb[0].mxu0
        %v3086 = vadd.f32 %v1730, %v3085
        %v3087 = vpop.f32.mrb[0].mxu0
        %v3088 = vadd.f32 %v1734, %v3087
        %3089 = vmatprep.mubr.bf16.mxu0 %v1442
        %3090 = vmatmul.mubr.bf16.gmra.mrb[0].mxu0 %v1441
        %v3091 = vpop.f32.mrb[0].mxu0
        %v3092 = vadd.f32 %v1730, %v3091
        %v3093 = vpop.f32.mrb[0].mxu0
        %v3094 = vadd.f32 %v1734, %v3093
        %v3095 = vpop.f32.mrb[0].mxu0
        %v3096 = vadd.f32 %v1730, %v3095
        %v3097 = vpop.f32.mrb[0].mxu0
        %v3098 = vadd.f32 %v1734, %v3097
        %3099 = vmatprep.mubr.bf16.mxu0 %v1446
        %3100 = vmatmul.mubr.bf16.gmra.mrb[0].mxu0 %v1445
        %v3101 = vpop.f32.mrb[0].mxu0
        %v3102 = vadd.f32 %v1730, %v3101
        %v3103 = vpop.f32.mrb[0].mxu0
        %v3104 = vadd.f32 %v1734, %v3103
        %v3105 = vpop.f32.mrb[0].mxu0
        %v3106 = vadd.f32 %v1730, %v3105
        %v3107 = vpop.f32.mrb[0].mxu0
        %v3108 = vadd.f32 %v1734, %v3107
        %3109 = vmatprep.mubr.bf16.mxu0 %v1450
        %3110 = vmatmul.mubr.bf16.gmra.mrb[0].mxu0 %v1449
        %v3111 = vpop.f32.mrb[0].mxu0
        %v3112 = vadd.f32 %v1730, %v3111
        %v3113 = vpop.f32.mrb[0].mxu0
        %v3114 = vadd.f32 %v1734, %v3113
        %v3115 = vpop.f32.mrb[0].mxu0
        %v3116 = vadd.f32 %v1730, %v3115
        %v3117 = vpop.f32.mrb[0].mxu0
        %v3118 = vadd.f32 %v1734, %v3117
        %3119 = vmatprep.mubr.bf16.mxu0 %v1454
        %3120 = vmatmul.mubr.bf16.gmra.mrb[0].mxu0 %v1453
        %v3121 = vpop.f32.mrb[0].mxu0
        %v3122 = vadd.f32 %v1730, %v3121
        %v3123 = vpop.f32.mrb[0].mxu0
        %v3124 = vadd.f32 %v1734, %v3123
        %v3125 = vpop.f32.mrb[0].mxu0
        %v3126 = vadd.f32 %v1730, %v3125
        %v3127 = vpop.f32.mrb[0].mxu0
        %v3128 = vadd.f32 %v1734, %v3127
        %3129 = vmatprep.mubr.bf16.mxu0 %v1458
        %3130 = vmatmul.mubr.bf16.gmra.mrb[0].mxu0 %v1457
        %v3131 = vpop.f32.mrb[0].mxu0
        %v3132 = vadd.f32 %v1730, %v3131
        %v3133 = vpop.f32.mrb[0].mxu0
        %v3134 = vadd.f32 %v1734, %v3133
        %v3135 = vpop.f32.mrb[0].mxu0
        %v3136 = vadd.f32 %v1730, %v3135
        %v3137 = vpop.f32.mrb[0].mxu0
        %v3138 = vadd.f32 %v1734, %v3137
        %3139 = vmatprep.mubr.bf16.mxu0 %v1462
        %3140 = vmatmul.mubr.bf16.gmra.mrb[0].mxu0 %v1461
        %v3141 = vpop.f32.mrb[0].mxu0
        %v3142 = vadd.f32 %v1730, %v3141
        %v3143 = vpop.f32.mrb[0].mxu0
        %v3144 = vadd.f32 %v1734, %v3143
        %v3145 = vpop.f32.mrb[0].mxu0
        %v3146 = vadd.f32 %v1730, %v3145
        %v3147 = vpop.f32.mrb[0].mxu0
        %v3148 = vadd.f32 %v1734, %v3147
        %3149 = vmatprep.mubr.bf16.mxu0 %v1466
        %3150 = vmatmul.mubr.bf16.gmra.mrb[0].mxu0 %v1465
        %v3151 = vpop.f32.mrb[0].mxu0
        %v3152 = vadd.f32 %v1730, %v3151
        %v3153 = vpop.f32.mrb[0].mxu0
        %v3154 = vadd.f32 %v1734, %v3153
        %v3155 = vpop.f32.mrb[0].mxu0
        %v3156 = vadd.f32 %v1730, %v3155
        %v3157 = vpop.f32.mrb[0].mxu0
        %v3158 = vadd.f32 %v1734, %v3157
        %3159 = vdwg.mxu0
        %3160 = vmatprep.subr.bf16.mxu0 %v2664
        %3161 = vmatpush1.bf16.msra.mxu0 %v2663
        %3162 = vmatprep.subr.bf16.mxu0 %v2672
        %3163 = vmatpush1.bf16.msra.mxu0 %v2671
        %3164 = vmatprep.subr.bf16.mxu0 %v2680
        %3165 = vmatpush1.bf16.msra.mxu0 %v2679
        %3166 = vmatprep.subr.bf16.mxu0 %v2688
        %3167 = vmatpush1.bf16.msra.mxu0 %v2687
        %3168 = vmatprep.subr.bf16.mxu0 %v2696
        %3169 = vmatpush1.bf16.msra.mxu0 %v2695
        %3170 = vmatprep.subr.bf16.mxu0 %v2704
        %3171 = vmatpush1.bf16.msra.mxu0 %v2703
        %3172 = vmatprep.subr.bf16.mxu0 %v2712
        %3173 = vmatpush1.bf16.msra.mxu0 %v2711
        %3174 = vmatprep.subr.bf16.mxu0 %v2720
        %3175 = vmatpush1.bf16.msra.mxu0 %v2719
        %3176 = vmatprep.subr.bf16.mxu0 %v2728
        %3177 = vmatpush1.bf16.msra.mxu0 %v2727
        %3178 = vmatprep.subr.bf16.mxu0 %v2736
        %3179 = vmatpush1.bf16.msra.mxu0 %v2735
        %3180 = vmatprep.subr.bf16.mxu0 %v2744
        %3181 = vmatpush1.bf16.msra.mxu0 %v2743
        %3182 = vmatprep.subr.bf16.mxu0 %v2752
        %3183 = vmatpush1.bf16.msra.mxu0 %v2751
        %3184 = vmatprep.subr.bf16.mxu0 %v2760
        %3185 = vmatpush1.bf16.msra.mxu0 %v2759
        %3186 = vmatprep.subr.bf16.mxu0 %v2768
        %3187 = vmatpush1.bf16.msra.mxu0 %v2767
        %3188 = vmatprep.subr.bf16.mxu0 %v2776
        %3189 = vmatpush1.bf16.msra.mxu0 %v2775
        %3190 = vmatprep.subr.bf16.mxu0 %v2784
        %3191 = vmatpush1.bf16.msra.mxu0 %v2783
        %3192 = vmatprep.mubr.bf16.mxu0 %v1440
        %3193 = vmatmul.mubr.bf16.gmra.mrb[0].mxu0 %v1439
        %v3194 = vpop.f32.mrb[0].mxu0
        %v3195 = vadd.f32 %v3082, %v3194
        %v3196 = vpop.f32.mrb[0].mxu0
        %v3197 = vadd.f32 %v3084, %v3196
        %v3198 = vpop.f32.mrb[0].mxu0
        %v3199 = vadd.f32 %v3086, %v3198
        %v3200 = vpop.f32.mrb[0].mxu0
        %v3201 = vadd.f32 %v3088, %v3200
        %3202 = vmatprep.mubr.bf16.mxu0 %v1444
        %3203 = vmatmul.mubr.bf16.gmra.mrb[0].mxu0 %v1443
        %v3204 = vpop.f32.mrb[0].mxu0
        %v3205 = vadd.f32 %v3092, %v3204
        %v3206 = vpop.f32.mrb[0].mxu0
        %v3207 = vadd.f32 %v3094, %v3206
        %v3208 = vpop.f32.mrb[0].mxu0
        %v3209 = vadd.f32 %v3096, %v3208
        %v3210 = vpop.f32.mrb[0].mxu0
        %v3211 = vadd.f32 %v3098, %v3210
        %3212 = vmatprep.mubr.bf16.mxu0 %v1448
        %3213 = vmatmul.mubr.bf16.gmra.mrb[0].mxu0 %v1447
        %v3214 = vpop.f32.mrb[0].mxu0
        %v3215 = vadd.f32 %v3102, %v3214
        %v3216 = vpop.f32.mrb[0].mxu0
        %v3217 = vadd.f32 %v3104, %v3216
        %v3218 = vpop.f32.mrb[0].mxu0
        %v3219 = vadd.f32 %v3106, %v3218
        %v3220 = vpop.f32.mrb[0].mxu0
        %v3221 = vadd.f32 %v3108, %v3220
        %3222 = vmatprep.mubr.bf16.mxu0 %v1452
        %3223 = vmatmul.mubr.bf16.gmra.mrb[0].mxu0 %v1451
        %v3224 = vpop.f32.mrb[0].mxu0
        %v3225 = vadd.f32 %v3112, %v3224
        %v3226 = vpop.f32.mrb[0].mxu0
        %v3227 = vadd.f32 %v3114, %v3226
        %v3228 = vpop.f32.mrb[0].mxu0
        %v3229 = vadd.f32 %v3116, %v3228
        %v3230 = vpop.f32.mrb[0].mxu0
        %v3231 = vadd.f32 %v3118, %v3230
        %3232 = vmatprep.mubr.bf16.mxu0 %v1456
        %3233 = vmatmul.mubr.bf16.gmra.mrb[0].mxu0 %v1455
        %v3234 = vpop.f32.mrb[0].mxu0
        %v3235 = vadd.f32 %v3122, %v3234
        %v3236 = vpop.f32.mrb[0].mxu0
        %v3237 = vadd.f32 %v3124, %v3236
        %v3238 = vpop.f32.mrb[0].mxu0
        %v3239 = vadd.f32 %v3126, %v3238
        %v3240 = vpop.f32.mrb[0].mxu0
        %v3241 = vadd.f32 %v3128, %v3240
        %3242 = vmatprep.mubr.bf16.mxu0 %v1460
        %3243 = vmatmul.mubr.bf16.gmra.mrb[0].mxu0 %v1459
        %v3244 = vpop.f32.mrb[0].mxu0
        %v3245 = vadd.f32 %v3132, %v3244
        %v3246 = vpop.f32.mrb[0].mxu0
        %v3247 = vadd.f32 %v3134, %v3246
        %v3248 = vpop.f32.mrb[0].mxu0
        %v3249 = vadd.f32 %v3136, %v3248
        %v3250 = vpop.f32.mrb[0].mxu0
        %v3251 = vadd.f32 %v3138, %v3250
        %3252 = vmatprep.mubr.bf16.mxu0 %v1464
        %3253 = vmatmul.mubr.bf16.gmra.mrb[0].mxu0 %v1463
        %v3254 = vpop.f32.mrb[0].mxu0
        %v3255 = vadd.f32 %v3142, %v3254
        %v3256 = vpop.f32.mrb[0].mxu0
        %v3257 = vadd.f32 %v3144, %v3256
        %v3258 = vpop.f32.mrb[0].mxu0
        %v3259 = vadd.f32 %v3146, %v3258
        %v3260 = vpop.f32.mrb[0].mxu0
        %v3261 = vadd.f32 %v3148, %v3260
        %3262 = vmatprep.mubr.bf16.mxu0 %v1468
        %3263 = vmatmul.mubr.bf16.gmra.mrb[0].mxu0 %v1467
        %v3264 = vpop.f32.mrb[0].mxu0
        %v3265 = vadd.f32 %v3152, %v3264
        %v3266 = vpop.f32.mrb[0].mxu0
        %v3267 = vadd.f32 %v3154, %v3266
        %v3268 = vpop.f32.mrb[0].mxu0
        %v3269 = vadd.f32 %v3156, %v3268
        %v3270 = vpop.f32.mrb[0].mxu0
        %v3271 = vadd.f32 %v3158, %v3270
        %3272 = vdwg.mxu0
        %3273 = vmatprep.subr.bf16.mxu0 %v2538
        %3274 = vmatpush1.bf16.msra.mxu0 %v2537
        %3275 = vmatprep.subr.bf16.mxu0 %v2546
        %3276 = vmatpush1.bf16.msra.mxu0 %v2545
        %3277 = vmatprep.subr.bf16.mxu0 %v2554
        %3278 = vmatpush1.bf16.msra.mxu0 %v2553
        %3279 = vmatprep.subr.bf16.mxu0 %v2562
        %3280 = vmatpush1.bf16.msra.mxu0 %v2561
        %3281 = vmatprep.subr.bf16.mxu0 %v2570
        %3282 = vmatpush1.bf16.msra.mxu0 %v2569
        %3283 = vmatprep.subr.bf16.mxu0 %v2578
        %3284 = vmatpush1.bf16.msra.mxu0 %v2577
        %3285 = vmatprep.subr.bf16.mxu0 %v2586
        %3286 = vmatpush1.bf16.msra.mxu0 %v2585
        %3287 = vmatprep.subr.bf16.mxu0 %v2594
        %3288 = vmatpush1.bf16.msra.mxu0 %v2593
        %3289 = vmatprep.subr.bf16.mxu0 %v2602
        %3290 = vmatpush1.bf16.msra.mxu0 %v2601
        %3291 = vmatprep.subr.bf16.mxu0 %v2610
        %3292 = vmatpush1.bf16.msra.mxu0 %v2609
        %3293 = vmatprep.subr.bf16.mxu0 %v2618
        %3294 = vmatpush1.bf16.msra.mxu0 %v2617
        %3295 = vmatprep.subr.bf16.mxu0 %v2626
        %3296 = vmatpush1.bf16.msra.mxu0 %v2625
        %3297 = vmatprep.subr.bf16.mxu0 %v2634
        %3298 = vmatpush1.bf16.msra.mxu0 %v2633
        %3299 = vmatprep.subr.bf16.mxu0 %v2642
        %3300 = vmatpush1.bf16.msra.mxu0 %v2641
        %3301 = vmatprep.subr.bf16.mxu0 %v2650
        %3302 = vmatpush1.bf16.msra.mxu0 %v2649
        %3303 = vmatprep.subr.bf16.mxu0 %v2658
        %3304 = vmatpush1.bf16.msra.mxu0 %v2657
        %3305 = vmatprep.mubr.bf16.mxu0 %v1438
        %3306 = vmatmul.mubr.bf16.gmra.mrb[0].mxu0 %v1437
        %v3307 = vpop.f32.mrb[0].mxu0
        %v3308 = vadd.f32 %v1738, %v3307
        %v3309 = vpop.f32.mrb[0].mxu0
        %v3310 = vadd.f32 %v1742, %v3309
        %v3311 = vpop.f32.mrb[0].mxu0
        %v3312 = vadd.f32 %v1738, %v3311
        %v3313 = vpop.f32.mrb[0].mxu0
        %v3314 = vadd.f32 %v1742, %v3313
        %3315 = vmatprep.mubr.bf16.mxu0 %v1442
        %3316 = vmatmul.mubr.bf16.gmra.mrb[0].mxu0 %v1441
        %v3317 = vpop.f32.mrb[0].mxu0
        %v3318 = vadd.f32 %v1738, %v3317
        %v3319 = vpop.f32.mrb[0].mxu0
        %v3320 = vadd.f32 %v1742, %v3319
        %v3321 = vpop.f32.mrb[0].mxu0
        %v3322 = vadd.f32 %v1738, %v3321
        %v3323 = vpop.f32.mrb[0].mxu0
        %v3324 = vadd.f32 %v1742, %v3323
        %3325 = vmatprep.mubr.bf16.mxu0 %v1446
        %3326 = vmatmul.mubr.bf16.gmra.mrb[0].mxu0 %v1445
        %v3327 = vpop.f32.mrb[0].mxu0
        %v3328 = vadd.f32 %v1738, %v3327
        %v3329 = vpop.f32.mrb[0].mxu0
        %v3330 = vadd.f32 %v1742, %v3329
        %v3331 = vpop.f32.mrb[0].mxu0
        %v3332 = vadd.f32 %v1738, %v3331
        %v3333 = vpop.f32.mrb[0].mxu0
        %v3334 = vadd.f32 %v1742, %v3333
        %3335 = vmatprep.mubr.bf16.mxu0 %v1450
        %3336 = vmatmul.mubr.bf16.gmra.mrb[0].mxu0 %v1449
        %v3337 = vpop.f32.mrb[0].mxu0
        %v3338 = vadd.f32 %v1738, %v3337
        %v3339 = vpop.f32.mrb[0].mxu0
        %v3340 = vadd.f32 %v1742, %v3339
        %v3341 = vpop.f32.mrb[0].mxu0
        %v3342 = vadd.f32 %v1738, %v3341
        %v3343 = vpop.f32.mrb[0].mxu0
        %v3344 = vadd.f32 %v1742, %v3343
        %3345 = vmatprep.mubr.bf16.mxu0 %v1454
        %3346 = vmatmul.mubr.bf16.gmra.mrb[0].mxu0 %v1453
        %v3347 = vpop.f32.mrb[0].mxu0
        %v3348 = vadd.f32 %v1738, %v3347
        %v3349 = vpop.f32.mrb[0].mxu0
        %v3350 = vadd.f32 %v1742, %v3349
        %v3351 = vpop.f32.mrb[0].mxu0
        %v3352 = vadd.f32 %v1738, %v3351
        %v3353 = vpop.f32.mrb[0].mxu0
        %v3354 = vadd.f32 %v1742, %v3353
        %3355 = vmatprep.mubr.bf16.mxu0 %v1458
        %3356 = vmatmul.mubr.bf16.gmra.mrb[0].mxu0 %v1457
        %v3357 = vpop.f32.mrb[0].mxu0
        %v3358 = vadd.f32 %v1738, %v3357
        %v3359 = vpop.f32.mrb[0].mxu0
        %v3360 = vadd.f32 %v1742, %v3359
        %v3361 = vpop.f32.mrb[0].mxu0
        %v3362 = vadd.f32 %v1738, %v3361
        %v3363 = vpop.f32.mrb[0].mxu0
        %v3364 = vadd.f32 %v1742, %v3363
        %3365 = vmatprep.mubr.bf16.mxu0 %v1462
        %3366 = vmatmul.mubr.bf16.gmra.mrb[0].mxu0 %v1461
        %v3367 = vpop.f32.mrb[0].mxu0
        %v3368 = vadd.f32 %v1738, %v3367
        %v3369 = vpop.f32.mrb[0].mxu0
        %v3370 = vadd.f32 %v1742, %v3369
        %v3371 = vpop.f32.mrb[0].mxu0
        %v3372 = vadd.f32 %v1738, %v3371
        %v3373 = vpop.f32.mrb[0].mxu0
        %v3374 = vadd.f32 %v1742, %v3373
        %3375 = vmatprep.mubr.bf16.mxu0 %v1466
        %3376 = vmatmul.mubr.bf16.gmra.mrb[0].mxu0 %v1465
        %v3377 = vpop.f32.mrb[0].mxu0
        %v3378 = vadd.f32 %v1738, %v3377
        %v3379 = vpop.f32.mrb[0].mxu0
        %v3380 = vadd.f32 %v1742, %v3379
        %v3381 = vpop.f32.mrb[0].mxu0
        %v3382 = vadd.f32 %v1738, %v3381
        %v3383 = vpop.f32.mrb[0].mxu0
        %v3384 = vadd.f32 %v1742, %v3383
        %3385 = vdwg.mxu0
        %3386 = vmatprep.subr.bf16.mxu0 %v2666
        %3387 = vmatpush1.bf16.msra.mxu0 %v2665
        %3388 = vmatprep.subr.bf16.mxu0 %v2674
        %3389 = vmatpush1.bf16.msra.mxu0 %v2673
        %3390 = vmatprep.subr.bf16.mxu0 %v2682
        %3391 = vmatpush1.bf16.msra.mxu0 %v2681
        %3392 = vmatprep.subr.bf16.mxu0 %v2690
        %3393 = vmatpush1.bf16.msra.mxu0 %v2689
        %3394 = vmatprep.subr.bf16.mxu0 %v2698
        %3395 = vmatpush1.bf16.msra.mxu0 %v2697
        %3396 = vmatprep.subr.bf16.mxu0 %v2706
        %3397 = vmatpush1.bf16.msra.mxu0 %v2705
        %3398 = vmatprep.subr.bf16.mxu0 %v2714
        %3399 = vmatpush1.bf16.msra.mxu0 %v2713
        %3400 = vmatprep.subr.bf16.mxu0 %v2722
        %3401 = vmatpush1.bf16.msra.mxu0 %v2721
        %3402 = vmatprep.subr.bf16.mxu0 %v2730
        %3403 = vmatpush1.bf16.msra.mxu0 %v2729
        %3404 = vmatprep.subr.bf16.mxu0 %v2738
        %3405 = vmatpush1.bf16.msra.mxu0 %v2737
        %3406 = vmatprep.subr.bf16.mxu0 %v2746
        %3407 = vmatpush1.bf16.msra.mxu0 %v2745
        %3408 = vmatprep.subr.bf16.mxu0 %v2754
        %3409 = vmatpush1.bf16.msra.mxu0 %v2753
        %3410 = vmatprep.subr.bf16.mxu0 %v2762
        %3411 = vmatpush1.bf16.msra.mxu0 %v2761
        %3412 = vmatprep.subr.bf16.mxu0 %v2770
        %3413 = vmatpush1.bf16.msra.mxu0 %v2769
        %3414 = vmatprep.subr.bf16.mxu0 %v2778
        %3415 = vmatpush1.bf16.msra.mxu0 %v2777
        %3416 = vmatprep.subr.bf16.mxu0 %v2786
        %3417 = vmatpush1.bf16.msra.mxu0 %v2785
        %3418 = vmatprep.mubr.bf16.mxu0 %v1440
        %3419 = vmatmul.mubr.bf16.gmra.mrb[0].mxu0 %v1439
        %v3420 = vpop.f32.mrb[0].mxu0
        %v3421 = vadd.f32 %v3308, %v3420
        %v3422 = vpop.f32.mrb[0].mxu0
        %v3423 = vadd.f32 %v3310, %v3422
        %v3424 = vpop.f32.mrb[0].mxu0
        %v3425 = vadd.f32 %v3312, %v3424
        %v3426 = vpop.f32.mrb[0].mxu0
        %v3427 = vadd.f32 %v3314, %v3426
        %3428 = vmatprep.mubr.bf16.mxu0 %v1444
        %3429 = vmatmul.mubr.bf16.gmra.mrb[0].mxu0 %v1443
        %v3430 = vpop.f32.mrb[0].mxu0
        %v3431 = vadd.f32 %v3318, %v3430
        %v3432 = vpop.f32.mrb[0].mxu0
        %v3433 = vadd.f32 %v3320, %v3432
        %v3434 = vpop.f32.mrb[0].mxu0
        %v3435 = vadd.f32 %v3322, %v3434
        %v3436 = vpop.f32.mrb[0].mxu0
        %v3437 = vadd.f32 %v3324, %v3436
        %3438 = vmatprep.mubr.bf16.mxu0 %v1448
        %3439 = vmatmul.mubr.bf16.gmra.mrb[0].mxu0 %v1447
        %v3440 = vpop.f32.mrb[0].mxu0
        %v3441 = vadd.f32 %v3328, %v3440
        %v3442 = vpop.f32.mrb[0].mxu0
        %v3443 = vadd.f32 %v3330, %v3442
        %v3444 = vpop.f32.mrb[0].mxu0
        %v3445 = vadd.f32 %v3332, %v3444
        %v3446 = vpop.f32.mrb[0].mxu0
        %v3447 = vadd.f32 %v3334, %v3446
        %3448 = vmatprep.mubr.bf16.mxu0 %v1452
        %3449 = vmatmul.mubr.bf16.gmra.mrb[0].mxu0 %v1451
        %v3450 = vpop.f32.mrb[0].mxu0
        %v3451 = vadd.f32 %v3338, %v3450
        %v3452 = vpop.f32.mrb[0].mxu0
        %v3453 = vadd.f32 %v3340, %v3452
        %v3454 = vpop.f32.mrb[0].mxu0
        %v3455 = vadd.f32 %v3342, %v3454
        %v3456 = vpop.f32.mrb[0].mxu0
        %v3457 = vadd.f32 %v3344, %v3456
        %3458 = vmatprep.mubr.bf16.mxu0 %v1456
        %3459 = vmatmul.mubr.bf16.gmra.mrb[0].mxu0 %v1455
        %v3460 = vpop.f32.mrb[0].mxu0
        %v3461 = vadd.f32 %v3348, %v3460
        %v3462 = vpop.f32.mrb[0].mxu0
        %v3463 = vadd.f32 %v3350, %v3462
        %v3464 = vpop.f32.mrb[0].mxu0
        %v3465 = vadd.f32 %v3352, %v3464
        %v3466 = vpop.f32.mrb[0].mxu0
        %v3467 = vadd.f32 %v3354, %v3466
        %3468 = vmatprep.mubr.bf16.mxu0 %v1460
        %3469 = vmatmul.mubr.bf16.gmra.mrb[0].mxu0 %v1459
        %v3470 = vpop.f32.mrb[0].mxu0
        %v3471 = vadd.f32 %v3358, %v3470
        %v3472 = vpop.f32.mrb[0].mxu0
        %v3473 = vadd.f32 %v3360, %v3472
        %v3474 = vpop.f32.mrb[0].mxu0
        %v3475 = vadd.f32 %v3362, %v3474
        %v3476 = vpop.f32.mrb[0].mxu0
        %v3477 = vadd.f32 %v3364, %v3476
        %3478 = vmatprep.mubr.bf16.mxu0 %v1464
        %3479 = vmatmul.mubr.bf16.gmra.mrb[0].mxu0 %v1463
        %v3480 = vpop.f32.mrb[0].mxu0
        %v3481 = vadd.f32 %v3368, %v3480
        %v3482 = vpop.f32.mrb[0].mxu0
        %v3483 = vadd.f32 %v3370, %v3482
        %v3484 = vpop.f32.mrb[0].mxu0
        %v3485 = vadd.f32 %v3372, %v3484
        %v3486 = vpop.f32.mrb[0].mxu0
        %v3487 = vadd.f32 %v3374, %v3486
        %3488 = vmatprep.mubr.bf16.mxu0 %v1468
        %3489 = vmatmul.mubr.bf16.gmra.mrb[0].mxu0 %v1467
        %v3490 = vpop.f32.mrb[0].mxu0
        %v3491 = vadd.f32 %v3378, %v3490
        %v3492 = vpop.f32.mrb[0].mxu0
        %v3493 = vadd.f32 %v3380, %v3492
        %v3494 = vpop.f32.mrb[0].mxu0
        %v3495 = vadd.f32 %v3382, %v3494
        %v3496 = vpop.f32.mrb[0].mxu0
        %v3497 = vadd.f32 %v3384, %v3496
        %3498 = vdwg.mxu0
        %3499 = vmatprep.subr.bf16.mxu0 %v2540
        %3500 = vmatpush1.bf16.msra.mxu0 %v2539
        %3501 = vmatprep.subr.bf16.mxu0 %v2548
        %3502 = vmatpush1.bf16.msra.mxu0 %v2547
        %3503 = vmatprep.subr.bf16.mxu0 %v2556
        %3504 = vmatpush1.bf16.msra.mxu0 %v2555
        %3505 = vmatprep.subr.bf16.mxu0 %v2564
        %3506 = vmatpush1.bf16.msra.mxu0 %v2563
        %3507 = vmatprep.subr.bf16.mxu0 %v2572
        %3508 = vmatpush1.bf16.msra.mxu0 %v2571
        %3509 = vmatprep.subr.bf16.mxu0 %v2580
        %3510 = vmatpush1.bf16.msra.mxu0 %v2579
        %3511 = vmatprep.subr.bf16.mxu0 %v2588
        %3512 = vmatpush1.bf16.msra.mxu0 %v2587
        %3513 = vmatprep.subr.bf16.mxu0 %v2596
        %3514 = vmatpush1.bf16.msra.mxu0 %v2595
        %3515 = vmatprep.subr.bf16.mxu0 %v2604
        %3516 = vmatpush1.bf16.msra.mxu0 %v2603
        %3517 = vmatprep.subr.bf16.mxu0 %v2612
        %3518 = vmatpush1.bf16.msra.mxu0 %v2611
        %3519 = vmatprep.subr.bf16.mxu0 %v2620
        %3520 = vmatpush1.bf16.msra.mxu0 %v2619
        %3521 = vmatprep.subr.bf16.mxu0 %v2628
        %3522 = vmatpush1.bf16.msra.mxu0 %v2627
        %3523 = vmatprep.subr.bf16.mxu0 %v2636
        %3524 = vmatpush1.bf16.msra.mxu0 %v2635
        %3525 = vmatprep.subr.bf16.mxu0 %v2644
        %3526 = vmatpush1.bf16.msra.mxu0 %v2643
        %3527 = vmatprep.subr.bf16.mxu0 %v2652
        %3528 = vmatpush1.bf16.msra.mxu0 %v2651
        %3529 = vmatprep.subr.bf16.mxu0 %v2660
        %3530 = vmatpush1.bf16.msra.mxu0 %v2659
        %3531 = vmatprep.mubr.bf16.mxu0 %v1438
        %3532 = vmatmul.mubr.bf16.gmra.mrb[0].mxu0 %v1437
        %v3533 = vpop.f32.mrb[0].mxu0
        %v3534 = vadd.f32 %v1746, %v3533
        %v3535 = vpop.f32.mrb[0].mxu0
        %v3536 = vadd.f32 %v1750, %v3535
        %v3537 = vpop.f32.mrb[0].mxu0
        %v3538 = vadd.f32 %v1746, %v3537
        %v3539 = vpop.f32.mrb[0].mxu0
        %v3540 = vadd.f32 %v1750, %v3539
        %3541 = vmatprep.mubr.bf16.mxu0 %v1442
        %3542 = vmatmul.mubr.bf16.gmra.mrb[0].mxu0 %v1441
        %v3543 = vpop.f32.mrb[0].mxu0
        %v3544 = vadd.f32 %v1746, %v3543
        %v3545 = vpop.f32.mrb[0].mxu0
        %v3546 = vadd.f32 %v1750, %v3545
        %v3547 = vpop.f32.mrb[0].mxu0
        %v3548 = vadd.f32 %v1746, %v3547
        %v3549 = vpop.f32.mrb[0].mxu0
        %v3550 = vadd.f32 %v1750, %v3549
        %3551 = vmatprep.mubr.bf16.mxu0 %v1446
        %3552 = vmatmul.mubr.bf16.gmra.mrb[0].mxu0 %v1445
        %v3553 = vpop.f32.mrb[0].mxu0
        %v3554 = vadd.f32 %v1746, %v3553
        %v3555 = vpop.f32.mrb[0].mxu0
        %v3556 = vadd.f32 %v1750, %v3555
        %v3557 = vpop.f32.mrb[0].mxu0
        %v3558 = vadd.f32 %v1746, %v3557
        %v3559 = vpop.f32.mrb[0].mxu0
        %v3560 = vadd.f32 %v1750, %v3559
        %3561 = vmatprep.mubr.bf16.mxu0 %v1450
        %3562 = vmatmul.mubr.bf16.gmra.mrb[0].mxu0 %v1449
        %v3563 = vpop.f32.mrb[0].mxu0
        %v3564 = vadd.f32 %v1746, %v3563
        %v3565 = vpop.f32.mrb[0].mxu0
        %v3566 = vadd.f32 %v1750, %v3565
        %v3567 = vpop.f32.mrb[0].mxu0
        %v3568 = vadd.f32 %v1746, %v3567
        %v3569 = vpop.f32.mrb[0].mxu0
        %v3570 = vadd.f32 %v1750, %v3569
        %3571 = vmatprep.mubr.bf16.mxu0 %v1454
        %3572 = vmatmul.mubr.bf16.gmra.mrb[0].mxu0 %v1453
        %v3573 = vpop.f32.mrb[0].mxu0
        %v3574 = vadd.f32 %v1746, %v3573
        %v3575 = vpop.f32.mrb[0].mxu0
        %v3576 = vadd.f32 %v1750, %v3575
        %v3577 = vpop.f32.mrb[0].mxu0
        %v3578 = vadd.f32 %v1746, %v3577
        %v3579 = vpop.f32.mrb[0].mxu0
        %v3580 = vadd.f32 %v1750, %v3579
        %3581 = vmatprep.mubr.bf16.mxu0 %v1458
        %3582 = vmatmul.mubr.bf16.gmra.mrb[0].mxu0 %v1457
        %v3583 = vpop.f32.mrb[0].mxu0
        %v3584 = vadd.f32 %v1746, %v3583
        %v3585 = vpop.f32.mrb[0].mxu0
        %v3586 = vadd.f32 %v1750, %v3585
        %v3587 = vpop.f32.mrb[0].mxu0
        %v3588 = vadd.f32 %v1746, %v3587
        %v3589 = vpop.f32.mrb[0].mxu0
        %v3590 = vadd.f32 %v1750, %v3589
        %3591 = vmatprep.mubr.bf16.mxu0 %v1462
        %3592 = vmatmul.mubr.bf16.gmra.mrb[0].mxu0 %v1461
        %v3593 = vpop.f32.mrb[0].mxu0
        %v3594 = vadd.f32 %v1746, %v3593
        %v3595 = vpop.f32.mrb[0].mxu0
        %v3596 = vadd.f32 %v1750, %v3595
        %v3597 = vpop.f32.mrb[0].mxu0
        %v3598 = vadd.f32 %v1746, %v3597
        %v3599 = vpop.f32.mrb[0].mxu0
        %v3600 = vadd.f32 %v1750, %v3599
        %3601 = vmatprep.mubr.bf16.mxu0 %v1466
        %3602 = vmatmul.mubr.bf16.gmra.mrb[0].mxu0 %v1465
        %v3603 = vpop.f32.mrb[0].mxu0
        %v3604 = vadd.f32 %v1746, %v3603
        %v3605 = vpop.f32.mrb[0].mxu0
        %v3606 = vadd.f32 %v1750, %v3605
        %v3607 = vpop.f32.mrb[0].mxu0
        %v3608 = vadd.f32 %v1746, %v3607
        %v3609 = vpop.f32.mrb[0].mxu0
        %v3610 = vadd.f32 %v1750, %v3609
        %3611 = vdwg.mxu0
        %3612 = vmatprep.subr.bf16.mxu0 %v2668
        %3613 = vmatpush1.bf16.msra.mxu0 %v2667
        %3614 = vmatprep.subr.bf16.mxu0 %v2676
        %3615 = vmatpush1.bf16.msra.mxu0 %v2675
        %3616 = vmatprep.subr.bf16.mxu0 %v2684
        %3617 = vmatpush1.bf16.msra.mxu0 %v2683
        %3618 = vmatprep.subr.bf16.mxu0 %v2692
        %3619 = vmatpush1.bf16.msra.mxu0 %v2691
        %3620 = vmatprep.subr.bf16.mxu0 %v2700
        %3621 = vmatpush1.bf16.msra.mxu0 %v2699
        %3622 = vmatprep.subr.bf16.mxu0 %v2708
        %3623 = vmatpush1.bf16.msra.mxu0 %v2707
        %3624 = vmatprep.subr.bf16.mxu0 %v2716
        %3625 = vmatpush1.bf16.msra.mxu0 %v2715
        %3626 = vmatprep.subr.bf16.mxu0 %v2724
        %3627 = vmatpush1.bf16.msra.mxu0 %v2723
        %3628 = vmatprep.subr.bf16.mxu0 %v2732
        %3629 = vmatpush1.bf16.msra.mxu0 %v2731
        %3630 = vmatprep.subr.bf16.mxu0 %v2740
        %3631 = vmatpush1.bf16.msra.mxu0 %v2739
        %3632 = vmatprep.subr.bf16.mxu0 %v2748
        %3633 = vmatpush1.bf16.msra.mxu0 %v2747
        %3634 = vmatprep.subr.bf16.mxu0 %v2756
        %3635 = vmatpush1.bf16.msra.mxu0 %v2755
        %3636 = vmatprep.subr.bf16.mxu0 %v2764
        %3637 = vmatpush1.bf16.msra.mxu0 %v2763
        %3638 = vmatprep.subr.bf16.mxu0 %v2772
        %3639 = vmatpush1.bf16.msra.mxu0 %v2771
        %3640 = vmatprep.subr.bf16.mxu0 %v2780
        %3641 = vmatpush1.bf16.msra.mxu0 %v2779
        %3642 = vmatprep.subr.bf16.mxu0 %v2788
        %3643 = vmatpush1.bf16.msra.mxu0 %v2787
        %3644 = vmatprep.mubr.bf16.mxu0 %v1440
        %3645 = vmatmul.mubr.bf16.gmra.mrb[0].mxu0 %v1439
        %v3646 = vpop.f32.mrb[0].mxu0
        %v3647 = vadd.f32 %v3534, %v3646
        %v3648 = vpop.f32.mrb[0].mxu0
        %v3649 = vadd.f32 %v3536, %v3648
        %v3650 = vpop.f32.mrb[0].mxu0
        %v3651 = vadd.f32 %v3538, %v3650
        %v3652 = vpop.f32.mrb[0].mxu0
        %v3653 = vadd.f32 %v3540, %v3652
        %3654 = vmatprep.mubr.bf16.mxu0 %v1444
        %3655 = vmatmul.mubr.bf16.gmra.mrb[0].mxu0 %v1443
        %v3656 = vpop.f32.mrb[0].mxu0
        %v3657 = vadd.f32 %v3544, %v3656
        %v3658 = vpop.f32.mrb[0].mxu0
        %v3659 = vadd.f32 %v3546, %v3658
        %v3660 = vpop.f32.mrb[0].mxu0
        %v3661 = vadd.f32 %v3548, %v3660
        %v3662 = vpop.f32.mrb[0].mxu0
        %v3663 = vadd.f32 %v3550, %v3662
        %3664 = vmatprep.mubr.bf16.mxu0 %v1448
        %3665 = vmatmul.mubr.bf16.gmra.mrb[0].mxu0 %v1447
        %v3666 = vpop.f32.mrb[0].mxu0
        %v3667 = vadd.f32 %v3554, %v3666
        %v3668 = vpop.f32.mrb[0].mxu0
        %v3669 = vadd.f32 %v3556, %v3668
        %v3670 = vpop.f32.mrb[0].mxu0
        %v3671 = vadd.f32 %v3558, %v3670
        %v3672 = vpop.f32.mrb[0].mxu0
        %v3673 = vadd.f32 %v3560, %v3672
        %3674 = vmatprep.mubr.bf16.mxu0 %v1452
        %3675 = vmatmul.mubr.bf16.gmra.mrb[0].mxu0 %v1451
        %v3676 = vpop.f32.mrb[0].mxu0
        %v3677 = vadd.f32 %v3564, %v3676
        %v3678 = vpop.f32.mrb[0].mxu0
        %v3679 = vadd.f32 %v3566, %v3678
        %v3680 = vpop.f32.mrb[0].mxu0
        %v3681 = vadd.f32 %v3568, %v3680
        %v3682 = vpop.f32.mrb[0].mxu0
        %v3683 = vadd.f32 %v3570, %v3682
        %3684 = vmatprep.mubr.bf16.mxu0 %v1456
        %3685 = vmatmul.mubr.bf16.gmra.mrb[0].mxu0 %v1455
        %v3686 = vpop.f32.mrb[0].mxu0
        %v3687 = vadd.f32 %v3574, %v3686
        %v3688 = vpop.f32.mrb[0].mxu0
        %v3689 = vadd.f32 %v3576, %v3688
        %v3690 = vpop.f32.mrb[0].mxu0
        %v3691 = vadd.f32 %v3578, %v3690
        %v3692 = vpop.f32.mrb[0].mxu0
        %v3693 = vadd.f32 %v3580, %v3692
        %3694 = vmatprep.mubr.bf16.mxu0 %v1460
        %3695 = vmatmul.mubr.bf16.gmra.mrb[0].mxu0 %v1459
        %v3696 = vpop.f32.mrb[0].mxu0
        %v3697 = vadd.f32 %v3584, %v3696
        %v3698 = vpop.f32.mrb[0].mxu0
        %v3699 = vadd.f32 %v3586, %v3698
        %v3700 = vpop.f32.mrb[0].mxu0
        %v3701 = vadd.f32 %v3588, %v3700
        %v3702 = vpop.f32.mrb[0].mxu0
        %v3703 = vadd.f32 %v3590, %v3702
        %3704 = vmatprep.mubr.bf16.mxu0 %v1464
        %3705 = vmatmul.mubr.bf16.gmra.mrb[0].mxu0 %v1463
        %v3706 = vpop.f32.mrb[0].mxu0
        %v3707 = vadd.f32 %v3594, %v3706
        %v3708 = vpop.f32.mrb[0].mxu0
        %v3709 = vadd.f32 %v3596, %v3708
        %v3710 = vpop.f32.mrb[0].mxu0
        %v3711 = vadd.f32 %v3598, %v3710
        %v3712 = vpop.f32.mrb[0].mxu0
        %v3713 = vadd.f32 %v3600, %v3712
        %3714 = vmatprep.mubr.bf16.mxu0 %v1468
        %3715 = vmatmul.mubr.bf16.gmra.mrb[0].mxu0 %v1467
        %v3716 = vpop.f32.mrb[0].mxu0
        %v3717 = vadd.f32 %v3604, %v3716
        %v3718 = vpop.f32.mrb[0].mxu0
        %v3719 = vadd.f32 %v3606, %v3718
        %v3720 = vpop.f32.mrb[0].mxu0
        %v3721 = vadd.f32 %v3608, %v3720
        %v3722 = vpop.f32.mrb[0].mxu0
        %v3723 = vadd.f32 %v3610, %v3722
        %3724 = vdwg.mxu0
        %3725 = vmatprep.subr.bf16.mxu0 %v2542
        %3726 = vmatpush1.bf16.msra.mxu0 %v2541
        %3727 = vmatprep.subr.bf16.mxu0 %v2550
        %3728 = vmatpush1.bf16.msra.mxu0 %v2549
        %3729 = vmatprep.subr.bf16.mxu0 %v2558
        %3730 = vmatpush1.bf16.msra.mxu0 %v2557
        %3731 = vmatprep.subr.bf16.mxu0 %v2566
        %3732 = vmatpush1.bf16.msra.mxu0 %v2565
        %3733 = vmatprep.subr.bf16.mxu0 %v2574
        %3734 = vmatpush1.bf16.msra.mxu0 %v2573
        %3735 = vmatprep.subr.bf16.mxu0 %v2582
        %3736 = vmatpush1.bf16.msra.mxu0 %v2581
        %3737 = vmatprep.subr.bf16.mxu0 %v2590
        %3738 = vmatpush1.bf16.msra.mxu0 %v2589
        %3739 = vmatprep.subr.bf16.mxu0 %v2598
        %3740 = vmatpush1.bf16.msra.mxu0 %v2597
        %3741 = vmatprep.subr.bf16.mxu0 %v2606
        %3742 = vmatpush1.bf16.msra.mxu0 %v2605
        %3743 = vmatprep.subr.bf16.mxu0 %v2614
        %3744 = vmatpush1.bf16.msra.mxu0 %v2613
        %3745 = vmatprep.subr.bf16.mxu0 %v2622
        %3746 = vmatpush1.bf16.msra.mxu0 %v2621
        %3747 = vmatprep.subr.bf16.mxu0 %v2630
        %3748 = vmatpush1.bf16.msra.mxu0 %v2629
        %3749 = vmatprep.subr.bf16.mxu0 %v2638
        %3750 = vmatpush1.bf16.msra.mxu0 %v2637
        %3751 = vmatprep.subr.bf16.mxu0 %v2646
        %3752 = vmatpush1.bf16.msra.mxu0 %v2645
        %3753 = vmatprep.subr.bf16.mxu0 %v2654
        %3754 = vmatpush1.bf16.msra.mxu0 %v2653
        %3755 = vmatprep.subr.bf16.mxu0 %v2662
        %3756 = vmatpush1.bf16.msra.mxu0 %v2661
        %3757 = vmatprep.mubr.bf16.mxu0 %v1438
        %3758 = vmatmul.mubr.bf16.gmra.mrb[0].mxu0 %v1437
        %v3759 = vpop.f32.mrb[0].mxu0
        %v3760 = vadd.f32 %v1754, %v3759
        %v3761 = vpop.f32.mrb[0].mxu0
        %v3762 = vadd.f32 %v1758, %v3761
        %v3763 = vpop.f32.mrb[0].mxu0
        %v3764 = vadd.f32 %v1754, %v3763
        %v3765 = vpop.f32.mrb[0].mxu0
        %v3766 = vadd.f32 %v1758, %v3765
        %3767 = vmatprep.mubr.bf16.mxu0 %v1442
        %3768 = vmatmul.mubr.bf16.gmra.mrb[0].mxu0 %v1441
        %v3769 = vpop.f32.mrb[0].mxu0
        %v3770 = vadd.f32 %v1754, %v3769
        %v3771 = vpop.f32.mrb[0].mxu0
        %v3772 = vadd.f32 %v1758, %v3771
        %v3773 = vpop.f32.mrb[0].mxu0
        %v3774 = vadd.f32 %v1754, %v3773
        %v3775 = vpop.f32.mrb[0].mxu0
        %v3776 = vadd.f32 %v1758, %v3775
        %3777 = vmatprep.mubr.bf16.mxu0 %v1446
        %3778 = vmatmul.mubr.bf16.gmra.mrb[0].mxu0 %v1445
        %v3779 = vpop.f32.mrb[0].mxu0
        %v3780 = vadd.f32 %v1754, %v3779
        %v3781 = vpop.f32.mrb[0].mxu0
        %v3782 = vadd.f32 %v1758, %v3781
        %v3783 = vpop.f32.mrb[0].mxu0
        %v3784 = vadd.f32 %v1754, %v3783
        %v3785 = vpop.f32.mrb[0].mxu0
        %v3786 = vadd.f32 %v1758, %v3785
        %3787 = vmatprep.mubr.bf16.mxu0 %v1450
        %3788 = vmatmul.mubr.bf16.gmra.mrb[0].mxu0 %v1449
        %v3789 = vpop.f32.mrb[0].mxu0
        %v3790 = vadd.f32 %v1754, %v3789
        %v3791 = vpop.f32.mrb[0].mxu0
        %v3792 = vadd.f32 %v1758, %v3791
        %v3793 = vpop.f32.mrb[0].mxu0
        %v3794 = vadd.f32 %v1754, %v3793
        %v3795 = vpop.f32.mrb[0].mxu0
        %v3796 = vadd.f32 %v1758, %v3795
        %3797 = vmatprep.mubr.bf16.mxu0 %v1454
        %3798 = vmatmul.mubr.bf16.gmra.mrb[0].mxu0 %v1453
        %v3799 = vpop.f32.mrb[0].mxu0
        %v3800 = vadd.f32 %v1754, %v3799
        %v3801 = vpop.f32.mrb[0].mxu0
        %v3802 = vadd.f32 %v1758, %v3801
        %v3803 = vpop.f32.mrb[0].mxu0
        %v3804 = vadd.f32 %v1754, %v3803
        %v3805 = vpop.f32.mrb[0].mxu0
        %v3806 = vadd.f32 %v1758, %v3805
        %3807 = vmatprep.mubr.bf16.mxu0 %v1458
        %3808 = vmatmul.mubr.bf16.gmra.mrb[0].mxu0 %v1457
        %v3809 = vpop.f32.mrb[0].mxu0
        %v3810 = vadd.f32 %v1754, %v3809
        %v3811 = vpop.f32.mrb[0].mxu0
        %v3812 = vadd.f32 %v1758, %v3811
        %v3813 = vpop.f32.mrb[0].mxu0
        %v3814 = vadd.f32 %v1754, %v3813
        %v3815 = vpop.f32.mrb[0].mxu0
        %v3816 = vadd.f32 %v1758, %v3815
        %3817 = vmatprep.mubr.bf16.mxu0 %v1462
        %3818 = vmatmul.mubr.bf16.gmra.mrb[0].mxu0 %v1461
        %v3819 = vpop.f32.mrb[0].mxu0
        %v3820 = vadd.f32 %v1754, %v3819
        %v3821 = vpop.f32.mrb[0].mxu0
        %v3822 = vadd.f32 %v1758, %v3821
        %v3823 = vpop.f32.mrb[0].mxu0
        %v3824 = vadd.f32 %v1754, %v3823
        %v3825 = vpop.f32.mrb[0].mxu0
        %v3826 = vadd.f32 %v1758, %v3825
        %3827 = vmatprep.mubr.bf16.mxu0 %v1466
        %3828 = vmatmul.mubr.bf16.gmra.mrb[0].mxu0 %v1465
        %v3829 = vpop.f32.mrb[0].mxu0
        %v3830 = vadd.f32 %v1754, %v3829
        %v3831 = vpop.f32.mrb[0].mxu0
        %v3832 = vadd.f32 %v1758, %v3831
        %v3833 = vpop.f32.mrb[0].mxu0
        %v3834 = vadd.f32 %v1754, %v3833
        %v3835 = vpop.f32.mrb[0].mxu0
        %v3836 = vadd.f32 %v1758, %v3835
        %3837 = vdwg.mxu0
        %3838 = vmatprep.subr.bf16.mxu0 %v2670
        %3839 = vmatpush1.bf16.msra.mxu0 %v2669
        %3840 = vmatprep.subr.bf16.mxu0 %v2678
        %3841 = vmatpush1.bf16.msra.mxu0 %v2677
        %3842 = vmatprep.subr.bf16.mxu0 %v2686
        %3843 = vmatpush1.bf16.msra.mxu0 %v2685
        %3844 = vmatprep.subr.bf16.mxu0 %v2694
        %3845 = vmatpush1.bf16.msra.mxu0 %v2693
        %3846 = vmatprep.subr.bf16.mxu0 %v2702
        %3847 = vmatpush1.bf16.msra.mxu0 %v2701
        %3848 = vmatprep.subr.bf16.mxu0 %v2710
        %3849 = vmatpush1.bf16.msra.mxu0 %v2709
        %3850 = vmatprep.subr.bf16.mxu0 %v2718
        %3851 = vmatpush1.bf16.msra.mxu0 %v2717
        %3852 = vmatprep.subr.bf16.mxu0 %v2726
        %3853 = vmatpush1.bf16.msra.mxu0 %v2725
        %3854 = vmatprep.subr.bf16.mxu0 %v2734
        %3855 = vmatpush1.bf16.msra.mxu0 %v2733
        %3856 = vmatprep.subr.bf16.mxu0 %v2742
        %3857 = vmatpush1.bf16.msra.mxu0 %v2741
        %3858 = vmatprep.subr.bf16.mxu0 %v2750
        %3859 = vmatpush1.bf16.msra.mxu0 %v2749
        %3860 = vmatprep.subr.bf16.mxu0 %v2758
        %3861 = vmatpush1.bf16.msra.mxu0 %v2757
        %3862 = vmatprep.subr.bf16.mxu0 %v2766
        %3863 = vmatpush1.bf16.msra.mxu0 %v2765
        %3864 = vmatprep.subr.bf16.mxu0 %v2774
        %3865 = vmatpush1.bf16.msra.mxu0 %v2773
        %3866 = vmatprep.subr.bf16.mxu0 %v2782
        %3867 = vmatpush1.bf16.msra.mxu0 %v2781
        %3868 = vmatprep.subr.bf16.mxu0 %v2790
        %3869 = vmatpush1.bf16.msra.mxu0 %v2789
        %3870 = vmatprep.mubr.bf16.mxu0 %v1440
        %3871 = vmatmul.mubr.bf16.gmra.mrb[0].mxu0 %v1439
        %v3872 = vpop.f32.mrb[0].mxu0
        %v3873 = vadd.f32 %v3760, %v3872
        %v3874 = vpop.f32.mrb[0].mxu0
        %v3875 = vadd.f32 %v3762, %v3874
        %v3876 = vpop.f32.mrb[0].mxu0
        %v3877 = vadd.f32 %v3764, %v3876
        %v3878 = vpop.f32.mrb[0].mxu0
        %v3879 = vadd.f32 %v3766, %v3878
        %3880 = vmatprep.mubr.bf16.mxu0 %v1444
        %3881 = vmatmul.mubr.bf16.gmra.mrb[0].mxu0 %v1443
        %v3882 = vpop.f32.mrb[0].mxu0
        %v3883 = vadd.f32 %v3770, %v3882
        %v3884 = vpop.f32.mrb[0].mxu0
        %v3885 = vadd.f32 %v3772, %v3884
        %v3886 = vpop.f32.mrb[0].mxu0
        %v3887 = vadd.f32 %v3774, %v3886
        %v3888 = vpop.f32.mrb[0].mxu0
        %v3889 = vadd.f32 %v3776, %v3888
        %3890 = vmatprep.mubr.bf16.mxu0 %v1448
        %3891 = vmatmul.mubr.bf16.gmra.mrb[0].mxu0 %v1447
        %v3892 = vpop.f32.mrb[0].mxu0
        %v3893 = vadd.f32 %v3780, %v3892
        %v3894 = vpop.f32.mrb[0].mxu0
        %v3895 = vadd.f32 %v3782, %v3894
        %v3896 = vpop.f32.mrb[0].mxu0
        %v3897 = vadd.f32 %v3784, %v3896
        %v3898 = vpop.f32.mrb[0].mxu0
        %v3899 = vadd.f32 %v3786, %v3898
        %3900 = vmatprep.mubr.bf16.mxu0 %v1452
        %3901 = vmatmul.mubr.bf16.gmra.mrb[0].mxu0 %v1451
        %v3902 = vpop.f32.mrb[0].mxu0
        %v3903 = vadd.f32 %v3790, %v3902
        %v3904 = vpop.f32.mrb[0].mxu0
        %v3905 = vadd.f32 %v3792, %v3904
        %v3906 = vpop.f32.mrb[0].mxu0
        %v3907 = vadd.f32 %v3794, %v3906
        %v3908 = vpop.f32.mrb[0].mxu0
        %v3909 = vadd.f32 %v3796, %v3908
        %3910 = vmatprep.mubr.bf16.mxu0 %v1456
        %3911 = vmatmul.mubr.bf16.gmra.mrb[0].mxu0 %v1455
        %v3912 = vpop.f32.mrb[0].mxu0
        %v3913 = vadd.f32 %v3800, %v3912
        %v3914 = vpop.f32.mrb[0].mxu0
        %v3915 = vadd.f32 %v3802, %v3914
        %v3916 = vpop.f32.mrb[0].mxu0
        %v3917 = vadd.f32 %v3804, %v3916
        %v3918 = vpop.f32.mrb[0].mxu0
        %v3919 = vadd.f32 %v3806, %v3918
        %3920 = vmatprep.mubr.bf16.mxu0 %v1460
        %3921 = vmatmul.mubr.bf16.gmra.mrb[0].mxu0 %v1459
        %v3922 = vpop.f32.mrb[0].mxu0
        %v3923 = vadd.f32 %v3810, %v3922
        %v3924 = vpop.f32.mrb[0].mxu0
        %v3925 = vadd.f32 %v3812, %v3924
        %v3926 = vpop.f32.mrb[0].mxu0
        %v3927 = vadd.f32 %v3814, %v3926
        %v3928 = vpop.f32.mrb[0].mxu0
        %v3929 = vadd.f32 %v3816, %v3928
        %3930 = vmatprep.mubr.bf16.mxu0 %v1464
        %3931 = vmatmul.mubr.bf16.gmra.mrb[0].mxu0 %v1463
        %v3932 = vpop.f32.mrb[0].mxu0
        %v3933 = vadd.f32 %v3820, %v3932
        %v3934 = vpop.f32.mrb[0].mxu0
        %v3935 = vadd.f32 %v3822, %v3934
        %v3936 = vpop.f32.mrb[0].mxu0
        %v3937 = vadd.f32 %v3824, %v3936
        %v3938 = vpop.f32.mrb[0].mxu0
        %v3939 = vadd.f32 %v3826, %v3938
        %3940 = vmatprep.mubr.bf16.mxu0 %v1468
        %3941 = vmatmul.mubr.bf16.gmra.mrb[0].mxu0 %v1467
        %v3942 = vpop.f32.mrb[0].mxu0
        %v3943 = vadd.f32 %v3830, %v3942
        %v3944 = vpop.f32.mrb[0].mxu0
        %v3945 = vadd.f32 %v3832, %v3944
        %v3946 = vpop.f32.mrb[0].mxu0
        %v3947 = vadd.f32 %v3834, %v3946
        %v3948 = vpop.f32.mrb[0].mxu0
        %v3949 = vadd.f32 %v3836, %v3948
        %3950 = vdwg.mxu0
        %v3951 = vmax.f32 %v3195, 0.0
        %v3952 = vmax.f32 %v3197, 0.0
        %v3953 = vmax.f32 %v3421, 0.0
        %v3954 = vmax.f32 %v3423, 0.0
        %v3955 = vmax.f32 %v3647, 0.0
        %v3956 = vmax.f32 %v3649, 0.0
        %v3957 = vmax.f32 %v3873, 0.0
        %v3958 = vmax.f32 %v3875, 0.0
        %v3959 = vmax.f32 %v3199, 0.0
        %v3960 = vmax.f32 %v3201, 0.0
        %v3961 = vmax.f32 %v3425, 0.0
        %v3962 = vmax.f32 %v3427, 0.0
        %v3963 = vmax.f32 %v3651, 0.0
        %v3964 = vmax.f32 %v3653, 0.0
        %v3965 = vmax.f32 %v3877, 0.0
        %v3966 = vmax.f32 %v3879, 0.0
        %v3967 = vmax.f32 %v3205, 0.0
        %v3968 = vmax.f32 %v3207, 0.0
        %v3969 = vmax.f32 %v3431, 0.0
        %v3970 = vmax.f32 %v3433, 0.0
        %v3971 = vmax.f32 %v3657, 0.0
        %v3972 = vmax.f32 %v3659, 0.0
        %v3973 = vmax.f32 %v3883, 0.0
        %v3974 = vmax.f32 %v3885, 0.0
        %v3975 = vmax.f32 %v3209, 0.0
        %v3976 = vmax.f32 %v3211, 0.0
        %v3977 = vmax.f32 %v3435, 0.0
        %v3978 = vmax.f32 %v3437, 0.0
        %v3979 = vmax.f32 %v3661, 0.0
        %v3980 = vmax.f32 %v3663, 0.0
        %v3981 = vmax.f32 %v3887, 0.0
        %v3982 = vmax.f32 %v3889, 0.0
        %v3983 = vmax.f32 %v3215, 0.0
        %v3984 = vmax.f32 %v3217, 0.0
        %v3985 = vmax.f32 %v3441, 0.0
        %v3986 = vmax.f32 %v3443, 0.0
        %v3987 = vmax.f32 %v3667, 0.0
        %v3988 = vmax.f32 %v3669, 0.0
        %v3989 = vmax.f32 %v3893, 0.0
        %v3990 = vmax.f32 %v3895, 0.0
        %v3991 = vmax.f32 %v3219, 0.0
        %v3992 = vmax.f32 %v3221, 0.0
        %v3993 = vmax.f32 %v3445, 0.0
        %v3994 = vmax.f32 %v3447, 0.0
        %v3995 = vmax.f32 %v3671, 0.0
        %v3996 = vmax.f32 %v3673, 0.0
        %v3997 = vmax.f32 %v3897, 0.0
        %v3998 = vmax.f32 %v3899, 0.0
        %v3999 = vmax.f32 %v3225, 0.0
        %v4000 = vmax.f32 %v3227, 0.0
        %v4001 = vmax.f32 %v3451, 0.0
        %v4002 = vmax.f32 %v3453, 0.0
        %v4003 = vmax.f32 %v3677, 0.0
        %v4004 = vmax.f32 %v3679, 0.0
        %v4005 = vmax.f32 %v3903, 0.0
        %v4006 = vmax.f32 %v3905, 0.0
        %v4007 = vmax.f32 %v3229, 0.0
        %v4008 = vmax.f32 %v3231, 0.0
        %v4009 = vmax.f32 %v3455, 0.0
        %v4010 = vmax.f32 %v3457, 0.0
        %v4011 = vmax.f32 %v3681, 0.0
        %v4012 = vmax.f32 %v3683, 0.0
        %v4013 = vmax.f32 %v3907, 0.0
        %v4014 = vmax.f32 %v3909, 0.0
        %v4015 = vmax.f32 %v3235, 0.0
        %v4016 = vmax.f32 %v3237, 0.0
        %v4017 = vmax.f32 %v3461, 0.0
        %v4018 = vmax.f32 %v3463, 0.0
        %v4019 = vmax.f32 %v3687, 0.0
        %v4020 = vmax.f32 %v3689, 0.0
        %v4021 = vmax.f32 %v3913, 0.0
        %v4022 = vmax.f32 %v3915, 0.0
        %v4023 = vmax.f32 %v3239, 0.0
        %v4024 = vmax.f32 %v3241, 0.0
        %v4025 = vmax.f32 %v3465, 0.0
        %v4026 = vmax.f32 %v3467, 0.0
        %v4027 = vmax.f32 %v3691, 0.0
        %v4028 = vmax.f32 %v3693, 0.0
        %v4029 = vmax.f32 %v3917, 0.0
        %v4030 = vmax.f32 %v3919, 0.0
        %v4031 = vmax.f32 %v3245, 0.0
        %v4032 = vmax.f32 %v3247, 0.0
        %v4033 = vmax.f32 %v3471, 0.0
        %v4034 = vmax.f32 %v3473, 0.0
        %v4035 = vmax.f32 %v3697, 0.0
        %v4036 = vmax.f32 %v3699, 0.0
        %v4037 = vmax.f32 %v3923, 0.0
        %v4038 = vmax.f32 %v3925, 0.0
        %v4039 = vmax.f32 %v3249, 0.0
        %v4040 = vmax.f32 %v3251, 0.0
        %v4041 = vmax.f32 %v3475, 0.0
        %v4042 = vmax.f32 %v3477, 0.0
        %v4043 = vmax.f32 %v3701, 0.0
        %v4044 = vmax.f32 %v3703, 0.0
        %v4045 = vmax.f32 %v3927, 0.0
        %v4046 = vmax.f32 %v3929, 0.0
        %v4047 = vmax.f32 %v3255, 0.0
        %v4048 = vmax.f32 %v3257, 0.0
        %v4049 = vmax.f32 %v3481, 0.0
        %v4050 = vmax.f32 %v3483, 0.0
        %v4051 = vmax.f32 %v3707, 0.0
        %v4052 = vmax.f32 %v3709, 0.0
        %v4053 = vmax.f32 %v3933, 0.0
        %v4054 = vmax.f32 %v3935, 0.0
        %v4055 = vmax.f32 %v3259, 0.0
        %v4056 = vmax.f32 %v3261, 0.0
        %v4057 = vmax.f32 %v3485, 0.0
        %v4058 = vmax.f32 %v3487, 0.0
        %v4059 = vmax.f32 %v3711, 0.0
        %v4060 = vmax.f32 %v3713, 0.0
        %v4061 = vmax.f32 %v3937, 0.0
        %v4062 = vmax.f32 %v3939, 0.0
        %v4063 = vmax.f32 %v3265, 0.0
        %v4064 = vmax.f32 %v3267, 0.0
        %v4065 = vmax.f32 %v3491, 0.0
        %v4066 = vmax.f32 %v3493, 0.0
        %v4067 = vmax.f32 %v3717, 0.0
        %v4068 = vmax.f32 %v3719, 0.0
        %v4069 = vmax.f32 %v3943, 0.0
        %v4070 = vmax.f32 %v3945, 0.0
        %v4071 = vmax.f32 %v3269, 0.0
        %v4072 = vmax.f32 %v3271, 0.0
        %v4073 = vmax.f32 %v3495, 0.0
        %v4074 = vmax.f32 %v3497, 0.0
        %v4075 = vmax.f32 %v3721, 0.0
        %v4076 = vmax.f32 %v3723, 0.0
        %v4077 = vmax.f32 %v3947, 0.0
        %v4078 = vmax.f32 %v3949, 0.0
        %v4079 = vpack.c.bf16 %v3959, %v3951
        %v4080 = vpack.c.bf16 %v3960, %v3952
        %v4081 = vpack.c.bf16 %v3961, %v3953
        %v4082 = vpack.c.bf16 %v3962, %v3954
        %v4083 = vpack.c.bf16 %v3963, %v3955
        %v4084 = vpack.c.bf16 %v3964, %v3956
        %v4085 = vpack.c.bf16 %v3965, %v3957
        %v4086 = vpack.c.bf16 %v3966, %v3958
        %v4087 = vpack.c.bf16 %v3975, %v3967
        %v4088 = vpack.c.bf16 %v3976, %v3968
        %v4089 = vpack.c.bf16 %v3977, %v3969
        %v4090 = vpack.c.bf16 %v3978, %v3970
        %v4091 = vpack.c.bf16 %v3979, %v3971
        %v4092 = vpack.c.bf16 %v3980, %v3972
        %v4093 = vpack.c.bf16 %v3981, %v3973
        %v4094 = vpack.c.bf16 %v3982, %v3974
        %v4095 = vpack.c.bf16 %v3991, %v3983
        %v4096 = vpack.c.bf16 %v3992, %v3984
        %v4097 = vpack.c.bf16 %v3993, %v3985
        %v4098 = vpack.c.bf16 %v3994, %v3986
        %v4099 = vpack.c.bf16 %v3995, %v3987
        %v4100 = vpack.c.bf16 %v3996, %v3988
        %v4101 = vpack.c.bf16 %v3997, %v3989
        %v4102 = vpack.c.bf16 %v3998, %v3990
        %v4103 = vpack.c.bf16 %v4007, %v3999
        %v4104 = vpack.c.bf16 %v4008, %v4000
        %v4105 = vpack.c.bf16 %v4009, %v4001
        %v4106 = vpack.c.bf16 %v4010, %v4002
        %v4107 = vpack.c.bf16 %v4011, %v4003
        %v4108 = vpack.c.bf16 %v4012, %v4004
        %v4109 = vpack.c.bf16 %v4013, %v4005
        %v4110 = vpack.c.bf16 %v4014, %v4006
        %v4111 = vpack.c.bf16 %v4023, %v4015
        %v4112 = vpack.c.bf16 %v4024, %v4016
        %v4113 = vpack.c.bf16 %v4025, %v4017
        %v4114 = vpack.c.bf16 %v4026, %v4018
        %v4115 = vpack.c.bf16 %v4027, %v4019
        %v4116 = vpack.c.bf16 %v4028, %v4020
        %v4117 = vpack.c.bf16 %v4029, %v4021
        %v4118 = vpack.c.bf16 %v4030, %v4022
        %v4119 = vpack.c.bf16 %v4039, %v4031
        %v4120 = vpack.c.bf16 %v4040, %v4032
        %v4121 = vpack.c.bf16 %v4041, %v4033
        %v4122 = vpack.c.bf16 %v4042, %v4034
        %v4123 = vpack.c.bf16 %v4043, %v4035
        %v4124 = vpack.c.bf16 %v4044, %v4036
        %v4125 = vpack.c.bf16 %v4045, %v4037
        %v4126 = vpack.c.bf16 %v4046, %v4038
        %v4127 = vpack.c.bf16 %v4055, %v4047
        %v4128 = vpack.c.bf16 %v4056, %v4048
        %v4129 = vpack.c.bf16 %v4057, %v4049
        %v4130 = vpack.c.bf16 %v4058, %v4050
        %v4131 = vpack.c.bf16 %v4059, %v4051
        %v4132 = vpack.c.bf16 %v4060, %v4052
        %v4133 = vpack.c.bf16 %v4061, %v4053
        %v4134 = vpack.c.bf16 %v4062, %v4054
        %v4135 = vpack.c.bf16 %v4071, %v4063
        %v4136 = vpack.c.bf16 %v4072, %v4064
        %v4137 = vpack.c.bf16 %v4073, %v4065
        %v4138 = vpack.c.bf16 %v4074, %v4066
        %v4139 = vpack.c.bf16 %v4075, %v4067
        %v4140 = vpack.c.bf16 %v4076, %v4068
        %v4141 = vpack.c.bf16 %v4077, %v4069
        %v4142 = vpack.c.bf16 %v4078, %v4070
        %v4143 = vld [vmem:[#allocation12] sm:$0xff]
        %v4144 = vld [vmem:[#allocation12 + $0x8] sm:$0xff]
        %v4145 = vld [vmem:[#allocation12 + $0x10] sm:$0xff]
        %v4146 = vld [vmem:[#allocation12 + $0x18] sm:$0xf]
        %v4147 = vld [vmem:[#allocation12 + $0x1c] sm:$0xff]
        %v4148 = vld [vmem:[#allocation12 + $0x24] sm:$0xff]
        %v4149 = vld [vmem:[#allocation12 + $0x2c] sm:$0xff]
        %v4150 = vld [vmem:[#allocation12 + $0x34] sm:$0xf]
        %v4151 = vld [vmem:[#allocation12 + $0x38] sm:$0xff]
        %v4152 = vld [vmem:[#allocation12 + $0x40] sm:$0xff]
        %v4153 = vld [vmem:[#allocation12 + $0x48] sm:$0xff]
        %v4154 = vld [vmem:[#allocation12 + $0x50] sm:$0xf]
        %v4155 = vld [vmem:[#allocation12 + $0x54] sm:$0xff]
        %v4156 = vld [vmem:[#allocation12 + $0x5c] sm:$0xff]
        %v4157 = vld [vmem:[#allocation12 + $0x64] sm:$0xff]
        %v4158 = vld [vmem:[#allocation12 + $0x6c] sm:$0xf]
        %v4159 = vld [vmem:[#allocation12 + $0x70] sm:$0xff]
        %v4160 = vld [vmem:[#allocation12 + $0x78] sm:$0xff]
        %v4161 = vld [vmem:[#allocation12 + $0x80] sm:$0xff]
        %v4162 = vld [vmem:[#allocation12 + $0x88] sm:$0xf]
        %v4163 = vld [vmem:[#allocation12 + $0x8c] sm:$0xff]
        %v4164 = vld [vmem:[#allocation12 + $0x94] sm:$0xff]
        %v4165 = vld [vmem:[#allocation12 + $0x9c] sm:$0xff]
        %v4166 = vld [vmem:[#allocation12 + $0xa4] sm:$0xf]
        %v4167 = vld [vmem:[#allocation12 + $0xa8] sm:$0xff]
        %v4168 = vld [vmem:[#allocation12 + $0xb0] sm:$0xff]
        %v4169 = vld [vmem:[#allocation12 + $0xb8] sm:$0xff]
        %v4170 = vld [vmem:[#allocation12 + $0xc0] sm:$0xf]
        %v4171 = vld [vmem:[#allocation12 + $0xc4] sm:$0xff]
        %v4172 = vld [vmem:[#allocation12 + $0xcc] sm:$0xff]
        %v4173 = vld [vmem:[#allocation12 + $0xd4] sm:$0xff]
        %v4174 = vld [vmem:[#allocation12 + $0xdc] sm:$0xf]
        %v4175 = vld [vmem:[#allocation12 + $0xe0] sm:$0xff]
        %v4176 = vld [vmem:[#allocation12 + $0xe8] sm:$0xff]
        %v4177 = vld [vmem:[#allocation12 + $0xf0] sm:$0xff]
        %v4178 = vld [vmem:[#allocation12 + $0xf8] sm:$0xf]
        %v4179 = vld [vmem:[#allocation12 + $0xfc] sm:$0xff]
        %v4180 = vld [vmem:[#allocation12 + $0x104] sm:$0xff]
        %v4181 = vld [vmem:[#allocation12 + $0x10c] sm:$0xff]
        %v4182 = vld [vmem:[#allocation12 + $0x114] sm:$0xf]
        %v4183 = vld [vmem:[#allocation12 + $0x118] sm:$0xff]
        %v4184 = vld [vmem:[#allocation12 + $0x120] sm:$0xff]
        %v4185 = vld [vmem:[#allocation12 + $0x128] sm:$0xff]
        %v4186 = vld [vmem:[#allocation12 + $0x130] sm:$0xf]
        %v4187 = vld [vmem:[#allocation12 + $0x134] sm:$0xff]
        %v4188 = vld [vmem:[#allocation12 + $0x13c] sm:$0xff]
        %v4189 = vld [vmem:[#allocation12 + $0x144] sm:$0xff]
        %v4190 = vld [vmem:[#allocation12 + $0x14c] sm:$0xf]
        %v4191 = vld [vmem:[#allocation12 + $0x150] sm:$0xff]
        %v4192 = vld [vmem:[#allocation12 + $0x158] sm:$0xff]
        %v4193 = vld [vmem:[#allocation12 + $0x160] sm:$0xff]
        %v4194 = vld [vmem:[#allocation12 + $0x168] sm:$0xf]
        %v4195 = vld [vmem:[#allocation12 + $0x16c] sm:$0xff]
        %v4196 = vld [vmem:[#allocation12 + $0x174] sm:$0xff]
        %v4197 = vld [vmem:[#allocation12 + $0x17c] sm:$0xff]
        %v4198 = vld [vmem:[#allocation12 + $0x184] sm:$0xf]
        %v4199 = vld [vmem:[#allocation12 + $0x188] sm:$0xff]
        %v4200 = vld [vmem:[#allocation12 + $0x190] sm:$0xff]
        %v4201 = vld [vmem:[#allocation12 + $0x198] sm:$0xff]
        %v4202 = vld [vmem:[#allocation12 + $0x1a0] sm:$0xf]
        %v4203 = vld [vmem:[#allocation12 + $0x1a4] sm:$0xff]
        %v4204 = vld [vmem:[#allocation12 + $0x1ac] sm:$0xff]
        %v4205 = vld [vmem:[#allocation12 + $0x1b4] sm:$0xff]
        %v4206 = vld [vmem:[#allocation12 + $0x1bc] sm:$0xf]
        %v4207 = vld [vmem:[#allocation12 + $0x1c0] sm:$0xff]
        %v4208 = vld [vmem:[#allocation12 + $0x1c8] sm:$0xff]
        %v4209 = vld [vmem:[#allocation12 + $0x1d0] sm:$0xff]
        %v4210 = vld [vmem:[#allocation12 + $0x1d8] sm:$0xf]
        %v4211 = vld [vmem:[#allocation12 + $0x1dc] sm:$0xff]
        %v4212 = vld [vmem:[#allocation12 + $0x1e4] sm:$0xff]
        %v4213 = vld [vmem:[#allocation12 + $0x1ec] sm:$0xff]
        %v4214 = vld [vmem:[#allocation12 + $0x1f4] sm:$0xf]
        %v4215 = vld [vmem:[#allocation12 + $0x1f8] sm:$0xff]
        %v4216 = vld [vmem:[#allocation12 + $0x200] sm:$0xff]
        %v4217 = vld [vmem:[#allocation12 + $0x208] sm:$0xff]
        %v4218 = vld [vmem:[#allocation12 + $0x210] sm:$0xf]
        %v4219 = vld [vmem:[#allocation12 + $0x214] sm:$0xff]
        %v4220 = vld [vmem:[#allocation12 + $0x21c] sm:$0xff]
        %v4221 = vld [vmem:[#allocation12 + $0x224] sm:$0xff]
        %v4222 = vld [vmem:[#allocation12 + $0x22c] sm:$0xf]
        %v4223 = vld [vmem:[#allocation12 + $0x230] sm:$0xff]
        %v4224 = vld [vmem:[#allocation12 + $0x238] sm:$0xff]
        %v4225 = vld [vmem:[#allocation12 + $0x240] sm:$0xff]
        %v4226 = vld [vmem:[#allocation12 + $0x248] sm:$0xf]
        %v4227 = vld [vmem:[#allocation12 + $0x24c] sm:$0xff]
        %v4228 = vld [vmem:[#allocation12 + $0x254] sm:$0xff]
        %v4229 = vld [vmem:[#allocation12 + $0x25c] sm:$0xff]
        %v4230 = vld [vmem:[#allocation12 + $0x264] sm:$0xf]
        %v4231 = vld [vmem:[#allocation12 + $0x268] sm:$0xff]
        %v4232 = vld [vmem:[#allocation12 + $0x270] sm:$0xff]
        %v4233 = vld [vmem:[#allocation12 + $0x278] sm:$0xff]
        %v4234 = vld [vmem:[#allocation12 + $0x280] sm:$0xf]
        %v4235 = vld [vmem:[#allocation12 + $0x284] sm:$0xff]
        %v4236 = vld [vmem:[#allocation12 + $0x28c] sm:$0xff]
        %v4237 = vld [vmem:[#allocation12 + $0x294] sm:$0xff]
        %v4238 = vld [vmem:[#allocation12 + $0x29c] sm:$0xf]
        %v4239 = vld [vmem:[#allocation12 + $0x2a0] sm:$0xff]
        %v4240 = vld [vmem:[#allocation12 + $0x2a8] sm:$0xff]
        %v4241 = vld [vmem:[#allocation12 + $0x2b0] sm:$0xff]
        %v4242 = vld [vmem:[#allocation12 + $0x2b8] sm:$0xf]
        %v4243 = vld [vmem:[#allocation12 + $0x2bc] sm:$0xff]
        %v4244 = vld [vmem:[#allocation12 + $0x2c4] sm:$0xff]
        %v4245 = vld [vmem:[#allocation12 + $0x2cc] sm:$0xff]
        %v4246 = vld [vmem:[#allocation12 + $0x2d4] sm:$0xf]
        %v4247 = vld [vmem:[#allocation12 + $0x2d8] sm:$0xff]
        %v4248 = vld [vmem:[#allocation12 + $0x2e0] sm:$0xff]
        %v4249 = vld [vmem:[#allocation12 + $0x2e8] sm:$0xff]
        %v4250 = vld [vmem:[#allocation12 + $0x2f0] sm:$0xf]
        %v4251 = vld [vmem:[#allocation12 + $0x2f4] sm:$0xff]
        %v4252 = vld [vmem:[#allocation12 + $0x2fc] sm:$0xff]
        %v4253 = vld [vmem:[#allocation12 + $0x304] sm:$0xff]
        %v4254 = vld [vmem:[#allocation12 + $0x30c] sm:$0xf]
        %v4255 = vld [vmem:[#allocation12 + $0x310] sm:$0xff]
        %v4256 = vld [vmem:[#allocation12 + $0x318] sm:$0xff]
        %v4257 = vld [vmem:[#allocation12 + $0x320] sm:$0xff]
        %v4258 = vld [vmem:[#allocation12 + $0x328] sm:$0xf]
        %v4259 = vld [vmem:[#allocation12 + $0x32c] sm:$0xff]
        %v4260 = vld [vmem:[#allocation12 + $0x334] sm:$0xff]
        %v4261 = vld [vmem:[#allocation12 + $0x33c] sm:$0xff]
        %v4262 = vld [vmem:[#allocation12 + $0x344] sm:$0xf]
        %v4263 = vld [vmem:[#allocation12 + $0x348] sm:$0xff]
        %v4264 = vld [vmem:[#allocation12 + $0x350] sm:$0xff]
        %v4265 = vld [vmem:[#allocation12 + $0x358] sm:$0xff]
        %v4266 = vld [vmem:[#allocation12 + $0x360] sm:$0xf]
        %v4267 = vld [vmem:[#allocation12 + $0x364] sm:$0xff]
        %v4268 = vld [vmem:[#allocation12 + $0x36c] sm:$0xff]
        %v4269 = vld [vmem:[#allocation12 + $0x374] sm:$0xff]
        %v4270 = vld [vmem:[#allocation12 + $0x37c] sm:$0xf]
        %v4271 = vld [vmem:[#allocation12 + $0x380] sm:$0xff]
        %v4272 = vld [vmem:[#allocation12 + $0x388] sm:$0xff]
        %v4273 = vld [vmem:[#allocation12 + $0x390] sm:$0xff]
        %v4274 = vld [vmem:[#allocation12 + $0x398] sm:$0xf]
        %v4275 = vld [vmem:[#allocation12 + $0x39c] sm:$0xff]
        %v4276 = vld [vmem:[#allocation12 + $0x3a4] sm:$0xff]
        %v4277 = vld [vmem:[#allocation12 + $0x3ac] sm:$0xff]
        %v4278 = vld [vmem:[#allocation12 + $0x3b4] sm:$0xf]
        %v4279 = vld [vmem:[#allocation12 + $0x3b8] sm:$0xff]
        %v4280 = vld [vmem:[#allocation12 + $0x3c0] sm:$0xff]
        %v4281 = vld [vmem:[#allocation12 + $0x3c8] sm:$0xff]
        %v4282 = vld [vmem:[#allocation12 + $0x3d0] sm:$0xf]
        %v4283 = vld [vmem:[#allocation12 + $0x3d4] sm:$0xff]
        %v4284 = vld [vmem:[#allocation12 + $0x3dc] sm:$0xff]
        %v4285 = vld [vmem:[#allocation12 + $0x3e4] sm:$0xff]
        %v4286 = vld [vmem:[#allocation12 + $0x3ec] sm:$0xf]
        %v4287 = vld [vmem:[#allocation12 + $0x3f0] sm:$0xff]
        %v4288 = vld [vmem:[#allocation12 + $0x3f8] sm:$0xff]
        %v4289 = vld [vmem:[#allocation12 + $0x400] sm:$0xff]
        %v4290 = vld [vmem:[#allocation12 + $0x408] sm:$0xf]
        %v4291 = vld [vmem:[#allocation12 + $0x40c] sm:$0xff]
        %v4292 = vld [vmem:[#allocation12 + $0x414] sm:$0xff]
        %v4293 = vld [vmem:[#allocation12 + $0x41c] sm:$0xff]
        %v4294 = vld [vmem:[#allocation12 + $0x424] sm:$0xf]
        %v4295 = vld [vmem:[#allocation12 + $0x428] sm:$0xff]
        %v4296 = vld [vmem:[#allocation12 + $0x430] sm:$0xff]
        %v4297 = vld [vmem:[#allocation12 + $0x438] sm:$0xff]
        %v4298 = vld [vmem:[#allocation12 + $0x440] sm:$0xf]
        %v4299 = vld [vmem:[#allocation12 + $0x444] sm:$0xff]
        %v4300 = vld [vmem:[#allocation12 + $0x44c] sm:$0xff]
        %v4301 = vld [vmem:[#allocation12 + $0x454] sm:$0xff]
        %v4302 = vld [vmem:[#allocation12 + $0x45c] sm:$0xf]
        %v4303 = vld [vmem:[#allocation12 + $0x460] sm:$0xff]
        %v4304 = vld [vmem:[#allocation12 + $0x468] sm:$0xff]
        %v4305 = vld [vmem:[#allocation12 + $0x470] sm:$0xff]
        %v4306 = vld [vmem:[#allocation12 + $0x478] sm:$0xf]
        %v4307 = vld [vmem:[#allocation12 + $0x47c] sm:$0xff]
        %v4308 = vld [vmem:[#allocation12 + $0x484] sm:$0xff]
        %v4309 = vld [vmem:[#allocation12 + $0x48c] sm:$0xff]
        %v4310 = vld [vmem:[#allocation12 + $0x494] sm:$0xf]
        %v4311 = vld [vmem:[#allocation12 + $0x498] sm:$0xff]
        %v4312 = vld [vmem:[#allocation12 + $0x4a0] sm:$0xff]
        %v4313 = vld [vmem:[#allocation12 + $0x4a8] sm:$0xff]
        %v4314 = vld [vmem:[#allocation12 + $0x4b0] sm:$0xf]
        %v4315 = vld [vmem:[#allocation12 + $0x4b4] sm:$0xff]
        %v4316 = vld [vmem:[#allocation12 + $0x4bc] sm:$0xff]
        %v4317 = vld [vmem:[#allocation12 + $0x4c4] sm:$0xff]
        %v4318 = vld [vmem:[#allocation12 + $0x4cc] sm:$0xf]
        %v4319 = vld [vmem:[#allocation12 + $0x4d0] sm:$0xff]
        %v4320 = vld [vmem:[#allocation12 + $0x4d8] sm:$0xff]
        %v4321 = vld [vmem:[#allocation12 + $0x4e0] sm:$0xff]
        %v4322 = vld [vmem:[#allocation12 + $0x4e8] sm:$0xf]
        %v4323 = vld [vmem:[#allocation12 + $0x4ec] sm:$0xff]
        %v4324 = vld [vmem:[#allocation12 + $0x4f4] sm:$0xff]
        %v4325 = vld [vmem:[#allocation12 + $0x4fc] sm:$0xff]
        %v4326 = vld [vmem:[#allocation12 + $0x504] sm:$0xf]
        %v4327 = vld [vmem:[#allocation12 + $0x508] sm:$0xff]
        %v4328 = vld [vmem:[#allocation12 + $0x510] sm:$0xff]
        %v4329 = vld [vmem:[#allocation12 + $0x518] sm:$0xff]
        %v4330 = vld [vmem:[#allocation12 + $0x520] sm:$0xf]
        %v4331 = vld [vmem:[#allocation12 + $0x524] sm:$0xff]
        %v4332 = vld [vmem:[#allocation12 + $0x52c] sm:$0xff]
        %v4333 = vld [vmem:[#allocation12 + $0x534] sm:$0xff]
        %v4334 = vld [vmem:[#allocation12 + $0x53c] sm:$0xf]
        %v4335 = vld [vmem:[#allocation12 + $0x540] sm:$0xff]
        %v4336 = vld [vmem:[#allocation12 + $0x548] sm:$0xff]
        %v4337 = vld [vmem:[#allocation12 + $0x550] sm:$0xff]
        %v4338 = vld [vmem:[#allocation12 + $0x558] sm:$0xf]
        %v4339 = vld [vmem:[#allocation12 + $0x55c] sm:$0xff]
        %v4340 = vld [vmem:[#allocation12 + $0x564] sm:$0xff]
        %v4341 = vld [vmem:[#allocation12 + $0x56c] sm:$0xff]
        %v4342 = vld [vmem:[#allocation12 + $0x574] sm:$0xf]
        %v4343 = vld [vmem:[#allocation12 + $0x578] sm:$0xff]
        %v4344 = vld [vmem:[#allocation12 + $0x580] sm:$0xff]
        %v4345 = vld [vmem:[#allocation12 + $0x588] sm:$0xff]
        %v4346 = vld [vmem:[#allocation12 + $0x590] sm:$0xf]
        %v4347 = vld [vmem:[#allocation12 + $0x594] sm:$0xff]
        %v4348 = vld [vmem:[#allocation12 + $0x59c] sm:$0xff]
        %v4349 = vld [vmem:[#allocation12 + $0x5a4] sm:$0xff]
        %v4350 = vld [vmem:[#allocation12 + $0x5ac] sm:$0xf]
        %v4351 = vld [vmem:[#allocation12 + $0x5b0] sm:$0xff]
        %v4352 = vld [vmem:[#allocation12 + $0x5b8] sm:$0xff]
        %v4353 = vld [vmem:[#allocation12 + $0x5c0] sm:$0xff]
        %v4354 = vld [vmem:[#allocation12 + $0x5c8] sm:$0xf]
        %v4355 = vld [vmem:[#allocation12 + $0x5cc] sm:$0xff]
        %v4356 = vld [vmem:[#allocation12 + $0x5d4] sm:$0xff]
        %v4357 = vld [vmem:[#allocation12 + $0x5dc] sm:$0xff]
        %v4358 = vld [vmem:[#allocation12 + $0x5e4] sm:$0xf]
        %v4359 = vld [vmem:[#allocation12 + $0x5e8] sm:$0xff]
        %v4360 = vld [vmem:[#allocation12 + $0x5f0] sm:$0xff]
        %v4361 = vld [vmem:[#allocation12 + $0x5f8] sm:$0xff]
        %v4362 = vld [vmem:[#allocation12 + $0x600] sm:$0xf]
        %v4363 = vld [vmem:[#allocation12 + $0x604] sm:$0xff]
        %v4364 = vld [vmem:[#allocation12 + $0x60c] sm:$0xff]
        %v4365 = vld [vmem:[#allocation12 + $0x614] sm:$0xff]
        %v4366 = vld [vmem:[#allocation12 + $0x61c] sm:$0xf]
        %v4367 = vld [vmem:[#allocation12 + $0x620] sm:$0xff]
        %v4368 = vld [vmem:[#allocation12 + $0x628] sm:$0xff]
        %v4369 = vld [vmem:[#allocation12 + $0x630] sm:$0xff]
        %v4370 = vld [vmem:[#allocation12 + $0x638] sm:$0xf]
        %v4371 = vld [vmem:[#allocation12 + $0x63c] sm:$0xff]
        %v4372 = vld [vmem:[#allocation12 + $0x644] sm:$0xff]
        %v4373 = vld [vmem:[#allocation12 + $0x64c] sm:$0xff]
        %v4374 = vld [vmem:[#allocation12 + $0x654] sm:$0xf]
        %v4375 = vld [vmem:[#allocation12 + $0x658] sm:$0xff]
        %v4376 = vld [vmem:[#allocation12 + $0x660] sm:$0xff]
        %v4377 = vld [vmem:[#allocation12 + $0x668] sm:$0xff]
        %v4378 = vld [vmem:[#allocation12 + $0x670] sm:$0xf]
        %v4379 = vld [vmem:[#allocation12 + $0x674] sm:$0xff]
        %v4380 = vld [vmem:[#allocation12 + $0x67c] sm:$0xff]
        %v4381 = vld [vmem:[#allocation12 + $0x684] sm:$0xff]
        %v4382 = vld [vmem:[#allocation12 + $0x68c] sm:$0xf]
        %v4383 = vld [vmem:[#allocation12 + $0x690] sm:$0xff]
        %v4384 = vld [vmem:[#allocation12 + $0x698] sm:$0xff]
        %v4385 = vld [vmem:[#allocation12 + $0x6a0] sm:$0xff]
        %v4386 = vld [vmem:[#allocation12 + $0x6a8] sm:$0xf]
        %v4387 = vld [vmem:[#allocation12 + $0x6ac] sm:$0xff]
        %v4388 = vld [vmem:[#allocation12 + $0x6b4] sm:$0xff]
        %v4389 = vld [vmem:[#allocation12 + $0x6bc] sm:$0xff]
        %v4390 = vld [vmem:[#allocation12 + $0x6c4] sm:$0xf]
        %v4391 = vld [vmem:[#allocation12 + $0x6c8] sm:$0xff]
        %v4392 = vld [vmem:[#allocation12 + $0x6d0] sm:$0xff]
        %v4393 = vld [vmem:[#allocation12 + $0x6d8] sm:$0xff]
        %v4394 = vld [vmem:[#allocation12 + $0x6e0] sm:$0xf]
        %v4395 = vld [vmem:[#allocation12 + $0x6e4] sm:$0xff]
        %v4396 = vld [vmem:[#allocation12 + $0x6ec] sm:$0xff]
        %v4397 = vld [vmem:[#allocation12 + $0x6f4] sm:$0xff]
        %v4398 = vld [vmem:[#allocation12 + $0x6fc] sm:$0xf]
        %v4399 = vld [vmem:[#allocation12 + $0x700] sm:$0xff]
        %v4400 = vld [vmem:[#allocation12 + $0x708] sm:$0xff]
        %v4401 = vld [vmem:[#allocation12 + $0x710] sm:$0xff]
        %v4402 = vld [vmem:[#allocation12 + $0x718] sm:$0xf]
        %v4403 = vld [vmem:[#allocation12 + $0x71c] sm:$0xff]
        %v4404 = vld [vmem:[#allocation12 + $0x724] sm:$0xff]
        %v4405 = vld [vmem:[#allocation12 + $0x72c] sm:$0xff]
        %v4406 = vld [vmem:[#allocation12 + $0x734] sm:$0xf]
        %v4407 = vld [vmem:[#allocation12 + $0x738] sm:$0xff]
        %v4408 = vld [vmem:[#allocation12 + $0x740] sm:$0xff]
        %v4409 = vld [vmem:[#allocation12 + $0x748] sm:$0xff]
        %v4410 = vld [vmem:[#allocation12 + $0x750] sm:$0xf]
        %v4411 = vld [vmem:[#allocation12 + $0x754] sm:$0xff]
        %v4412 = vld [vmem:[#allocation12 + $0x75c] sm:$0xff]
        %v4413 = vld [vmem:[#allocation12 + $0x764] sm:$0xff]
        %v4414 = vld [vmem:[#allocation12 + $0x76c] sm:$0xf]
        %v4415 = vld [vmem:[#allocation12 + $0x770] sm:$0xff]
        %v4416 = vld [vmem:[#allocation12 + $0x778] sm:$0xff]
        %v4417 = vld [vmem:[#allocation12 + $0x780] sm:$0xff]
        %v4418 = vld [vmem:[#allocation12 + $0x788] sm:$0xf]
        %v4419 = vld [vmem:[#allocation12 + $0x78c] sm:$0xff]
        %v4420 = vld [vmem:[#allocation12 + $0x794] sm:$0xff]
        %v4421 = vld [vmem:[#allocation12 + $0x79c] sm:$0xff]
        %v4422 = vld [vmem:[#allocation12 + $0x7a4] sm:$0xf]
        %v4423 = vld [vmem:[#allocation12 + $0x7a8] sm:$0xff]
        %v4424 = vld [vmem:[#allocation12 + $0x7b0] sm:$0xff]
        %v4425 = vld [vmem:[#allocation12 + $0x7b8] sm:$0xff]
        %v4426 = vld [vmem:[#allocation12 + $0x7c0] sm:$0xf]
        %v4427 = vld [vmem:[#allocation12 + $0x7c4] sm:$0xff]
        %v4428 = vld [vmem:[#allocation12 + $0x7cc] sm:$0xff]
        %v4429 = vld [vmem:[#allocation12 + $0x7d4] sm:$0xff]
        %v4430 = vld [vmem:[#allocation12 + $0x7dc] sm:$0xf]
        %v4431 = vld [vmem:[#allocation12 + $0x7e0] sm:$0xff]
        %v4432 = vld [vmem:[#allocation12 + $0x7e8] sm:$0xff]
        %v4433 = vld [vmem:[#allocation12 + $0x7f0] sm:$0xff]
        %v4434 = vld [vmem:[#allocation12 + $0x7f8] sm:$0xf]
        %v4435 = vld [vmem:[#allocation12 + $0x7fc] sm:$0xff]
        %v4436 = vld [vmem:[#allocation12 + $0x804] sm:$0xff]
        %v4437 = vld [vmem:[#allocation12 + $0x80c] sm:$0xff]
        %v4438 = vld [vmem:[#allocation12 + $0x814] sm:$0xf]
        %v4439 = vld [vmem:[#allocation12 + $0x818] sm:$0xff]
        %v4440 = vld [vmem:[#allocation12 + $0x820] sm:$0xff]
        %v4441 = vld [vmem:[#allocation12 + $0x828] sm:$0xff]
        %v4442 = vld [vmem:[#allocation12 + $0x830] sm:$0xf]
        %v4443 = vld [vmem:[#allocation12 + $0x834] sm:$0xff]
        %v4444 = vld [vmem:[#allocation12 + $0x83c] sm:$0xff]
        %v4445 = vld [vmem:[#allocation12 + $0x844] sm:$0xff]
        %v4446 = vld [vmem:[#allocation12 + $0x84c] sm:$0xf]
        %v4447 = vld [vmem:[#allocation12 + $0x850] sm:$0xff]
        %v4448 = vld [vmem:[#allocation12 + $0x858] sm:$0xff]
        %v4449 = vld [vmem:[#allocation12 + $0x860] sm:$0xff]
        %v4450 = vld [vmem:[#allocation12 + $0x868] sm:$0xf]
        %v4451 = vld [vmem:[#allocation12 + $0x86c] sm:$0xff]
        %v4452 = vld [vmem:[#allocation12 + $0x874] sm:$0xff]
        %v4453 = vld [vmem:[#allocation12 + $0x87c] sm:$0xff]
        %v4454 = vld [vmem:[#allocation12 + $0x884] sm:$0xf]
        %v4455 = vld [vmem:[#allocation12 + $0x888] sm:$0xff]
        %v4456 = vld [vmem:[#allocation12 + $0x890] sm:$0xff]
        %v4457 = vld [vmem:[#allocation12 + $0x898] sm:$0xff]
        %v4458 = vld [vmem:[#allocation12 + $0x8a0] sm:$0xf]
        %v4459 = vld [vmem:[#allocation12 + $0x8a4] sm:$0xff]
        %v4460 = vld [vmem:[#allocation12 + $0x8ac] sm:$0xff]
        %v4461 = vld [vmem:[#allocation12 + $0x8b4] sm:$0xff]
        %v4462 = vld [vmem:[#allocation12 + $0x8bc] sm:$0xf]
        %v4463 = vld [vmem:[#allocation12 + $0x8c0] sm:$0xff]
        %v4464 = vld [vmem:[#allocation12 + $0x8c8] sm:$0xff]
        %v4465 = vld [vmem:[#allocation12 + $0x8d0] sm:$0xff]
        %v4466 = vld [vmem:[#allocation12 + $0x8d8] sm:$0xf]
        %v4467 = vld [vmem:[#allocation12 + $0x8dc] sm:$0xff]
        %v4468 = vld [vmem:[#allocation12 + $0x8e4] sm:$0xff]
        %v4469 = vld [vmem:[#allocation12 + $0x8ec] sm:$0xff]
        %v4470 = vld [vmem:[#allocation12 + $0x8f4] sm:$0xf]
        %v4471 = vld [vmem:[#allocation12 + $0x8f8] sm:$0xff]
        %v4472 = vld [vmem:[#allocation12 + $0x900] sm:$0xff]
        %v4473 = vld [vmem:[#allocation12 + $0x908] sm:$0xff]
        %v4474 = vld [vmem:[#allocation12 + $0x910] sm:$0xf]
        %v4475 = vld [vmem:[#allocation12 + $0x914] sm:$0xff]
        %v4476 = vld [vmem:[#allocation12 + $0x91c] sm:$0xff]
        %v4477 = vld [vmem:[#allocation12 + $0x924] sm:$0xff]
        %v4478 = vld [vmem:[#allocation12 + $0x92c] sm:$0xf]
        %v4479 = vld [vmem:[#allocation12 + $0x930] sm:$0xff]
        %v4480 = vld [vmem:[#allocation12 + $0x938] sm:$0xff]
        %v4481 = vld [vmem:[#allocation12 + $0x940] sm:$0xff]
        %v4482 = vld [vmem:[#allocation12 + $0x948] sm:$0xf]
        %v4483 = vld [vmem:[#allocation12 + $0x94c] sm:$0xff]
        %v4484 = vld [vmem:[#allocation12 + $0x954] sm:$0xff]
        %v4485 = vld [vmem:[#allocation12 + $0x95c] sm:$0xff]
        %v4486 = vld [vmem:[#allocation12 + $0x964] sm:$0xf]
        %v4487 = vld [vmem:[#allocation12 + $0x968] sm:$0xff]
        %v4488 = vld [vmem:[#allocation12 + $0x970] sm:$0xff]
        %v4489 = vld [vmem:[#allocation12 + $0x978] sm:$0xff]
        %v4490 = vld [vmem:[#allocation12 + $0x980] sm:$0xf]
        %v4491 = vld [vmem:[#allocation12 + $0x984] sm:$0xff]
        %v4492 = vld [vmem:[#allocation12 + $0x98c] sm:$0xff]
        %v4493 = vld [vmem:[#allocation12 + $0x994] sm:$0xff]
        %v4494 = vld [vmem:[#allocation12 + $0x99c] sm:$0xf]
        %v4495 = vld [vmem:[#allocation12 + $0x9a0] sm:$0xff]
        %v4496 = vld [vmem:[#allocation12 + $0x9a8] sm:$0xff]
        %v4497 = vld [vmem:[#allocation12 + $0x9b0] sm:$0xff]
        %v4498 = vld [vmem:[#allocation12 + $0x9b8] sm:$0xf]
        %v4499 = vld [vmem:[#allocation12 + $0x9bc] sm:$0xff]
        %v4500 = vld [vmem:[#allocation12 + $0x9c4] sm:$0xff]
        %v4501 = vld [vmem:[#allocation12 + $0x9cc] sm:$0xff]
        %v4502 = vld [vmem:[#allocation12 + $0x9d4] sm:$0xf]
        %v4503 = vld [vmem:[#allocation12 + $0x9d8] sm:$0xff]
        %v4504 = vld [vmem:[#allocation12 + $0x9e0] sm:$0xff]
        %v4505 = vld [vmem:[#allocation12 + $0x9e8] sm:$0xff]
        %v4506 = vld [vmem:[#allocation12 + $0x9f0] sm:$0xf]
        %v4507 = vld [vmem:[#allocation12 + $0x9f4] sm:$0xff]
        %v4508 = vld [vmem:[#allocation12 + $0x9fc] sm:$0xff]
        %v4509 = vld [vmem:[#allocation12 + $0xa04] sm:$0xff]
        %v4510 = vld [vmem:[#allocation12 + $0xa0c] sm:$0xf]
        %v4511 = vld [vmem:[#allocation12 + $0xa10] sm:$0xff]
        %v4512 = vld [vmem:[#allocation12 + $0xa18] sm:$0xff]
        %v4513 = vld [vmem:[#allocation12 + $0xa20] sm:$0xff]
        %v4514 = vld [vmem:[#allocation12 + $0xa28] sm:$0xf]
        %v4515 = vld [vmem:[#allocation12 + $0xa2c] sm:$0xff]
        %v4516 = vld [vmem:[#allocation12 + $0xa34] sm:$0xff]
        %v4517 = vld [vmem:[#allocation12 + $0xa3c] sm:$0xff]
        %v4518 = vld [vmem:[#allocation12 + $0xa44] sm:$0xf]
        %v4519 = vld [vmem:[#allocation12 + $0xa48] sm:$0xff]
        %v4520 = vld [vmem:[#allocation12 + $0xa50] sm:$0xff]
        %v4521 = vld [vmem:[#allocation12 + $0xa58] sm:$0xff]
        %v4522 = vld [vmem:[#allocation12 + $0xa60] sm:$0xf]
        %v4523 = vld [vmem:[#allocation12 + $0xa64] sm:$0xff]
        %v4524 = vld [vmem:[#allocation12 + $0xa6c] sm:$0xff]
        %v4525 = vld [vmem:[#allocation12 + $0xa74] sm:$0xff]
        %v4526 = vld [vmem:[#allocation12 + $0xa7c] sm:$0xf]
        %v4527 = vld [vmem:[#allocation12 + $0xa80] sm:$0xff]
        %v4528 = vld [vmem:[#allocation12 + $0xa88] sm:$0xff]
        %v4529 = vld [vmem:[#allocation12 + $0xa90] sm:$0xff]
        %v4530 = vld [vmem:[#allocation12 + $0xa98] sm:$0xf]
        %v4531 = vld [vmem:[#allocation12 + $0xa9c] sm:$0xff]
        %v4532 = vld [vmem:[#allocation12 + $0xaa4] sm:$0xff]
        %v4533 = vld [vmem:[#allocation12 + $0xaac] sm:$0xff]
        %v4534 = vld [vmem:[#allocation12 + $0xab4] sm:$0xf]
        %v4535 = vld [vmem:[#allocation12 + $0xab8] sm:$0xff]
        %v4536 = vld [vmem:[#allocation12 + $0xac0] sm:$0xff]
        %v4537 = vld [vmem:[#allocation12 + $0xac8] sm:$0xff]
        %v4538 = vld [vmem:[#allocation12 + $0xad0] sm:$0xf]
        %v4539 = vld [vmem:[#allocation12 + $0xad4] sm:$0xff]
        %v4540 = vld [vmem:[#allocation12 + $0xadc] sm:$0xff]
        %v4541 = vld [vmem:[#allocation12 + $0xae4] sm:$0xff]
        %v4542 = vld [vmem:[#allocation12 + $0xaec] sm:$0xf]
        %v4543 = vld [vmem:[#allocation12 + $0xaf0] sm:$0xff]
        %v4544 = vld [vmem:[#allocation12 + $0xaf8] sm:$0xff]
        %v4545 = vld [vmem:[#allocation12 + $0xb00] sm:$0xff]
        %v4546 = vld [vmem:[#allocation12 + $0xb08] sm:$0xf]
        %v4547 = vld [vmem:[#allocation12 + $0xb0c] sm:$0xff]
        %v4548 = vld [vmem:[#allocation12 + $0xb14] sm:$0xff]
        %v4549 = vld [vmem:[#allocation12 + $0xb1c] sm:$0xff]
        %v4550 = vld [vmem:[#allocation12 + $0xb24] sm:$0xf]
        %v4551 = vld [vmem:[#allocation12 + $0xb28] sm:$0xff]
        %v4552 = vld [vmem:[#allocation12 + $0xb30] sm:$0xff]
        %v4553 = vld [vmem:[#allocation12 + $0xb38] sm:$0xff]
        %v4554 = vld [vmem:[#allocation12 + $0xb40] sm:$0xf]
        %v4555 = vld [vmem:[#allocation12 + $0xb44] sm:$0xff]
        %v4556 = vld [vmem:[#allocation12 + $0xb4c] sm:$0xff]
        %v4557 = vld [vmem:[#allocation12 + $0xb54] sm:$0xff]
        %v4558 = vld [vmem:[#allocation12 + $0xb5c] sm:$0xf]
        %v4559 = vld [vmem:[#allocation12 + $0xb60] sm:$0xff]
        %v4560 = vld [vmem:[#allocation12 + $0xb68] sm:$0xff]
        %v4561 = vld [vmem:[#allocation12 + $0xb70] sm:$0xff]
        %v4562 = vld [vmem:[#allocation12 + $0xb78] sm:$0xf]
        %v4563 = vld [vmem:[#allocation12 + $0xb7c] sm:$0xff]
        %v4564 = vld [vmem:[#allocation12 + $0xb84] sm:$0xff]
        %v4565 = vld [vmem:[#allocation12 + $0xb8c] sm:$0xff]
        %v4566 = vld [vmem:[#allocation12 + $0xb94] sm:$0xf]
        %v4567 = vld [vmem:[#allocation12 + $0xb98] sm:$0xff]
        %v4568 = vld [vmem:[#allocation12 + $0xba0] sm:$0xff]
        %v4569 = vld [vmem:[#allocation12 + $0xba8] sm:$0xff]
        %v4570 = vld [vmem:[#allocation12 + $0xbb0] sm:$0xf]
        %v4571 = vld [vmem:[#allocation12 + $0xbb4] sm:$0xff]
        %v4572 = vld [vmem:[#allocation12 + $0xbbc] sm:$0xff]
        %v4573 = vld [vmem:[#allocation12 + $0xbc4] sm:$0xff]
        %v4574 = vld [vmem:[#allocation12 + $0xbcc] sm:$0xf]
        %v4575 = vld [vmem:[#allocation12 + $0xbd0] sm:$0xff]
        %v4576 = vld [vmem:[#allocation12 + $0xbd8] sm:$0xff]
        %v4577 = vld [vmem:[#allocation12 + $0xbe0] sm:$0xff]
        %v4578 = vld [vmem:[#allocation12 + $0xbe8] sm:$0xf]
        %v4579 = vld [vmem:[#allocation12 + $0xbec] sm:$0xff]
        %v4580 = vld [vmem:[#allocation12 + $0xbf4] sm:$0xff]
        %v4581 = vld [vmem:[#allocation12 + $0xbfc] sm:$0xff]
        %v4582 = vld [vmem:[#allocation12 + $0xc04] sm:$0xf]
        %v4583 = vld [vmem:[#allocation12 + $0xc08] sm:$0xff]
        %v4584 = vld [vmem:[#allocation12 + $0xc10] sm:$0xff]
        %v4585 = vld [vmem:[#allocation12 + $0xc18] sm:$0xff]
        %v4586 = vld [vmem:[#allocation12 + $0xc20] sm:$0xf]
        %v4587 = vld [vmem:[#allocation12 + $0xc24] sm:$0xff]
        %v4588 = vld [vmem:[#allocation12 + $0xc2c] sm:$0xff]
        %v4589 = vld [vmem:[#allocation12 + $0xc34] sm:$0xff]
        %v4590 = vld [vmem:[#allocation12 + $0xc3c] sm:$0xf]
        %v4591 = vld [vmem:[#allocation12 + $0xc40] sm:$0xff]
        %v4592 = vld [vmem:[#allocation12 + $0xc48] sm:$0xff]
        %v4593 = vld [vmem:[#allocation12 + $0xc50] sm:$0xff]
        %v4594 = vld [vmem:[#allocation12 + $0xc58] sm:$0xf]
        %v4595 = vld [vmem:[#allocation12 + $0xc5c] sm:$0xff]
        %v4596 = vld [vmem:[#allocation12 + $0xc64] sm:$0xff]
        %v4597 = vld [vmem:[#allocation12 + $0xc6c] sm:$0xff]
        %v4598 = vld [vmem:[#allocation12 + $0xc74] sm:$0xf]
        %v4599 = vld [vmem:[#allocation12 + $0xc78] sm:$0xff]
        %v4600 = vld [vmem:[#allocation12 + $0xc80] sm:$0xff]
        %v4601 = vld [vmem:[#allocation12 + $0xc88] sm:$0xff]
        %v4602 = vld [vmem:[#allocation12 + $0xc90] sm:$0xf]
        %v4603 = vld [vmem:[#allocation12 + $0xc94] sm:$0xff]
        %v4604 = vld [vmem:[#allocation12 + $0xc9c] sm:$0xff]
        %v4605 = vld [vmem:[#allocation12 + $0xca4] sm:$0xff]
        %v4606 = vld [vmem:[#allocation12 + $0xcac] sm:$0xf]
        %v4607 = vld [vmem:[#allocation12 + $0xcb0] sm:$0xff]
        %v4608 = vld [vmem:[#allocation12 + $0xcb8] sm:$0xff]
        %v4609 = vld [vmem:[#allocation12 + $0xcc0] sm:$0xff]
        %v4610 = vld [vmem:[#allocation12 + $0xcc8] sm:$0xf]
        %v4611 = vld [vmem:[#allocation12 + $0xccc] sm:$0xff]
        %v4612 = vld [vmem:[#allocation12 + $0xcd4] sm:$0xff]
        %v4613 = vld [vmem:[#allocation12 + $0xcdc] sm:$0xff]
        %v4614 = vld [vmem:[#allocation12 + $0xce4] sm:$0xf]
        %v4615 = vld [vmem:[#allocation12 + $0xce8] sm:$0xff]
        %v4616 = vld [vmem:[#allocation12 + $0xcf0] sm:$0xff]
        %v4617 = vld [vmem:[#allocation12 + $0xcf8] sm:$0xff]
        %v4618 = vld [vmem:[#allocation12 + $0xd00] sm:$0xf]
        %v4619 = vld [vmem:[#allocation12 + $0xd04] sm:$0xff]
        %v4620 = vld [vmem:[#allocation12 + $0xd0c] sm:$0xff]
        %v4621 = vld [vmem:[#allocation12 + $0xd14] sm:$0xff]
        %v4622 = vld [vmem:[#allocation12 + $0xd1c] sm:$0xf]
        %v4623 = vld [vmem:[#allocation12 + $0xd20] sm:$0xff]
        %v4624 = vld [vmem:[#allocation12 + $0xd28] sm:$0xff]
        %v4625 = vld [vmem:[#allocation12 + $0xd30] sm:$0xff]
        %v4626 = vld [vmem:[#allocation12 + $0xd38] sm:$0xf]
        %v4627 = vld [vmem:[#allocation12 + $0xd3c] sm:$0xff]
        %v4628 = vld [vmem:[#allocation12 + $0xd44] sm:$0xff]
        %v4629 = vld [vmem:[#allocation12 + $0xd4c] sm:$0xff]
        %v4630 = vld [vmem:[#allocation12 + $0xd54] sm:$0xf]
        %v4631 = vld [vmem:[#allocation12 + $0xd58] sm:$0xff]
        %v4632 = vld [vmem:[#allocation12 + $0xd60] sm:$0xff]
        %v4633 = vld [vmem:[#allocation12 + $0xd68] sm:$0xff]
        %v4634 = vld [vmem:[#allocation12 + $0xd70] sm:$0xf]
        %v4635 = vld [vmem:[#allocation12 + $0xd74] sm:$0xff]
        %v4636 = vld [vmem:[#allocation12 + $0xd7c] sm:$0xff]
        %v4637 = vld [vmem:[#allocation12 + $0xd84] sm:$0xff]
        %v4638 = vld [vmem:[#allocation12 + $0xd8c] sm:$0xf]
        %v4639 = vld [vmem:[#allocation12 + $0xd90] sm:$0xff]
        %v4640 = vld [vmem:[#allocation12 + $0xd98] sm:$0xff]
        %v4641 = vld [vmem:[#allocation12 + $0xda0] sm:$0xff]
        %v4642 = vld [vmem:[#allocation12 + $0xda8] sm:$0xf]
        %v4643 = vld [vmem:[#allocation12 + $0xdac] sm:$0xff]
        %v4644 = vld [vmem:[#allocation12 + $0xdb4] sm:$0xff]
        %v4645 = vld [vmem:[#allocation12 + $0xdbc] sm:$0xff]
        %v4646 = vld [vmem:[#allocation12 + $0xdc4] sm:$0xf]
        %v4647 = vld [vmem:[#allocation12 + $0xdc8] sm:$0xff]
        %v4648 = vld [vmem:[#allocation12 + $0xdd0] sm:$0xff]
        %v4649 = vld [vmem:[#allocation12 + $0xdd8] sm:$0xff]
        %v4650 = vld [vmem:[#allocation12 + $0xde0] sm:$0xf]
        %v4651 = vld [vmem:[#allocation12 + $0xde4] sm:$0xff]
        %v4652 = vld [vmem:[#allocation12 + $0xdec] sm:$0xff]
        %v4653 = vld [vmem:[#allocation12 + $0xdf4] sm:$0xff]
        %v4654 = vld [vmem:[#allocation12 + $0xdfc] sm:$0xf]
        %v4655 = vld [vmem:[#allocation13] sm:$0xff]
        %v4657 = vlaneseq
        %v4658 = vshrl.u32 %v4657, 7
        %v4659 = vsub.s32 0, %v4658
        %v4660 = vrot.slane %v4655, %v4659
        %v4661 = vlaneseq
        %v4662 = vshrl.u32 %v4661, 7
        %v4663 = vsub.s32 1, %v4662
        %v4664 = vrot.slane %v4655, %v4663
        %v4665 = vlaneseq
        %v4666 = vshrl.u32 %v4665, 7
        %v4667 = vsub.s32 2, %v4666
        %v4668 = vrot.slane %v4655, %v4667
        %v4669 = vlaneseq
        %v4670 = vshrl.u32 %v4669, 7
        %v4671 = vsub.s32 3, %v4670
        %v4672 = vrot.slane %v4655, %v4671
        %v4673 = vlaneseq
        %v4674 = vshrl.u32 %v4673, 7
        %v4675 = vsub.s32 4, %v4674
        %v4676 = vrot.slane %v4655, %v4675
        %v4677 = vlaneseq
        %v4678 = vshrl.u32 %v4677, 7
        %v4679 = vsub.s32 5, %v4678
        %v4680 = vrot.slane %v4655, %v4679
        %v4681 = vlaneseq
        %v4682 = vshrl.u32 %v4681, 7
        %v4683 = vsub.s32 6, %v4682
        %v4684 = vrot.slane %v4655, %v4683
        %v5204 = vunpack.c.l.b16 %v4143
        %v5205 = vunpack.c.h.b16 %v4143
        %v5206 = vunpack.c.l.b16 %v4144
        %v5207 = vunpack.c.h.b16 %v4144
        %v5208 = vunpack.c.l.b16 %v4145
        %v5209 = vunpack.c.h.b16 %v4145
        %v5210 = vunpack.c.l.b16 %v4146
        %v5211 = vunpack.c.l.b16 %v4147
        %v5212 = vunpack.c.h.b16 %v4147
        %v5213 = vunpack.c.l.b16 %v4148
        %v5214 = vunpack.c.h.b16 %v4148
        %v5215 = vunpack.c.l.b16 %v4149
        %v5216 = vunpack.c.h.b16 %v4149
        %v5217 = vunpack.c.l.b16 %v4150
        %v5218 = vunpack.c.l.b16 %v4151
        %v5219 = vunpack.c.h.b16 %v4151
        %v5220 = vunpack.c.l.b16 %v4152
        %v5221 = vunpack.c.h.b16 %v4152
        %v5222 = vunpack.c.l.b16 %v4153
        %v5223 = vunpack.c.h.b16 %v4153
        %v5224 = vunpack.c.l.b16 %v4154
        %v5225 = vunpack.c.l.b16 %v4155
        %v5226 = vunpack.c.h.b16 %v4155
        %v5227 = vunpack.c.l.b16 %v4156
        %v5228 = vunpack.c.h.b16 %v4156
        %v5229 = vunpack.c.l.b16 %v4157
        %v5230 = vunpack.c.h.b16 %v4157
        %v5231 = vunpack.c.l.b16 %v4158
        %v5232 = vunpack.c.l.b16 %v4159
        %v5233 = vunpack.c.h.b16 %v4159
        %v5234 = vunpack.c.l.b16 %v4160
        %v5235 = vunpack.c.h.b16 %v4160
        %v5236 = vunpack.c.l.b16 %v4161
        %v5237 = vunpack.c.h.b16 %v4161
        %v5238 = vunpack.c.l.b16 %v4162
        %v5239 = vunpack.c.l.b16 %v4163
        %v5240 = vunpack.c.h.b16 %v4163
        %v5241 = vunpack.c.l.b16 %v4164
        %v5242 = vunpack.c.h.b16 %v4164
        %v5243 = vunpack.c.l.b16 %v4165
        %v5244 = vunpack.c.h.b16 %v4165
        %v5245 = vunpack.c.l.b16 %v4166
        %v5246 = vunpack.c.l.b16 %v4167
        %v5247 = vunpack.c.h.b16 %v4167
        %v5248 = vunpack.c.l.b16 %v4168
        %v5249 = vunpack.c.h.b16 %v4168
        %v5250 = vunpack.c.l.b16 %v4169
        %v5251 = vunpack.c.h.b16 %v4169
        %v5252 = vunpack.c.l.b16 %v4170
        %v5253 = vunpack.c.l.b16 %v4171
        %v5254 = vunpack.c.h.b16 %v4171
        %v5255 = vunpack.c.l.b16 %v4172
        %v5256 = vunpack.c.h.b16 %v4172
        %v5257 = vunpack.c.l.b16 %v4173
        %v5258 = vunpack.c.h.b16 %v4173
        %v5259 = vunpack.c.l.b16 %v4174
        %v5260 = vunpack.c.l.b16 %v4175
        %v5261 = vunpack.c.h.b16 %v4175
        %v5262 = vunpack.c.l.b16 %v4176
        %v5263 = vunpack.c.h.b16 %v4176
        %v5264 = vunpack.c.l.b16 %v4177
        %v5265 = vunpack.c.h.b16 %v4177
        %v5266 = vunpack.c.l.b16 %v4178
        %v5267 = vunpack.c.l.b16 %v4179
        %v5268 = vunpack.c.h.b16 %v4179
        %v5269 = vunpack.c.l.b16 %v4180
        %v5270 = vunpack.c.h.b16 %v4180
        %v5271 = vunpack.c.l.b16 %v4181
        %v5272 = vunpack.c.h.b16 %v4181
        %v5273 = vunpack.c.l.b16 %v4182
        %v5274 = vunpack.c.l.b16 %v4183
        %v5275 = vunpack.c.h.b16 %v4183
        %v5276 = vunpack.c.l.b16 %v4184
        %v5277 = vunpack.c.h.b16 %v4184
        %v5278 = vunpack.c.l.b16 %v4185
        %v5279 = vunpack.c.h.b16 %v4185
        %v5280 = vunpack.c.l.b16 %v4186
        %v5281 = vunpack.c.l.b16 %v4187
        %v5282 = vunpack.c.h.b16 %v4187
        %v5283 = vunpack.c.l.b16 %v4188
        %v5284 = vunpack.c.h.b16 %v4188
        %v5285 = vunpack.c.l.b16 %v4189
        %v5286 = vunpack.c.h.b16 %v4189
        %v5287 = vunpack.c.l.b16 %v4190
        %v5288 = vunpack.c.l.b16 %v4191
        %v5289 = vunpack.c.h.b16 %v4191
        %v5290 = vunpack.c.l.b16 %v4192
        %v5291 = vunpack.c.h.b16 %v4192
        %v5292 = vunpack.c.l.b16 %v4193
        %v5293 = vunpack.c.h.b16 %v4193
        %v5294 = vunpack.c.l.b16 %v4194
        %v5295 = vunpack.c.l.b16 %v4195
        %v5296 = vunpack.c.h.b16 %v4195
        %v5297 = vunpack.c.l.b16 %v4196
        %v5298 = vunpack.c.h.b16 %v4196
        %v5299 = vunpack.c.l.b16 %v4197
        %v5300 = vunpack.c.h.b16 %v4197
        %v5301 = vunpack.c.l.b16 %v4198
        %v5302 = vunpack.c.l.b16 %v4199
        %v5303 = vunpack.c.h.b16 %v4199
        %v5304 = vunpack.c.l.b16 %v4200
        %v5305 = vunpack.c.h.b16 %v4200
        %v5306 = vunpack.c.l.b16 %v4201
        %v5307 = vunpack.c.h.b16 %v4201
        %v5308 = vunpack.c.l.b16 %v4202
        %v5309 = vunpack.c.l.b16 %v4203
        %v5310 = vunpack.c.h.b16 %v4203
        %v5311 = vunpack.c.l.b16 %v4204
        %v5312 = vunpack.c.h.b16 %v4204
        %v5313 = vunpack.c.l.b16 %v4205
        %v5314 = vunpack.c.h.b16 %v4205
        %v5315 = vunpack.c.l.b16 %v4206
        %v5316 = vunpack.c.l.b16 %v4207
        %v5317 = vunpack.c.h.b16 %v4207
        %v5318 = vunpack.c.l.b16 %v4208
        %v5319 = vunpack.c.h.b16 %v4208
        %v5320 = vunpack.c.l.b16 %v4209
        %v5321 = vunpack.c.h.b16 %v4209
        %v5322 = vunpack.c.l.b16 %v4210
        %v5323 = vunpack.c.l.b16 %v4211
        %v5324 = vunpack.c.h.b16 %v4211
        %v5325 = vunpack.c.l.b16 %v4212
        %v5326 = vunpack.c.h.b16 %v4212
        %v5327 = vunpack.c.l.b16 %v4213
        %v5328 = vunpack.c.h.b16 %v4213
        %v5329 = vunpack.c.l.b16 %v4214
        %v5330 = vunpack.c.l.b16 %v4215
        %v5331 = vunpack.c.h.b16 %v4215
        %v5332 = vunpack.c.l.b16 %v4216
        %v5333 = vunpack.c.h.b16 %v4216
        %v5334 = vunpack.c.l.b16 %v4217
        %v5335 = vunpack.c.h.b16 %v4217
        %v5336 = vunpack.c.l.b16 %v4218
        %v5337 = vunpack.c.l.b16 %v4219
        %v5338 = vunpack.c.h.b16 %v4219
        %v5339 = vunpack.c.l.b16 %v4220
        %v5340 = vunpack.c.h.b16 %v4220
        %v5341 = vunpack.c.l.b16 %v4221
        %v5342 = vunpack.c.h.b16 %v4221
        %v5343 = vunpack.c.l.b16 %v4222
        %v5344 = vunpack.c.l.b16 %v4223
        %v5345 = vunpack.c.h.b16 %v4223
        %v5346 = vunpack.c.l.b16 %v4224
        %v5347 = vunpack.c.h.b16 %v4224
        %v5348 = vunpack.c.l.b16 %v4225
        %v5349 = vunpack.c.h.b16 %v4225
        %v5350 = vunpack.c.l.b16 %v4226
        %v5351 = vunpack.c.l.b16 %v4227
        %v5352 = vunpack.c.h.b16 %v4227
        %v5353 = vunpack.c.l.b16 %v4228
        %v5354 = vunpack.c.h.b16 %v4228
        %v5355 = vunpack.c.l.b16 %v4229
        %v5356 = vunpack.c.h.b16 %v4229
        %v5357 = vunpack.c.l.b16 %v4230
        %v5358 = vunpack.c.l.b16 %v4231
        %v5359 = vunpack.c.h.b16 %v4231
        %v5360 = vunpack.c.l.b16 %v4232
        %v5361 = vunpack.c.h.b16 %v4232
        %v5362 = vunpack.c.l.b16 %v4233
        %v5363 = vunpack.c.h.b16 %v4233
        %v5364 = vunpack.c.l.b16 %v4234
        %v5365 = vunpack.c.l.b16 %v4235
        %v5366 = vunpack.c.h.b16 %v4235
        %v5367 = vunpack.c.l.b16 %v4236
        %v5368 = vunpack.c.h.b16 %v4236
        %v5369 = vunpack.c.l.b16 %v4237
        %v5370 = vunpack.c.h.b16 %v4237
        %v5371 = vunpack.c.l.b16 %v4238
        %v5372 = vunpack.c.l.b16 %v4239
        %v5373 = vunpack.c.h.b16 %v4239
        %v5374 = vunpack.c.l.b16 %v4240
        %v5375 = vunpack.c.h.b16 %v4240
        %v5376 = vunpack.c.l.b16 %v4241
        %v5377 = vunpack.c.h.b16 %v4241
        %v5378 = vunpack.c.l.b16 %v4242
        %v5379 = vunpack.c.l.b16 %v4243
        %v5380 = vunpack.c.h.b16 %v4243
        %v5381 = vunpack.c.l.b16 %v4244
        %v5382 = vunpack.c.h.b16 %v4244
        %v5383 = vunpack.c.l.b16 %v4245
        %v5384 = vunpack.c.h.b16 %v4245
        %v5385 = vunpack.c.l.b16 %v4246
        %v5386 = vunpack.c.l.b16 %v4247
        %v5387 = vunpack.c.h.b16 %v4247
        %v5388 = vunpack.c.l.b16 %v4248
        %v5389 = vunpack.c.h.b16 %v4248
        %v5390 = vunpack.c.l.b16 %v4249
        %v5391 = vunpack.c.h.b16 %v4249
        %v5392 = vunpack.c.l.b16 %v4250
        %v5393 = vunpack.c.l.b16 %v4251
        %v5394 = vunpack.c.h.b16 %v4251
        %v5395 = vunpack.c.l.b16 %v4252
        %v5396 = vunpack.c.h.b16 %v4252
        %v5397 = vunpack.c.l.b16 %v4253
        %v5398 = vunpack.c.h.b16 %v4253
        %v5399 = vunpack.c.l.b16 %v4254
        %v5400 = vunpack.c.l.b16 %v4255
        %v5401 = vunpack.c.h.b16 %v4255
        %v5402 = vunpack.c.l.b16 %v4256
        %v5403 = vunpack.c.h.b16 %v4256
        %v5404 = vunpack.c.l.b16 %v4257
        %v5405 = vunpack.c.h.b16 %v4257
        %v5406 = vunpack.c.l.b16 %v4258
        %v5407 = vunpack.c.l.b16 %v4259
        %v5408 = vunpack.c.h.b16 %v4259
        %v5409 = vunpack.c.l.b16 %v4260
        %v5410 = vunpack.c.h.b16 %v4260
        %v5411 = vunpack.c.l.b16 %v4261
        %v5412 = vunpack.c.h.b16 %v4261
        %v5413 = vunpack.c.l.b16 %v4262
        %v5414 = vunpack.c.l.b16 %v4263
        %v5415 = vunpack.c.h.b16 %v4263
        %v5416 = vunpack.c.l.b16 %v4264
        %v5417 = vunpack.c.h.b16 %v4264
        %v5418 = vunpack.c.l.b16 %v4265
        %v5419 = vunpack.c.h.b16 %v4265
        %v5420 = vunpack.c.l.b16 %v4266
        %v5421 = vunpack.c.l.b16 %v4267
        %v5422 = vunpack.c.h.b16 %v4267
        %v5423 = vunpack.c.l.b16 %v4268
        %v5424 = vunpack.c.h.b16 %v4268
        %v5425 = vunpack.c.l.b16 %v4269
        %v5426 = vunpack.c.h.b16 %v4269
        %v5427 = vunpack.c.l.b16 %v4270
        %v5428 = vunpack.c.l.b16 %v4271
        %v5429 = vunpack.c.h.b16 %v4271
        %v5430 = vunpack.c.l.b16 %v4272
        %v5431 = vunpack.c.h.b16 %v4272
        %v5432 = vunpack.c.l.b16 %v4273
        %v5433 = vunpack.c.h.b16 %v4273
        %v5434 = vunpack.c.l.b16 %v4274
        %v5435 = vunpack.c.l.b16 %v4275
        %v5436 = vunpack.c.h.b16 %v4275
        %v5437 = vunpack.c.l.b16 %v4276
        %v5438 = vunpack.c.h.b16 %v4276
        %v5439 = vunpack.c.l.b16 %v4277
        %v5440 = vunpack.c.h.b16 %v4277
        %v5441 = vunpack.c.l.b16 %v4278
        %v5442 = vunpack.c.l.b16 %v4279
        %v5443 = vunpack.c.h.b16 %v4279
        %v5444 = vunpack.c.l.b16 %v4280
        %v5445 = vunpack.c.h.b16 %v4280
        %v5446 = vunpack.c.l.b16 %v4281
        %v5447 = vunpack.c.h.b16 %v4281
        %v5448 = vunpack.c.l.b16 %v4282
        %v5449 = vunpack.c.l.b16 %v4283
        %v5450 = vunpack.c.h.b16 %v4283
        %v5451 = vunpack.c.l.b16 %v4284
        %v5452 = vunpack.c.h.b16 %v4284
        %v5453 = vunpack.c.l.b16 %v4285
        %v5454 = vunpack.c.h.b16 %v4285
        %v5455 = vunpack.c.l.b16 %v4286
        %v5456 = vunpack.c.l.b16 %v4287
        %v5457 = vunpack.c.h.b16 %v4287
        %v5458 = vunpack.c.l.b16 %v4288
        %v5459 = vunpack.c.h.b16 %v4288
        %v5460 = vunpack.c.l.b16 %v4289
        %v5461 = vunpack.c.h.b16 %v4289
        %v5462 = vunpack.c.l.b16 %v4290
        %v5463 = vunpack.c.l.b16 %v4291
        %v5464 = vunpack.c.h.b16 %v4291
        %v5465 = vunpack.c.l.b16 %v4292
        %v5466 = vunpack.c.h.b16 %v4292
        %v5467 = vunpack.c.l.b16 %v4293
        %v5468 = vunpack.c.h.b16 %v4293
        %v5469 = vunpack.c.l.b16 %v4294
        %v5470 = vunpack.c.l.b16 %v4295
        %v5471 = vunpack.c.h.b16 %v4295
        %v5472 = vunpack.c.l.b16 %v4296
        %v5473 = vunpack.c.h.b16 %v4296
        %v5474 = vunpack.c.l.b16 %v4297
        %v5475 = vunpack.c.h.b16 %v4297
        %v5476 = vunpack.c.l.b16 %v4298
        %v5477 = vunpack.c.l.b16 %v4299
        %v5478 = vunpack.c.h.b16 %v4299
        %v5479 = vunpack.c.l.b16 %v4300
        %v5480 = vunpack.c.h.b16 %v4300
        %v5481 = vunpack.c.l.b16 %v4301
        %v5482 = vunpack.c.h.b16 %v4301
        %v5483 = vunpack.c.l.b16 %v4302
        %v5484 = vunpack.c.l.b16 %v4303
        %v5485 = vunpack.c.h.b16 %v4303
        %v5486 = vunpack.c.l.b16 %v4304
        %v5487 = vunpack.c.h.b16 %v4304
        %v5488 = vunpack.c.l.b16 %v4305
        %v5489 = vunpack.c.h.b16 %v4305
        %v5490 = vunpack.c.l.b16 %v4306
        %v5491 = vunpack.c.l.b16 %v4307
        %v5492 = vunpack.c.h.b16 %v4307
        %v5493 = vunpack.c.l.b16 %v4308
        %v5494 = vunpack.c.h.b16 %v4308
        %v5495 = vunpack.c.l.b16 %v4309
        %v5496 = vunpack.c.h.b16 %v4309
        %v5497 = vunpack.c.l.b16 %v4310
        %v5498 = vunpack.c.l.b16 %v4311
        %v5499 = vunpack.c.h.b16 %v4311
        %v5500 = vunpack.c.l.b16 %v4312
        %v5501 = vunpack.c.h.b16 %v4312
        %v5502 = vunpack.c.l.b16 %v4313
        %v5503 = vunpack.c.h.b16 %v4313
        %v5504 = vunpack.c.l.b16 %v4314
        %v5505 = vunpack.c.l.b16 %v4315
        %v5506 = vunpack.c.h.b16 %v4315
        %v5507 = vunpack.c.l.b16 %v4316
        %v5508 = vunpack.c.h.b16 %v4316
        %v5509 = vunpack.c.l.b16 %v4317
        %v5510 = vunpack.c.h.b16 %v4317
        %v5511 = vunpack.c.l.b16 %v4318
        %v5512 = vunpack.c.l.b16 %v4319
        %v5513 = vunpack.c.h.b16 %v4319
        %v5514 = vunpack.c.l.b16 %v4320
        %v5515 = vunpack.c.h.b16 %v4320
        %v5516 = vunpack.c.l.b16 %v4321
        %v5517 = vunpack.c.h.b16 %v4321
        %v5518 = vunpack.c.l.b16 %v4322
        %v5519 = vunpack.c.l.b16 %v4323
        %v5520 = vunpack.c.h.b16 %v4323
        %v5521 = vunpack.c.l.b16 %v4324
        %v5522 = vunpack.c.h.b16 %v4324
        %v5523 = vunpack.c.l.b16 %v4325
        %v5524 = vunpack.c.h.b16 %v4325
        %v5525 = vunpack.c.l.b16 %v4326
        %v5526 = vunpack.c.l.b16 %v4327
        %v5527 = vunpack.c.h.b16 %v4327
        %v5528 = vunpack.c.l.b16 %v4328
        %v5529 = vunpack.c.h.b16 %v4328
        %v5530 = vunpack.c.l.b16 %v4329
        %v5531 = vunpack.c.h.b16 %v4329
        %v5532 = vunpack.c.l.b16 %v4330
        %v5533 = vunpack.c.l.b16 %v4331
        %v5534 = vunpack.c.h.b16 %v4331
        %v5535 = vunpack.c.l.b16 %v4332
        %v5536 = vunpack.c.h.b16 %v4332
        %v5537 = vunpack.c.l.b16 %v4333
        %v5538 = vunpack.c.h.b16 %v4333
        %v5539 = vunpack.c.l.b16 %v4334
        %v5540 = vunpack.c.l.b16 %v4335
        %v5541 = vunpack.c.h.b16 %v4335
        %v5542 = vunpack.c.l.b16 %v4336
        %v5543 = vunpack.c.h.b16 %v4336
        %v5544 = vunpack.c.l.b16 %v4337
        %v5545 = vunpack.c.h.b16 %v4337
        %v5546 = vunpack.c.l.b16 %v4338
        %v5547 = vunpack.c.l.b16 %v4339
        %v5548 = vunpack.c.h.b16 %v4339
        %v5549 = vunpack.c.l.b16 %v4340
        %v5550 = vunpack.c.h.b16 %v4340
        %v5551 = vunpack.c.l.b16 %v4341
        %v5552 = vunpack.c.h.b16 %v4341
        %v5553 = vunpack.c.l.b16 %v4342
        %v5554 = vunpack.c.l.b16 %v4343
        %v5555 = vunpack.c.h.b16 %v4343
        %v5556 = vunpack.c.l.b16 %v4344
        %v5557 = vunpack.c.h.b16 %v4344
        %v5558 = vunpack.c.l.b16 %v4345
        %v5559 = vunpack.c.h.b16 %v4345
        %v5560 = vunpack.c.l.b16 %v4346
        %v5561 = vunpack.c.l.b16 %v4347
        %v5562 = vunpack.c.h.b16 %v4347
        %v5563 = vunpack.c.l.b16 %v4348
        %v5564 = vunpack.c.h.b16 %v4348
        %v5565 = vunpack.c.l.b16 %v4349
        %v5566 = vunpack.c.h.b16 %v4349
        %v5567 = vunpack.c.l.b16 %v4350
        %v5568 = vunpack.c.l.b16 %v4351
        %v5569 = vunpack.c.h.b16 %v4351
        %v5570 = vunpack.c.l.b16 %v4352
        %v5571 = vunpack.c.h.b16 %v4352
        %v5572 = vunpack.c.l.b16 %v4353
        %v5573 = vunpack.c.h.b16 %v4353
        %v5574 = vunpack.c.l.b16 %v4354
        %v5575 = vunpack.c.l.b16 %v4355
        %v5576 = vunpack.c.h.b16 %v4355
        %v5577 = vunpack.c.l.b16 %v4356
        %v5578 = vunpack.c.h.b16 %v4356
        %v5579 = vunpack.c.l.b16 %v4357
        %v5580 = vunpack.c.h.b16 %v4357
        %v5581 = vunpack.c.l.b16 %v4358
        %v5582 = vunpack.c.l.b16 %v4359
        %v5583 = vunpack.c.h.b16 %v4359
        %v5584 = vunpack.c.l.b16 %v4360
        %v5585 = vunpack.c.h.b16 %v4360
        %v5586 = vunpack.c.l.b16 %v4361
        %v5587 = vunpack.c.h.b16 %v4361
        %v5588 = vunpack.c.l.b16 %v4362
        %v5589 = vunpack.c.l.b16 %v4363
        %v5590 = vunpack.c.h.b16 %v4363
        %v5591 = vunpack.c.l.b16 %v4364
        %v5592 = vunpack.c.h.b16 %v4364
        %v5593 = vunpack.c.l.b16 %v4365
        %v5594 = vunpack.c.h.b16 %v4365
        %v5595 = vunpack.c.l.b16 %v4366
        %v5596 = vunpack.c.l.b16 %v4367
        %v5597 = vunpack.c.h.b16 %v4367
        %v5598 = vunpack.c.l.b16 %v4368
        %v5599 = vunpack.c.h.b16 %v4368
        %v5600 = vunpack.c.l.b16 %v4369
        %v5601 = vunpack.c.h.b16 %v4369
        %v5602 = vunpack.c.l.b16 %v4370
        %v5603 = vunpack.c.l.b16 %v4371
        %v5604 = vunpack.c.h.b16 %v4371
        %v5605 = vunpack.c.l.b16 %v4372
        %v5606 = vunpack.c.h.b16 %v4372
        %v5607 = vunpack.c.l.b16 %v4373
        %v5608 = vunpack.c.h.b16 %v4373
        %v5609 = vunpack.c.l.b16 %v4374
        %v5610 = vunpack.c.l.b16 %v4375
        %v5611 = vunpack.c.h.b16 %v4375
        %v5612 = vunpack.c.l.b16 %v4376
        %v5613 = vunpack.c.h.b16 %v4376
        %v5614 = vunpack.c.l.b16 %v4377
        %v5615 = vunpack.c.h.b16 %v4377
        %v5616 = vunpack.c.l.b16 %v4378
        %v5617 = vunpack.c.l.b16 %v4379
        %v5618 = vunpack.c.h.b16 %v4379
        %v5619 = vunpack.c.l.b16 %v4380
        %v5620 = vunpack.c.h.b16 %v4380
        %v5621 = vunpack.c.l.b16 %v4381
        %v5622 = vunpack.c.h.b16 %v4381
        %v5623 = vunpack.c.l.b16 %v4382
        %v5624 = vunpack.c.l.b16 %v4383
        %v5625 = vunpack.c.h.b16 %v4383
        %v5626 = vunpack.c.l.b16 %v4384
        %v5627 = vunpack.c.h.b16 %v4384
        %v5628 = vunpack.c.l.b16 %v4385
        %v5629 = vunpack.c.h.b16 %v4385
        %v5630 = vunpack.c.l.b16 %v4386
        %v5631 = vunpack.c.l.b16 %v4387
        %v5632 = vunpack.c.h.b16 %v4387
        %v5633 = vunpack.c.l.b16 %v4388
        %v5634 = vunpack.c.h.b16 %v4388
        %v5635 = vunpack.c.l.b16 %v4389
        %v5636 = vunpack.c.h.b16 %v4389
        %v5637 = vunpack.c.l.b16 %v4390
        %v5638 = vunpack.c.l.b16 %v4391
        %v5639 = vunpack.c.h.b16 %v4391
        %v5640 = vunpack.c.l.b16 %v4392
        %v5641 = vunpack.c.h.b16 %v4392
        %v5642 = vunpack.c.l.b16 %v4393
        %v5643 = vunpack.c.h.b16 %v4393
        %v5644 = vunpack.c.l.b16 %v4394
        %v5645 = vunpack.c.l.b16 %v4395
        %v5646 = vunpack.c.h.b16 %v4395
        %v5647 = vunpack.c.l.b16 %v4396
        %v5648 = vunpack.c.h.b16 %v4396
        %v5649 = vunpack.c.l.b16 %v4397
        %v5650 = vunpack.c.h.b16 %v4397
        %v5651 = vunpack.c.l.b16 %v4398
        %v5652 = vunpack.c.l.b16 %v4399
        %v5653 = vunpack.c.h.b16 %v4399
        %v5654 = vunpack.c.l.b16 %v4400
        %v5655 = vunpack.c.h.b16 %v4400
        %v5656 = vunpack.c.l.b16 %v4401
        %v5657 = vunpack.c.h.b16 %v4401
        %v5658 = vunpack.c.l.b16 %v4402
        %v5659 = vunpack.c.l.b16 %v4403
        %v5660 = vunpack.c.h.b16 %v4403
        %v5661 = vunpack.c.l.b16 %v4404
        %v5662 = vunpack.c.h.b16 %v4404
        %v5663 = vunpack.c.l.b16 %v4405
        %v5664 = vunpack.c.h.b16 %v4405
        %v5665 = vunpack.c.l.b16 %v4406
        %v5666 = vunpack.c.l.b16 %v4407
        %v5667 = vunpack.c.h.b16 %v4407
        %v5668 = vunpack.c.l.b16 %v4408
        %v5669 = vunpack.c.h.b16 %v4408
        %v5670 = vunpack.c.l.b16 %v4409
        %v5671 = vunpack.c.h.b16 %v4409
        %v5672 = vunpack.c.l.b16 %v4410
        %v5673 = vunpack.c.l.b16 %v4411
        %v5674 = vunpack.c.h.b16 %v4411
        %v5675 = vunpack.c.l.b16 %v4412
        %v5676 = vunpack.c.h.b16 %v4412
        %v5677 = vunpack.c.l.b16 %v4413
        %v5678 = vunpack.c.h.b16 %v4413
        %v5679 = vunpack.c.l.b16 %v4414
        %v5680 = vunpack.c.l.b16 %v4415
        %v5681 = vunpack.c.h.b16 %v4415
        %v5682 = vunpack.c.l.b16 %v4416
        %v5683 = vunpack.c.h.b16 %v4416
        %v5684 = vunpack.c.l.b16 %v4417
        %v5685 = vunpack.c.h.b16 %v4417
        %v5686 = vunpack.c.l.b16 %v4418
        %v5687 = vunpack.c.l.b16 %v4419
        %v5688 = vunpack.c.h.b16 %v4419
        %v5689 = vunpack.c.l.b16 %v4420
        %v5690 = vunpack.c.h.b16 %v4420
        %v5691 = vunpack.c.l.b16 %v4421
        %v5692 = vunpack.c.h.b16 %v4421
        %v5693 = vunpack.c.l.b16 %v4422
        %v5694 = vunpack.c.l.b16 %v4423
        %v5695 = vunpack.c.h.b16 %v4423
        %v5696 = vunpack.c.l.b16 %v4424
        %v5697 = vunpack.c.h.b16 %v4424
        %v5698 = vunpack.c.l.b16 %v4425
        %v5699 = vunpack.c.h.b16 %v4425
        %v5700 = vunpack.c.l.b16 %v4426
        %v5701 = vunpack.c.l.b16 %v4427
        %v5702 = vunpack.c.h.b16 %v4427
        %v5703 = vunpack.c.l.b16 %v4428
        %v5704 = vunpack.c.h.b16 %v4428
        %v5705 = vunpack.c.l.b16 %v4429
        %v5706 = vunpack.c.h.b16 %v4429
        %v5707 = vunpack.c.l.b16 %v4430
        %v5708 = vunpack.c.l.b16 %v4431
        %v5709 = vunpack.c.h.b16 %v4431
        %v5710 = vunpack.c.l.b16 %v4432
        %v5711 = vunpack.c.h.b16 %v4432
        %v5712 = vunpack.c.l.b16 %v4433
        %v5713 = vunpack.c.h.b16 %v4433
        %v5714 = vunpack.c.l.b16 %v4434
        %v5715 = vunpack.c.l.b16 %v4435
        %v5716 = vunpack.c.h.b16 %v4435
        %v5717 = vunpack.c.l.b16 %v4436
        %v5718 = vunpack.c.h.b16 %v4436
        %v5719 = vunpack.c.l.b16 %v4437
        %v5720 = vunpack.c.h.b16 %v4437
        %v5721 = vunpack.c.l.b16 %v4438
        %v5722 = vunpack.c.l.b16 %v4439
        %v5723 = vunpack.c.h.b16 %v4439
        %v5724 = vunpack.c.l.b16 %v4440
        %v5725 = vunpack.c.h.b16 %v4440
        %v5726 = vunpack.c.l.b16 %v4441
        %v5727 = vunpack.c.h.b16 %v4441
        %v5728 = vunpack.c.l.b16 %v4442
        %v5729 = vunpack.c.l.b16 %v4443
        %v5730 = vunpack.c.h.b16 %v4443
        %v5731 = vunpack.c.l.b16 %v4444
        %v5732 = vunpack.c.h.b16 %v4444
        %v5733 = vunpack.c.l.b16 %v4445
        %v5734 = vunpack.c.h.b16 %v4445
        %v5735 = vunpack.c.l.b16 %v4446
        %v5736 = vunpack.c.l.b16 %v4447
        %v5737 = vunpack.c.h.b16 %v4447
        %v5738 = vunpack.c.l.b16 %v4448
        %v5739 = vunpack.c.h.b16 %v4448
        %v5740 = vunpack.c.l.b16 %v4449
        %v5741 = vunpack.c.h.b16 %v4449
        %v5742 = vunpack.c.l.b16 %v4450
        %v5743 = vunpack.c.l.b16 %v4451
        %v5744 = vunpack.c.h.b16 %v4451
        %v5745 = vunpack.c.l.b16 %v4452
        %v5746 = vunpack.c.h.b16 %v4452
        %v5747 = vunpack.c.l.b16 %v4453
        %v5748 = vunpack.c.h.b16 %v4453
        %v5749 = vunpack.c.l.b16 %v4454
        %v5750 = vunpack.c.l.b16 %v4455
        %v5751 = vunpack.c.h.b16 %v4455
        %v5752 = vunpack.c.l.b16 %v4456
        %v5753 = vunpack.c.h.b16 %v4456
        %v5754 = vunpack.c.l.b16 %v4457
        %v5755 = vunpack.c.h.b16 %v4457
        %v5756 = vunpack.c.l.b16 %v4458
        %v5757 = vunpack.c.l.b16 %v4459
        %v5758 = vunpack.c.h.b16 %v4459
        %v5759 = vunpack.c.l.b16 %v4460
        %v5760 = vunpack.c.h.b16 %v4460
        %v5761 = vunpack.c.l.b16 %v4461
        %v5762 = vunpack.c.h.b16 %v4461
        %v5763 = vunpack.c.l.b16 %v4462
        %v5764 = vunpack.c.l.b16 %v4463
        %v5765 = vunpack.c.h.b16 %v4463
        %v5766 = vunpack.c.l.b16 %v4464
        %v5767 = vunpack.c.h.b16 %v4464
        %v5768 = vunpack.c.l.b16 %v4465
        %v5769 = vunpack.c.h.b16 %v4465
        %v5770 = vunpack.c.l.b16 %v4466
        %v5771 = vunpack.c.l.b16 %v4467
        %v5772 = vunpack.c.h.b16 %v4467
        %v5773 = vunpack.c.l.b16 %v4468
        %v5774 = vunpack.c.h.b16 %v4468
        %v5775 = vunpack.c.l.b16 %v4469
        %v5776 = vunpack.c.h.b16 %v4469
        %v5777 = vunpack.c.l.b16 %v4470
        %v5778 = vunpack.c.l.b16 %v4471
        %v5779 = vunpack.c.h.b16 %v4471
        %v5780 = vunpack.c.l.b16 %v4472
        %v5781 = vunpack.c.h.b16 %v4472
        %v5782 = vunpack.c.l.b16 %v4473
        %v5783 = vunpack.c.h.b16 %v4473
        %v5784 = vunpack.c.l.b16 %v4474
        %v5785 = vunpack.c.l.b16 %v4475
        %v5786 = vunpack.c.h.b16 %v4475
        %v5787 = vunpack.c.l.b16 %v4476
        %v5788 = vunpack.c.h.b16 %v4476
        %v5789 = vunpack.c.l.b16 %v4477
        %v5790 = vunpack.c.h.b16 %v4477
        %v5791 = vunpack.c.l.b16 %v4478
        %v5792 = vunpack.c.l.b16 %v4479
        %v5793 = vunpack.c.h.b16 %v4479
        %v5794 = vunpack.c.l.b16 %v4480
        %v5795 = vunpack.c.h.b16 %v4480
        %v5796 = vunpack.c.l.b16 %v4481
        %v5797 = vunpack.c.h.b16 %v4481
        %v5798 = vunpack.c.l.b16 %v4482
        %v5799 = vunpack.c.l.b16 %v4483
        %v5800 = vunpack.c.h.b16 %v4483
        %v5801 = vunpack.c.l.b16 %v4484
        %v5802 = vunpack.c.h.b16 %v4484
        %v5803 = vunpack.c.l.b16 %v4485
        %v5804 = vunpack.c.h.b16 %v4485
        %v5805 = vunpack.c.l.b16 %v4486
        %v5806 = vunpack.c.l.b16 %v4487
        %v5807 = vunpack.c.h.b16 %v4487
        %v5808 = vunpack.c.l.b16 %v4488
        %v5809 = vunpack.c.h.b16 %v4488
        %v5810 = vunpack.c.l.b16 %v4489
        %v5811 = vunpack.c.h.b16 %v4489
        %v5812 = vunpack.c.l.b16 %v4490
        %v5813 = vunpack.c.l.b16 %v4491
        %v5814 = vunpack.c.h.b16 %v4491
        %v5815 = vunpack.c.l.b16 %v4492
        %v5816 = vunpack.c.h.b16 %v4492
        %v5817 = vunpack.c.l.b16 %v4493
        %v5818 = vunpack.c.h.b16 %v4493
        %v5819 = vunpack.c.l.b16 %v4494
        %v5820 = vunpack.c.l.b16 %v4495
        %v5821 = vunpack.c.h.b16 %v4495
        %v5822 = vunpack.c.l.b16 %v4496
        %v5823 = vunpack.c.h.b16 %v4496
        %v5824 = vunpack.c.l.b16 %v4497
        %v5825 = vunpack.c.h.b16 %v4497
        %v5826 = vunpack.c.l.b16 %v4498
        %v5827 = vunpack.c.l.b16 %v4499
        %v5828 = vunpack.c.h.b16 %v4499
        %v5829 = vunpack.c.l.b16 %v4500
        %v5830 = vunpack.c.h.b16 %v4500
        %v5831 = vunpack.c.l.b16 %v4501
        %v5832 = vunpack.c.h.b16 %v4501
        %v5833 = vunpack.c.l.b16 %v4502
        %v5834 = vunpack.c.l.b16 %v4503
        %v5835 = vunpack.c.h.b16 %v4503
        %v5836 = vunpack.c.l.b16 %v4504
        %v5837 = vunpack.c.h.b16 %v4504
        %v5838 = vunpack.c.l.b16 %v4505
        %v5839 = vunpack.c.h.b16 %v4505
        %v5840 = vunpack.c.l.b16 %v4506
        %v5841 = vunpack.c.l.b16 %v4507
        %v5842 = vunpack.c.h.b16 %v4507
        %v5843 = vunpack.c.l.b16 %v4508
        %v5844 = vunpack.c.h.b16 %v4508
        %v5845 = vunpack.c.l.b16 %v4509
        %v5846 = vunpack.c.h.b16 %v4509
        %v5847 = vunpack.c.l.b16 %v4510
        %v5848 = vunpack.c.l.b16 %v4511
        %v5849 = vunpack.c.h.b16 %v4511
        %v5850 = vunpack.c.l.b16 %v4512
        %v5851 = vunpack.c.h.b16 %v4512
        %v5852 = vunpack.c.l.b16 %v4513
        %v5853 = vunpack.c.h.b16 %v4513
        %v5854 = vunpack.c.l.b16 %v4514
        %v5855 = vunpack.c.l.b16 %v4515
        %v5856 = vunpack.c.h.b16 %v4515
        %v5857 = vunpack.c.l.b16 %v4516
        %v5858 = vunpack.c.h.b16 %v4516
        %v5859 = vunpack.c.l.b16 %v4517
        %v5860 = vunpack.c.h.b16 %v4517
        %v5861 = vunpack.c.l.b16 %v4518
        %v5862 = vunpack.c.l.b16 %v4519
        %v5863 = vunpack.c.h.b16 %v4519
        %v5864 = vunpack.c.l.b16 %v4520
        %v5865 = vunpack.c.h.b16 %v4520
        %v5866 = vunpack.c.l.b16 %v4521
        %v5867 = vunpack.c.h.b16 %v4521
        %v5868 = vunpack.c.l.b16 %v4522
        %v5869 = vunpack.c.l.b16 %v4523
        %v5870 = vunpack.c.h.b16 %v4523
        %v5871 = vunpack.c.l.b16 %v4524
        %v5872 = vunpack.c.h.b16 %v4524
        %v5873 = vunpack.c.l.b16 %v4525
        %v5874 = vunpack.c.h.b16 %v4525
        %v5875 = vunpack.c.l.b16 %v4526
        %v5876 = vunpack.c.l.b16 %v4527
        %v5877 = vunpack.c.h.b16 %v4527
        %v5878 = vunpack.c.l.b16 %v4528
        %v5879 = vunpack.c.h.b16 %v4528
        %v5880 = vunpack.c.l.b16 %v4529
        %v5881 = vunpack.c.h.b16 %v4529
        %v5882 = vunpack.c.l.b16 %v4530
        %v5883 = vunpack.c.l.b16 %v4531
        %v5884 = vunpack.c.h.b16 %v4531
        %v5885 = vunpack.c.l.b16 %v4532
        %v5886 = vunpack.c.h.b16 %v4532
        %v5887 = vunpack.c.l.b16 %v4533
        %v5888 = vunpack.c.h.b16 %v4533
        %v5889 = vunpack.c.l.b16 %v4534
        %v5890 = vunpack.c.l.b16 %v4535
        %v5891 = vunpack.c.h.b16 %v4535
        %v5892 = vunpack.c.l.b16 %v4536
        %v5893 = vunpack.c.h.b16 %v4536
        %v5894 = vunpack.c.l.b16 %v4537
        %v5895 = vunpack.c.h.b16 %v4537
        %v5896 = vunpack.c.l.b16 %v4538
        %v5897 = vunpack.c.l.b16 %v4539
        %v5898 = vunpack.c.h.b16 %v4539
        %v5899 = vunpack.c.l.b16 %v4540
        %v5900 = vunpack.c.h.b16 %v4540
        %v5901 = vunpack.c.l.b16 %v4541
        %v5902 = vunpack.c.h.b16 %v4541
        %v5903 = vunpack.c.l.b16 %v4542
        %v5904 = vunpack.c.l.b16 %v4543
        %v5905 = vunpack.c.h.b16 %v4543
        %v5906 = vunpack.c.l.b16 %v4544
        %v5907 = vunpack.c.h.b16 %v4544
        %v5908 = vunpack.c.l.b16 %v4545
        %v5909 = vunpack.c.h.b16 %v4545
        %v5910 = vunpack.c.l.b16 %v4546
        %v5911 = vunpack.c.l.b16 %v4547
        %v5912 = vunpack.c.h.b16 %v4547
        %v5913 = vunpack.c.l.b16 %v4548
        %v5914 = vunpack.c.h.b16 %v4548
        %v5915 = vunpack.c.l.b16 %v4549
        %v5916 = vunpack.c.h.b16 %v4549
        %v5917 = vunpack.c.l.b16 %v4550
        %v5918 = vunpack.c.l.b16 %v4551
        %v5919 = vunpack.c.h.b16 %v4551
        %v5920 = vunpack.c.l.b16 %v4552
        %v5921 = vunpack.c.h.b16 %v4552
        %v5922 = vunpack.c.l.b16 %v4553
        %v5923 = vunpack.c.h.b16 %v4553
        %v5924 = vunpack.c.l.b16 %v4554
        %v5925 = vunpack.c.l.b16 %v4555
        %v5926 = vunpack.c.h.b16 %v4555
        %v5927 = vunpack.c.l.b16 %v4556
        %v5928 = vunpack.c.h.b16 %v4556
        %v5929 = vunpack.c.l.b16 %v4557
        %v5930 = vunpack.c.h.b16 %v4557
        %v5931 = vunpack.c.l.b16 %v4558
        %v5932 = vunpack.c.l.b16 %v4559
        %v5933 = vunpack.c.h.b16 %v4559
        %v5934 = vunpack.c.l.b16 %v4560
        %v5935 = vunpack.c.h.b16 %v4560
        %v5936 = vunpack.c.l.b16 %v4561
        %v5937 = vunpack.c.h.b16 %v4561
        %v5938 = vunpack.c.l.b16 %v4562
        %v5939 = vunpack.c.l.b16 %v4563
        %v5940 = vunpack.c.h.b16 %v4563
        %v5941 = vunpack.c.l.b16 %v4564
        %v5942 = vunpack.c.h.b16 %v4564
        %v5943 = vunpack.c.l.b16 %v4565
        %v5944 = vunpack.c.h.b16 %v4565
        %v5945 = vunpack.c.l.b16 %v4566
        %v5946 = vunpack.c.l.b16 %v4567
        %v5947 = vunpack.c.h.b16 %v4567
        %v5948 = vunpack.c.l.b16 %v4568
        %v5949 = vunpack.c.h.b16 %v4568
        %v5950 = vunpack.c.l.b16 %v4569
        %v5951 = vunpack.c.h.b16 %v4569
        %v5952 = vunpack.c.l.b16 %v4570
        %v5953 = vunpack.c.l.b16 %v4571
        %v5954 = vunpack.c.h.b16 %v4571
        %v5955 = vunpack.c.l.b16 %v4572
        %v5956 = vunpack.c.h.b16 %v4572
        %v5957 = vunpack.c.l.b16 %v4573
        %v5958 = vunpack.c.h.b16 %v4573
        %v5959 = vunpack.c.l.b16 %v4574
        %v5960 = vunpack.c.l.b16 %v4575
        %v5961 = vunpack.c.h.b16 %v4575
        %v5962 = vunpack.c.l.b16 %v4576
        %v5963 = vunpack.c.h.b16 %v4576
        %v5964 = vunpack.c.l.b16 %v4577
        %v5965 = vunpack.c.h.b16 %v4577
        %v5966 = vunpack.c.l.b16 %v4578
        %v5967 = vunpack.c.l.b16 %v4579
        %v5968 = vunpack.c.h.b16 %v4579
        %v5969 = vunpack.c.l.b16 %v4580
        %v5970 = vunpack.c.h.b16 %v4580
        %v5971 = vunpack.c.l.b16 %v4581
        %v5972 = vunpack.c.h.b16 %v4581
        %v5973 = vunpack.c.l.b16 %v4582
        %v5974 = vunpack.c.l.b16 %v4583
        %v5975 = vunpack.c.h.b16 %v4583
        %v5976 = vunpack.c.l.b16 %v4584
        %v5977 = vunpack.c.h.b16 %v4584
        %v5978 = vunpack.c.l.b16 %v4585
        %v5979 = vunpack.c.h.b16 %v4585
        %v5980 = vunpack.c.l.b16 %v4586
        %v5981 = vunpack.c.l.b16 %v4587
        %v5982 = vunpack.c.h.b16 %v4587
        %v5983 = vunpack.c.l.b16 %v4588
        %v5984 = vunpack.c.h.b16 %v4588
        %v5985 = vunpack.c.l.b16 %v4589
        %v5986 = vunpack.c.h.b16 %v4589
        %v5987 = vunpack.c.l.b16 %v4590
        %v5988 = vunpack.c.l.b16 %v4591
        %v5989 = vunpack.c.h.b16 %v4591
        %v5990 = vunpack.c.l.b16 %v4592
        %v5991 = vunpack.c.h.b16 %v4592
        %v5992 = vunpack.c.l.b16 %v4593
        %v5993 = vunpack.c.h.b16 %v4593
        %v5994 = vunpack.c.l.b16 %v4594
        %v5995 = vunpack.c.l.b16 %v4595
        %v5996 = vunpack.c.h.b16 %v4595
        %v5997 = vunpack.c.l.b16 %v4596
        %v5998 = vunpack.c.h.b16 %v4596
        %v5999 = vunpack.c.l.b16 %v4597
        %v6000 = vunpack.c.h.b16 %v4597
        %v6001 = vunpack.c.l.b16 %v4598
        %v6002 = vunpack.c.l.b16 %v4599
        %v6003 = vunpack.c.h.b16 %v4599
        %v6004 = vunpack.c.l.b16 %v4600
        %v6005 = vunpack.c.h.b16 %v4600
        %v6006 = vunpack.c.l.b16 %v4601
        %v6007 = vunpack.c.h.b16 %v4601
        %v6008 = vunpack.c.l.b16 %v4602
        %v6009 = vunpack.c.l.b16 %v4603
        %v6010 = vunpack.c.h.b16 %v4603
        %v6011 = vunpack.c.l.b16 %v4604
        %v6012 = vunpack.c.h.b16 %v4604
        %v6013 = vunpack.c.l.b16 %v4605
        %v6014 = vunpack.c.h.b16 %v4605
        %v6015 = vunpack.c.l.b16 %v4606
        %v6016 = vunpack.c.l.b16 %v4607
        %v6017 = vunpack.c.h.b16 %v4607
        %v6018 = vunpack.c.l.b16 %v4608
        %v6019 = vunpack.c.h.b16 %v4608
        %v6020 = vunpack.c.l.b16 %v4609
        %v6021 = vunpack.c.h.b16 %v4609
        %v6022 = vunpack.c.l.b16 %v4610
        %v6023 = vunpack.c.l.b16 %v4611
        %v6024 = vunpack.c.h.b16 %v4611
        %v6025 = vunpack.c.l.b16 %v4612
        %v6026 = vunpack.c.h.b16 %v4612
        %v6027 = vunpack.c.l.b16 %v4613
        %v6028 = vunpack.c.h.b16 %v4613
        %v6029 = vunpack.c.l.b16 %v4614
        %v6030 = vunpack.c.l.b16 %v4615
        %v6031 = vunpack.c.h.b16 %v4615
        %v6032 = vunpack.c.l.b16 %v4616
        %v6033 = vunpack.c.h.b16 %v4616
        %v6034 = vunpack.c.l.b16 %v4617
        %v6035 = vunpack.c.h.b16 %v4617
        %v6036 = vunpack.c.l.b16 %v4618
        %v6037 = vunpack.c.l.b16 %v4619
        %v6038 = vunpack.c.h.b16 %v4619
        %v6039 = vunpack.c.l.b16 %v4620
        %v6040 = vunpack.c.h.b16 %v4620
        %v6041 = vunpack.c.l.b16 %v4621
        %v6042 = vunpack.c.h.b16 %v4621
        %v6043 = vunpack.c.l.b16 %v4622
        %v6044 = vunpack.c.l.b16 %v4623
        %v6045 = vunpack.c.h.b16 %v4623
        %v6046 = vunpack.c.l.b16 %v4624
        %v6047 = vunpack.c.h.b16 %v4624
        %v6048 = vunpack.c.l.b16 %v4625
        %v6049 = vunpack.c.h.b16 %v4625
        %v6050 = vunpack.c.l.b16 %v4626
        %v6051 = vunpack.c.l.b16 %v4627
        %v6052 = vunpack.c.h.b16 %v4627
        %v6053 = vunpack.c.l.b16 %v4628
        %v6054 = vunpack.c.h.b16 %v4628
        %v6055 = vunpack.c.l.b16 %v4629
        %v6056 = vunpack.c.h.b16 %v4629
        %v6057 = vunpack.c.l.b16 %v4630
        %v6058 = vunpack.c.l.b16 %v4631
        %v6059 = vunpack.c.h.b16 %v4631
        %v6060 = vunpack.c.l.b16 %v4632
        %v6061 = vunpack.c.h.b16 %v4632
        %v6062 = vunpack.c.l.b16 %v4633
        %v6063 = vunpack.c.h.b16 %v4633
        %v6064 = vunpack.c.l.b16 %v4634
        %v6065 = vunpack.c.l.b16 %v4635
        %v6066 = vunpack.c.h.b16 %v4635
        %v6067 = vunpack.c.l.b16 %v4636
        %v6068 = vunpack.c.h.b16 %v4636
        %v6069 = vunpack.c.l.b16 %v4637
        %v6070 = vunpack.c.h.b16 %v4637
        %v6071 = vunpack.c.l.b16 %v4638
        %v6072 = vunpack.c.l.b16 %v4639
        %v6073 = vunpack.c.h.b16 %v4639
        %v6074 = vunpack.c.l.b16 %v4640
        %v6075 = vunpack.c.h.b16 %v4640
        %v6076 = vunpack.c.l.b16 %v4641
        %v6077 = vunpack.c.h.b16 %v4641
        %v6078 = vunpack.c.l.b16 %v4642
        %v6079 = vunpack.c.l.b16 %v4643
        %v6080 = vunpack.c.h.b16 %v4643
        %v6081 = vunpack.c.l.b16 %v4644
        %v6082 = vunpack.c.h.b16 %v4644
        %v6083 = vunpack.c.l.b16 %v4645
        %v6084 = vunpack.c.h.b16 %v4645
        %v6085 = vunpack.c.l.b16 %v4646
        %v6086 = vunpack.c.l.b16 %v4647
        %v6087 = vunpack.c.h.b16 %v4647
        %v6088 = vunpack.c.l.b16 %v4648
        %v6089 = vunpack.c.h.b16 %v4648
        %v6090 = vunpack.c.l.b16 %v4649
        %v6091 = vunpack.c.h.b16 %v4649
        %v6092 = vunpack.c.l.b16 %v4650
        %v6093 = vunpack.c.l.b16 %v4651
        %v6094 = vunpack.c.h.b16 %v4651
        %v6095 = vunpack.c.l.b16 %v4652
        %v6096 = vunpack.c.h.b16 %v4652
        %v6097 = vunpack.c.l.b16 %v4653
        %v6098 = vunpack.c.h.b16 %v4653
        %v6099 = vunpack.c.l.b16 %v4654
        %v6100 = vpack.c.b16 %v5211, %v5204
        %v6101 = vpack.c.b16 %v5212, %v5205
        %v6102 = vpack.c.b16 %v5213, %v5206
        %v6103 = vpack.c.b16 %v5214, %v5207
        %v6104 = vpack.c.b16 %v5215, %v5208
        %v6105 = vpack.c.b16 %v5216, %v5209
        %v6106 = vpack.c.b16 %v5217, %v5210
        %v6107 = vpack.c.b16 %v5225, %v5218
        %v6108 = vpack.c.b16 %v5226, %v5219
        %v6109 = vpack.c.b16 %v5227, %v5220
        %v6110 = vpack.c.b16 %v5228, %v5221
        %v6111 = vpack.c.b16 %v5229, %v5222
        %v6112 = vpack.c.b16 %v5230, %v5223
        %v6113 = vpack.c.b16 %v5231, %v5224
        %v6114 = vpack.c.b16 %v5239, %v5232
        %v6115 = vpack.c.b16 %v5240, %v5233
        %v6116 = vpack.c.b16 %v5241, %v5234
        %v6117 = vpack.c.b16 %v5242, %v5235
        %v6118 = vpack.c.b16 %v5243, %v5236
        %v6119 = vpack.c.b16 %v5244, %v5237
        %v6120 = vpack.c.b16 %v5245, %v5238
        %v6121 = vpack.c.b16 %v5253, %v5246
        %v6122 = vpack.c.b16 %v5254, %v5247
        %v6123 = vpack.c.b16 %v5255, %v5248
        %v6124 = vpack.c.b16 %v5256, %v5249
        %v6125 = vpack.c.b16 %v5257, %v5250
        %v6126 = vpack.c.b16 %v5258, %v5251
        %v6127 = vpack.c.b16 %v5259, %v5252
        %v6128 = vpack.c.b16 %v5267, %v5260
        %v6129 = vpack.c.b16 %v5268, %v5261
        %v6130 = vpack.c.b16 %v5269, %v5262
        %v6131 = vpack.c.b16 %v5270, %v5263
        %v6132 = vpack.c.b16 %v5271, %v5264
        %v6133 = vpack.c.b16 %v5272, %v5265
        %v6134 = vpack.c.b16 %v5273, %v5266
        %v6135 = vpack.c.b16 %v5281, %v5274
        %v6136 = vpack.c.b16 %v5282, %v5275
        %v6137 = vpack.c.b16 %v5283, %v5276
        %v6138 = vpack.c.b16 %v5284, %v5277
        %v6139 = vpack.c.b16 %v5285, %v5278
        %v6140 = vpack.c.b16 %v5286, %v5279
        %v6141 = vpack.c.b16 %v5287, %v5280
        %v6142 = vpack.c.b16 %v5295, %v5288
        %v6143 = vpack.c.b16 %v5296, %v5289
        %v6144 = vpack.c.b16 %v5297, %v5290
        %v6145 = vpack.c.b16 %v5298, %v5291
        %v6146 = vpack.c.b16 %v5299, %v5292
        %v6147 = vpack.c.b16 %v5300, %v5293
        %v6148 = vpack.c.b16 %v5301, %v5294
        %v6149 = vpack.c.b16 %v5309, %v5302
        %v6150 = vpack.c.b16 %v5310, %v5303
        %v6151 = vpack.c.b16 %v5311, %v5304
        %v6152 = vpack.c.b16 %v5312, %v5305
        %v6153 = vpack.c.b16 %v5313, %v5306
        %v6154 = vpack.c.b16 %v5314, %v5307
        %v6155 = vpack.c.b16 %v5315, %v5308
        %v6156 = vpack.c.b16 %v5323, %v5316
        %v6157 = vpack.c.b16 %v5324, %v5317
        %v6158 = vpack.c.b16 %v5325, %v5318
        %v6159 = vpack.c.b16 %v5326, %v5319
        %v6160 = vpack.c.b16 %v5327, %v5320
        %v6161 = vpack.c.b16 %v5328, %v5321
        %v6162 = vpack.c.b16 %v5329, %v5322
        %v6163 = vpack.c.b16 %v5337, %v5330
        %v6164 = vpack.c.b16 %v5338, %v5331
        %v6165 = vpack.c.b16 %v5339, %v5332
        %v6166 = vpack.c.b16 %v5340, %v5333
        %v6167 = vpack.c.b16 %v5341, %v5334
        %v6168 = vpack.c.b16 %v5342, %v5335
        %v6169 = vpack.c.b16 %v5343, %v5336
        %v6170 = vpack.c.b16 %v5351, %v5344
        %v6171 = vpack.c.b16 %v5352, %v5345
        %v6172 = vpack.c.b16 %v5353, %v5346
        %v6173 = vpack.c.b16 %v5354, %v5347
        %v6174 = vpack.c.b16 %v5355, %v5348
        %v6175 = vpack.c.b16 %v5356, %v5349
        %v6176 = vpack.c.b16 %v5357, %v5350
        %v6177 = vpack.c.b16 %v5365, %v5358
        %v6178 = vpack.c.b16 %v5366, %v5359
        %v6179 = vpack.c.b16 %v5367, %v5360
        %v6180 = vpack.c.b16 %v5368, %v5361
        %v6181 = vpack.c.b16 %v5369, %v5362
        %v6182 = vpack.c.b16 %v5370, %v5363
        %v6183 = vpack.c.b16 %v5371, %v5364
        %v6184 = vpack.c.b16 %v5379, %v5372
        %v6185 = vpack.c.b16 %v5380, %v5373
        %v6186 = vpack.c.b16 %v5381, %v5374
        %v6187 = vpack.c.b16 %v5382, %v5375
        %v6188 = vpack.c.b16 %v5383, %v5376
        %v6189 = vpack.c.b16 %v5384, %v5377
        %v6190 = vpack.c.b16 %v5385, %v5378
        %v6191 = vpack.c.b16 %v5393, %v5386
        %v6192 = vpack.c.b16 %v5394, %v5387
        %v6193 = vpack.c.b16 %v5395, %v5388
        %v6194 = vpack.c.b16 %v5396, %v5389
        %v6195 = vpack.c.b16 %v5397, %v5390
        %v6196 = vpack.c.b16 %v5398, %v5391
        %v6197 = vpack.c.b16 %v5399, %v5392
        %v6198 = vpack.c.b16 %v5407, %v5400
        %v6199 = vpack.c.b16 %v5408, %v5401
        %v6200 = vpack.c.b16 %v5409, %v5402
        %v6201 = vpack.c.b16 %v5410, %v5403
        %v6202 = vpack.c.b16 %v5411, %v5404
        %v6203 = vpack.c.b16 %v5412, %v5405
        %v6204 = vpack.c.b16 %v5413, %v5406
        %v6205 = vpack.c.b16 %v5421, %v5414
        %v6206 = vpack.c.b16 %v5422, %v5415
        %v6207 = vpack.c.b16 %v5423, %v5416
        %v6208 = vpack.c.b16 %v5424, %v5417
        %v6209 = vpack.c.b16 %v5425, %v5418
        %v6210 = vpack.c.b16 %v5426, %v5419
        %v6211 = vpack.c.b16 %v5427, %v5420
        %v6212 = vpack.c.b16 %v5435, %v5428
        %v6213 = vpack.c.b16 %v5436, %v5429
        %v6214 = vpack.c.b16 %v5437, %v5430
        %v6215 = vpack.c.b16 %v5438, %v5431
        %v6216 = vpack.c.b16 %v5439, %v5432
        %v6217 = vpack.c.b16 %v5440, %v5433
        %v6218 = vpack.c.b16 %v5441, %v5434
        %v6219 = vpack.c.b16 %v5449, %v5442
        %v6220 = vpack.c.b16 %v5450, %v5443
        %v6221 = vpack.c.b16 %v5451, %v5444
        %v6222 = vpack.c.b16 %v5452, %v5445
        %v6223 = vpack.c.b16 %v5453, %v5446
        %v6224 = vpack.c.b16 %v5454, %v5447
        %v6225 = vpack.c.b16 %v5455, %v5448
        %v6226 = vpack.c.b16 %v5463, %v5456
        %v6227 = vpack.c.b16 %v5464, %v5457
        %v6228 = vpack.c.b16 %v5465, %v5458
        %v6229 = vpack.c.b16 %v5466, %v5459
        %v6230 = vpack.c.b16 %v5467, %v5460
        %v6231 = vpack.c.b16 %v5468, %v5461
        %v6232 = vpack.c.b16 %v5469, %v5462
        %v6233 = vpack.c.b16 %v5477, %v5470
        %v6234 = vpack.c.b16 %v5478, %v5471
        %v6235 = vpack.c.b16 %v5479, %v5472
        %v6236 = vpack.c.b16 %v5480, %v5473
        %v6237 = vpack.c.b16 %v5481, %v5474
        %v6238 = vpack.c.b16 %v5482, %v5475
        %v6239 = vpack.c.b16 %v5483, %v5476
        %v6240 = vpack.c.b16 %v5491, %v5484
        %v6241 = vpack.c.b16 %v5492, %v5485
        %v6242 = vpack.c.b16 %v5493, %v5486
        %v6243 = vpack.c.b16 %v5494, %v5487
        %v6244 = vpack.c.b16 %v5495, %v5488
        %v6245 = vpack.c.b16 %v5496, %v5489
        %v6246 = vpack.c.b16 %v5497, %v5490
        %v6247 = vpack.c.b16 %v5505, %v5498
        %v6248 = vpack.c.b16 %v5506, %v5499
        %v6249 = vpack.c.b16 %v5507, %v5500
        %v6250 = vpack.c.b16 %v5508, %v5501
        %v6251 = vpack.c.b16 %v5509, %v5502
        %v6252 = vpack.c.b16 %v5510, %v5503
        %v6253 = vpack.c.b16 %v5511, %v5504
        %v6254 = vpack.c.b16 %v5519, %v5512
        %v6255 = vpack.c.b16 %v5520, %v5513
        %v6256 = vpack.c.b16 %v5521, %v5514
        %v6257 = vpack.c.b16 %v5522, %v5515
        %v6258 = vpack.c.b16 %v5523, %v5516
        %v6259 = vpack.c.b16 %v5524, %v5517
        %v6260 = vpack.c.b16 %v5525, %v5518
        %v6261 = vpack.c.b16 %v5533, %v5526
        %v6262 = vpack.c.b16 %v5534, %v5527
        %v6263 = vpack.c.b16 %v5535, %v5528
        %v6264 = vpack.c.b16 %v5536, %v5529
        %v6265 = vpack.c.b16 %v5537, %v5530
        %v6266 = vpack.c.b16 %v5538, %v5531
        %v6267 = vpack.c.b16 %v5539, %v5532
        %v6268 = vpack.c.b16 %v5547, %v5540
        %v6269 = vpack.c.b16 %v5548, %v5541
        %v6270 = vpack.c.b16 %v5549, %v5542
        %v6271 = vpack.c.b16 %v5550, %v5543
        %v6272 = vpack.c.b16 %v5551, %v5544
        %v6273 = vpack.c.b16 %v5552, %v5545
        %v6274 = vpack.c.b16 %v5553, %v5546
        %v6275 = vpack.c.b16 %v5561, %v5554
        %v6276 = vpack.c.b16 %v5562, %v5555
        %v6277 = vpack.c.b16 %v5563, %v5556
        %v6278 = vpack.c.b16 %v5564, %v5557
        %v6279 = vpack.c.b16 %v5565, %v5558
        %v6280 = vpack.c.b16 %v5566, %v5559
        %v6281 = vpack.c.b16 %v5567, %v5560
        %v6282 = vpack.c.b16 %v5575, %v5568
        %v6283 = vpack.c.b16 %v5576, %v5569
        %v6284 = vpack.c.b16 %v5577, %v5570
        %v6285 = vpack.c.b16 %v5578, %v5571
        %v6286 = vpack.c.b16 %v5579, %v5572
        %v6287 = vpack.c.b16 %v5580, %v5573
        %v6288 = vpack.c.b16 %v5581, %v5574
        %v6289 = vpack.c.b16 %v5589, %v5582
        %v6290 = vpack.c.b16 %v5590, %v5583
        %v6291 = vpack.c.b16 %v5591, %v5584
        %v6292 = vpack.c.b16 %v5592, %v5585
        %v6293 = vpack.c.b16 %v5593, %v5586
        %v6294 = vpack.c.b16 %v5594, %v5587
        %v6295 = vpack.c.b16 %v5595, %v5588
        %v6296 = vpack.c.b16 %v5603, %v5596
        %v6297 = vpack.c.b16 %v5604, %v5597
        %v6298 = vpack.c.b16 %v5605, %v5598
        %v6299 = vpack.c.b16 %v5606, %v5599
        %v6300 = vpack.c.b16 %v5607, %v5600
        %v6301 = vpack.c.b16 %v5608, %v5601
        %v6302 = vpack.c.b16 %v5609, %v5602
        %v6303 = vpack.c.b16 %v5617, %v5610
        %v6304 = vpack.c.b16 %v5618, %v5611
        %v6305 = vpack.c.b16 %v5619, %v5612
        %v6306 = vpack.c.b16 %v5620, %v5613
        %v6307 = vpack.c.b16 %v5621, %v5614
        %v6308 = vpack.c.b16 %v5622, %v5615
        %v6309 = vpack.c.b16 %v5623, %v5616
        %v6310 = vpack.c.b16 %v5631, %v5624
        %v6311 = vpack.c.b16 %v5632, %v5625
        %v6312 = vpack.c.b16 %v5633, %v5626
        %v6313 = vpack.c.b16 %v5634, %v5627
        %v6314 = vpack.c.b16 %v5635, %v5628
        %v6315 = vpack.c.b16 %v5636, %v5629
        %v6316 = vpack.c.b16 %v5637, %v5630
        %v6317 = vpack.c.b16 %v5645, %v5638
        %v6318 = vpack.c.b16 %v5646, %v5639
        %v6319 = vpack.c.b16 %v5647, %v5640
        %v6320 = vpack.c.b16 %v5648, %v5641
        %v6321 = vpack.c.b16 %v5649, %v5642
        %v6322 = vpack.c.b16 %v5650, %v5643
        %v6323 = vpack.c.b16 %v5651, %v5644
        %v6324 = vpack.c.b16 %v5659, %v5652
        %v6325 = vpack.c.b16 %v5660, %v5653
        %v6326 = vpack.c.b16 %v5661, %v5654
        %v6327 = vpack.c.b16 %v5662, %v5655
        %v6328 = vpack.c.b16 %v5663, %v5656
        %v6329 = vpack.c.b16 %v5664, %v5657
        %v6330 = vpack.c.b16 %v5665, %v5658
        %v6331 = vpack.c.b16 %v5673, %v5666
        %v6332 = vpack.c.b16 %v5674, %v5667
        %v6333 = vpack.c.b16 %v5675, %v5668
        %v6334 = vpack.c.b16 %v5676, %v5669
        %v6335 = vpack.c.b16 %v5677, %v5670
        %v6336 = vpack.c.b16 %v5678, %v5671
        %v6337 = vpack.c.b16 %v5679, %v5672
        %v6338 = vpack.c.b16 %v5687, %v5680
        %v6339 = vpack.c.b16 %v5688, %v5681
        %v6340 = vpack.c.b16 %v5689, %v5682
        %v6341 = vpack.c.b16 %v5690, %v5683
        %v6342 = vpack.c.b16 %v5691, %v5684
        %v6343 = vpack.c.b16 %v5692, %v5685
        %v6344 = vpack.c.b16 %v5693, %v5686
        %v6345 = vpack.c.b16 %v5701, %v5694
        %v6346 = vpack.c.b16 %v5702, %v5695
        %v6347 = vpack.c.b16 %v5703, %v5696
        %v6348 = vpack.c.b16 %v5704, %v5697
        %v6349 = vpack.c.b16 %v5705, %v5698
        %v6350 = vpack.c.b16 %v5706, %v5699
        %v6351 = vpack.c.b16 %v5707, %v5700
        %v6352 = vpack.c.b16 %v5715, %v5708
        %v6353 = vpack.c.b16 %v5716, %v5709
        %v6354 = vpack.c.b16 %v5717, %v5710
        %v6355 = vpack.c.b16 %v5718, %v5711
        %v6356 = vpack.c.b16 %v5719, %v5712
        %v6357 = vpack.c.b16 %v5720, %v5713
        %v6358 = vpack.c.b16 %v5721, %v5714
        %v6359 = vpack.c.b16 %v5729, %v5722
        %v6360 = vpack.c.b16 %v5730, %v5723
        %v6361 = vpack.c.b16 %v5731, %v5724
        %v6362 = vpack.c.b16 %v5732, %v5725
        %v6363 = vpack.c.b16 %v5733, %v5726
        %v6364 = vpack.c.b16 %v5734, %v5727
        %v6365 = vpack.c.b16 %v5735, %v5728
        %v6366 = vpack.c.b16 %v5743, %v5736
        %v6367 = vpack.c.b16 %v5744, %v5737
        %v6368 = vpack.c.b16 %v5745, %v5738
        %v6369 = vpack.c.b16 %v5746, %v5739
        %v6370 = vpack.c.b16 %v5747, %v5740
        %v6371 = vpack.c.b16 %v5748, %v5741
        %v6372 = vpack.c.b16 %v5749, %v5742
        %v6373 = vpack.c.b16 %v5757, %v5750
        %v6374 = vpack.c.b16 %v5758, %v5751
        %v6375 = vpack.c.b16 %v5759, %v5752
        %v6376 = vpack.c.b16 %v5760, %v5753
        %v6377 = vpack.c.b16 %v5761, %v5754
        %v6378 = vpack.c.b16 %v5762, %v5755
        %v6379 = vpack.c.b16 %v5763, %v5756
        %v6380 = vpack.c.b16 %v5771, %v5764
        %v6381 = vpack.c.b16 %v5772, %v5765
        %v6382 = vpack.c.b16 %v5773, %v5766
        %v6383 = vpack.c.b16 %v5774, %v5767
        %v6384 = vpack.c.b16 %v5775, %v5768
        %v6385 = vpack.c.b16 %v5776, %v5769
        %v6386 = vpack.c.b16 %v5777, %v5770
        %v6387 = vpack.c.b16 %v5785, %v5778
        %v6388 = vpack.c.b16 %v5786, %v5779
        %v6389 = vpack.c.b16 %v5787, %v5780
        %v6390 = vpack.c.b16 %v5788, %v5781
        %v6391 = vpack.c.b16 %v5789, %v5782
        %v6392 = vpack.c.b16 %v5790, %v5783
        %v6393 = vpack.c.b16 %v5791, %v5784
        %v6394 = vpack.c.b16 %v5799, %v5792
        %v6395 = vpack.c.b16 %v5800, %v5793
        %v6396 = vpack.c.b16 %v5801, %v5794
        %v6397 = vpack.c.b16 %v5802, %v5795
        %v6398 = vpack.c.b16 %v5803, %v5796
        %v6399 = vpack.c.b16 %v5804, %v5797
        %v6400 = vpack.c.b16 %v5805, %v5798
        %v6401 = vpack.c.b16 %v5813, %v5806
        %v6402 = vpack.c.b16 %v5814, %v5807
        %v6403 = vpack.c.b16 %v5815, %v5808
        %v6404 = vpack.c.b16 %v5816, %v5809
        %v6405 = vpack.c.b16 %v5817, %v5810
        %v6406 = vpack.c.b16 %v5818, %v5811
        %v6407 = vpack.c.b16 %v5819, %v5812
        %v6408 = vpack.c.b16 %v5827, %v5820
        %v6409 = vpack.c.b16 %v5828, %v5821
        %v6410 = vpack.c.b16 %v5829, %v5822
        %v6411 = vpack.c.b16 %v5830, %v5823
        %v6412 = vpack.c.b16 %v5831, %v5824
        %v6413 = vpack.c.b16 %v5832, %v5825
        %v6414 = vpack.c.b16 %v5833, %v5826
        %v6415 = vpack.c.b16 %v5841, %v5834
        %v6416 = vpack.c.b16 %v5842, %v5835
        %v6417 = vpack.c.b16 %v5843, %v5836
        %v6418 = vpack.c.b16 %v5844, %v5837
        %v6419 = vpack.c.b16 %v5845, %v5838
        %v6420 = vpack.c.b16 %v5846, %v5839
        %v6421 = vpack.c.b16 %v5847, %v5840
        %v6422 = vpack.c.b16 %v5855, %v5848
        %v6423 = vpack.c.b16 %v5856, %v5849
        %v6424 = vpack.c.b16 %v5857, %v5850
        %v6425 = vpack.c.b16 %v5858, %v5851
        %v6426 = vpack.c.b16 %v5859, %v5852
        %v6427 = vpack.c.b16 %v5860, %v5853
        %v6428 = vpack.c.b16 %v5861, %v5854
        %v6429 = vpack.c.b16 %v5869, %v5862
        %v6430 = vpack.c.b16 %v5870, %v5863
        %v6431 = vpack.c.b16 %v5871, %v5864
        %v6432 = vpack.c.b16 %v5872, %v5865
        %v6433 = vpack.c.b16 %v5873, %v5866
        %v6434 = vpack.c.b16 %v5874, %v5867
        %v6435 = vpack.c.b16 %v5875, %v5868
        %v6436 = vpack.c.b16 %v5883, %v5876
        %v6437 = vpack.c.b16 %v5884, %v5877
        %v6438 = vpack.c.b16 %v5885, %v5878
        %v6439 = vpack.c.b16 %v5886, %v5879
        %v6440 = vpack.c.b16 %v5887, %v5880
        %v6441 = vpack.c.b16 %v5888, %v5881
        %v6442 = vpack.c.b16 %v5889, %v5882
        %v6443 = vpack.c.b16 %v5897, %v5890
        %v6444 = vpack.c.b16 %v5898, %v5891
        %v6445 = vpack.c.b16 %v5899, %v5892
        %v6446 = vpack.c.b16 %v5900, %v5893
        %v6447 = vpack.c.b16 %v5901, %v5894
        %v6448 = vpack.c.b16 %v5902, %v5895
        %v6449 = vpack.c.b16 %v5903, %v5896
        %v6450 = vpack.c.b16 %v5911, %v5904
        %v6451 = vpack.c.b16 %v5912, %v5905
        %v6452 = vpack.c.b16 %v5913, %v5906
        %v6453 = vpack.c.b16 %v5914, %v5907
        %v6454 = vpack.c.b16 %v5915, %v5908
        %v6455 = vpack.c.b16 %v5916, %v5909
        %v6456 = vpack.c.b16 %v5917, %v5910
        %v6457 = vpack.c.b16 %v5925, %v5918
        %v6458 = vpack.c.b16 %v5926, %v5919
        %v6459 = vpack.c.b16 %v5927, %v5920
        %v6460 = vpack.c.b16 %v5928, %v5921
        %v6461 = vpack.c.b16 %v5929, %v5922
        %v6462 = vpack.c.b16 %v5930, %v5923
        %v6463 = vpack.c.b16 %v5931, %v5924
        %v6464 = vpack.c.b16 %v5939, %v5932
        %v6465 = vpack.c.b16 %v5940, %v5933
        %v6466 = vpack.c.b16 %v5941, %v5934
        %v6467 = vpack.c.b16 %v5942, %v5935
        %v6468 = vpack.c.b16 %v5943, %v5936
        %v6469 = vpack.c.b16 %v5944, %v5937
        %v6470 = vpack.c.b16 %v5945, %v5938
        %v6471 = vpack.c.b16 %v5953, %v5946
        %v6472 = vpack.c.b16 %v5954, %v5947
        %v6473 = vpack.c.b16 %v5955, %v5948
        %v6474 = vpack.c.b16 %v5956, %v5949
        %v6475 = vpack.c.b16 %v5957, %v5950
        %v6476 = vpack.c.b16 %v5958, %v5951
        %v6477 = vpack.c.b16 %v5959, %v5952
        %v6478 = vpack.c.b16 %v5967, %v5960
        %v6479 = vpack.c.b16 %v5968, %v5961
        %v6480 = vpack.c.b16 %v5969, %v5962
        %v6481 = vpack.c.b16 %v5970, %v5963
        %v6482 = vpack.c.b16 %v5971, %v5964
        %v6483 = vpack.c.b16 %v5972, %v5965
        %v6484 = vpack.c.b16 %v5973, %v5966
        %v6485 = vpack.c.b16 %v5981, %v5974
        %v6486 = vpack.c.b16 %v5982, %v5975
        %v6487 = vpack.c.b16 %v5983, %v5976
        %v6488 = vpack.c.b16 %v5984, %v5977
        %v6489 = vpack.c.b16 %v5985, %v5978
        %v6490 = vpack.c.b16 %v5986, %v5979
        %v6491 = vpack.c.b16 %v5987, %v5980
        %v6492 = vpack.c.b16 %v5995, %v5988
        %v6493 = vpack.c.b16 %v5996, %v5989
        %v6494 = vpack.c.b16 %v5997, %v5990
        %v6495 = vpack.c.b16 %v5998, %v5991
        %v6496 = vpack.c.b16 %v5999, %v5992
        %v6497 = vpack.c.b16 %v6000, %v5993
        %v6498 = vpack.c.b16 %v6001, %v5994
        %v6499 = vpack.c.b16 %v6009, %v6002
        %v6500 = vpack.c.b16 %v6010, %v6003
        %v6501 = vpack.c.b16 %v6011, %v6004
        %v6502 = vpack.c.b16 %v6012, %v6005
        %v6503 = vpack.c.b16 %v6013, %v6006
        %v6504 = vpack.c.b16 %v6014, %v6007
        %v6505 = vpack.c.b16 %v6015, %v6008
        %v6506 = vpack.c.b16 %v6023, %v6016
        %v6507 = vpack.c.b16 %v6024, %v6017
        %v6508 = vpack.c.b16 %v6025, %v6018
        %v6509 = vpack.c.b16 %v6026, %v6019
        %v6510 = vpack.c.b16 %v6027, %v6020
        %v6511 = vpack.c.b16 %v6028, %v6021
        %v6512 = vpack.c.b16 %v6029, %v6022
        %v6513 = vpack.c.b16 %v6037, %v6030
        %v6514 = vpack.c.b16 %v6038, %v6031
        %v6515 = vpack.c.b16 %v6039, %v6032
        %v6516 = vpack.c.b16 %v6040, %v6033
        %v6517 = vpack.c.b16 %v6041, %v6034
        %v6518 = vpack.c.b16 %v6042, %v6035
        %v6519 = vpack.c.b16 %v6043, %v6036
        %v6520 = vpack.c.b16 %v6051, %v6044
        %v6521 = vpack.c.b16 %v6052, %v6045
        %v6522 = vpack.c.b16 %v6053, %v6046
        %v6523 = vpack.c.b16 %v6054, %v6047
        %v6524 = vpack.c.b16 %v6055, %v6048
        %v6525 = vpack.c.b16 %v6056, %v6049
        %v6526 = vpack.c.b16 %v6057, %v6050
        %v6527 = vpack.c.b16 %v6065, %v6058
        %v6528 = vpack.c.b16 %v6066, %v6059
        %v6529 = vpack.c.b16 %v6067, %v6060
        %v6530 = vpack.c.b16 %v6068, %v6061
        %v6531 = vpack.c.b16 %v6069, %v6062
        %v6532 = vpack.c.b16 %v6070, %v6063
        %v6533 = vpack.c.b16 %v6071, %v6064
        %v6534 = vpack.c.b16 %v6079, %v6072
        %v6535 = vpack.c.b16 %v6080, %v6073
        %v6536 = vpack.c.b16 %v6081, %v6074
        %v6537 = vpack.c.b16 %v6082, %v6075
        %v6538 = vpack.c.b16 %v6083, %v6076
        %v6539 = vpack.c.b16 %v6084, %v6077
        %v6540 = vpack.c.b16 %v6085, %v6078
        %v6541 = vpack.c.b16 %v6093, %v6086
        %v6542 = vpack.c.b16 %v6094, %v6087
        %v6543 = vpack.c.b16 %v6095, %v6088
        %v6544 = vpack.c.b16 %v6096, %v6089
        %v6545 = vpack.c.b16 %v6097, %v6090
        %v6546 = vpack.c.b16 %v6098, %v6091
        %v6547 = vpack.c.b16 %v6099, %v6092
        %6996 = vmatprep.subr.bf16.mxu0 %v6101
        %6997 = vmatpush1.bf16.msra.mxu0 %v6100
        %6998 = vmatprep.subr.bf16.mxu0 %v6108
        %6999 = vmatpush1.bf16.msra.mxu0 %v6107
        %7000 = vmatprep.subr.bf16.mxu0 %v6115
        %7001 = vmatpush1.bf16.msra.mxu0 %v6114
        %7002 = vmatprep.subr.bf16.mxu0 %v6122
        %7003 = vmatpush1.bf16.msra.mxu0 %v6121
        %7004 = vmatprep.subr.bf16.mxu0 %v6129
        %7005 = vmatpush1.bf16.msra.mxu0 %v6128
        %7006 = vmatprep.subr.bf16.mxu0 %v6136
        %7007 = vmatpush1.bf16.msra.mxu0 %v6135
        %7008 = vmatprep.subr.bf16.mxu0 %v6143
        %7009 = vmatpush1.bf16.msra.mxu0 %v6142
        %7010 = vmatprep.subr.bf16.mxu0 %v6150
        %7011 = vmatpush1.bf16.msra.mxu0 %v6149
        %7012 = vmatprep.subr.bf16.mxu0 %v6157
        %7013 = vmatpush1.bf16.msra.mxu0 %v6156
        %7014 = vmatprep.subr.bf16.mxu0 %v6164
        %7015 = vmatpush1.bf16.msra.mxu0 %v6163
        %7016 = vmatprep.subr.bf16.mxu0 %v6171
        %7017 = vmatpush1.bf16.msra.mxu0 %v6170
        %7018 = vmatprep.subr.bf16.mxu0 %v6178
        %7019 = vmatpush1.bf16.msra.mxu0 %v6177
        %7020 = vmatprep.subr.bf16.mxu0 %v6185
        %7021 = vmatpush1.bf16.msra.mxu0 %v6184
        %7022 = vmatprep.subr.bf16.mxu0 %v6192
        %7023 = vmatpush1.bf16.msra.mxu0 %v6191
        %7024 = vmatprep.subr.bf16.mxu0 %v6199
        %7025 = vmatpush1.bf16.msra.mxu0 %v6198
        %7026 = vmatprep.subr.bf16.mxu0 %v6206
        %7027 = vmatpush1.bf16.msra.mxu0 %v6205
        %7028 = vmatprep.mubr.bf16.mxu0 %v4080
        %7029 = vmatmul.mubr.bf16.gmra.mrb[0].mxu0 %v4079
        %v7030 = vpop.f32.mrb[0].mxu0
        %v7031 = vadd.f32 %v4660, %v7030
        %v7032 = vpop.f32.mrb[0].mxu0
        %v7033 = vadd.f32 %v4664, %v7032
        %v7034 = vpop.f32.mrb[0].mxu0
        %v7035 = vadd.f32 %v4660, %v7034
        %v7036 = vpop.f32.mrb[0].mxu0
        %v7037 = vadd.f32 %v4664, %v7036
        %7038 = vmatprep.mubr.bf16.mxu0 %v4088
        %7039 = vmatmul.mubr.bf16.gmra.mrb[0].mxu0 %v4087
        %v7040 = vpop.f32.mrb[0].mxu0
        %v7041 = vadd.f32 %v4660, %v7040
        %v7042 = vpop.f32.mrb[0].mxu0
        %v7043 = vadd.f32 %v4664, %v7042
        %v7044 = vpop.f32.mrb[0].mxu0
        %v7045 = vadd.f32 %v4660, %v7044
        %v7046 = vpop.f32.mrb[0].mxu0
        %v7047 = vadd.f32 %v4664, %v7046
        %7048 = vmatprep.mubr.bf16.mxu0 %v4096
        %7049 = vmatmul.mubr.bf16.gmra.mrb[0].mxu0 %v4095
        %v7050 = vpop.f32.mrb[0].mxu0
        %v7051 = vadd.f32 %v4660, %v7050
        %v7052 = vpop.f32.mrb[0].mxu0
        %v7053 = vadd.f32 %v4664, %v7052
        %v7054 = vpop.f32.mrb[0].mxu0
        %v7055 = vadd.f32 %v4660, %v7054
        %v7056 = vpop.f32.mrb[0].mxu0
        %v7057 = vadd.f32 %v4664, %v7056
        %7058 = vmatprep.mubr.bf16.mxu0 %v4104
        %7059 = vmatmul.mubr.bf16.gmra.mrb[0].mxu0 %v4103
        %v7060 = vpop.f32.mrb[0].mxu0
        %v7061 = vadd.f32 %v4660, %v7060
        %v7062 = vpop.f32.mrb[0].mxu0
        %v7063 = vadd.f32 %v4664, %v7062
        %v7064 = vpop.f32.mrb[0].mxu0
        %v7065 = vadd.f32 %v4660, %v7064
        %v7066 = vpop.f32.mrb[0].mxu0
        %v7067 = vadd.f32 %v4664, %v7066
        %7068 = vmatprep.mubr.bf16.mxu0 %v4112
        %7069 = vmatmul.mubr.bf16.gmra.mrb[0].mxu0 %v4111
        %v7070 = vpop.f32.mrb[0].mxu0
        %v7071 = vadd.f32 %v4660, %v7070
        %v7072 = vpop.f32.mrb[0].mxu0
        %v7073 = vadd.f32 %v4664, %v7072
        %v7074 = vpop.f32.mrb[0].mxu0
        %v7075 = vadd.f32 %v4660, %v7074
        %v7076 = vpop.f32.mrb[0].mxu0
        %v7077 = vadd.f32 %v4664, %v7076
        %7078 = vmatprep.mubr.bf16.mxu0 %v4120
        %7079 = vmatmul.mubr.bf16.gmra.mrb[0].mxu0 %v4119
        %v7080 = vpop.f32.mrb[0].mxu0
        %v7081 = vadd.f32 %v4660, %v7080
        %v7082 = vpop.f32.mrb[0].mxu0
        %v7083 = vadd.f32 %v4664, %v7082
        %v7084 = vpop.f32.mrb[0].mxu0
        %v7085 = vadd.f32 %v4660, %v7084
        %v7086 = vpop.f32.mrb[0].mxu0
        %v7087 = vadd.f32 %v4664, %v7086
        %7088 = vmatprep.mubr.bf16.mxu0 %v4128
        %7089 = vmatmul.mubr.bf16.gmra.mrb[0].mxu0 %v4127
        %v7090 = vpop.f32.mrb[0].mxu0
        %v7091 = vadd.f32 %v4660, %v7090
        %v7092 = vpop.f32.mrb[0].mxu0
        %v7093 = vadd.f32 %v4664, %v7092
        %v7094 = vpop.f32.mrb[0].mxu0
        %v7095 = vadd.f32 %v4660, %v7094
        %v7096 = vpop.f32.mrb[0].mxu0
        %v7097 = vadd.f32 %v4664, %v7096
        %7098 = vmatprep.mubr.bf16.mxu0 %v4136
        %7099 = vmatmul.mubr.bf16.gmra.mrb[0].mxu0 %v4135
        %v7100 = vpop.f32.mrb[0].mxu0
        %v7101 = vadd.f32 %v4660, %v7100
        %v7102 = vpop.f32.mrb[0].mxu0
        %v7103 = vadd.f32 %v4664, %v7102
        %v7104 = vpop.f32.mrb[0].mxu0
        %v7105 = vadd.f32 %v4660, %v7104
        %v7106 = vpop.f32.mrb[0].mxu0
        %v7107 = vadd.f32 %v4664, %v7106
        %7108 = vdwg.mxu0
        %7109 = vmatprep.subr.bf16.mxu0 %v6213
        %7110 = vmatpush1.bf16.msra.mxu0 %v6212
        %7111 = vmatprep.subr.bf16.mxu0 %v6220
        %7112 = vmatpush1.bf16.msra.mxu0 %v6219
        %7113 = vmatprep.subr.bf16.mxu0 %v6227
        %7114 = vmatpush1.bf16.msra.mxu0 %v6226
        %7115 = vmatprep.subr.bf16.mxu0 %v6234
        %7116 = vmatpush1.bf16.msra.mxu0 %v6233
        %7117 = vmatprep.subr.bf16.mxu0 %v6241
        %7118 = vmatpush1.bf16.msra.mxu0 %v6240
        %7119 = vmatprep.subr.bf16.mxu0 %v6248
        %7120 = vmatpush1.bf16.msra.mxu0 %v6247
        %7121 = vmatprep.subr.bf16.mxu0 %v6255
        %7122 = vmatpush1.bf16.msra.mxu0 %v6254
        %7123 = vmatprep.subr.bf16.mxu0 %v6262
        %7124 = vmatpush1.bf16.msra.mxu0 %v6261
        %7125 = vmatprep.subr.bf16.mxu0 %v6269
        %7126 = vmatpush1.bf16.msra.mxu0 %v6268
        %7127 = vmatprep.subr.bf16.mxu0 %v6276
        %7128 = vmatpush1.bf16.msra.mxu0 %v6275
        %7129 = vmatprep.subr.bf16.mxu0 %v6283
        %7130 = vmatpush1.bf16.msra.mxu0 %v6282
        %7131 = vmatprep.subr.bf16.mxu0 %v6290
        %7132 = vmatpush1.bf16.msra.mxu0 %v6289
        %7133 = vmatprep.subr.bf16.mxu0 %v6297
        %7134 = vmatpush1.bf16.msra.mxu0 %v6296
        %7135 = vmatprep.subr.bf16.mxu0 %v6304
        %7136 = vmatpush1.bf16.msra.mxu0 %v6303
        %7137 = vmatprep.subr.bf16.mxu0 %v6311
        %7138 = vmatpush1.bf16.msra.mxu0 %v6310
        %7139 = vmatprep.subr.bf16.mxu0 %v6318
        %7140 = vmatpush1.bf16.msra.mxu0 %v6317
        %7141 = vmatprep.mubr.bf16.mxu0 %v4082
        %7142 = vmatmul.mubr.bf16.gmra.mrb[0].mxu0 %v4081
        %v7143 = vpop.f32.mrb[0].mxu0
        %v7144 = vadd.f32 %v7031, %v7143
        %v7145 = vpop.f32.mrb[0].mxu0
        %v7146 = vadd.f32 %v7033, %v7145
        %v7147 = vpop.f32.mrb[0].mxu0
        %v7148 = vadd.f32 %v7035, %v7147
        %v7149 = vpop.f32.mrb[0].mxu0
        %v7150 = vadd.f32 %v7037, %v7149
        %7151 = vmatprep.mubr.bf16.mxu0 %v4090
        %7152 = vmatmul.mubr.bf16.gmra.mrb[0].mxu0 %v4089
        %v7153 = vpop.f32.mrb[0].mxu0
        %v7154 = vadd.f32 %v7041, %v7153
        %v7155 = vpop.f32.mrb[0].mxu0
        %v7156 = vadd.f32 %v7043, %v7155
        %v7157 = vpop.f32.mrb[0].mxu0
        %v7158 = vadd.f32 %v7045, %v7157
        %v7159 = vpop.f32.mrb[0].mxu0
        %v7160 = vadd.f32 %v7047, %v7159
        %7161 = vmatprep.mubr.bf16.mxu0 %v4098
        %7162 = vmatmul.mubr.bf16.gmra.mrb[0].mxu0 %v4097
        %v7163 = vpop.f32.mrb[0].mxu0
        %v7164 = vadd.f32 %v7051, %v7163
        %v7165 = vpop.f32.mrb[0].mxu0
        %v7166 = vadd.f32 %v7053, %v7165
        %v7167 = vpop.f32.mrb[0].mxu0
        %v7168 = vadd.f32 %v7055, %v7167
        %v7169 = vpop.f32.mrb[0].mxu0
        %v7170 = vadd.f32 %v7057, %v7169
        %7171 = vmatprep.mubr.bf16.mxu0 %v4106
        %7172 = vmatmul.mubr.bf16.gmra.mrb[0].mxu0 %v4105
        %v7173 = vpop.f32.mrb[0].mxu0
        %v7174 = vadd.f32 %v7061, %v7173
        %v7175 = vpop.f32.mrb[0].mxu0
        %v7176 = vadd.f32 %v7063, %v7175
        %v7177 = vpop.f32.mrb[0].mxu0
        %v7178 = vadd.f32 %v7065, %v7177
        %v7179 = vpop.f32.mrb[0].mxu0
        %v7180 = vadd.f32 %v7067, %v7179
        %7181 = vmatprep.mubr.bf16.mxu0 %v4114
        %7182 = vmatmul.mubr.bf16.gmra.mrb[0].mxu0 %v4113
        %v7183 = vpop.f32.mrb[0].mxu0
        %v7184 = vadd.f32 %v7071, %v7183
        %v7185 = vpop.f32.mrb[0].mxu0
        %v7186 = vadd.f32 %v7073, %v7185
        %v7187 = vpop.f32.mrb[0].mxu0
        %v7188 = vadd.f32 %v7075, %v7187
        %v7189 = vpop.f32.mrb[0].mxu0
        %v7190 = vadd.f32 %v7077, %v7189
        %7191 = vmatprep.mubr.bf16.mxu0 %v4122
        %7192 = vmatmul.mubr.bf16.gmra.mrb[0].mxu0 %v4121
        %v7193 = vpop.f32.mrb[0].mxu0
        %v7194 = vadd.f32 %v7081, %v7193
        %v7195 = vpop.f32.mrb[0].mxu0
        %v7196 = vadd.f32 %v7083, %v7195
        %v7197 = vpop.f32.mrb[0].mxu0
        %v7198 = vadd.f32 %v7085, %v7197
        %v7199 = vpop.f32.mrb[0].mxu0
        %v7200 = vadd.f32 %v7087, %v7199
        %7201 = vmatprep.mubr.bf16.mxu0 %v4130
        %7202 = vmatmul.mubr.bf16.gmra.mrb[0].mxu0 %v4129
        %v7203 = vpop.f32.mrb[0].mxu0
        %v7204 = vadd.f32 %v7091, %v7203
        %v7205 = vpop.f32.mrb[0].mxu0
        %v7206 = vadd.f32 %v7093, %v7205
        %v7207 = vpop.f32.mrb[0].mxu0
        %v7208 = vadd.f32 %v7095, %v7207
        %v7209 = vpop.f32.mrb[0].mxu0
        %v7210 = vadd.f32 %v7097, %v7209
        %7211 = vmatprep.mubr.bf16.mxu0 %v4138
        %7212 = vmatmul.mubr.bf16.gmra.mrb[0].mxu0 %v4137
        %v7213 = vpop.f32.mrb[0].mxu0
        %v7214 = vadd.f32 %v7101, %v7213
        %v7215 = vpop.f32.mrb[0].mxu0
        %v7216 = vadd.f32 %v7103, %v7215
        %v7217 = vpop.f32.mrb[0].mxu0
        %v7218 = vadd.f32 %v7105, %v7217
        %v7219 = vpop.f32.mrb[0].mxu0
        %v7220 = vadd.f32 %v7107, %v7219
        %7221 = vdwg.mxu0
        %7222 = vmatprep.subr.bf16.mxu0 %v6325
        %7223 = vmatpush1.bf16.msra.mxu0 %v6324
        %7224 = vmatprep.subr.bf16.mxu0 %v6332
        %7225 = vmatpush1.bf16.msra.mxu0 %v6331
        %7226 = vmatprep.subr.bf16.mxu0 %v6339
        %7227 = vmatpush1.bf16.msra.mxu0 %v6338
        %7228 = vmatprep.subr.bf16.mxu0 %v6346
        %7229 = vmatpush1.bf16.msra.mxu0 %v6345
        %7230 = vmatprep.subr.bf16.mxu0 %v6353
        %7231 = vmatpush1.bf16.msra.mxu0 %v6352
        %7232 = vmatprep.subr.bf16.mxu0 %v6360
        %7233 = vmatpush1.bf16.msra.mxu0 %v6359
        %7234 = vmatprep.subr.bf16.mxu0 %v6367
        %7235 = vmatpush1.bf16.msra.mxu0 %v6366
        %7236 = vmatprep.subr.bf16.mxu0 %v6374
        %7237 = vmatpush1.bf16.msra.mxu0 %v6373
        %7238 = vmatprep.subr.bf16.mxu0 %v6381
        %7239 = vmatpush1.bf16.msra.mxu0 %v6380
        %7240 = vmatprep.subr.bf16.mxu0 %v6388
        %7241 = vmatpush1.bf16.msra.mxu0 %v6387
        %7242 = vmatprep.subr.bf16.mxu0 %v6395
        %7243 = vmatpush1.bf16.msra.mxu0 %v6394
        %7244 = vmatprep.subr.bf16.mxu0 %v6402
        %7245 = vmatpush1.bf16.msra.mxu0 %v6401
        %7246 = vmatprep.subr.bf16.mxu0 %v6409
        %7247 = vmatpush1.bf16.msra.mxu0 %v6408
        %7248 = vmatprep.subr.bf16.mxu0 %v6416
        %7249 = vmatpush1.bf16.msra.mxu0 %v6415
        %7250 = vmatprep.subr.bf16.mxu0 %v6423
        %7251 = vmatpush1.bf16.msra.mxu0 %v6422
        %7252 = vmatprep.subr.bf16.mxu0 %v6430
        %7253 = vmatpush1.bf16.msra.mxu0 %v6429
        %7254 = vmatprep.mubr.bf16.mxu0 %v4084
        %7255 = vmatmul.mubr.bf16.gmra.mrb[0].mxu0 %v4083
        %v7256 = vpop.f32.mrb[0].mxu0
        %v7257 = vadd.f32 %v7144, %v7256
        %v7258 = vpop.f32.mrb[0].mxu0
        %v7259 = vadd.f32 %v7146, %v7258
        %v7260 = vpop.f32.mrb[0].mxu0
        %v7261 = vadd.f32 %v7148, %v7260
        %v7262 = vpop.f32.mrb[0].mxu0
        %v7263 = vadd.f32 %v7150, %v7262
        %7264 = vmatprep.mubr.bf16.mxu0 %v4092
        %7265 = vmatmul.mubr.bf16.gmra.mrb[0].mxu0 %v4091
        %v7266 = vpop.f32.mrb[0].mxu0
        %v7267 = vadd.f32 %v7154, %v7266
        %v7268 = vpop.f32.mrb[0].mxu0
        %v7269 = vadd.f32 %v7156, %v7268
        %v7270 = vpop.f32.mrb[0].mxu0
        %v7271 = vadd.f32 %v7158, %v7270
        %v7272 = vpop.f32.mrb[0].mxu0
        %v7273 = vadd.f32 %v7160, %v7272
        %7274 = vmatprep.mubr.bf16.mxu0 %v4100
        %7275 = vmatmul.mubr.bf16.gmra.mrb[0].mxu0 %v4099
        %v7276 = vpop.f32.mrb[0].mxu0
        %v7277 = vadd.f32 %v7164, %v7276
        %v7278 = vpop.f32.mrb[0].mxu0
        %v7279 = vadd.f32 %v7166, %v7278
        %v7280 = vpop.f32.mrb[0].mxu0
        %v7281 = vadd.f32 %v7168, %v7280
        %v7282 = vpop.f32.mrb[0].mxu0
        %v7283 = vadd.f32 %v7170, %v7282
        %7284 = vmatprep.mubr.bf16.mxu0 %v4108
        %7285 = vmatmul.mubr.bf16.gmra.mrb[0].mxu0 %v4107
        %v7286 = vpop.f32.mrb[0].mxu0
        %v7287 = vadd.f32 %v7174, %v7286
        %v7288 = vpop.f32.mrb[0].mxu0
        %v7289 = vadd.f32 %v7176, %v7288
        %v7290 = vpop.f32.mrb[0].mxu0
        %v7291 = vadd.f32 %v7178, %v7290
        %v7292 = vpop.f32.mrb[0].mxu0
        %v7293 = vadd.f32 %v7180, %v7292
        %7294 = vmatprep.mubr.bf16.mxu0 %v4116
        %7295 = vmatmul.mubr.bf16.gmra.mrb[0].mxu0 %v4115
        %v7296 = vpop.f32.mrb[0].mxu0
        %v7297 = vadd.f32 %v7184, %v7296
        %v7298 = vpop.f32.mrb[0].mxu0
        %v7299 = vadd.f32 %v7186, %v7298
        %v7300 = vpop.f32.mrb[0].mxu0
        %v7301 = vadd.f32 %v7188, %v7300
        %v7302 = vpop.f32.mrb[0].mxu0
        %v7303 = vadd.f32 %v7190, %v7302
        %7304 = vmatprep.mubr.bf16.mxu0 %v4124
        %7305 = vmatmul.mubr.bf16.gmra.mrb[0].mxu0 %v4123
        %v7306 = vpop.f32.mrb[0].mxu0
        %v7307 = vadd.f32 %v7194, %v7306
        %v7308 = vpop.f32.mrb[0].mxu0
        %v7309 = vadd.f32 %v7196, %v7308
        %v7310 = vpop.f32.mrb[0].mxu0
        %v7311 = vadd.f32 %v7198, %v7310
        %v7312 = vpop.f32.mrb[0].mxu0
        %v7313 = vadd.f32 %v7200, %v7312
        %7314 = vmatprep.mubr.bf16.mxu0 %v4132
        %7315 = vmatmul.mubr.bf16.gmra.mrb[0].mxu0 %v4131
        %v7316 = vpop.f32.mrb[0].mxu0
        %v7317 = vadd.f32 %v7204, %v7316
        %v7318 = vpop.f32.mrb[0].mxu0
        %v7319 = vadd.f32 %v7206, %v7318
        %v7320 = vpop.f32.mrb[0].mxu0
        %v7321 = vadd.f32 %v7208, %v7320
        %v7322 = vpop.f32.mrb[0].mxu0
        %v7323 = vadd.f32 %v7210, %v7322
        %7324 = vmatprep.mubr.bf16.mxu0 %v4140
        %7325 = vmatmul.mubr.bf16.gmra.mrb[0].mxu0 %v4139
        %v7326 = vpop.f32.mrb[0].mxu0
        %v7327 = vadd.f32 %v7214, %v7326
        %v7328 = vpop.f32.mrb[0].mxu0
        %v7329 = vadd.f32 %v7216, %v7328
        %v7330 = vpop.f32.mrb[0].mxu0
        %v7331 = vadd.f32 %v7218, %v7330
        %v7332 = vpop.f32.mrb[0].mxu0
        %v7333 = vadd.f32 %v7220, %v7332
        %7334 = vdwg.mxu0
        %7335 = vmatprep.subr.bf16.mxu0 %v6437
        %7336 = vmatpush1.bf16.msra.mxu0 %v6436
        %7337 = vmatprep.subr.bf16.mxu0 %v6444
        %7338 = vmatpush1.bf16.msra.mxu0 %v6443
        %7339 = vmatprep.subr.bf16.mxu0 %v6451
        %7340 = vmatpush1.bf16.msra.mxu0 %v6450
        %7341 = vmatprep.subr.bf16.mxu0 %v6458
        %7342 = vmatpush1.bf16.msra.mxu0 %v6457
        %7343 = vmatprep.subr.bf16.mxu0 %v6465
        %7344 = vmatpush1.bf16.msra.mxu0 %v6464
        %7345 = vmatprep.subr.bf16.mxu0 %v6472
        %7346 = vmatpush1.bf16.msra.mxu0 %v6471
        %7347 = vmatprep.subr.bf16.mxu0 %v6479
        %7348 = vmatpush1.bf16.msra.mxu0 %v6478
        %7349 = vmatprep.subr.bf16.mxu0 %v6486
        %7350 = vmatpush1.bf16.msra.mxu0 %v6485
        %7351 = vmatprep.subr.bf16.mxu0 %v6493
        %7352 = vmatpush1.bf16.msra.mxu0 %v6492
        %7353 = vmatprep.subr.bf16.mxu0 %v6500
        %7354 = vmatpush1.bf16.msra.mxu0 %v6499
        %7355 = vmatprep.subr.bf16.mxu0 %v6507
        %7356 = vmatpush1.bf16.msra.mxu0 %v6506
        %7357 = vmatprep.subr.bf16.mxu0 %v6514
        %7358 = vmatpush1.bf16.msra.mxu0 %v6513
        %7359 = vmatprep.subr.bf16.mxu0 %v6521
        %7360 = vmatpush1.bf16.msra.mxu0 %v6520
        %7361 = vmatprep.subr.bf16.mxu0 %v6528
        %7362 = vmatpush1.bf16.msra.mxu0 %v6527
        %7363 = vmatprep.subr.bf16.mxu0 %v6535
        %7364 = vmatpush1.bf16.msra.mxu0 %v6534
        %7365 = vmatprep.subr.bf16.mxu0 %v6542
        %7366 = vmatpush1.bf16.msra.mxu0 %v6541
        %7367 = vmatprep.mubr.bf16.mxu0 %v4086
        %7368 = vmatmul.mubr.bf16.gmra.mrb[0].mxu0 %v4085
        %v7369 = vpop.f32.mrb[0].mxu0
        %v7370 = vadd.f32 %v7257, %v7369
        %v7371 = vpop.f32.mrb[0].mxu0
        %v7372 = vadd.f32 %v7259, %v7371
        %v7373 = vpop.f32.mrb[0].mxu0
        %v7374 = vadd.f32 %v7261, %v7373
        %v7375 = vpop.f32.mrb[0].mxu0
        %v7376 = vadd.f32 %v7263, %v7375
        %7377 = vmatprep.mubr.bf16.mxu0 %v4094
        %7378 = vmatmul.mubr.bf16.gmra.mrb[0].mxu0 %v4093
        %v7379 = vpop.f32.mrb[0].mxu0
        %v7380 = vadd.f32 %v7267, %v7379
        %v7381 = vpop.f32.mrb[0].mxu0
        %v7382 = vadd.f32 %v7269, %v7381
        %v7383 = vpop.f32.mrb[0].mxu0
        %v7384 = vadd.f32 %v7271, %v7383
        %v7385 = vpop.f32.mrb[0].mxu0
        %v7386 = vadd.f32 %v7273, %v7385
        %7387 = vmatprep.mubr.bf16.mxu0 %v4102
        %7388 = vmatmul.mubr.bf16.gmra.mrb[0].mxu0 %v4101
        %v7389 = vpop.f32.mrb[0].mxu0
        %v7390 = vadd.f32 %v7277, %v7389
        %v7391 = vpop.f32.mrb[0].mxu0
        %v7392 = vadd.f32 %v7279, %v7391
        %v7393 = vpop.f32.mrb[0].mxu0
        %v7394 = vadd.f32 %v7281, %v7393
        %v7395 = vpop.f32.mrb[0].mxu0
        %v7396 = vadd.f32 %v7283, %v7395
        %7397 = vmatprep.mubr.bf16.mxu0 %v4110
        %7398 = vmatmul.mubr.bf16.gmra.mrb[0].mxu0 %v4109
        %v7399 = vpop.f32.mrb[0].mxu0
        %v7400 = vadd.f32 %v7287, %v7399
        %v7401 = vpop.f32.mrb[0].mxu0
        %v7402 = vadd.f32 %v7289, %v7401
        %v7403 = vpop.f32.mrb[0].mxu0
        %v7404 = vadd.f32 %v7291, %v7403
        %v7405 = vpop.f32.mrb[0].mxu0
        %v7406 = vadd.f32 %v7293, %v7405
        %7407 = vmatprep.mubr.bf16.mxu0 %v4118
        %7408 = vmatmul.mubr.bf16.gmra.mrb[0].mxu0 %v4117
        %v7409 = vpop.f32.mrb[0].mxu0
        %v7410 = vadd.f32 %v7297, %v7409
        %v7411 = vpop.f32.mrb[0].mxu0
        %v7412 = vadd.f32 %v7299, %v7411
        %v7413 = vpop.f32.mrb[0].mxu0
        %v7414 = vadd.f32 %v7301, %v7413
        %v7415 = vpop.f32.mrb[0].mxu0
        %v7416 = vadd.f32 %v7303, %v7415
        %7417 = vmatprep.mubr.bf16.mxu0 %v4126
        %7418 = vmatmul.mubr.bf16.gmra.mrb[0].mxu0 %v4125
        %v7419 = vpop.f32.mrb[0].mxu0
        %v7420 = vadd.f32 %v7307, %v7419
        %v7421 = vpop.f32.mrb[0].mxu0
        %v7422 = vadd.f32 %v7309, %v7421
        %v7423 = vpop.f32.mrb[0].mxu0
        %v7424 = vadd.f32 %v7311, %v7423
        %v7425 = vpop.f32.mrb[0].mxu0
        %v7426 = vadd.f32 %v7313, %v7425
        %7427 = vmatprep.mubr.bf16.mxu0 %v4134
        %7428 = vmatmul.mubr.bf16.gmra.mrb[0].mxu0 %v4133
        %v7429 = vpop.f32.mrb[0].mxu0
        %v7430 = vadd.f32 %v7317, %v7429
        %v7431 = vpop.f32.mrb[0].mxu0
        %v7432 = vadd.f32 %v7319, %v7431
        %v7433 = vpop.f32.mrb[0].mxu0
        %v7434 = vadd.f32 %v7321, %v7433
        %v7435 = vpop.f32.mrb[0].mxu0
        %v7436 = vadd.f32 %v7323, %v7435
        %7437 = vmatprep.mubr.bf16.mxu0 %v4142
        %7438 = vmatmul.mubr.bf16.gmra.mrb[0].mxu0 %v4141
        %v7439 = vpop.f32.mrb[0].mxu0
        %v7440 = vadd.f32 %v7327, %v7439
        %v7441 = vpop.f32.mrb[0].mxu0
        %v7442 = vadd.f32 %v7329, %v7441
        %v7443 = vpop.f32.mrb[0].mxu0
        %v7444 = vadd.f32 %v7331, %v7443
        %v7445 = vpop.f32.mrb[0].mxu0
        %v7446 = vadd.f32 %v7333, %v7445
        %7447 = vdwg.mxu0
        %7448 = vmatprep.subr.bf16.mxu0 %v6103
        %7449 = vmatpush1.bf16.msra.mxu0 %v6102
        %7450 = vmatprep.subr.bf16.mxu0 %v6110
        %7451 = vmatpush1.bf16.msra.mxu0 %v6109
        %7452 = vmatprep.subr.bf16.mxu0 %v6117
        %7453 = vmatpush1.bf16.msra.mxu0 %v6116
        %7454 = vmatprep.subr.bf16.mxu0 %v6124
        %7455 = vmatpush1.bf16.msra.mxu0 %v6123
        %7456 = vmatprep.subr.bf16.mxu0 %v6131
        %7457 = vmatpush1.bf16.msra.mxu0 %v6130
        %7458 = vmatprep.subr.bf16.mxu0 %v6138
        %7459 = vmatpush1.bf16.msra.mxu0 %v6137
        %7460 = vmatprep.subr.bf16.mxu0 %v6145
        %7461 = vmatpush1.bf16.msra.mxu0 %v6144
        %7462 = vmatprep.subr.bf16.mxu0 %v6152
        %7463 = vmatpush1.bf16.msra.mxu0 %v6151
        %7464 = vmatprep.subr.bf16.mxu0 %v6159
        %7465 = vmatpush1.bf16.msra.mxu0 %v6158
        %7466 = vmatprep.subr.bf16.mxu0 %v6166
        %7467 = vmatpush1.bf16.msra.mxu0 %v6165
        %7468 = vmatprep.subr.bf16.mxu0 %v6173
        %7469 = vmatpush1.bf16.msra.mxu0 %v6172
        %7470 = vmatprep.subr.bf16.mxu0 %v6180
        %7471 = vmatpush1.bf16.msra.mxu0 %v6179
        %7472 = vmatprep.subr.bf16.mxu0 %v6187
        %7473 = vmatpush1.bf16.msra.mxu0 %v6186
        %7474 = vmatprep.subr.bf16.mxu0 %v6194
        %7475 = vmatpush1.bf16.msra.mxu0 %v6193
        %7476 = vmatprep.subr.bf16.mxu0 %v6201
        %7477 = vmatpush1.bf16.msra.mxu0 %v6200
        %7478 = vmatprep.subr.bf16.mxu0 %v6208
        %7479 = vmatpush1.bf16.msra.mxu0 %v6207
        %7480 = vmatprep.mubr.bf16.mxu0 %v4080
        %7481 = vmatmul.mubr.bf16.gmra.mrb[0].mxu0 %v4079
        %v7482 = vpop.f32.mrb[0].mxu0
        %v7483 = vadd.f32 %v4668, %v7482
        %v7484 = vpop.f32.mrb[0].mxu0
        %v7485 = vadd.f32 %v4672, %v7484
        %v7486 = vpop.f32.mrb[0].mxu0
        %v7487 = vadd.f32 %v4668, %v7486
        %v7488 = vpop.f32.mrb[0].mxu0
        %v7489 = vadd.f32 %v4672, %v7488
        %7490 = vmatprep.mubr.bf16.mxu0 %v4088
        %7491 = vmatmul.mubr.bf16.gmra.mrb[0].mxu0 %v4087
        %v7492 = vpop.f32.mrb[0].mxu0
        %v7493 = vadd.f32 %v4668, %v7492
        %v7494 = vpop.f32.mrb[0].mxu0
        %v7495 = vadd.f32 %v4672, %v7494
        %v7496 = vpop.f32.mrb[0].mxu0
        %v7497 = vadd.f32 %v4668, %v7496
        %v7498 = vpop.f32.mrb[0].mxu0
        %v7499 = vadd.f32 %v4672, %v7498
        %7500 = vmatprep.mubr.bf16.mxu0 %v4096
        %7501 = vmatmul.mubr.bf16.gmra.mrb[0].mxu0 %v4095
        %v7502 = vpop.f32.mrb[0].mxu0
        %v7503 = vadd.f32 %v4668, %v7502
        %v7504 = vpop.f32.mrb[0].mxu0
        %v7505 = vadd.f32 %v4672, %v7504
        %v7506 = vpop.f32.mrb[0].mxu0
        %v7507 = vadd.f32 %v4668, %v7506
        %v7508 = vpop.f32.mrb[0].mxu0
        %v7509 = vadd.f32 %v4672, %v7508
        %7510 = vmatprep.mubr.bf16.mxu0 %v4104
        %7511 = vmatmul.mubr.bf16.gmra.mrb[0].mxu0 %v4103
        %v7512 = vpop.f32.mrb[0].mxu0
        %v7513 = vadd.f32 %v4668, %v7512
        %v7514 = vpop.f32.mrb[0].mxu0
        %v7515 = vadd.f32 %v4672, %v7514
        %v7516 = vpop.f32.mrb[0].mxu0
        %v7517 = vadd.f32 %v4668, %v7516
        %v7518 = vpop.f32.mrb[0].mxu0
        %v7519 = vadd.f32 %v4672, %v7518
        %7520 = vmatprep.mubr.bf16.mxu0 %v4112
        %7521 = vmatmul.mubr.bf16.gmra.mrb[0].mxu0 %v4111
        %v7522 = vpop.f32.mrb[0].mxu0
        %v7523 = vadd.f32 %v4668, %v7522
        %v7524 = vpop.f32.mrb[0].mxu0
        %v7525 = vadd.f32 %v4672, %v7524
        %v7526 = vpop.f32.mrb[0].mxu0
        %v7527 = vadd.f32 %v4668, %v7526
        %v7528 = vpop.f32.mrb[0].mxu0
        %v7529 = vadd.f32 %v4672, %v7528
        %7530 = vmatprep.mubr.bf16.mxu0 %v4120
        %7531 = vmatmul.mubr.bf16.gmra.mrb[0].mxu0 %v4119
        %v7532 = vpop.f32.mrb[0].mxu0
        %v7533 = vadd.f32 %v4668, %v7532
        %v7534 = vpop.f32.mrb[0].mxu0
        %v7535 = vadd.f32 %v4672, %v7534
        %v7536 = vpop.f32.mrb[0].mxu0
        %v7537 = vadd.f32 %v4668, %v7536
        %v7538 = vpop.f32.mrb[0].mxu0
        %v7539 = vadd.f32 %v4672, %v7538
        %7540 = vmatprep.mubr.bf16.mxu0 %v4128
        %7541 = vmatmul.mubr.bf16.gmra.mrb[0].mxu0 %v4127
        %v7542 = vpop.f32.mrb[0].mxu0
        %v7543 = vadd.f32 %v4668, %v7542
        %v7544 = vpop.f32.mrb[0].mxu0
        %v7545 = vadd.f32 %v4672, %v7544
        %v7546 = vpop.f32.mrb[0].mxu0
        %v7547 = vadd.f32 %v4668, %v7546
        %v7548 = vpop.f32.mrb[0].mxu0
        %v7549 = vadd.f32 %v4672, %v7548
        %7550 = vmatprep.mubr.bf16.mxu0 %v4136
        %7551 = vmatmul.mubr.bf16.gmra.mrb[0].mxu0 %v4135
        %v7552 = vpop.f32.mrb[0].mxu0
        %v7553 = vadd.f32 %v4668, %v7552
        %v7554 = vpop.f32.mrb[0].mxu0
        %v7555 = vadd.f32 %v4672, %v7554
        %v7556 = vpop.f32.mrb[0].mxu0
        %v7557 = vadd.f32 %v4668, %v7556
        %v7558 = vpop.f32.mrb[0].mxu0
        %v7559 = vadd.f32 %v4672, %v7558
        %7560 = vdwg.mxu0
        %7561 = vmatprep.subr.bf16.mxu0 %v6215
        %7562 = vmatpush1.bf16.msra.mxu0 %v6214
        %7563 = vmatprep.subr.bf16.mxu0 %v6222
        %7564 = vmatpush1.bf16.msra.mxu0 %v6221
        %7565 = vmatprep.subr.bf16.mxu0 %v6229
        %7566 = vmatpush1.bf16.msra.mxu0 %v6228
        %7567 = vmatprep.subr.bf16.mxu0 %v6236
        %7568 = vmatpush1.bf16.msra.mxu0 %v6235
        %7569 = vmatprep.subr.bf16.mxu0 %v6243
        %7570 = vmatpush1.bf16.msra.mxu0 %v6242
        %7571 = vmatprep.subr.bf16.mxu0 %v6250
        %7572 = vmatpush1.bf16.msra.mxu0 %v6249
        %7573 = vmatprep.subr.bf16.mxu0 %v6257
        %7574 = vmatpush1.bf16.msra.mxu0 %v6256
        %7575 = vmatprep.subr.bf16.mxu0 %v6264
        %7576 = vmatpush1.bf16.msra.mxu0 %v6263
        %7577 = vmatprep.subr.bf16.mxu0 %v6271
        %7578 = vmatpush1.bf16.msra.mxu0 %v6270
        %7579 = vmatprep.subr.bf16.mxu0 %v6278
        %7580 = vmatpush1.bf16.msra.mxu0 %v6277
        %7581 = vmatprep.subr.bf16.mxu0 %v6285
        %7582 = vmatpush1.bf16.msra.mxu0 %v6284
        %7583 = vmatprep.subr.bf16.mxu0 %v6292
        %7584 = vmatpush1.bf16.msra.mxu0 %v6291
        %7585 = vmatprep.subr.bf16.mxu0 %v6299
        %7586 = vmatpush1.bf16.msra.mxu0 %v6298
        %7587 = vmatprep.subr.bf16.mxu0 %v6306
        %7588 = vmatpush1.bf16.msra.mxu0 %v6305
        %7589 = vmatprep.subr.bf16.mxu0 %v6313
        %7590 = vmatpush1.bf16.msra.mxu0 %v6312
        %7591 = vmatprep.subr.bf16.mxu0 %v6320
        %7592 = vmatpush1.bf16.msra.mxu0 %v6319
        %7593 = vmatprep.mubr.bf16.mxu0 %v4082
        %7594 = vmatmul.mubr.bf16.gmra.mrb[0].mxu0 %v4081
        %v7595 = vpop.f32.mrb[0].mxu0
        %v7596 = vadd.f32 %v7483, %v7595
        %v7597 = vpop.f32.mrb[0].mxu0
        %v7598 = vadd.f32 %v7485, %v7597
        %v7599 = vpop.f32.mrb[0].mxu0
        %v7600 = vadd.f32 %v7487, %v7599
        %v7601 = vpop.f32.mrb[0].mxu0
        %v7602 = vadd.f32 %v7489, %v7601
        %7603 = vmatprep.mubr.bf16.mxu0 %v4090
        %7604 = vmatmul.mubr.bf16.gmra.mrb[0].mxu0 %v4089
        %v7605 = vpop.f32.mrb[0].mxu0
        %v7606 = vadd.f32 %v7493, %v7605
        %v7607 = vpop.f32.mrb[0].mxu0
        %v7608 = vadd.f32 %v7495, %v7607
        %v7609 = vpop.f32.mrb[0].mxu0
        %v7610 = vadd.f32 %v7497, %v7609
        %v7611 = vpop.f32.mrb[0].mxu0
        %v7612 = vadd.f32 %v7499, %v7611
        %7613 = vmatprep.mubr.bf16.mxu0 %v4098
        %7614 = vmatmul.mubr.bf16.gmra.mrb[0].mxu0 %v4097
        %v7615 = vpop.f32.mrb[0].mxu0
        %v7616 = vadd.f32 %v7503, %v7615
        %v7617 = vpop.f32.mrb[0].mxu0
        %v7618 = vadd.f32 %v7505, %v7617
        %v7619 = vpop.f32.mrb[0].mxu0
        %v7620 = vadd.f32 %v7507, %v7619
        %v7621 = vpop.f32.mrb[0].mxu0
        %v7622 = vadd.f32 %v7509, %v7621
        %7623 = vmatprep.mubr.bf16.mxu0 %v4106
        %7624 = vmatmul.mubr.bf16.gmra.mrb[0].mxu0 %v4105
        %v7625 = vpop.f32.mrb[0].mxu0
        %v7626 = vadd.f32 %v7513, %v7625
        %v7627 = vpop.f32.mrb[0].mxu0
        %v7628 = vadd.f32 %v7515, %v7627
        %v7629 = vpop.f32.mrb[0].mxu0
        %v7630 = vadd.f32 %v7517, %v7629
        %v7631 = vpop.f32.mrb[0].mxu0
        %v7632 = vadd.f32 %v7519, %v7631
        %7633 = vmatprep.mubr.bf16.mxu0 %v4114
        %7634 = vmatmul.mubr.bf16.gmra.mrb[0].mxu0 %v4113
        %v7635 = vpop.f32.mrb[0].mxu0
        %v7636 = vadd.f32 %v7523, %v7635
        %v7637 = vpop.f32.mrb[0].mxu0
        %v7638 = vadd.f32 %v7525, %v7637
        %v7639 = vpop.f32.mrb[0].mxu0
        %v7640 = vadd.f32 %v7527, %v7639
        %v7641 = vpop.f32.mrb[0].mxu0
        %v7642 = vadd.f32 %v7529, %v7641
        %7643 = vmatprep.mubr.bf16.mxu0 %v4122
        %7644 = vmatmul.mubr.bf16.gmra.mrb[0].mxu0 %v4121
        %v7645 = vpop.f32.mrb[0].mxu0
        %v7646 = vadd.f32 %v7533, %v7645
        %v7647 = vpop.f32.mrb[0].mxu0
        %v7648 = vadd.f32 %v7535, %v7647
        %v7649 = vpop.f32.mrb[0].mxu0
        %v7650 = vadd.f32 %v7537, %v7649
        %v7651 = vpop.f32.mrb[0].mxu0
        %v7652 = vadd.f32 %v7539, %v7651
        %7653 = vmatprep.mubr.bf16.mxu0 %v4130
        %7654 = vmatmul.mubr.bf16.gmra.mrb[0].mxu0 %v4129
        %v7655 = vpop.f32.mrb[0].mxu0
        %v7656 = vadd.f32 %v7543, %v7655
        %v7657 = vpop.f32.mrb[0].mxu0
        %v7658 = vadd.f32 %v7545, %v7657
        %v7659 = vpop.f32.mrb[0].mxu0
        %v7660 = vadd.f32 %v7547, %v7659
        %v7661 = vpop.f32.mrb[0].mxu0
        %v7662 = vadd.f32 %v7549, %v7661
        %7663 = vmatprep.mubr.bf16.mxu0 %v4138
        %7664 = vmatmul.mubr.bf16.gmra.mrb[0].mxu0 %v4137
        %v7665 = vpop.f32.mrb[0].mxu0
        %v7666 = vadd.f32 %v7553, %v7665
        %v7667 = vpop.f32.mrb[0].mxu0
        %v7668 = vadd.f32 %v7555, %v7667
        %v7669 = vpop.f32.mrb[0].mxu0
        %v7670 = vadd.f32 %v7557, %v7669
        %v7671 = vpop.f32.mrb[0].mxu0
        %v7672 = vadd.f32 %v7559, %v7671
        %7673 = vdwg.mxu0
        %7674 = vmatprep.subr.bf16.mxu0 %v6327
        %7675 = vmatpush1.bf16.msra.mxu0 %v6326
        %7676 = vmatprep.subr.bf16.mxu0 %v6334
        %7677 = vmatpush1.bf16.msra.mxu0 %v6333
        %7678 = vmatprep.subr.bf16.mxu0 %v6341
        %7679 = vmatpush1.bf16.msra.mxu0 %v6340
        %7680 = vmatprep.subr.bf16.mxu0 %v6348
        %7681 = vmatpush1.bf16.msra.mxu0 %v6347
        %7682 = vmatprep.subr.bf16.mxu0 %v6355
        %7683 = vmatpush1.bf16.msra.mxu0 %v6354
        %7684 = vmatprep.subr.bf16.mxu0 %v6362
        %7685 = vmatpush1.bf16.msra.mxu0 %v6361
        %7686 = vmatprep.subr.bf16.mxu0 %v6369
        %7687 = vmatpush1.bf16.msra.mxu0 %v6368
        %7688 = vmatprep.subr.bf16.mxu0 %v6376
        %7689 = vmatpush1.bf16.msra.mxu0 %v6375
        %7690 = vmatprep.subr.bf16.mxu0 %v6383
        %7691 = vmatpush1.bf16.msra.mxu0 %v6382
        %7692 = vmatprep.subr.bf16.mxu0 %v6390
        %7693 = vmatpush1.bf16.msra.mxu0 %v6389
        %7694 = vmatprep.subr.bf16.mxu0 %v6397
        %7695 = vmatpush1.bf16.msra.mxu0 %v6396
        %7696 = vmatprep.subr.bf16.mxu0 %v6404
        %7697 = vmatpush1.bf16.msra.mxu0 %v6403
        %7698 = vmatprep.subr.bf16.mxu0 %v6411
        %7699 = vmatpush1.bf16.msra.mxu0 %v6410
        %7700 = vmatprep.subr.bf16.mxu0 %v6418
        %7701 = vmatpush1.bf16.msra.mxu0 %v6417
        %7702 = vmatprep.subr.bf16.mxu0 %v6425
        %7703 = vmatpush1.bf16.msra.mxu0 %v6424
        %7704 = vmatprep.subr.bf16.mxu0 %v6432
        %7705 = vmatpush1.bf16.msra.mxu0 %v6431
        %7706 = vmatprep.mubr.bf16.mxu0 %v4084
        %7707 = vmatmul.mubr.bf16.gmra.mrb[0].mxu0 %v4083
        %v7708 = vpop.f32.mrb[0].mxu0
        %v7709 = vadd.f32 %v7596, %v7708
        %v7710 = vpop.f32.mrb[0].mxu0
        %v7711 = vadd.f32 %v7598, %v7710
        %v7712 = vpop.f32.mrb[0].mxu0
        %v7713 = vadd.f32 %v7600, %v7712
        %v7714 = vpop.f32.mrb[0].mxu0
        %v7715 = vadd.f32 %v7602, %v7714
        %7716 = vmatprep.mubr.bf16.mxu0 %v4092
        %7717 = vmatmul.mubr.bf16.gmra.mrb[0].mxu0 %v4091
        %v7718 = vpop.f32.mrb[0].mxu0
        %v7719 = vadd.f32 %v7606, %v7718
        %v7720 = vpop.f32.mrb[0].mxu0
        %v7721 = vadd.f32 %v7608, %v7720
        %v7722 = vpop.f32.mrb[0].mxu0
        %v7723 = vadd.f32 %v7610, %v7722
        %v7724 = vpop.f32.mrb[0].mxu0
        %v7725 = vadd.f32 %v7612, %v7724
        %7726 = vmatprep.mubr.bf16.mxu0 %v4100
        %7727 = vmatmul.mubr.bf16.gmra.mrb[0].mxu0 %v4099
        %v7728 = vpop.f32.mrb[0].mxu0
        %v7729 = vadd.f32 %v7616, %v7728
        %v7730 = vpop.f32.mrb[0].mxu0
        %v7731 = vadd.f32 %v7618, %v7730
        %v7732 = vpop.f32.mrb[0].mxu0
        %v7733 = vadd.f32 %v7620, %v7732
        %v7734 = vpop.f32.mrb[0].mxu0
        %v7735 = vadd.f32 %v7622, %v7734
        %7736 = vmatprep.mubr.bf16.mxu0 %v4108
        %7737 = vmatmul.mubr.bf16.gmra.mrb[0].mxu0 %v4107
        %v7738 = vpop.f32.mrb[0].mxu0
        %v7739 = vadd.f32 %v7626, %v7738
        %v7740 = vpop.f32.mrb[0].mxu0
        %v7741 = vadd.f32 %v7628, %v7740
        %v7742 = vpop.f32.mrb[0].mxu0
        %v7743 = vadd.f32 %v7630, %v7742
        %v7744 = vpop.f32.mrb[0].mxu0
        %v7745 = vadd.f32 %v7632, %v7744
        %7746 = vmatprep.mubr.bf16.mxu0 %v4116
        %7747 = vmatmul.mubr.bf16.gmra.mrb[0].mxu0 %v4115
        %v7748 = vpop.f32.mrb[0].mxu0
        %v7749 = vadd.f32 %v7636, %v7748
        %v7750 = vpop.f32.mrb[0].mxu0
        %v7751 = vadd.f32 %v7638, %v7750
        %v7752 = vpop.f32.mrb[0].mxu0
        %v7753 = vadd.f32 %v7640, %v7752
        %v7754 = vpop.f32.mrb[0].mxu0
        %v7755 = vadd.f32 %v7642, %v7754
        %7756 = vmatprep.mubr.bf16.mxu0 %v4124
        %7757 = vmatmul.mubr.bf16.gmra.mrb[0].mxu0 %v4123
        %v7758 = vpop.f32.mrb[0].mxu0
        %v7759 = vadd.f32 %v7646, %v7758
        %v7760 = vpop.f32.mrb[0].mxu0
        %v7761 = vadd.f32 %v7648, %v7760
        %v7762 = vpop.f32.mrb[0].mxu0
        %v7763 = vadd.f32 %v7650, %v7762
        %v7764 = vpop.f32.mrb[0].mxu0
        %v7765 = vadd.f32 %v7652, %v7764
        %7766 = vmatprep.mubr.bf16.mxu0 %v4132
        %7767 = vmatmul.mubr.bf16.gmra.mrb[0].mxu0 %v4131
        %v7768 = vpop.f32.mrb[0].mxu0
        %v7769 = vadd.f32 %v7656, %v7768
        %v7770 = vpop.f32.mrb[0].mxu0
        %v7771 = vadd.f32 %v7658, %v7770
        %v7772 = vpop.f32.mrb[0].mxu0
        %v7773 = vadd.f32 %v7660, %v7772
        %v7774 = vpop.f32.mrb[0].mxu0
        %v7775 = vadd.f32 %v7662, %v7774
        %7776 = vmatprep.mubr.bf16.mxu0 %v4140
        %7777 = vmatmul.mubr.bf16.gmra.mrb[0].mxu0 %v4139
        %v7778 = vpop.f32.mrb[0].mxu0
        %v7779 = vadd.f32 %v7666, %v7778
        %v7780 = vpop.f32.mrb[0].mxu0
        %v7781 = vadd.f32 %v7668, %v7780
        %v7782 = vpop.f32.mrb[0].mxu0
        %v7783 = vadd.f32 %v7670, %v7782
        %v7784 = vpop.f32.mrb[0].mxu0
        %v7785 = vadd.f32 %v7672, %v7784
        %7786 = vdwg.mxu0
        %7787 = vmatprep.subr.bf16.mxu0 %v6439
        %7788 = vmatpush1.bf16.msra.mxu0 %v6438
        %7789 = vmatprep.subr.bf16.mxu0 %v6446
        %7790 = vmatpush1.bf16.msra.mxu0 %v6445
        %7791 = vmatprep.subr.bf16.mxu0 %v6453
        %7792 = vmatpush1.bf16.msra.mxu0 %v6452
        %7793 = vmatprep.subr.bf16.mxu0 %v6460
        %7794 = vmatpush1.bf16.msra.mxu0 %v6459
        %7795 = vmatprep.subr.bf16.mxu0 %v6467
        %7796 = vmatpush1.bf16.msra.mxu0 %v6466
        %7797 = vmatprep.subr.bf16.mxu0 %v6474
        %7798 = vmatpush1.bf16.msra.mxu0 %v6473
        %7799 = vmatprep.subr.bf16.mxu0 %v6481
        %7800 = vmatpush1.bf16.msra.mxu0 %v6480
        %7801 = vmatprep.subr.bf16.mxu0 %v6488
        %7802 = vmatpush1.bf16.msra.mxu0 %v6487
        %7803 = vmatprep.subr.bf16.mxu0 %v6495
        %7804 = vmatpush1.bf16.msra.mxu0 %v6494
        %7805 = vmatprep.subr.bf16.mxu0 %v6502
        %7806 = vmatpush1.bf16.msra.mxu0 %v6501
        %7807 = vmatprep.subr.bf16.mxu0 %v6509
        %7808 = vmatpush1.bf16.msra.mxu0 %v6508
        %7809 = vmatprep.subr.bf16.mxu0 %v6516
        %7810 = vmatpush1.bf16.msra.mxu0 %v6515
        %7811 = vmatprep.subr.bf16.mxu0 %v6523
        %7812 = vmatpush1.bf16.msra.mxu0 %v6522
        %7813 = vmatprep.subr.bf16.mxu0 %v6530
        %7814 = vmatpush1.bf16.msra.mxu0 %v6529
        %7815 = vmatprep.subr.bf16.mxu0 %v6537
        %7816 = vmatpush1.bf16.msra.mxu0 %v6536
        %7817 = vmatprep.subr.bf16.mxu0 %v6544
        %7818 = vmatpush1.bf16.msra.mxu0 %v6543
        %7819 = vmatprep.mubr.bf16.mxu0 %v4086
        %7820 = vmatmul.mubr.bf16.gmra.mrb[0].mxu0 %v4085
        %v7821 = vpop.f32.mrb[0].mxu0
        %v7822 = vadd.f32 %v7709, %v7821
        %v7823 = vpop.f32.mrb[0].mxu0
        %v7824 = vadd.f32 %v7711, %v7823
        %v7825 = vpop.f32.mrb[0].mxu0
        %v7826 = vadd.f32 %v7713, %v7825
        %v7827 = vpop.f32.mrb[0].mxu0
        %v7828 = vadd.f32 %v7715, %v7827
        %7829 = vmatprep.mubr.bf16.mxu0 %v4094
        %7830 = vmatmul.mubr.bf16.gmra.mrb[0].mxu0 %v4093
        %v7831 = vpop.f32.mrb[0].mxu0
        %v7832 = vadd.f32 %v7719, %v7831
        %v7833 = vpop.f32.mrb[0].mxu0
        %v7834 = vadd.f32 %v7721, %v7833
        %v7835 = vpop.f32.mrb[0].mxu0
        %v7836 = vadd.f32 %v7723, %v7835
        %v7837 = vpop.f32.mrb[0].mxu0
        %v7838 = vadd.f32 %v7725, %v7837
        %7839 = vmatprep.mubr.bf16.mxu0 %v4102
        %7840 = vmatmul.mubr.bf16.gmra.mrb[0].mxu0 %v4101
        %v7841 = vpop.f32.mrb[0].mxu0
        %v7842 = vadd.f32 %v7729, %v7841
        %v7843 = vpop.f32.mrb[0].mxu0
        %v7844 = vadd.f32 %v7731, %v7843
        %v7845 = vpop.f32.mrb[0].mxu0
        %v7846 = vadd.f32 %v7733, %v7845
        %v7847 = vpop.f32.mrb[0].mxu0
        %v7848 = vadd.f32 %v7735, %v7847
        %7849 = vmatprep.mubr.bf16.mxu0 %v4110
        %7850 = vmatmul.mubr.bf16.gmra.mrb[0].mxu0 %v4109
        %v7851 = vpop.f32.mrb[0].mxu0
        %v7852 = vadd.f32 %v7739, %v7851
        %v7853 = vpop.f32.mrb[0].mxu0
        %v7854 = vadd.f32 %v7741, %v7853
        %v7855 = vpop.f32.mrb[0].mxu0
        %v7856 = vadd.f32 %v7743, %v7855
        %v7857 = vpop.f32.mrb[0].mxu0
        %v7858 = vadd.f32 %v7745, %v7857
        %7859 = vmatprep.mubr.bf16.mxu0 %v4118
        %7860 = vmatmul.mubr.bf16.gmra.mrb[0].mxu0 %v4117
        %v7861 = vpop.f32.mrb[0].mxu0
        %v7862 = vadd.f32 %v7749, %v7861
        %v7863 = vpop.f32.mrb[0].mxu0
        %v7864 = vadd.f32 %v7751, %v7863
        %v7865 = vpop.f32.mrb[0].mxu0
        %v7866 = vadd.f32 %v7753, %v7865
        %v7867 = vpop.f32.mrb[0].mxu0
        %v7868 = vadd.f32 %v7755, %v7867
        %7869 = vmatprep.mubr.bf16.mxu0 %v4126
        %7870 = vmatmul.mubr.bf16.gmra.mrb[0].mxu0 %v4125
        %v7871 = vpop.f32.mrb[0].mxu0
        %v7872 = vadd.f32 %v7759, %v7871
        %v7873 = vpop.f32.mrb[0].mxu0
        %v7874 = vadd.f32 %v7761, %v7873
        %v7875 = vpop.f32.mrb[0].mxu0
        %v7876 = vadd.f32 %v7763, %v7875
        %v7877 = vpop.f32.mrb[0].mxu0
        %v7878 = vadd.f32 %v7765, %v7877
        %7879 = vmatprep.mubr.bf16.mxu0 %v4134
        %7880 = vmatmul.mubr.bf16.gmra.mrb[0].mxu0 %v4133
        %v7881 = vpop.f32.mrb[0].mxu0
        %v7882 = vadd.f32 %v7769, %v7881
        %v7883 = vpop.f32.mrb[0].mxu0
        %v7884 = vadd.f32 %v7771, %v7883
        %v7885 = vpop.f32.mrb[0].mxu0
        %v7886 = vadd.f32 %v7773, %v7885
        %v7887 = vpop.f32.mrb[0].mxu0
        %v7888 = vadd.f32 %v7775, %v7887
        %7889 = vmatprep.mubr.bf16.mxu0 %v4142
        %7890 = vmatmul.mubr.bf16.gmra.mrb[0].mxu0 %v4141
        %v7891 = vpop.f32.mrb[0].mxu0
        %v7892 = vadd.f32 %v7779, %v7891
        %v7893 = vpop.f32.mrb[0].mxu0
        %v7894 = vadd.f32 %v7781, %v7893
        %v7895 = vpop.f32.mrb[0].mxu0
        %v7896 = vadd.f32 %v7783, %v7895
        %v7897 = vpop.f32.mrb[0].mxu0
        %v7898 = vadd.f32 %v7785, %v7897
        %7899 = vdwg.mxu0
        %7900 = vmatprep.subr.bf16.mxu0 %v6105
        %7901 = vmatpush1.bf16.msra.mxu0 %v6104
        %7902 = vmatprep.subr.bf16.mxu0 %v6112
        %7903 = vmatpush1.bf16.msra.mxu0 %v6111
        %7904 = vmatprep.subr.bf16.mxu0 %v6119
        %7905 = vmatpush1.bf16.msra.mxu0 %v6118
        %7906 = vmatprep.subr.bf16.mxu0 %v6126
        %7907 = vmatpush1.bf16.msra.mxu0 %v6125
        %7908 = vmatprep.subr.bf16.mxu0 %v6133
        %7909 = vmatpush1.bf16.msra.mxu0 %v6132
        %7910 = vmatprep.subr.bf16.mxu0 %v6140
        %7911 = vmatpush1.bf16.msra.mxu0 %v6139
        %7912 = vmatprep.subr.bf16.mxu0 %v6147
        %7913 = vmatpush1.bf16.msra.mxu0 %v6146
        %7914 = vmatprep.subr.bf16.mxu0 %v6154
        %7915 = vmatpush1.bf16.msra.mxu0 %v6153
        %7916 = vmatprep.subr.bf16.mxu0 %v6161
        %7917 = vmatpush1.bf16.msra.mxu0 %v6160
        %7918 = vmatprep.subr.bf16.mxu0 %v6168
        %7919 = vmatpush1.bf16.msra.mxu0 %v6167
        %7920 = vmatprep.subr.bf16.mxu0 %v6175
        %7921 = vmatpush1.bf16.msra.mxu0 %v6174
        %7922 = vmatprep.subr.bf16.mxu0 %v6182
        %7923 = vmatpush1.bf16.msra.mxu0 %v6181
        %7924 = vmatprep.subr.bf16.mxu0 %v6189
        %7925 = vmatpush1.bf16.msra.mxu0 %v6188
        %7926 = vmatprep.subr.bf16.mxu0 %v6196
        %7927 = vmatpush1.bf16.msra.mxu0 %v6195
        %7928 = vmatprep.subr.bf16.mxu0 %v6203
        %7929 = vmatpush1.bf16.msra.mxu0 %v6202
        %7930 = vmatprep.subr.bf16.mxu0 %v6210
        %7931 = vmatpush1.bf16.msra.mxu0 %v6209
        %7932 = vmatprep.mubr.bf16.mxu0 %v4080
        %7933 = vmatmul.mubr.bf16.gmra.mrb[0].mxu0 %v4079
        %v7934 = vpop.f32.mrb[0].mxu0
        %v7935 = vadd.f32 %v4676, %v7934
        %v7936 = vpop.f32.mrb[0].mxu0
        %v7937 = vadd.f32 %v4680, %v7936
        %v7938 = vpop.f32.mrb[0].mxu0
        %v7939 = vadd.f32 %v4676, %v7938
        %v7940 = vpop.f32.mrb[0].mxu0
        %v7941 = vadd.f32 %v4680, %v7940
        %7942 = vmatprep.mubr.bf16.mxu0 %v4088
        %7943 = vmatmul.mubr.bf16.gmra.mrb[0].mxu0 %v4087
        %v7944 = vpop.f32.mrb[0].mxu0
        %v7945 = vadd.f32 %v4676, %v7944
        %v7946 = vpop.f32.mrb[0].mxu0
        %v7947 = vadd.f32 %v4680, %v7946
        %v7948 = vpop.f32.mrb[0].mxu0
        %v7949 = vadd.f32 %v4676, %v7948
        %v7950 = vpop.f32.mrb[0].mxu0
        %v7951 = vadd.f32 %v4680, %v7950
        %7952 = vmatprep.mubr.bf16.mxu0 %v4096
        %7953 = vmatmul.mubr.bf16.gmra.mrb[0].mxu0 %v4095
        %v7954 = vpop.f32.mrb[0].mxu0
        %v7955 = vadd.f32 %v4676, %v7954
        %v7956 = vpop.f32.mrb[0].mxu0
        %v7957 = vadd.f32 %v4680, %v7956
        %v7958 = vpop.f32.mrb[0].mxu0
        %v7959 = vadd.f32 %v4676, %v7958
        %v7960 = vpop.f32.mrb[0].mxu0
        %v7961 = vadd.f32 %v4680, %v7960
        %7962 = vmatprep.mubr.bf16.mxu0 %v4104
        %7963 = vmatmul.mubr.bf16.gmra.mrb[0].mxu0 %v4103
        %v7964 = vpop.f32.mrb[0].mxu0
        %v7965 = vadd.f32 %v4676, %v7964
        %v7966 = vpop.f32.mrb[0].mxu0
        %v7967 = vadd.f32 %v4680, %v7966
        %v7968 = vpop.f32.mrb[0].mxu0
        %v7969 = vadd.f32 %v4676, %v7968
        %v7970 = vpop.f32.mrb[0].mxu0
        %v7971 = vadd.f32 %v4680, %v7970
        %7972 = vmatprep.mubr.bf16.mxu0 %v4112
        %7973 = vmatmul.mubr.bf16.gmra.mrb[0].mxu0 %v4111
        %v7974 = vpop.f32.mrb[0].mxu0
        %v7975 = vadd.f32 %v4676, %v7974
        %v7976 = vpop.f32.mrb[0].mxu0
        %v7977 = vadd.f32 %v4680, %v7976
        %v7978 = vpop.f32.mrb[0].mxu0
        %v7979 = vadd.f32 %v4676, %v7978
        %v7980 = vpop.f32.mrb[0].mxu0
        %v7981 = vadd.f32 %v4680, %v7980
        %7982 = vmatprep.mubr.bf16.mxu0 %v4120
        %7983 = vmatmul.mubr.bf16.gmra.mrb[0].mxu0 %v4119
        %v7984 = vpop.f32.mrb[0].mxu0
        %v7985 = vadd.f32 %v4676, %v7984
        %v7986 = vpop.f32.mrb[0].mxu0
        %v7987 = vadd.f32 %v4680, %v7986
        %v7988 = vpop.f32.mrb[0].mxu0
        %v7989 = vadd.f32 %v4676, %v7988
        %v7990 = vpop.f32.mrb[0].mxu0
        %v7991 = vadd.f32 %v4680, %v7990
        %7992 = vmatprep.mubr.bf16.mxu0 %v4128
        %7993 = vmatmul.mubr.bf16.gmra.mrb[0].mxu0 %v4127
        %v7994 = vpop.f32.mrb[0].mxu0
        %v7995 = vadd.f32 %v4676, %v7994
        %v7996 = vpop.f32.mrb[0].mxu0
        %v7997 = vadd.f32 %v4680, %v7996
        %v7998 = vpop.f32.mrb[0].mxu0
        %v7999 = vadd.f32 %v4676, %v7998
        %v8000 = vpop.f32.mrb[0].mxu0
        %v8001 = vadd.f32 %v4680, %v8000
        %8002 = vmatprep.mubr.bf16.mxu0 %v4136
        %8003 = vmatmul.mubr.bf16.gmra.mrb[0].mxu0 %v4135
        %v8004 = vpop.f32.mrb[0].mxu0
        %v8005 = vadd.f32 %v4676, %v8004
        %v8006 = vpop.f32.mrb[0].mxu0
        %v8007 = vadd.f32 %v4680, %v8006
        %v8008 = vpop.f32.mrb[0].mxu0
        %v8009 = vadd.f32 %v4676, %v8008
        %v8010 = vpop.f32.mrb[0].mxu0
        %v8011 = vadd.f32 %v4680, %v8010
        %8012 = vdwg.mxu0
        %8013 = vmatprep.subr.bf16.mxu0 %v6217
        %8014 = vmatpush1.bf16.msra.mxu0 %v6216
        %8015 = vmatprep.subr.bf16.mxu0 %v6224
        %8016 = vmatpush1.bf16.msra.mxu0 %v6223
        %8017 = vmatprep.subr.bf16.mxu0 %v6231
        %8018 = vmatpush1.bf16.msra.mxu0 %v6230
        %8019 = vmatprep.subr.bf16.mxu0 %v6238
        %8020 = vmatpush1.bf16.msra.mxu0 %v6237
        %8021 = vmatprep.subr.bf16.mxu0 %v6245
        %8022 = vmatpush1.bf16.msra.mxu0 %v6244
        %8023 = vmatprep.subr.bf16.mxu0 %v6252
        %8024 = vmatpush1.bf16.msra.mxu0 %v6251
        %8025 = vmatprep.subr.bf16.mxu0 %v6259
        %8026 = vmatpush1.bf16.msra.mxu0 %v6258
        %8027 = vmatprep.subr.bf16.mxu0 %v6266
        %8028 = vmatpush1.bf16.msra.mxu0 %v6265
        %8029 = vmatprep.subr.bf16.mxu0 %v6273
        %8030 = vmatpush1.bf16.msra.mxu0 %v6272
        %8031 = vmatprep.subr.bf16.mxu0 %v6280
        %8032 = vmatpush1.bf16.msra.mxu0 %v6279
        %8033 = vmatprep.subr.bf16.mxu0 %v6287
        %8034 = vmatpush1.bf16.msra.mxu0 %v6286
        %8035 = vmatprep.subr.bf16.mxu0 %v6294
        %8036 = vmatpush1.bf16.msra.mxu0 %v6293
        %8037 = vmatprep.subr.bf16.mxu0 %v6301
        %8038 = vmatpush1.bf16.msra.mxu0 %v6300
        %8039 = vmatprep.subr.bf16.mxu0 %v6308
        %8040 = vmatpush1.bf16.msra.mxu0 %v6307
        %8041 = vmatprep.subr.bf16.mxu0 %v6315
        %8042 = vmatpush1.bf16.msra.mxu0 %v6314
        %8043 = vmatprep.subr.bf16.mxu0 %v6322
        %8044 = vmatpush1.bf16.msra.mxu0 %v6321
        %8045 = vmatprep.mubr.bf16.mxu0 %v4082
        %8046 = vmatmul.mubr.bf16.gmra.mrb[0].mxu0 %v4081
        %v8047 = vpop.f32.mrb[0].mxu0
        %v8048 = vadd.f32 %v7935, %v8047
        %v8049 = vpop.f32.mrb[0].mxu0
        %v8050 = vadd.f32 %v7937, %v8049
        %v8051 = vpop.f32.mrb[0].mxu0
        %v8052 = vadd.f32 %v7939, %v8051
        %v8053 = vpop.f32.mrb[0].mxu0
        %v8054 = vadd.f32 %v7941, %v8053
        %8055 = vmatprep.mubr.bf16.mxu0 %v4090
        %8056 = vmatmul.mubr.bf16.gmra.mrb[0].mxu0 %v4089
        %v8057 = vpop.f32.mrb[0].mxu0
        %v8058 = vadd.f32 %v7945, %v8057
        %v8059 = vpop.f32.mrb[0].mxu0
        %v8060 = vadd.f32 %v7947, %v8059
        %v8061 = vpop.f32.mrb[0].mxu0
        %v8062 = vadd.f32 %v7949, %v8061
        %v8063 = vpop.f32.mrb[0].mxu0
        %v8064 = vadd.f32 %v7951, %v8063
        %8065 = vmatprep.mubr.bf16.mxu0 %v4098
        %8066 = vmatmul.mubr.bf16.gmra.mrb[0].mxu0 %v4097
        %v8067 = vpop.f32.mrb[0].mxu0
        %v8068 = vadd.f32 %v7955, %v8067
        %v8069 = vpop.f32.mrb[0].mxu0
        %v8070 = vadd.f32 %v7957, %v8069
        %v8071 = vpop.f32.mrb[0].mxu0
        %v8072 = vadd.f32 %v7959, %v8071
        %v8073 = vpop.f32.mrb[0].mxu0
        %v8074 = vadd.f32 %v7961, %v8073
        %8075 = vmatprep.mubr.bf16.mxu0 %v4106
        %8076 = vmatmul.mubr.bf16.gmra.mrb[0].mxu0 %v4105
        %v8077 = vpop.f32.mrb[0].mxu0
        %v8078 = vadd.f32 %v7965, %v8077
        %v8079 = vpop.f32.mrb[0].mxu0
        %v8080 = vadd.f32 %v7967, %v8079
        %v8081 = vpop.f32.mrb[0].mxu0
        %v8082 = vadd.f32 %v7969, %v8081
        %v8083 = vpop.f32.mrb[0].mxu0
        %v8084 = vadd.f32 %v7971, %v8083
        %8085 = vmatprep.mubr.bf16.mxu0 %v4114
        %8086 = vmatmul.mubr.bf16.gmra.mrb[0].mxu0 %v4113
        %v8087 = vpop.f32.mrb[0].mxu0
        %v8088 = vadd.f32 %v7975, %v8087
        %v8089 = vpop.f32.mrb[0].mxu0
        %v8090 = vadd.f32 %v7977, %v8089
        %v8091 = vpop.f32.mrb[0].mxu0
        %v8092 = vadd.f32 %v7979, %v8091
        %v8093 = vpop.f32.mrb[0].mxu0
        %v8094 = vadd.f32 %v7981, %v8093
        %8095 = vmatprep.mubr.bf16.mxu0 %v4122
        %8096 = vmatmul.mubr.bf16.gmra.mrb[0].mxu0 %v4121
        %v8097 = vpop.f32.mrb[0].mxu0
        %v8098 = vadd.f32 %v7985, %v8097
        %v8099 = vpop.f32.mrb[0].mxu0
        %v8100 = vadd.f32 %v7987, %v8099
        %v8101 = vpop.f32.mrb[0].mxu0
        %v8102 = vadd.f32 %v7989, %v8101
        %v8103 = vpop.f32.mrb[0].mxu0
        %v8104 = vadd.f32 %v7991, %v8103
        %8105 = vmatprep.mubr.bf16.mxu0 %v4130
        %8106 = vmatmul.mubr.bf16.gmra.mrb[0].mxu0 %v4129
        %v8107 = vpop.f32.mrb[0].mxu0
        %v8108 = vadd.f32 %v7995, %v8107
        %v8109 = vpop.f32.mrb[0].mxu0
        %v8110 = vadd.f32 %v7997, %v8109
        %v8111 = vpop.f32.mrb[0].mxu0
        %v8112 = vadd.f32 %v7999, %v8111
        %v8113 = vpop.f32.mrb[0].mxu0
        %v8114 = vadd.f32 %v8001, %v8113
        %8115 = vmatprep.mubr.bf16.mxu0 %v4138
        %8116 = vmatmul.mubr.bf16.gmra.mrb[0].mxu0 %v4137
        %v8117 = vpop.f32.mrb[0].mxu0
        %v8118 = vadd.f32 %v8005, %v8117
        %v8119 = vpop.f32.mrb[0].mxu0
        %v8120 = vadd.f32 %v8007, %v8119
        %v8121 = vpop.f32.mrb[0].mxu0
        %v8122 = vadd.f32 %v8009, %v8121
        %v8123 = vpop.f32.mrb[0].mxu0
        %v8124 = vadd.f32 %v8011, %v8123
        %8125 = vdwg.mxu0
        %8126 = vmatprep.subr.bf16.mxu0 %v6329
        %8127 = vmatpush1.bf16.msra.mxu0 %v6328
        %8128 = vmatprep.subr.bf16.mxu0 %v6336
        %8129 = vmatpush1.bf16.msra.mxu0 %v6335
        %8130 = vmatprep.subr.bf16.mxu0 %v6343
        %8131 = vmatpush1.bf16.msra.mxu0 %v6342
        %8132 = vmatprep.subr.bf16.mxu0 %v6350
        %8133 = vmatpush1.bf16.msra.mxu0 %v6349
        %8134 = vmatprep.subr.bf16.mxu0 %v6357
        %8135 = vmatpush1.bf16.msra.mxu0 %v6356
        %8136 = vmatprep.subr.bf16.mxu0 %v6364
        %8137 = vmatpush1.bf16.msra.mxu0 %v6363
        %8138 = vmatprep.subr.bf16.mxu0 %v6371
        %8139 = vmatpush1.bf16.msra.mxu0 %v6370
        %8140 = vmatprep.subr.bf16.mxu0 %v6378
        %8141 = vmatpush1.bf16.msra.mxu0 %v6377
        %8142 = vmatprep.subr.bf16.mxu0 %v6385
        %8143 = vmatpush1.bf16.msra.mxu0 %v6384
        %8144 = vmatprep.subr.bf16.mxu0 %v6392
        %8145 = vmatpush1.bf16.msra.mxu0 %v6391
        %8146 = vmatprep.subr.bf16.mxu0 %v6399
        %8147 = vmatpush1.bf16.msra.mxu0 %v6398
        %8148 = vmatprep.subr.bf16.mxu0 %v6406
        %8149 = vmatpush1.bf16.msra.mxu0 %v6405
        %8150 = vmatprep.subr.bf16.mxu0 %v6413
        %8151 = vmatpush1.bf16.msra.mxu0 %v6412
        %8152 = vmatprep.subr.bf16.mxu0 %v6420
        %8153 = vmatpush1.bf16.msra.mxu0 %v6419
        %8154 = vmatprep.subr.bf16.mxu0 %v6427
        %8155 = vmatpush1.bf16.msra.mxu0 %v6426
        %8156 = vmatprep.subr.bf16.mxu0 %v6434
        %8157 = vmatpush1.bf16.msra.mxu0 %v6433
        %8158 = vmatprep.mubr.bf16.mxu0 %v4084
        %8159 = vmatmul.mubr.bf16.gmra.mrb[0].mxu0 %v4083
        %v8160 = vpop.f32.mrb[0].mxu0
        %v8161 = vadd.f32 %v8048, %v8160
        %v8162 = vpop.f32.mrb[0].mxu0
        %v8163 = vadd.f32 %v8050, %v8162
        %v8164 = vpop.f32.mrb[0].mxu0
        %v8165 = vadd.f32 %v8052, %v8164
        %v8166 = vpop.f32.mrb[0].mxu0
        %v8167 = vadd.f32 %v8054, %v8166
        %8168 = vmatprep.mubr.bf16.mxu0 %v4092
        %8169 = vmatmul.mubr.bf16.gmra.mrb[0].mxu0 %v4091
        %v8170 = vpop.f32.mrb[0].mxu0
        %v8171 = vadd.f32 %v8058, %v8170
        %v8172 = vpop.f32.mrb[0].mxu0
        %v8173 = vadd.f32 %v8060, %v8172
        %v8174 = vpop.f32.mrb[0].mxu0
        %v8175 = vadd.f32 %v8062, %v8174
        %v8176 = vpop.f32.mrb[0].mxu0
        %v8177 = vadd.f32 %v8064, %v8176
        %8178 = vmatprep.mubr.bf16.mxu0 %v4100
        %8179 = vmatmul.mubr.bf16.gmra.mrb[0].mxu0 %v4099
        %v8180 = vpop.f32.mrb[0].mxu0
        %v8181 = vadd.f32 %v8068, %v8180
        %v8182 = vpop.f32.mrb[0].mxu0
        %v8183 = vadd.f32 %v8070, %v8182
        %v8184 = vpop.f32.mrb[0].mxu0
        %v8185 = vadd.f32 %v8072, %v8184
        %v8186 = vpop.f32.mrb[0].mxu0
        %v8187 = vadd.f32 %v8074, %v8186
        %8188 = vmatprep.mubr.bf16.mxu0 %v4108
        %8189 = vmatmul.mubr.bf16.gmra.mrb[0].mxu0 %v4107
        %v8190 = vpop.f32.mrb[0].mxu0
        %v8191 = vadd.f32 %v8078, %v8190
        %v8192 = vpop.f32.mrb[0].mxu0
        %v8193 = vadd.f32 %v8080, %v8192
        %v8194 = vpop.f32.mrb[0].mxu0
        %v8195 = vadd.f32 %v8082, %v8194
        %v8196 = vpop.f32.mrb[0].mxu0
        %v8197 = vadd.f32 %v8084, %v8196
        %8198 = vmatprep.mubr.bf16.mxu0 %v4116
        %8199 = vmatmul.mubr.bf16.gmra.mrb[0].mxu0 %v4115
        %v8200 = vpop.f32.mrb[0].mxu0
        %v8201 = vadd.f32 %v8088, %v8200
        %v8202 = vpop.f32.mrb[0].mxu0
        %v8203 = vadd.f32 %v8090, %v8202
        %v8204 = vpop.f32.mrb[0].mxu0
        %v8205 = vadd.f32 %v8092, %v8204
        %v8206 = vpop.f32.mrb[0].mxu0
        %v8207 = vadd.f32 %v8094, %v8206
        %8208 = vmatprep.mubr.bf16.mxu0 %v4124
        %8209 = vmatmul.mubr.bf16.gmra.mrb[0].mxu0 %v4123
        %v8210 = vpop.f32.mrb[0].mxu0
        %v8211 = vadd.f32 %v8098, %v8210
        %v8212 = vpop.f32.mrb[0].mxu0
        %v8213 = vadd.f32 %v8100, %v8212
        %v8214 = vpop.f32.mrb[0].mxu0
        %v8215 = vadd.f32 %v8102, %v8214
        %v8216 = vpop.f32.mrb[0].mxu0
        %v8217 = vadd.f32 %v8104, %v8216
        %8218 = vmatprep.mubr.bf16.mxu0 %v4132
        %8219 = vmatmul.mubr.bf16.gmra.mrb[0].mxu0 %v4131
        %v8220 = vpop.f32.mrb[0].mxu0
        %v8221 = vadd.f32 %v8108, %v8220
        %v8222 = vpop.f32.mrb[0].mxu0
        %v8223 = vadd.f32 %v8110, %v8222
        %v8224 = vpop.f32.mrb[0].mxu0
        %v8225 = vadd.f32 %v8112, %v8224
        %v8226 = vpop.f32.mrb[0].mxu0
        %v8227 = vadd.f32 %v8114, %v8226
        %8228 = vmatprep.mubr.bf16.mxu0 %v4140
        %8229 = vmatmul.mubr.bf16.gmra.mrb[0].mxu0 %v4139
        %v8230 = vpop.f32.mrb[0].mxu0
        %v8231 = vadd.f32 %v8118, %v8230
        %v8232 = vpop.f32.mrb[0].mxu0
        %v8233 = vadd.f32 %v8120, %v8232
        %v8234 = vpop.f32.mrb[0].mxu0
        %v8235 = vadd.f32 %v8122, %v8234
        %v8236 = vpop.f32.mrb[0].mxu0
        %v8237 = vadd.f32 %v8124, %v8236
        %8238 = vdwg.mxu0
        %8239 = vmatprep.subr.bf16.mxu0 %v6441
        %8240 = vmatpush1.bf16.msra.mxu0 %v6440
        %8241 = vmatprep.subr.bf16.mxu0 %v6448
        %8242 = vmatpush1.bf16.msra.mxu0 %v6447
        %8243 = vmatprep.subr.bf16.mxu0 %v6455
        %8244 = vmatpush1.bf16.msra.mxu0 %v6454
        %8245 = vmatprep.subr.bf16.mxu0 %v6462
        %8246 = vmatpush1.bf16.msra.mxu0 %v6461
        %8247 = vmatprep.subr.bf16.mxu0 %v6469
        %8248 = vmatpush1.bf16.msra.mxu0 %v6468
        %8249 = vmatprep.subr.bf16.mxu0 %v6476
        %8250 = vmatpush1.bf16.msra.mxu0 %v6475
        %8251 = vmatprep.subr.bf16.mxu0 %v6483
        %8252 = vmatpush1.bf16.msra.mxu0 %v6482
        %8253 = vmatprep.subr.bf16.mxu0 %v6490
        %8254 = vmatpush1.bf16.msra.mxu0 %v6489
        %8255 = vmatprep.subr.bf16.mxu0 %v6497
        %8256 = vmatpush1.bf16.msra.mxu0 %v6496
        %8257 = vmatprep.subr.bf16.mxu0 %v6504
        %8258 = vmatpush1.bf16.msra.mxu0 %v6503
        %8259 = vmatprep.subr.bf16.mxu0 %v6511
        %8260 = vmatpush1.bf16.msra.mxu0 %v6510
        %8261 = vmatprep.subr.bf16.mxu0 %v6518
        %8262 = vmatpush1.bf16.msra.mxu0 %v6517
        %8263 = vmatprep.subr.bf16.mxu0 %v6525
        %8264 = vmatpush1.bf16.msra.mxu0 %v6524
        %8265 = vmatprep.subr.bf16.mxu0 %v6532
        %8266 = vmatpush1.bf16.msra.mxu0 %v6531
        %8267 = vmatprep.subr.bf16.mxu0 %v6539
        %8268 = vmatpush1.bf16.msra.mxu0 %v6538
        %8269 = vmatprep.subr.bf16.mxu0 %v6546
        %8270 = vmatpush1.bf16.msra.mxu0 %v6545
        %8271 = vmatprep.mubr.bf16.mxu0 %v4086
        %8272 = vmatmul.mubr.bf16.gmra.mrb[0].mxu0 %v4085
        %v8273 = vpop.f32.mrb[0].mxu0
        %v8274 = vadd.f32 %v8161, %v8273
        %v8275 = vpop.f32.mrb[0].mxu0
        %v8276 = vadd.f32 %v8163, %v8275
        %v8277 = vpop.f32.mrb[0].mxu0
        %v8278 = vadd.f32 %v8165, %v8277
        %v8279 = vpop.f32.mrb[0].mxu0
        %v8280 = vadd.f32 %v8167, %v8279
        %8281 = vmatprep.mubr.bf16.mxu0 %v4094
        %8282 = vmatmul.mubr.bf16.gmra.mrb[0].mxu0 %v4093
        %v8283 = vpop.f32.mrb[0].mxu0
        %v8284 = vadd.f32 %v8171, %v8283
        %v8285 = vpop.f32.mrb[0].mxu0
        %v8286 = vadd.f32 %v8173, %v8285
        %v8287 = vpop.f32.mrb[0].mxu0
        %v8288 = vadd.f32 %v8175, %v8287
        %v8289 = vpop.f32.mrb[0].mxu0
        %v8290 = vadd.f32 %v8177, %v8289
        %8291 = vmatprep.mubr.bf16.mxu0 %v4102
        %8292 = vmatmul.mubr.bf16.gmra.mrb[0].mxu0 %v4101
        %v8293 = vpop.f32.mrb[0].mxu0
        %v8294 = vadd.f32 %v8181, %v8293
        %v8295 = vpop.f32.mrb[0].mxu0
        %v8296 = vadd.f32 %v8183, %v8295
        %v8297 = vpop.f32.mrb[0].mxu0
        %v8298 = vadd.f32 %v8185, %v8297
        %v8299 = vpop.f32.mrb[0].mxu0
        %v8300 = vadd.f32 %v8187, %v8299
        %8301 = vmatprep.mubr.bf16.mxu0 %v4110
        %8302 = vmatmul.mubr.bf16.gmra.mrb[0].mxu0 %v4109
        %v8303 = vpop.f32.mrb[0].mxu0
        %v8304 = vadd.f32 %v8191, %v8303
        %v8305 = vpop.f32.mrb[0].mxu0
        %v8306 = vadd.f32 %v8193, %v8305
        %v8307 = vpop.f32.mrb[0].mxu0
        %v8308 = vadd.f32 %v8195, %v8307
        %v8309 = vpop.f32.mrb[0].mxu0
        %v8310 = vadd.f32 %v8197, %v8309
        %8311 = vmatprep.mubr.bf16.mxu0 %v4118
        %8312 = vmatmul.mubr.bf16.gmra.mrb[0].mxu0 %v4117
        %v8313 = vpop.f32.mrb[0].mxu0
        %v8314 = vadd.f32 %v8201, %v8313
        %v8315 = vpop.f32.mrb[0].mxu0
        %v8316 = vadd.f32 %v8203, %v8315
        %v8317 = vpop.f32.mrb[0].mxu0
        %v8318 = vadd.f32 %v8205, %v8317
        %v8319 = vpop.f32.mrb[0].mxu0
        %v8320 = vadd.f32 %v8207, %v8319
        %8321 = vmatprep.mubr.bf16.mxu0 %v4126
        %8322 = vmatmul.mubr.bf16.gmra.mrb[0].mxu0 %v4125
        %v8323 = vpop.f32.mrb[0].mxu0
        %v8324 = vadd.f32 %v8211, %v8323
        %v8325 = vpop.f32.mrb[0].mxu0
        %v8326 = vadd.f32 %v8213, %v8325
        %v8327 = vpop.f32.mrb[0].mxu0
        %v8328 = vadd.f32 %v8215, %v8327
        %v8329 = vpop.f32.mrb[0].mxu0
        %v8330 = vadd.f32 %v8217, %v8329
        %8331 = vmatprep.mubr.bf16.mxu0 %v4134
        %8332 = vmatmul.mubr.bf16.gmra.mrb[0].mxu0 %v4133
        %v8333 = vpop.f32.mrb[0].mxu0
        %v8334 = vadd.f32 %v8221, %v8333
        %v8335 = vpop.f32.mrb[0].mxu0
        %v8336 = vadd.f32 %v8223, %v8335
        %v8337 = vpop.f32.mrb[0].mxu0
        %v8338 = vadd.f32 %v8225, %v8337
        %v8339 = vpop.f32.mrb[0].mxu0
        %v8340 = vadd.f32 %v8227, %v8339
        %8341 = vmatprep.mubr.bf16.mxu0 %v4142
        %8342 = vmatmul.mubr.bf16.gmra.mrb[0].mxu0 %v4141
        %v8343 = vpop.f32.mrb[0].mxu0
        %v8344 = vadd.f32 %v8231, %v8343
        %v8345 = vpop.f32.mrb[0].mxu0
        %v8346 = vadd.f32 %v8233, %v8345
        %v8347 = vpop.f32.mrb[0].mxu0
        %v8348 = vadd.f32 %v8235, %v8347
        %v8349 = vpop.f32.mrb[0].mxu0
        %v8350 = vadd.f32 %v8237, %v8349
        %8351 = vdwg.mxu0
        %8352 = vmatprep.subr.bf16.mxu0 0
        %8353 = vmatpush1.bf16.msra.mxu0 %v6106
        %8354 = vmatprep.subr.bf16.mxu0 0
        %8355 = vmatpush1.bf16.msra.mxu0 %v6113
        %8356 = vmatprep.subr.bf16.mxu0 0
        %8357 = vmatpush1.bf16.msra.mxu0 %v6120
        %8358 = vmatprep.subr.bf16.mxu0 0
        %8359 = vmatpush1.bf16.msra.mxu0 %v6127
        %8360 = vmatprep.subr.bf16.mxu0 0
        %8361 = vmatpush1.bf16.msra.mxu0 %v6134
        %8362 = vmatprep.subr.bf16.mxu0 0
        %8363 = vmatpush1.bf16.msra.mxu0 %v6141
        %8364 = vmatprep.subr.bf16.mxu0 0
        %8365 = vmatpush1.bf16.msra.mxu0 %v6148
        %8366 = vmatprep.subr.bf16.mxu0 0
        %8367 = vmatpush1.bf16.msra.mxu0 %v6155
        %8368 = vmatprep.subr.bf16.mxu0 0
        %8369 = vmatpush1.bf16.msra.mxu0 %v6162
        %8370 = vmatprep.subr.bf16.mxu0 0
        %8371 = vmatpush1.bf16.msra.mxu0 %v6169
        %8372 = vmatprep.subr.bf16.mxu0 0
        %8373 = vmatpush1.bf16.msra.mxu0 %v6176
        %8374 = vmatprep.subr.bf16.mxu0 0
        %8375 = vmatpush1.bf16.msra.mxu0 %v6183
        %8376 = vmatprep.subr.bf16.mxu0 0
        %8377 = vmatpush1.bf16.msra.mxu0 %v6190
        %8378 = vmatprep.subr.bf16.mxu0 0
        %8379 = vmatpush1.bf16.msra.mxu0 %v6197
        %8380 = vmatprep.subr.bf16.mxu0 0
        %8381 = vmatpush1.bf16.msra.mxu0 %v6204
        %8382 = vmatprep.subr.bf16.mxu0 0
        %8383 = vmatpush1.bf16.msra.mxu0 %v6211
        %8384 = vmatprep.mubr.bf16.mxu0 %v4080
        %8385 = vmatmul.mubr.bf16.gmra.mrb[0].mxu0 %v4079
        %v8386 = vpop.f32.mrb[0].mxu0
        %v8387 = vadd.f32 %v4684, %v8386
        %v8388 = vpop.f32.mrb[0].mxu0
        %v8389 = vpop.f32.mrb[0].mxu0
        %v8390 = vadd.f32 %v4684, %v8389
        %v8391 = vpop.f32.mrb[0].mxu0
        %8392 = vmatprep.mubr.bf16.mxu0 %v4088
        %8393 = vmatmul.mubr.bf16.gmra.mrb[0].mxu0 %v4087
        %v8394 = vpop.f32.mrb[0].mxu0
        %v8395 = vadd.f32 %v4684, %v8394
        %v8396 = vpop.f32.mrb[0].mxu0
        %v8397 = vpop.f32.mrb[0].mxu0
        %v8398 = vadd.f32 %v4684, %v8397
        %v8399 = vpop.f32.mrb[0].mxu0
        %8400 = vmatprep.mubr.bf16.mxu0 %v4096
        %8401 = vmatmul.mubr.bf16.gmra.mrb[0].mxu0 %v4095
        %v8402 = vpop.f32.mrb[0].mxu0
        %v8403 = vadd.f32 %v4684, %v8402
        %v8404 = vpop.f32.mrb[0].mxu0
        %v8405 = vpop.f32.mrb[0].mxu0
        %v8406 = vadd.f32 %v4684, %v8405
        %v8407 = vpop.f32.mrb[0].mxu0
        %8408 = vmatprep.mubr.bf16.mxu0 %v4104
        %8409 = vmatmul.mubr.bf16.gmra.mrb[0].mxu0 %v4103
        %v8410 = vpop.f32.mrb[0].mxu0
        %v8411 = vadd.f32 %v4684, %v8410
        %v8412 = vpop.f32.mrb[0].mxu0
        %v8413 = vpop.f32.mrb[0].mxu0
        %v8414 = vadd.f32 %v4684, %v8413
        %v8415 = vpop.f32.mrb[0].mxu0
        %8416 = vmatprep.mubr.bf16.mxu0 %v4112
        %8417 = vmatmul.mubr.bf16.gmra.mrb[0].mxu0 %v4111
        %v8418 = vpop.f32.mrb[0].mxu0
        %v8419 = vadd.f32 %v4684, %v8418
        %v8420 = vpop.f32.mrb[0].mxu0
        %v8421 = vpop.f32.mrb[0].mxu0
        %v8422 = vadd.f32 %v4684, %v8421
        %v8423 = vpop.f32.mrb[0].mxu0
        %8424 = vmatprep.mubr.bf16.mxu0 %v4120
        %8425 = vmatmul.mubr.bf16.gmra.mrb[0].mxu0 %v4119
        %v8426 = vpop.f32.mrb[0].mxu0
        %v8427 = vadd.f32 %v4684, %v8426
        %v8428 = vpop.f32.mrb[0].mxu0
        %v8429 = vpop.f32.mrb[0].mxu0
        %v8430 = vadd.f32 %v4684, %v8429
        %v8431 = vpop.f32.mrb[0].mxu0
        %8432 = vmatprep.mubr.bf16.mxu0 %v4128
        %8433 = vmatmul.mubr.bf16.gmra.mrb[0].mxu0 %v4127
        %v8434 = vpop.f32.mrb[0].mxu0
        %v8435 = vadd.f32 %v4684, %v8434
        %v8436 = vpop.f32.mrb[0].mxu0
        %v8437 = vpop.f32.mrb[0].mxu0
        %v8438 = vadd.f32 %v4684, %v8437
        %v8439 = vpop.f32.mrb[0].mxu0
        %8440 = vmatprep.mubr.bf16.mxu0 %v4136
        %8441 = vmatmul.mubr.bf16.gmra.mrb[0].mxu0 %v4135
        %v8442 = vpop.f32.mrb[0].mxu0
        %v8443 = vadd.f32 %v4684, %v8442
        %v8444 = vpop.f32.mrb[0].mxu0
        %v8445 = vpop.f32.mrb[0].mxu0
        %v8446 = vadd.f32 %v4684, %v8445
        %v8447 = vpop.f32.mrb[0].mxu0
        %8448 = vdwg.mxu0
        %8449 = vmatprep.subr.bf16.mxu0 0
        %8450 = vmatpush1.bf16.msra.mxu0 %v6218
        %8451 = vmatprep.subr.bf16.mxu0 0
        %8452 = vmatpush1.bf16.msra.mxu0 %v6225
        %8453 = vmatprep.subr.bf16.mxu0 0
        %8454 = vmatpush1.bf16.msra.mxu0 %v6232
        %8455 = vmatprep.subr.bf16.mxu0 0
        %8456 = vmatpush1.bf16.msra.mxu0 %v6239
        %8457 = vmatprep.subr.bf16.mxu0 0
        %8458 = vmatpush1.bf16.msra.mxu0 %v6246
        %8459 = vmatprep.subr.bf16.mxu0 0
        %8460 = vmatpush1.bf16.msra.mxu0 %v6253
        %8461 = vmatprep.subr.bf16.mxu0 0
        %8462 = vmatpush1.bf16.msra.mxu0 %v6260
        %8463 = vmatprep.subr.bf16.mxu0 0
        %8464 = vmatpush1.bf16.msra.mxu0 %v6267
        %8465 = vmatprep.subr.bf16.mxu0 0
        %8466 = vmatpush1.bf16.msra.mxu0 %v6274
        %8467 = vmatprep.subr.bf16.mxu0 0
        %8468 = vmatpush1.bf16.msra.mxu0 %v6281
        %8469 = vmatprep.subr.bf16.mxu0 0
        %8470 = vmatpush1.bf16.msra.mxu0 %v6288
        %8471 = vmatprep.subr.bf16.mxu0 0
        %8472 = vmatpush1.bf16.msra.mxu0 %v6295
        %8473 = vmatprep.subr.bf16.mxu0 0
        %8474 = vmatpush1.bf16.msra.mxu0 %v6302
        %8475 = vmatprep.subr.bf16.mxu0 0
        %8476 = vmatpush1.bf16.msra.mxu0 %v6309
        %8477 = vmatprep.subr.bf16.mxu0 0
        %8478 = vmatpush1.bf16.msra.mxu0 %v6316
        %8479 = vmatprep.subr.bf16.mxu0 0
        %8480 = vmatpush1.bf16.msra.mxu0 %v6323
        %8481 = vmatprep.mubr.bf16.mxu0 %v4082
        %8482 = vmatmul.mubr.bf16.gmra.mrb[0].mxu0 %v4081
        %v8483 = vpop.f32.mrb[0].mxu0
        %v8484 = vadd.f32 %v8387, %v8483
        %v8485 = vpop.f32.mrb[0].mxu0
        %v8486 = vpop.f32.mrb[0].mxu0
        %v8487 = vadd.f32 %v8390, %v8486
        %v8488 = vpop.f32.mrb[0].mxu0
        %8489 = vmatprep.mubr.bf16.mxu0 %v4090
        %8490 = vmatmul.mubr.bf16.gmra.mrb[0].mxu0 %v4089
        %v8491 = vpop.f32.mrb[0].mxu0
        %v8492 = vadd.f32 %v8395, %v8491
        %v8493 = vpop.f32.mrb[0].mxu0
        %v8494 = vpop.f32.mrb[0].mxu0
        %v8495 = vadd.f32 %v8398, %v8494
        %v8496 = vpop.f32.mrb[0].mxu0
        %8497 = vmatprep.mubr.bf16.mxu0 %v4098
        %8498 = vmatmul.mubr.bf16.gmra.mrb[0].mxu0 %v4097
        %v8499 = vpop.f32.mrb[0].mxu0
        %v8500 = vadd.f32 %v8403, %v8499
        %v8501 = vpop.f32.mrb[0].mxu0
        %v8502 = vpop.f32.mrb[0].mxu0
        %v8503 = vadd.f32 %v8406, %v8502
        %v8504 = vpop.f32.mrb[0].mxu0
        %8505 = vmatprep.mubr.bf16.mxu0 %v4106
        %8506 = vmatmul.mubr.bf16.gmra.mrb[0].mxu0 %v4105
        %v8507 = vpop.f32.mrb[0].mxu0
        %v8508 = vadd.f32 %v8411, %v8507
        %v8509 = vpop.f32.mrb[0].mxu0
        %v8510 = vpop.f32.mrb[0].mxu0
        %v8511 = vadd.f32 %v8414, %v8510
        %v8512 = vpop.f32.mrb[0].mxu0
        %8513 = vmatprep.mubr.bf16.mxu0 %v4114
        %8514 = vmatmul.mubr.bf16.gmra.mrb[0].mxu0 %v4113
        %v8515 = vpop.f32.mrb[0].mxu0
        %v8516 = vadd.f32 %v8419, %v8515
        %v8517 = vpop.f32.mrb[0].mxu0
        %v8518 = vpop.f32.mrb[0].mxu0
        %v8519 = vadd.f32 %v8422, %v8518
        %v8520 = vpop.f32.mrb[0].mxu0
        %8521 = vmatprep.mubr.bf16.mxu0 %v4122
        %8522 = vmatmul.mubr.bf16.gmra.mrb[0].mxu0 %v4121
        %v8523 = vpop.f32.mrb[0].mxu0
        %v8524 = vadd.f32 %v8427, %v8523
        %v8525 = vpop.f32.mrb[0].mxu0
        %v8526 = vpop.f32.mrb[0].mxu0
        %v8527 = vadd.f32 %v8430, %v8526
        %v8528 = vpop.f32.mrb[0].mxu0
        %8529 = vmatprep.mubr.bf16.mxu0 %v4130
        %8530 = vmatmul.mubr.bf16.gmra.mrb[0].mxu0 %v4129
        %v8531 = vpop.f32.mrb[0].mxu0
        %v8532 = vadd.f32 %v8435, %v8531
        %v8533 = vpop.f32.mrb[0].mxu0
        %v8534 = vpop.f32.mrb[0].mxu0
        %v8535 = vadd.f32 %v8438, %v8534
        %v8536 = vpop.f32.mrb[0].mxu0
        %8537 = vmatprep.mubr.bf16.mxu0 %v4138
        %8538 = vmatmul.mubr.bf16.gmra.mrb[0].mxu0 %v4137
        %v8539 = vpop.f32.mrb[0].mxu0
        %v8540 = vadd.f32 %v8443, %v8539
        %v8541 = vpop.f32.mrb[0].mxu0
        %v8542 = vpop.f32.mrb[0].mxu0
        %v8543 = vadd.f32 %v8446, %v8542
        %v8544 = vpop.f32.mrb[0].mxu0
        %8545 = vdwg.mxu0
        %8546 = vmatprep.subr.bf16.mxu0 0
        %8547 = vmatpush1.bf16.msra.mxu0 %v6330
        %8548 = vmatprep.subr.bf16.mxu0 0
        %8549 = vmatpush1.bf16.msra.mxu0 %v6337
        %8550 = vmatprep.subr.bf16.mxu0 0
        %8551 = vmatpush1.bf16.msra.mxu0 %v6344
        %8552 = vmatprep.subr.bf16.mxu0 0
        %8553 = vmatpush1.bf16.msra.mxu0 %v6351
        %8554 = vmatprep.subr.bf16.mxu0 0
        %8555 = vmatpush1.bf16.msra.mxu0 %v6358
        %8556 = vmatprep.subr.bf16.mxu0 0
        %8557 = vmatpush1.bf16.msra.mxu0 %v6365
        %8558 = vmatprep.subr.bf16.mxu0 0
        %8559 = vmatpush1.bf16.msra.mxu0 %v6372
        %8560 = vmatprep.subr.bf16.mxu0 0
        %8561 = vmatpush1.bf16.msra.mxu0 %v6379
        %8562 = vmatprep.subr.bf16.mxu0 0
        %8563 = vmatpush1.bf16.msra.mxu0 %v6386
        %8564 = vmatprep.subr.bf16.mxu0 0
        %8565 = vmatpush1.bf16.msra.mxu0 %v6393
        %8566 = vmatprep.subr.bf16.mxu0 0
        %8567 = vmatpush1.bf16.msra.mxu0 %v6400
        %8568 = vmatprep.subr.bf16.mxu0 0
        %8569 = vmatpush1.bf16.msra.mxu0 %v6407
        %8570 = vmatprep.subr.bf16.mxu0 0
        %8571 = vmatpush1.bf16.msra.mxu0 %v6414
        %8572 = vmatprep.subr.bf16.mxu0 0
        %8573 = vmatpush1.bf16.msra.mxu0 %v6421
        %8574 = vmatprep.subr.bf16.mxu0 0
        %8575 = vmatpush1.bf16.msra.mxu0 %v6428
        %8576 = vmatprep.subr.bf16.mxu0 0
        %8577 = vmatpush1.bf16.msra.mxu0 %v6435
        %8578 = vmatprep.mubr.bf16.mxu0 %v4084
        %8579 = vmatmul.mubr.bf16.gmra.mrb[0].mxu0 %v4083
        %v8580 = vpop.f32.mrb[0].mxu0
        %v8581 = vadd.f32 %v8484, %v8580
        %v8582 = vpop.f32.mrb[0].mxu0
        %v8583 = vpop.f32.mrb[0].mxu0
        %v8584 = vadd.f32 %v8487, %v8583
        %v8585 = vpop.f32.mrb[0].mxu0
        %8586 = vmatprep.mubr.bf16.mxu0 %v4092
        %8587 = vmatmul.mubr.bf16.gmra.mrb[0].mxu0 %v4091
        %v8588 = vpop.f32.mrb[0].mxu0
        %v8589 = vadd.f32 %v8492, %v8588
        %v8590 = vpop.f32.mrb[0].mxu0
        %v8591 = vpop.f32.mrb[0].mxu0
        %v8592 = vadd.f32 %v8495, %v8591
        %v8593 = vpop.f32.mrb[0].mxu0
        %8594 = vmatprep.mubr.bf16.mxu0 %v4100
        %8595 = vmatmul.mubr.bf16.gmra.mrb[0].mxu0 %v4099
        %v8596 = vpop.f32.mrb[0].mxu0
        %v8597 = vadd.f32 %v8500, %v8596
        %v8598 = vpop.f32.mrb[0].mxu0
        %v8599 = vpop.f32.mrb[0].mxu0
        %v8600 = vadd.f32 %v8503, %v8599
        %v8601 = vpop.f32.mrb[0].mxu0
        %8602 = vmatprep.mubr.bf16.mxu0 %v4108
        %8603 = vmatmul.mubr.bf16.gmra.mrb[0].mxu0 %v4107
        %v8604 = vpop.f32.mrb[0].mxu0
        %v8605 = vadd.f32 %v8508, %v8604
        %v8606 = vpop.f32.mrb[0].mxu0
        %v8607 = vpop.f32.mrb[0].mxu0
        %v8608 = vadd.f32 %v8511, %v8607
        %v8609 = vpop.f32.mrb[0].mxu0
        %8610 = vmatprep.mubr.bf16.mxu0 %v4116
        %8611 = vmatmul.mubr.bf16.gmra.mrb[0].mxu0 %v4115
        %v8612 = vpop.f32.mrb[0].mxu0
        %v8613 = vadd.f32 %v8516, %v8612
        %v8614 = vpop.f32.mrb[0].mxu0
        %v8615 = vpop.f32.mrb[0].mxu0
        %v8616 = vadd.f32 %v8519, %v8615
        %v8617 = vpop.f32.mrb[0].mxu0
        %8618 = vmatprep.mubr.bf16.mxu0 %v4124
        %8619 = vmatmul.mubr.bf16.gmra.mrb[0].mxu0 %v4123
        %v8620 = vpop.f32.mrb[0].mxu0
        %v8621 = vadd.f32 %v8524, %v8620
        %v8622 = vpop.f32.mrb[0].mxu0
        %v8623 = vpop.f32.mrb[0].mxu0
        %v8624 = vadd.f32 %v8527, %v8623
        %v8625 = vpop.f32.mrb[0].mxu0
        %8626 = vmatprep.mubr.bf16.mxu0 %v4132
        %8627 = vmatmul.mubr.bf16.gmra.mrb[0].mxu0 %v4131
        %v8628 = vpop.f32.mrb[0].mxu0
        %v8629 = vadd.f32 %v8532, %v8628
        %v8630 = vpop.f32.mrb[0].mxu0
        %v8631 = vpop.f32.mrb[0].mxu0
        %v8632 = vadd.f32 %v8535, %v8631
        %v8633 = vpop.f32.mrb[0].mxu0
        %8634 = vmatprep.mubr.bf16.mxu0 %v4140
        %8635 = vmatmul.mubr.bf16.gmra.mrb[0].mxu0 %v4139
        %v8636 = vpop.f32.mrb[0].mxu0
        %v8637 = vadd.f32 %v8540, %v8636
        %v8638 = vpop.f32.mrb[0].mxu0
        %v8639 = vpop.f32.mrb[0].mxu0
        %v8640 = vadd.f32 %v8543, %v8639
        %v8641 = vpop.f32.mrb[0].mxu0
        %8642 = vdwg.mxu0
        %8643 = vmatprep.subr.bf16.mxu0 0
        %8644 = vmatpush1.bf16.msra.mxu0 %v6442
        %8645 = vmatprep.subr.bf16.mxu0 0
        %8646 = vmatpush1.bf16.msra.mxu0 %v6449
        %8647 = vmatprep.subr.bf16.mxu0 0
        %8648 = vmatpush1.bf16.msra.mxu0 %v6456
        %8649 = vmatprep.subr.bf16.mxu0 0
        %8650 = vmatpush1.bf16.msra.mxu0 %v6463
        %8651 = vmatprep.subr.bf16.mxu0 0
        %8652 = vmatpush1.bf16.msra.mxu0 %v6470
        %8653 = vmatprep.subr.bf16.mxu0 0
        %8654 = vmatpush1.bf16.msra.mxu0 %v6477
        %8655 = vmatprep.subr.bf16.mxu0 0
        %8656 = vmatpush1.bf16.msra.mxu0 %v6484
        %8657 = vmatprep.subr.bf16.mxu0 0
        %8658 = vmatpush1.bf16.msra.mxu0 %v6491
        %8659 = vmatprep.subr.bf16.mxu0 0
        %8660 = vmatpush1.bf16.msra.mxu0 %v6498
        %8661 = vmatprep.subr.bf16.mxu0 0
        %8662 = vmatpush1.bf16.msra.mxu0 %v6505
        %8663 = vmatprep.subr.bf16.mxu0 0
        %8664 = vmatpush1.bf16.msra.mxu0 %v6512
        %8665 = vmatprep.subr.bf16.mxu0 0
        %8666 = vmatpush1.bf16.msra.mxu0 %v6519
        %8667 = vmatprep.subr.bf16.mxu0 0
        %8668 = vmatpush1.bf16.msra.mxu0 %v6526
        %8669 = vmatprep.subr.bf16.mxu0 0
        %8670 = vmatpush1.bf16.msra.mxu0 %v6533
        %8671 = vmatprep.subr.bf16.mxu0 0
        %8672 = vmatpush1.bf16.msra.mxu0 %v6540
        %8673 = vmatprep.subr.bf16.mxu0 0
        %8674 = vmatpush1.bf16.msra.mxu0 %v6547
        %8675 = vmatprep.mubr.bf16.mxu0 %v4086
        %8676 = vmatmul.mubr.bf16.gmra.mrb[0].mxu0 %v4085
        %v8677 = vpop.f32.mrb[0].mxu0
        %v8678 = vadd.f32 %v8581, %v8677
        %v8679 = vpop.f32.mrb[0].mxu0
        %v8680 = vpop.f32.mrb[0].mxu0
        %v8681 = vadd.f32 %v8584, %v8680
        %v8682 = vpop.f32.mrb[0].mxu0
        %8683 = vmatprep.mubr.bf16.mxu0 %v4094
        %8684 = vmatmul.mubr.bf16.gmra.mrb[0].mxu0 %v4093
        %v8685 = vpop.f32.mrb[0].mxu0
        %v8686 = vadd.f32 %v8589, %v8685
        %v8687 = vpop.f32.mrb[0].mxu0
        %v8688 = vpop.f32.mrb[0].mxu0
        %v8689 = vadd.f32 %v8592, %v8688
        %v8690 = vpop.f32.mrb[0].mxu0
        %8691 = vmatprep.mubr.bf16.mxu0 %v4102
        %8692 = vmatmul.mubr.bf16.gmra.mrb[0].mxu0 %v4101
        %v8693 = vpop.f32.mrb[0].mxu0
        %v8694 = vadd.f32 %v8597, %v8693
        %v8695 = vpop.f32.mrb[0].mxu0
        %v8696 = vpop.f32.mrb[0].mxu0
        %v8697 = vadd.f32 %v8600, %v8696
        %v8698 = vpop.f32.mrb[0].mxu0
        %8699 = vmatprep.mubr.bf16.mxu0 %v4110
        %8700 = vmatmul.mubr.bf16.gmra.mrb[0].mxu0 %v4109
        %v8701 = vpop.f32.mrb[0].mxu0
        %v8702 = vadd.f32 %v8605, %v8701
        %v8703 = vpop.f32.mrb[0].mxu0
        %v8704 = vpop.f32.mrb[0].mxu0
        %v8705 = vadd.f32 %v8608, %v8704
        %v8706 = vpop.f32.mrb[0].mxu0
        %8707 = vmatprep.mubr.bf16.mxu0 %v4118
        %8708 = vmatmul.mubr.bf16.gmra.mrb[0].mxu0 %v4117
        %v8709 = vpop.f32.mrb[0].mxu0
        %v8710 = vadd.f32 %v8613, %v8709
        %v8711 = vpop.f32.mrb[0].mxu0
        %v8712 = vpop.f32.mrb[0].mxu0
        %v8713 = vadd.f32 %v8616, %v8712
        %v8714 = vpop.f32.mrb[0].mxu0
        %8715 = vmatprep.mubr.bf16.mxu0 %v4126
        %8716 = vmatmul.mubr.bf16.gmra.mrb[0].mxu0 %v4125
        %v8717 = vpop.f32.mrb[0].mxu0
        %v8718 = vadd.f32 %v8621, %v8717
        %v8719 = vpop.f32.mrb[0].mxu0
        %v8720 = vpop.f32.mrb[0].mxu0
        %v8721 = vadd.f32 %v8624, %v8720
        %v8722 = vpop.f32.mrb[0].mxu0
        %8723 = vmatprep.mubr.bf16.mxu0 %v4134
        %8724 = vmatmul.mubr.bf16.gmra.mrb[0].mxu0 %v4133
        %v8725 = vpop.f32.mrb[0].mxu0
        %v8726 = vadd.f32 %v8629, %v8725
        %v8727 = vpop.f32.mrb[0].mxu0
        %v8728 = vpop.f32.mrb[0].mxu0
        %v8729 = vadd.f32 %v8632, %v8728
        %v8730 = vpop.f32.mrb[0].mxu0
        %8731 = vmatprep.mubr.bf16.mxu0 %v4142
        %8732 = vmatmul.mubr.bf16.gmra.mrb[0].mxu0 %v4141
        %v8733 = vpop.f32.mrb[0].mxu0
        %v8734 = vadd.f32 %v8637, %v8733
        %v8735 = vpop.f32.mrb[0].mxu0
        %v8736 = vpop.f32.mrb[0].mxu0
        %v8737 = vadd.f32 %v8640, %v8736
        %v8738 = vpop.f32.mrb[0].mxu0
        %8739 = vdwg.mxu0
        %v8740 = vtanh.pop %v7370
        %v8741 = vtanh.pop %v7372
        %v8742 = vtanh.pop %v7822
        %v8743 = vtanh.pop %v7824
        %v8744 = vtanh.pop %v8274
        %v8745 = vtanh.pop %v8276
        %v8746 = vtanh.pop %v8678
        %v8747 = vtanh.pop %v7374
        %v8748 = vtanh.pop %v7376
        %v8749 = vtanh.pop %v7826
        %v8750 = vtanh.pop %v7828
        %v8751 = vtanh.pop %v8278
        %v8752 = vtanh.pop %v8280
        %v8753 = vtanh.pop %v8681
        %v8754 = vtanh.pop %v7380
        %v8755 = vtanh.pop %v7382
        %v8756 = vtanh.pop %v7832
        %v8757 = vtanh.pop %v7834
        %v8758 = vtanh.pop %v8284
        %v8759 = vtanh.pop %v8286
        %v8760 = vtanh.pop %v8686
        %v8761 = vtanh.pop %v7384
        %v8762 = vtanh.pop %v7386
        %v8763 = vtanh.pop %v7836
        %v8764 = vtanh.pop %v7838
        %v8765 = vtanh.pop %v8288
        %v8766 = vtanh.pop %v8290
        %v8767 = vtanh.pop %v8689
        %v8768 = vtanh.pop %v7390
        %v8769 = vtanh.pop %v7392
        %v8770 = vtanh.pop %v7842
        %v8771 = vtanh.pop %v7844
        %v8772 = vtanh.pop %v8294
        %v8773 = vtanh.pop %v8296
        %v8774 = vtanh.pop %v8694
        %v8775 = vtanh.pop %v7394
        %v8776 = vtanh.pop %v7396
        %v8777 = vtanh.pop %v7846
        %v8778 = vtanh.pop %v7848
        %v8779 = vtanh.pop %v8298
        %v8780 = vtanh.pop %v8300
        %v8781 = vtanh.pop %v8697
        %v8782 = vtanh.pop %v7400
        %v8783 = vtanh.pop %v7402
        %v8784 = vtanh.pop %v7852
        %v8785 = vtanh.pop %v7854
        %v8786 = vtanh.pop %v8304
        %v8787 = vtanh.pop %v8306
        %v8788 = vtanh.pop %v8702
        %v8789 = vtanh.pop %v7404
        %v8790 = vtanh.pop %v7406
        %v8791 = vtanh.pop %v7856
        %v8792 = vtanh.pop %v7858
        %v8793 = vtanh.pop %v8308
        %v8794 = vtanh.pop %v8310
        %v8795 = vtanh.pop %v8705
        %v8796 = vtanh.pop %v7410
        %v8797 = vtanh.pop %v7412
        %v8798 = vtanh.pop %v7862
        %v8799 = vtanh.pop %v7864
        %v8800 = vtanh.pop %v8314
        %v8801 = vtanh.pop %v8316
        %v8802 = vtanh.pop %v8710
        %v8803 = vtanh.pop %v7414
        %v8804 = vtanh.pop %v7416
        %v8805 = vtanh.pop %v7866
        %v8806 = vtanh.pop %v7868
        %v8807 = vtanh.pop %v8318
        %v8808 = vtanh.pop %v8320
        %v8809 = vtanh.pop %v8713
        %v8810 = vtanh.pop %v7420
        %v8811 = vtanh.pop %v7422
        %v8812 = vtanh.pop %v7872
        %v8813 = vtanh.pop %v7874
        %v8814 = vtanh.pop %v8324
        %v8815 = vtanh.pop %v8326
        %v8816 = vtanh.pop %v8718
        %v8817 = vtanh.pop %v7424
        %v8818 = vtanh.pop %v7426
        %v8819 = vtanh.pop %v7876
        %v8820 = vtanh.pop %v7878
        %v8821 = vtanh.pop %v8328
        %v8822 = vtanh.pop %v8330
        %v8823 = vtanh.pop %v8721
        %v8824 = vtanh.pop %v7430
        %v8825 = vtanh.pop %v7432
        %v8826 = vtanh.pop %v7882
        %v8827 = vtanh.pop %v7884
        %v8828 = vtanh.pop %v8334
        %v8829 = vtanh.pop %v8336
        %v8830 = vtanh.pop %v8726
        %v8831 = vtanh.pop %v7434
        %v8832 = vtanh.pop %v7436
        %v8833 = vtanh.pop %v7886
        %v8834 = vtanh.pop %v7888
        %v8835 = vtanh.pop %v8338
        %v8836 = vtanh.pop %v8340
        %v8837 = vtanh.pop %v8729
        %v8838 = vtanh.pop %v7440
        %v8839 = vtanh.pop %v7442
        %v8840 = vtanh.pop %v7892
        %v8841 = vtanh.pop %v7894
        %v8842 = vtanh.pop %v8344
        %v8843 = vtanh.pop %v8346
        %v8844 = vtanh.pop %v8734
        %v8845 = vtanh.pop %v7444
        %v8846 = vtanh.pop %v7446
        %v8847 = vtanh.pop %v7896
        %v8848 = vtanh.pop %v7898
        %v8849 = vtanh.pop %v8348
        %v8850 = vtanh.pop %v8350
        %v8851 = vtanh.pop %v8737
        %8852 = vst [vmem:[%s445] sm:$0xff] %v8740
        %8853 = vst [vmem:[%s445 + $0x8] sm:$0xff] %v8741
        %8854 = vst [vmem:[%s445 + $0x10] sm:$0xff] %v8742
        %8855 = vst [vmem:[%s445 + $0x18] sm:$0xff] %v8743
        %8856 = vst [vmem:[%s445 + $0x20] sm:$0xff] %v8744
        %8857 = vst [vmem:[%s445 + $0x28] sm:$0xff] %v8745
        %8858 = vst [vmem:[%s445 + $0x30] sm:$0xff] %v8746
        %8859 = vst [vmem:[%s445 + $0x38] sm:$0xff] %v8747
        %8860 = vst [vmem:[%s445 + $0x40] sm:$0xff] %v8748
        %8861 = vst [vmem:[%s445 + $0x48] sm:$0xff] %v8749
        %8862 = vst [vmem:[%s445 + $0x50] sm:$0xff] %v8750
        %8863 = vst [vmem:[%s445 + $0x58] sm:$0xff] %v8751
        %8864 = vst [vmem:[%s445 + $0x60] sm:$0xff] %v8752
        %8865 = vst [vmem:[%s445 + $0x68] sm:$0xff] %v8753
        %8866 = vst [vmem:[%s445 + $0x70] sm:$0xff] %v8754
        %8867 = vst [vmem:[%s445 + $0x78] sm:$0xff] %v8755
        %8868 = vst [vmem:[%s445 + $0x80] sm:$0xff] %v8756
        %8869 = vst [vmem:[%s445 + $0x88] sm:$0xff] %v8757
        %8870 = vst [vmem:[%s445 + $0x90] sm:$0xff] %v8758
        %8871 = vst [vmem:[%s445 + $0x98] sm:$0xff] %v8759
        %8872 = vst [vmem:[%s445 + $0xa0] sm:$0xff] %v8760
        %8873 = vst [vmem:[%s445 + $0xa8] sm:$0xff] %v8761
        %8874 = vst [vmem:[%s445 + $0xb0] sm:$0xff] %v8762
        %8875 = vst [vmem:[%s445 + $0xb8] sm:$0xff] %v8763
        %8876 = vst [vmem:[%s445 + $0xc0] sm:$0xff] %v8764
        %8877 = vst [vmem:[%s445 + $0xc8] sm:$0xff] %v8765
        %8878 = vst [vmem:[%s445 + $0xd0] sm:$0xff] %v8766
        %8879 = vst [vmem:[%s445 + $0xd8] sm:$0xff] %v8767
        %8880 = vst [vmem:[%s445 + $0xe0] sm:$0xff] %v8768
        %8881 = vst [vmem:[%s445 + $0xe8] sm:$0xff] %v8769
        %8882 = vst [vmem:[%s445 + $0xf0] sm:$0xff] %v8770
        %8883 = vst [vmem:[%s445 + $0xf8] sm:$0xff] %v8771
        %8884 = vst [vmem:[%s445 + $0x100] sm:$0xff] %v8772
        %8885 = vst [vmem:[%s445 + $0x108] sm:$0xff] %v8773
        %8886 = vst [vmem:[%s445 + $0x110] sm:$0xff] %v8774
        %8887 = vst [vmem:[%s445 + $0x118] sm:$0xff] %v8775
        %8888 = vst [vmem:[%s445 + $0x120] sm:$0xff] %v8776
        %8889 = vst [vmem:[%s445 + $0x128] sm:$0xff] %v8777
        %8890 = vst [vmem:[%s445 + $0x130] sm:$0xff] %v8778
        %8891 = vst [vmem:[%s445 + $0x138] sm:$0xff] %v8779
        %8892 = vst [vmem:[%s445 + $0x140] sm:$0xff] %v8780
        %8893 = vst [vmem:[%s445 + $0x148] sm:$0xff] %v8781
        %8894 = vst [vmem:[%s445 + $0x150] sm:$0xff] %v8782
        %8895 = vst [vmem:[%s445 + $0x158] sm:$0xff] %v8783
        %8896 = vst [vmem:[%s445 + $0x160] sm:$0xff] %v8784
        %8897 = vst [vmem:[%s445 + $0x168] sm:$0xff] %v8785
        %8898 = vst [vmem:[%s445 + $0x170] sm:$0xff] %v8786
        %8899 = vst [vmem:[%s445 + $0x178] sm:$0xff] %v8787
        %8900 = vst [vmem:[%s445 + $0x180] sm:$0xff] %v8788
        %8901 = vst [vmem:[%s445 + $0x188] sm:$0xff] %v8789
        %8902 = vst [vmem:[%s445 + $0x190] sm:$0xff] %v8790
        %8903 = vst [vmem:[%s445 + $0x198] sm:$0xff] %v8791
        %8904 = vst [vmem:[%s445 + $0x1a0] sm:$0xff] %v8792
        %8905 = vst [vmem:[%s445 + $0x1a8] sm:$0xff] %v8793
        %8906 = vst [vmem:[%s445 + $0x1b0] sm:$0xff] %v8794
        %8907 = vst [vmem:[%s445 + $0x1b8] sm:$0xff] %v8795
        %8908 = vst [vmem:[%s445 + $0x1c0] sm:$0xff] %v8796
        %8909 = vst [vmem:[%s445 + $0x1c8] sm:$0xff] %v8797
        %8910 = vst [vmem:[%s445 + $0x1d0] sm:$0xff] %v8798
        %8911 = vst [vmem:[%s445 + $0x1d8] sm:$0xff] %v8799
        %8912 = vst [vmem:[%s445 + $0x1e0] sm:$0xff] %v8800
        %8913 = vst [vmem:[%s445 + $0x1e8] sm:$0xff] %v8801
        %8914 = vst [vmem:[%s445 + $0x1f0] sm:$0xff] %v8802
        %8915 = vst [vmem:[%s445 + $0x1f8] sm:$0xff] %v8803
        %8916 = vst [vmem:[%s445 + $0x200] sm:$0xff] %v8804
        %8917 = vst [vmem:[%s445 + $0x208] sm:$0xff] %v8805
        %8918 = vst [vmem:[%s445 + $0x210] sm:$0xff] %v8806
        %8919 = vst [vmem:[%s445 + $0x218] sm:$0xff] %v8807
        %8920 = vst [vmem:[%s445 + $0x220] sm:$0xff] %v8808
        %8921 = vst [vmem:[%s445 + $0x228] sm:$0xff] %v8809
        %8922 = vst [vmem:[%s445 + $0x230] sm:$0xff] %v8810
        %8923 = vst [vmem:[%s445 + $0x238] sm:$0xff] %v8811
        %8924 = vst [vmem:[%s445 + $0x240] sm:$0xff] %v8812
        %8925 = vst [vmem:[%s445 + $0x248] sm:$0xff] %v8813
        %8926 = vst [vmem:[%s445 + $0x250] sm:$0xff] %v8814
        %8927 = vst [vmem:[%s445 + $0x258] sm:$0xff] %v8815
        %8928 = vst [vmem:[%s445 + $0x260] sm:$0xff] %v8816
        %8929 = vst [vmem:[%s445 + $0x268] sm:$0xff] %v8817
        %8930 = vst [vmem:[%s445 + $0x270] sm:$0xff] %v8818
        %8931 = vst [vmem:[%s445 + $0x278] sm:$0xff] %v8819
        %8932 = vst [vmem:[%s445 + $0x280] sm:$0xff] %v8820
        %8933 = vst [vmem:[%s445 + $0x288] sm:$0xff] %v8821
        %8934 = vst [vmem:[%s445 + $0x290] sm:$0xff] %v8822
        %8935 = vst [vmem:[%s445 + $0x298] sm:$0xff] %v8823
        %8936 = vst [vmem:[%s445 + $0x2a0] sm:$0xff] %v8824
        %8937 = vst [vmem:[%s445 + $0x2a8] sm:$0xff] %v8825
        %8938 = vst [vmem:[%s445 + $0x2b0] sm:$0xff] %v8826
        %8939 = vst [vmem:[%s445 + $0x2b8] sm:$0xff] %v8827
        %8940 = vst [vmem:[%s445 + $0x2c0] sm:$0xff] %v8828
        %8941 = vst [vmem:[%s445 + $0x2c8] sm:$0xff] %v8829
        %8942 = vst [vmem:[%s445 + $0x2d0] sm:$0xff] %v8830
        %8943 = vst [vmem:[%s445 + $0x2d8] sm:$0xff] %v8831
        %8944 = vst [vmem:[%s445 + $0x2e0] sm:$0xff] %v8832
        %8945 = vst [vmem:[%s445 + $0x2e8] sm:$0xff] %v8833
        %8946 = vst [vmem:[%s445 + $0x2f0] sm:$0xff] %v8834
        %8947 = vst [vmem:[%s445 + $0x2f8] sm:$0xff] %v8835
        %8948 = vst [vmem:[%s445 + $0x300] sm:$0xff] %v8836
        %8949 = vst [vmem:[%s445 + $0x308] sm:$0xff] %v8837
        %8950 = vst [vmem:[%s445 + $0x310] sm:$0xff] %v8838
        %8951 = vst [vmem:[%s445 + $0x318] sm:$0xff] %v8839
        %8952 = vst [vmem:[%s445 + $0x320] sm:$0xff] %v8840
        %8953 = vst [vmem:[%s445 + $0x328] sm:$0xff] %v8841
        %8954 = vst [vmem:[%s445 + $0x330] sm:$0xff] %v8842
        %8955 = vst [vmem:[%s445 + $0x338] sm:$0xff] %v8843
        %8956 = vst [vmem:[%s445 + $0x340] sm:$0xff] %v8844
        %8957 = vst [vmem:[%s445 + $0x348] sm:$0xff] %v8845
        %8958 = vst [vmem:[%s445 + $0x350] sm:$0xff] %v8846
        %8959 = vst [vmem:[%s445 + $0x358] sm:$0xff] %v8847
        %8960 = vst [vmem:[%s445 + $0x360] sm:$0xff] %v8848
        %8961 = vst [vmem:[%s445 + $0x368] sm:$0xff] %v8849
        %8962 = vst [vmem:[%s445 + $0x370] sm:$0xff] %v8850
        %8963 = vst [vmem:[%s445 + $0x378] sm:$0xff] %v8851
        %s8964 = smul.u32 16, %s25
        %p8965 = scmp.lt.s32.totalorder %s8964, 31
        %s8966 = scalar_select %p8965, %s8964, 31
        %s8967 = smul.addr %s8966, 7
        %s8968 = smul.addr %s8967, 8
        %s8969 = scalar_lea.vmem %s9, %s8968
        // Predicated region
        $region89: #{generator_forward.1} parent=55 // pred_check
          %p8970 = pneg %p237
        $region90: #{generator_forward.1} parent=55 // pred_check_branch
          %8972 = sbr.rel (%p8970) target = $region92
        $region91: #{generator_forward.1} parent=55 // pred_region
          %s8973 = smul.u32 16, %s25
        $region92: #{generator_forward.1} parent=55 // pred_fallthru
          _
      $region56: #{generator_forward.1} parent=5 // pred_fallthru
        _
      %p8974 = scmp.le.s32.totalorder 2, %s20
      // Predicated region
      $region93: #{generator_forward.1} parent=5 // pred_check
        %p8975 = pneg %p8974
      $region94: #{generator_forward.1} parent=5 // pred_check_branch
        %8977 = sbr.rel (%p8975) target = $region96
      $region95: #{generator_forward.1} parent=5 // pred_region
        %s8978 = ssub.s32 %s20, 2
        // Predicated region
        $region97: #{generator_forward.1} parent=95 // pred_check
          %p8979 = pneg %p243
        $region98: #{generator_forward.1} parent=95 // pred_check_branch
          %8981 = sbr.rel (%p8979) target = $region100
        $region99: #{generator_forward.1} parent=95 // pred_region
          %s8982 = smul.u32 16, %s26
          %p8983 = scmp.lt.s32.totalorder %s8982, 31
          %s8984 = scalar_select %p8983, %s8982, 31
          %s8985 = smul.addr %s8984, 7
          %s8986 = smul.addr %s8985, 8
          %s8987 = scalar_lea.vmem %s9, %s8986
        $region100: #{generator_forward.1} parent=95 // pred_fallthru
          _
      $region96: #{generator_forward.1} parent=5 // pred_fallthru
        _
    $region6: #{generator_forward.1} parent=1 // loop_footer
      %s24 = sadd.s32 1, %s20
    $region7: #{generator_forward.1} parent=1 // loop_footer_branch
      %19 = sbr.rel target = $region3
    $region8: #{generator_forward.1} parent=1 // loop_exit
      _
    %8988 = vsyncpa [#allocation3], 1
    %s8989 = scalar_lea.sflag [#allocation3], 1
    %8990 = vsyncpa %s8989, 1
    %8991 = vsyncpa [#allocation5], 1
    %8992 = vsyncpa [#allocation8], 1
    %8993 = vsyncpa [#allocation11], 1
    %8994 = vsyncpa [#allocation14], 1

</llo_original>
